<compile_context>
chip_gen: v6e
topology: v6e:2x2x1
jax: 0.10.0
libtpu: 0.0.40
codegen_flags: <defaults>
</compile_context>

<pallas_src>
import jax
import jax.numpy as jnp
from jax.experimental import pallas as pl
from jax.experimental.pallas import tpu as pltpu

EPS = 1e-5


# ----------------------------- kernels ------------------------------------ #

def _conv1_kernel(x_ref, w_ref, out_ref, sum_ref, ssq_ref):
    # conv1: 1x1, no bias.  Emits per-tile partial stats for bn1.
    _, H, W, Cin = x_ref.shape
    P = w_ref.shape[1]
    rows = H * W
    x2d = x_ref[...].reshape(rows, Cin)
    y = jnp.dot(x2d, w_ref[...], preferred_element_type=jnp.float32)
    out_ref[...] = y.reshape(1, H, W, P)
    sum_ref[...] = jnp.sum(y, axis=0, keepdims=True).reshape(1, 1, P)
    ssq_ref[...] = jnp.sum(y * y, axis=0, keepdims=True).reshape(1, 1, P)


def _conv2_kernel(t1_ref, sc_ref, sh_ref, w2_ref, out_ref, sum_ref, ssq_ref,
                  pad_ref):
    # bn1 (global batch-stat affine) + relu -> 3x3 conv (stride 1, pad 1)
    # as one im2col matmul with K = 9*P.  Emits partial stats for bn2.
    _, H, W, P = t1_ref.shape
    rows = H * W

    t1 = jnp.maximum(t1_ref[...].reshape(rows, P) * sc_ref[...] + sh_ref[...],
                     0.0)

    # Halo-only zeroing: the interior is fully overwritten below; the halo is
    # re-zeroed every step because the scratch persists across grid steps
    # (and each core has its own instance under "parallel" sharding).
    pad_ref[0:1, :, :] = jnp.zeros((1, W + 2, P), jnp.float32)
    pad_ref[H + 1:H + 2, :, :] = jnp.zeros((1, W + 2, P), jnp.float32)
    pad_ref[1:H + 1, 0:1, :] = jnp.zeros((H, 1, P), jnp.float32)
    pad_ref[1:H + 1, W + 1:W + 2, :] = jnp.zeros((H, 1, P), jnp.float32)
    pad_ref[1:H + 1, 1:W + 1, :] = t1.reshape(H, W, P)

    # im2col: 9 shifted windows (bf16) -> (rows, 9P) slab, single MXU matmul.
    slabs = [
        pad_ref[dh:dh + H, dw:dw + W, :].reshape(rows, P).astype(jnp.bfloat16)
        for dh in range(3) for dw in range(3)
    ]
    col = jnp.concatenate(slabs, axis=-1)                       # (rows, 9P)
    y = jnp.dot(col, w2_ref[...], preferred_element_type=jnp.float32)

    out_ref[...] = y.reshape(1, H, W, P)
    sum_ref[...] = jnp.sum(y, axis=0, keepdims=True).reshape(1, 1, P)
    ssq_ref[...] = jnp.sum(y * y, axis=0, keepdims=True).reshape(1, 1, P)


def _conv3_kernel(t2_ref, sc_ref, sh_ref, w3_ref, out_ref, sum_ref, ssq_ref):
    # bn2 affine + relu -> conv3 (1x1).  Emits partial stats for bn3.
    _, H, W, P = t2_ref.shape
    C = w3_ref.shape[1]
    rows = H * W
    t2 = jnp.maximum(t2_ref[...].reshape(rows, P) * sc_ref[...] + sh_ref[...],
                     0.0)
    y = jnp.dot(t2.astype(jnp.bfloat16), w3_ref[...],
                preferred_element_type=jnp.float32)
    out_ref[...] = y.reshape(1, H, W, C)
    sum_ref[...] = jnp.sum(y, axis=0, keepdims=True).reshape(1, 1, C)
    ssq_ref[...] = jnp.sum(y * y, axis=0, keepdims=True).reshape(1, 1, C)


def _bn_residual_relu_kernel(t3_ref, x_ref, sc_ref, sh_ref, out_ref):
    # bn3 affine + residual add (downsample=None -> residual = x) + relu.
    _, H, W, C = t3_ref.shape
    rows = H * W
    y = (t3_ref[...].reshape(rows, C) * sc_ref[...] + sh_ref[...]
         + x_ref[...].reshape(rows, C))
    out_ref[...] = jnp.maximum(y, 0.0).reshape(1, H, W, C).astype(out_ref.dtype)


# ----------------------------- wrapper ------------------------------------ #

def _affine_from_partials(psum, psqsum, gamma, beta, count):
    # Fold global batch statistics into a per-channel affine: y*scale + shift.
    mean = jnp.sum(psum, axis=(0, 1)) / count
    ex2 = jnp.sum(psqsum, axis=(0, 1)) / count
    var = ex2 - mean * mean                      # biased var (training-mode BN)
    scale = gamma.reshape(-1) * jax.lax.rsqrt(var + EPS)
    shift = beta.reshape(-1) - mean * scale
    return scale.reshape(1, -1), shift.reshape(1, -1)


def bottleneck_forward(x, params):
    w1, g1, b1, w2, g2, b2, w3, g3, b3 = params
    N, H, W, Cin = x.shape
    P = w1.shape[1]
    Cout = w3.shape[1]
    assert Cin == Cout, "downsample=None requires inplanes == planes*4"
    count = N * H * W

    # (3,3,P,P) HWIO -> (9P, P): rows ordered (dh, dw, cin), matching im2col.
    w2r = w2.reshape(9 * P, P).astype(jnp.bfloat16)
    w3b = w3.astype(jnp.bfloat16)

    act = lambda c: pl.BlockSpec((1, H, W, c), lambda i: (i, 0, 0, 0))
    stat = lambda c: pl.BlockSpec((1, 1, c), lambda i: (i, 0, 0))
    rep = lambda a: pl.BlockSpec(a.shape, lambda i, _n=a.ndim: (0,) * _n)

    cparams = pltpu.CompilerParams(
        dimension_semantics=("parallel",),
        vmem_limit_bytes=32 * 1024 * 1024,
    )

    def conv_call(kernel, ins, in_specs, out_c, scratch=()):
        return pl.pallas_call(
            kernel,
            out_shape=(jax.ShapeDtypeStruct((N, H, W, out_c), jnp.float32),
                       jax.ShapeDtypeStruct((N, 1, out_c), jnp.float32),
                       jax.ShapeDtypeStruct((N, 1, out_c), jnp.float32)),
            grid_spec=pltpu.PrefetchScalarGridSpec(
                num_scalar_prefetch=0,
                grid=(N,),
                in_specs=in_specs,
                out_specs=(act(out_c), stat(out_c), stat(out_c)),
                scratch_shapes=list(scratch)),
            compiler_params=cparams,
        )(*ins)

    # pass 1: conv1 (1x1) + partial bn1 stats
    t1, s1, q1 = conv_call(_conv1_kernel, (x, w1), [act(Cin), rep(w1)], P)
    sc1, sh1 = _affine_from_partials(s1, q1, g1, b1, count)

    # pass 2: bn1 + relu -> conv2 (3x3 via im2col, K=9P) + partial bn2 stats
    t2, s2, q2 = conv_call(
        _conv2_kernel, (t1, sc1, sh1, w2r),
        [act(P), rep(sc1), rep(sh1), rep(w2r)], P,
        scratch=(pltpu.VMEM((H + 2, W + 2, P), jnp.float32),))
    sc2, sh2 = _affine_from_partials(s2, q2, g2, b2, count)

    # pass 3: bn2 + relu -> conv3 (1x1) + partial bn3 stats
    t3, s3, q3 = conv_call(
        _conv3_kernel, (t2, sc2, sh2, w3b),
        [act(P), rep(sc2), rep(sh2), rep(w3b)], Cout)
    sc3, sh3 = _affine_from_partials(s3, q3, g3, b3, count)

    # pass 4: bn3 + residual add + relu
    out = pl.pallas_call(
        _bn_residual_relu_kernel,
        out_shape=jax.ShapeDtypeStruct((N, H, W, Cout), x.dtype),
        grid_spec=pltpu.PrefetchScalarGridSpec(
            num_scalar_prefetch=0,
            grid=(N,),
            in_specs=[act(Cout), act(Cout), rep(sc3), rep(sh3)],
            out_specs=act(Cout)),
        compiler_params=cparams,
    )(t3, x, sc3, sh3)
    return out


# ----------------------------- reference ----------------------------------- #

def ref_forward(x, params):
    # Pure-JAX (f32, HIGHEST precision) reference for validation.
    w1, g1, b1, w2, g2, b2, w3, g3, b3 = params
    dn = ('NHWC', 'HWIO', 'NHWC')
    hp = jax.lax.Precision.HIGHEST

    def bn(t, g, b):
        m = jnp.mean(t, axis=(0, 1, 2), keepdims=True)
        v = jnp.mean(jnp.square(t - m), axis=(0, 1, 2), keepdims=True)
        return ((t - m) * jax.lax.rsqrt(v + EPS)
                * g.reshape(1, 1, 1, -1) + b.reshape(1, 1, 1, -1))

    o = jax.lax.conv_general_dilated(x, w1.reshape(1, 1, *w1.shape), (1, 1),
                                     'VALID', dimension_numbers=dn,
                                     precision=hp)
    o = jax.nn.relu(bn(o, g1, b1))
    o = jax.lax.conv_general_dilated(o, w2, (1, 1), 'SAME',
                                     dimension_numbers=dn, precision=hp)
    o = jax.nn.relu(bn(o, g2, b2))
    o = jax.lax.conv_general_dilated(o, w3.reshape(1, 1, *w3.shape), (1, 1),
                                     'VALID', dimension_numbers=dn,
                                     precision=hp)
    o = bn(o, g3, b3)
    return jax.nn.relu(o + x)


if __name__ == "__main__":
    key = jax.random.PRNGKey(0)
    # ResNet-style bottleneck config: planes=128, inplanes=planes*4=512
    # (downsample=None forces inplanes == planes*expansion).  128-multiple
    # channel dims keep every HBM store lane-dense (unmasked vst).
    N, H, W = 2, 16, 16
    planes = 128
    inplanes = planes * 4
    Cout = planes * 4

    ks = jax.random.split(key, 10)
    x = jax.random.normal(ks[0], (N, H, W, inplanes), jnp.float32)
    w1 = jax.random.normal(ks[1], (inplanes, planes), jnp.float32) * 0.2
    w2 = jax.random.normal(ks[2], (3, 3, planes, planes), jnp.float32) * 0.2
    w3 = jax.random.normal(ks[3], (planes, Cout), jnp.float32) * 0.2
    g1 = 1.0 + 0.1 * jax.random.normal(ks[4], (1, planes), jnp.float32)
    b1 = 0.1 * jax.random.normal(ks[5], (1, planes), jnp.float32)
    g2 = 1.0 + 0.1 * jax.random.normal(ks[6], (1, planes), jnp.float32)
    b2 = 0.1 * jax.random.normal(ks[7], (1, planes), jnp.float32)
    g3 = 1.0 + 0.1 * jax.random.normal(ks[8], (1, Cout), jnp.float32)
    b3 = 0.1 * jax.random.normal(ks[9], (1, Cout), jnp.float32)
    params = (w1, g1, b1, w2, g2, b2, w3, g3, b3)

    out = jax.block_until_ready(jax.jit(bottleneck_forward)(x, params))
    ref = jax.block_until_ready(ref_forward(x, params))

    assert out.shape == (N, H, W, Cout)
    # conv2/conv3 use bf16 MXU inputs (f32 accumulation), so compare against
    # the f32 HIGHEST-precision reference with a bf16-level tolerance.
    max_err = float(jnp.max(jnp.abs(out - ref)))
    assert jnp.allclose(out, ref, atol=5e-2, rtol=5e-2), max_err

    print("KERNEL_OK")
</pallas_src>

<mosaic_0001>
module attributes {stable_mosaic.version = 11 : i64} {
  func.func @_conv1_kernel(%arg0: i32, %arg1: memref<1x16x16x512xf32, #tpu.memory_space<vmem>>, %arg2: memref<512x128xf32, #tpu.memory_space<vmem>>, %arg3: memref<1x16x16x128xf32, #tpu.memory_space<vmem>>, %arg4: memref<1x1x128xf32, #tpu.memory_space<vmem>>, %arg5: memref<1x1x128xf32, #tpu.memory_space<vmem>>) attributes {dimension_semantics = [#tpu.dimension_semantics<parallel>], iteration_bounds = array<i64: 2>, scalar_prefetch = 0 : i64, scratch_operands = 0 : i64, tpu.core_type = #tpu.core_type<tc>, window_params = [{transform_indices = @transform_0, window_bounds = array<i64: 1, 16, 16, 512>}, {pipeline_mode = #tpu.pipeline_mode<synchronous>, transform_indices = @transform_1, window_bounds = array<i64: 512, 128>}, {transform_indices = @transform_2, window_bounds = array<i64: 1, 16, 16, 128>}, {transform_indices = @transform_3, window_bounds = array<i64: 1, 1, 128>}, {transform_indices = @transform_4, window_bounds = array<i64: 1, 1, 128>}]} {
    %c0 = arith.constant 0 : index
    %c0_0 = arith.constant 0 : index
    %c0_1 = arith.constant 0 : index
    %c0_2 = arith.constant 0 : index
    %0 = vector.load %arg1[%c0, %c0_0, %c0_1, %c0_2] : memref<1x16x16x512xf32, #tpu.memory_space<vmem>>, vector<1x16x16x512xf32>
    %1 = vector.shape_cast %0 : vector<1x16x16x512xf32> to vector<256x512xf32>
    %c0_3 = arith.constant 0 : index
    %c0_4 = arith.constant 0 : index
    %2 = vector.load %arg2[%c0_3, %c0_4] : memref<512x128xf32, #tpu.memory_space<vmem>>, vector<512x128xf32>
    %cst = arith.constant dense<0.000000e+00> : vector<256x128xf32>
    %3 = tpu.matmul %1, %2, %cst {dimension_numbers = #tpu.dot_dimension_numbers<[1], [0], [0], [1], [0, 0, 1, 1], [], []>} : vector<256x512xf32>, vector<512x128xf32>, vector<256x128xf32> -> vector<256x128xf32>
    %4 = vector.shape_cast %3 : vector<256x128xf32> to vector<1x16x16x128xf32>
    %c0_5 = arith.constant 0 : index
    %c0_6 = arith.constant 0 : index
    %c0_7 = arith.constant 0 : index
    %c0_8 = arith.constant 0 : index
    %5 = vector.load %arg3[%c0_5, %c0_6, %c0_7, %c0_8] : memref<1x16x16x128xf32, #tpu.memory_space<vmem>>, vector<1x16x16x128xf32>
    tpu.vector_store %arg3[%c0_5, %c0_6, %c0_7, %c0_8], %4 {strides = array<i32>} : memref<1x16x16x128xf32, #tpu.memory_space<vmem>>, vector<1x16x16x128xf32>,
    %cst_9 = arith.constant dense<0.000000e+00> : vector<128xf32>
    %6 = vector.multi_reduction <add>, %3, %cst_9 [0] : vector<256x128xf32> to vector<128xf32>
    %7 = vector.shape_cast %6 : vector<128xf32> to vector<1x128xf32>
    %8 = vector.shape_cast %7 : vector<1x128xf32> to vector<1x1x128xf32>
    %c0_10 = arith.constant 0 : index
    %c0_11 = arith.constant 0 : index
    %c0_12 = arith.constant 0 : index
    %9 = vector.load %arg4[%c0_10, %c0_11, %c0_12] : memref<1x1x128xf32, #tpu.memory_space<vmem>>, vector<1x1x128xf32>
    tpu.vector_store %arg4[%c0_10, %c0_11, %c0_12], %8 {strides = array<i32>} : memref<1x1x128xf32, #tpu.memory_space<vmem>>, vector<1x1x128xf32>,
    %10 = arith.mulf %3, %3 : vector<256x128xf32>
    %cst_13 = arith.constant dense<0.000000e+00> : vector<128xf32>
    %11 = vector.multi_reduction <add>, %10, %cst_13 [0] : vector<256x128xf32> to vector<128xf32>
    %12 = vector.shape_cast %11 : vector<128xf32> to vector<1x128xf32>
    %13 = vector.shape_cast %12 : vector<1x128xf32> to vector<1x1x128xf32>
    %c0_14 = arith.constant 0 : index
    %c0_15 = arith.constant 0 : index
    %c0_16 = arith.constant 0 : index
    %14 = vector.load %arg5[%c0_14, %c0_15, %c0_16] : memref<1x1x128xf32, #tpu.memory_space<vmem>>, vector<1x1x128xf32>
    tpu.vector_store %arg5[%c0_14, %c0_15, %c0_16], %13 {strides = array<i32>} : memref<1x1x128xf32, #tpu.memory_space<vmem>>, vector<1x1x128xf32>,
    return
  }
  func.func @transform_0(%arg0: i32) -> (i32, i32, i32, i32) {
    %c0_i32 = arith.constant 0 : i32
    %c0_i32_0 = arith.constant 0 : i32
    %c0_i32_1 = arith.constant 0 : i32
    %c0_i32_2 = arith.constant 0 : i32
    return %arg0, %c0_i32, %c0_i32_0, %c0_i32_1 : i32, i32, i32, i32
  }
  func.func @transform_1(%arg0: i32) -> (i32, i32) {
    %c0_i32 = arith.constant 0 : i32
    %c0_i32_0 = arith.constant 0 : i32
    %c0_i32_1 = arith.constant 0 : i32
    return %c0_i32, %c0_i32_0 : i32, i32
  }
  func.func @transform_2(%arg0: i32) -> (i32, i32, i32, i32) {
    %c0_i32 = arith.constant 0 : i32
    %c0_i32_0 = arith.constant 0 : i32
    %c0_i32_1 = arith.constant 0 : i32
    %c0_i32_2 = arith.constant 0 : i32
    return %arg0, %c0_i32, %c0_i32_0, %c0_i32_1 : i32, i32, i32, i32
  }
  func.func @transform_3(%arg0: i32) -> (i32, i32, i32) {
    %c0_i32 = arith.constant 0 : i32
    %c0_i32_0 = arith.constant 0 : i32
    %c0_i32_1 = arith.constant 0 : i32
    return %arg0, %c0_i32, %c0_i32_0 : i32, i32, i32
  }
  func.func @transform_4(%arg0: i32) -> (i32, i32, i32) {
    %c0_i32 = arith.constant 0 : i32
    %c0_i32_0 = arith.constant 0 : i32
    %c0_i32_1 = arith.constant 0 : i32
    return %arg0, %c0_i32, %c0_i32_0 : i32, i32, i32
  }
}

module attributes {stable_mosaic.version = 11 : i64} {
  func.func @_conv3_kernel(%arg0: i32, %arg1: memref<1x16x16x128xf32, #tpu.memory_space<vmem>>, %arg2: memref<1x128xf32, #tpu.memory_space<vmem>>, %arg3: memref<1x128xf32, #tpu.memory_space<vmem>>, %arg4: memref<128x512xbf16, #tpu.memory_space<vmem>>, %arg5: memref<1x16x16x512xf32, #tpu.memory_space<vmem>>, %arg6: memref<1x1x512xf32, #tpu.memory_space<vmem>>, %arg7: memref<1x1x512xf32, #tpu.memory_space<vmem>>) attributes {dimension_semantics = [#tpu.dimension_semantics<parallel>], iteration_bounds = array<i64: 2>, scalar_prefetch = 0 : i64, scratch_operands = 0 : i64, tpu.core_type = #tpu.core_type<tc>, window_params = [{transform_indices = @transform_0, window_bounds = array<i64: 1, 16, 16, 128>}, {pipeline_mode = #tpu.pipeline_mode<synchronous>, transform_indices = @transform_1, window_bounds = array<i64: 1, 128>}, {pipeline_mode = #tpu.pipeline_mode<synchronous>, transform_indices = @transform_2, window_bounds = array<i64: 1, 128>}, {pipeline_mode = #tpu.pipeline_mode<synchronous>, transform_indices = @transform_3, window_bounds = array<i64: 128, 512>}, {transform_indices = @transform_4, window_bounds = array<i64: 1, 16, 16, 512>}, {transform_indices = @transform_5, window_bounds = array<i64: 1, 1, 512>}, {transform_indices = @transform_6, window_bounds = array<i64: 1, 1, 512>}]} {
    %c0 = arith.constant 0 : index
    %c0_0 = arith.constant 0 : index
    %c0_1 = arith.constant 0 : index
    %c0_2 = arith.constant 0 : index
    %0 = vector.load %arg1[%c0, %c0_0, %c0_1, %c0_2] : memref<1x16x16x128xf32, #tpu.memory_space<vmem>>, vector<1x16x16x128xf32>
    %1 = vector.shape_cast %0 : vector<1x16x16x128xf32> to vector<256x128xf32>
    %c0_3 = arith.constant 0 : index
    %c0_4 = arith.constant 0 : index
    %2 = vector.load %arg2[%c0_3, %c0_4] : memref<1x128xf32, #tpu.memory_space<vmem>>, vector<1x128xf32>
    %3 = vector.broadcast %2 : vector<1x128xf32> to vector<256x128xf32>
    %4 = arith.mulf %1, %3 : vector<256x128xf32>
    %c0_5 = arith.constant 0 : index
    %c0_6 = arith.constant 0 : index
    %5 = vector.load %arg3[%c0_5, %c0_6] : memref<1x128xf32, #tpu.memory_space<vmem>>, vector<1x128xf32>
    %6 = vector.broadcast %5 : vector<1x128xf32> to vector<256x128xf32>
    %7 = arith.addf %4, %6 : vector<256x128xf32>
    %cst = arith.constant 0.000000e+00 : f32
    %8 = vector.broadcast %cst : f32 to vector<256x128xf32>
    %9 = arith.maximumf %7, %8 : vector<256x128xf32>
    %10 = arith.truncf %9 : vector<256x128xf32> to vector<256x128xbf16>
    %c0_7 = arith.constant 0 : index
    %c0_8 = arith.constant 0 : index
    %11 = vector.load %arg4[%c0_7, %c0_8] : memref<128x512xbf16, #tpu.memory_space<vmem>>, vector<128x512xbf16>
    %cst_9 = arith.constant dense<0.000000e+00> : vector<256x512xf32>
    %12 = tpu.matmul %10, %11, %cst_9 {dimension_numbers = #tpu.dot_dimension_numbers<[1], [0], [0], [1], [0, 0, 1, 1], [], []>} : vector<256x128xbf16>, vector<128x512xbf16>, vector<256x512xf32> -> vector<256x512xf32>
    %13 = vector.shape_cast %12 : vector<256x512xf32> to vector<1x16x16x512xf32>
    %c0_10 = arith.constant 0 : index
    %c0_11 = arith.constant 0 : index
    %c0_12 = arith.constant 0 : index
    %c0_13 = arith.constant 0 : index
    %14 = vector.load %arg5[%c0_10, %c0_11, %c0_12, %c0_13] : memref<1x16x16x512xf32, #tpu.memory_space<vmem>>, vector<1x16x16x512xf32>
    tpu.vector_store %arg5[%c0_10, %c0_11, %c0_12, %c0_13], %13 {strides = array<i32>} : memref<1x16x16x512xf32, #tpu.memory_space<vmem>>, vector<1x16x16x512xf32>,
    %cst_14 = arith.constant dense<0.000000e+00> : vector<512xf32>
    %15 = vector.multi_reduction <add>, %12, %cst_14 [0] : vector<256x512xf32> to vector<512xf32>
    %16 = vector.shape_cast %15 : vector<512xf32> to vector<1x512xf32>
    %17 = vector.shape_cast %16 : vector<1x512xf32> to vector<1x1x512xf32>
    %c0_15 = arith.constant 0 : index
    %c0_16 = arith.constant 0 : index
    %c0_17 = arith.constant 0 : index
    %18 = vector.load %arg6[%c0_15, %c0_16, %c0_17] : memref<1x1x512xf32, #tpu.memory_space<vmem>>, vector<1x1x512xf32>
    tpu.vector_store %arg6[%c0_15, %c0_16, %c0_17], %17 {strides = array<i32>} : memref<1x1x512xf32, #tpu.memory_space<vmem>>, vector<1x1x512xf32>,
    %19 = arith.mulf %12, %12 : vector<256x512xf32>
    %cst_18 = arith.constant dense<0.000000e+00> : vector<512xf32>
    %20 = vector.multi_reduction <add>, %19, %cst_18 [0] : vector<256x512xf32> to vector<512xf32>
    %21 = vector.shape_cast %20 : vector<512xf32> to vector<1x512xf32>
    %22 = vector.shape_cast %21 : vector<1x512xf32> to vector<1x1x512xf32>
    %c0_19 = arith.constant 0 : index
    %c0_20 = arith.constant 0 : index
    %c0_21 = arith.constant 0 : index
    %23 = vector.load %arg7[%c0_19, %c0_20, %c0_21] : memref<1x1x512xf32, #tpu.memory_space<vmem>>, vector<1x1x512xf32>
    tpu.vector_store %arg7[%c0_19, %c0_20, %c0_21], %22 {strides = array<i32>} : memref<1x1x512xf32, #tpu.memory_space<vmem>>, vector<1x1x512xf32>,
    return
  }
  func.func @transform_0(%arg0: i32) -> (i32, i32, i32, i32) {
    %c0_i32 = arith.constant 0 : i32
    %c0_i32_0 = arith.constant 0 : i32
    %c0_i32_1 = arith.constant 0 : i32
    %c0_i32_2 = arith.constant 0 : i32
    return %arg0, %c0_i32, %c0_i32_0, %c0_i32_1 : i32, i32, i32, i32
  }
  func.func @transform_1(%arg0: i32) -> (i32, i32) {
    %c0_i32 = arith.constant 0 : i32
    %c0_i32_0 = arith.constant 0 : i32
    %c0_i32_1 = arith.constant 0 : i32
    return %c0_i32, %c0_i32_0 : i32, i32
  }
  func.func @transform_2(%arg0: i32) -> (i32, i32) {
    %c0_i32 = arith.constant 0 : i32
    %c0_i32_0 = arith.constant 0 : i32
    %c0_i32_1 = arith.constant 0 : i32
    return %c0_i32, %c0_i32_0 : i32, i32
  }
  func.func @transform_3(%arg0: i32) -> (i32, i32) {
    %c0_i32 = arith.constant 0 : i32
    %c0_i32_0 = arith.constant 0 : i32
    %c0_i32_1 = arith.constant 0 : i32
    return %c0_i32, %c0_i32_0 : i32, i32
  }
  func.func @transform_4(%arg0: i32) -> (i32, i32, i32, i32) {
    %c0_i32 = arith.constant 0 : i32
    %c0_i32_0 = arith.constant 0 : i32
    %c0_i32_1 = arith.constant 0 : i32
    %c0_i32_2 = arith.constant 0 : i32
    return %arg0, %c0_i32, %c0_i32_0, %c0_i32_1 : i32, i32, i32, i32
  }
  func.func @transform_5(%arg0: i32) -> (i32, i32, i32) {
    %c0_i32 = arith.constant 0 : i32
    %c0_i32_0 = arith.constant 0 : i32
    %c0_i32_1 = arith.constant 0 : i32
    return %arg0, %c0_i32, %c0_i32_0 : i32, i32, i32
  }
  func.func @transform_6(%arg0: i32) -> (i32, i32, i32) {
    %c0_i32 = arith.constant 0 : i32
    %c0_i32_0 = arith.constant 0 : i32
    %c0_i32_1 = arith.constant 0 : i32
    return %arg0, %c0_i32, %c0_i32_0 : i32, i32, i32
  }
}

module attributes {stable_mosaic.version = 11 : i64} {
  func.func @_conv2_kernel(%arg0: i32, %arg1: memref<1x16x16x128xf32, #tpu.memory_space<vmem>>, %arg2: memref<1x128xf32, #tpu.memory_space<vmem>>, %arg3: memref<1x128xf32, #tpu.memory_space<vmem>>, %arg4: memref<1152x128xbf16, #tpu.memory_space<vmem>>, %arg5: memref<1x16x16x128xf32, #tpu.memory_space<vmem>>, %arg6: memref<1x1x128xf32, #tpu.memory_space<vmem>>, %arg7: memref<1x1x128xf32, #tpu.memory_space<vmem>>, %arg8: memref<18x18x128xf32, #tpu.memory_space<vmem>>) attributes {dimension_semantics = [#tpu.dimension_semantics<parallel>], iteration_bounds = array<i64: 2>, scalar_prefetch = 0 : i64, scratch_operands = 1 : i64, tpu.core_type = #tpu.core_type<tc>, window_params = [{transform_indices = @transform_0, window_bounds = array<i64: 1, 16, 16, 128>}, {pipeline_mode = #tpu.pipeline_mode<synchronous>, transform_indices = @transform_1, window_bounds = array<i64: 1, 128>}, {pipeline_mode = #tpu.pipeline_mode<synchronous>, transform_indices = @transform_2, window_bounds = array<i64: 1, 128>}, {pipeline_mode = #tpu.pipeline_mode<synchronous>, transform_indices = @transform_3, window_bounds = array<i64: 1152, 128>}, {transform_indices = @transform_4, window_bounds = array<i64: 1, 16, 16, 128>}, {transform_indices = @transform_5, window_bounds = array<i64: 1, 1, 128>}, {transform_indices = @transform_6, window_bounds = array<i64: 1, 1, 128>}]} {
    %c0 = arith.constant 0 : index
    %c0_0 = arith.constant 0 : index
    %c0_1 = arith.constant 0 : index
    %c0_2 = arith.constant 0 : index
    %0 = vector.load %arg1[%c0, %c0_0, %c0_1, %c0_2] : memref<1x16x16x128xf32, #tpu.memory_space<vmem>>, vector<1x16x16x128xf32>
    %1 = vector.shape_cast %0 : vector<1x16x16x128xf32> to vector<256x128xf32>
    %c0_3 = arith.constant 0 : index
    %c0_4 = arith.constant 0 : index
    %2 = vector.load %arg2[%c0_3, %c0_4] : memref<1x128xf32, #tpu.memory_space<vmem>>, vector<1x128xf32>
    %3 = vector.broadcast %2 : vector<1x128xf32> to vector<256x128xf32>
    %4 = arith.mulf %1, %3 : vector<256x128xf32>
    %c0_5 = arith.constant 0 : index
    %c0_6 = arith.constant 0 : index
    %5 = vector.load %arg3[%c0_5, %c0_6] : memref<1x128xf32, #tpu.memory_space<vmem>>, vector<1x128xf32>
    %6 = vector.broadcast %5 : vector<1x128xf32> to vector<256x128xf32>
    %7 = arith.addf %4, %6 : vector<256x128xf32>
    %cst = arith.constant 0.000000e+00 : f32
    %8 = vector.broadcast %cst : f32 to vector<256x128xf32>
    %9 = arith.maximumf %7, %8 : vector<256x128xf32>
    %cst_7 = arith.constant 0.000000e+00 : f32
    %10 = vector.broadcast %cst_7 : f32 to vector<1x18x128xf32>
    %c0_8 = arith.constant 0 : index
    %c0_9 = arith.constant 0 : index
    %c0_10 = arith.constant 0 : index
    %11 = vector.load %arg8[%c0_8, %c0_9, %c0_10] : memref<18x18x128xf32, #tpu.memory_space<vmem>>, vector<1x18x128xf32>
    tpu.vector_store %arg8[%c0_8, %c0_9, %c0_10], %10 {strides = array<i32>} : memref<18x18x128xf32, #tpu.memory_space<vmem>>, vector<1x18x128xf32>,
    %cst_11 = arith.constant 0.000000e+00 : f32
    %12 = vector.broadcast %cst_11 : f32 to vector<1x18x128xf32>
    %c17 = arith.constant 17 : index
    %c0_12 = arith.constant 0 : index
    %c0_13 = arith.constant 0 : index
    %13 = vector.load %arg8[%c17, %c0_12, %c0_13] : memref<18x18x128xf32, #tpu.memory_space<vmem>>, vector<1x18x128xf32>
    tpu.vector_store %arg8[%c17, %c0_12, %c0_13], %12 {strides = array<i32>} : memref<18x18x128xf32, #tpu.memory_space<vmem>>, vector<1x18x128xf32>,
    %cst_14 = arith.constant 0.000000e+00 : f32
    %14 = vector.broadcast %cst_14 : f32 to vector<16x1x128xf32>
    %c1 = arith.constant 1 : index
    %c0_15 = arith.constant 0 : index
    %c0_16 = arith.constant 0 : index
    %15 = vector.load %arg8[%c1, %c0_15, %c0_16] : memref<18x18x128xf32, #tpu.memory_space<vmem>>, vector<16x1x128xf32>
    tpu.vector_store %arg8[%c1, %c0_15, %c0_16], %14 {strides = array<i32>} : memref<18x18x128xf32, #tpu.memory_space<vmem>>, vector<16x1x128xf32>,
    %cst_17 = arith.constant 0.000000e+00 : f32
    %16 = vector.broadcast %cst_17 : f32 to vector<16x1x128xf32>
    %c1_18 = arith.constant 1 : index
    %c17_19 = arith.constant 17 : index
    %c0_20 = arith.constant 0 : index
    %17 = vector.load %arg8[%c1_18, %c17_19, %c0_20] : memref<18x18x128xf32, #tpu.memory_space<vmem>>, vector<16x1x128xf32>
    tpu.vector_store %arg8[%c1_18, %c17_19, %c0_20], %16 {strides = array<i32>} : memref<18x18x128xf32, #tpu.memory_space<vmem>>, vector<16x1x128xf32>,
    %18 = vector.shape_cast %9 : vector<256x128xf32> to vector<16x16x128xf32>
    %c1_21 = arith.constant 1 : index
    %c1_22 = arith.constant 1 : index
    %c0_23 = arith.constant 0 : index
    %19 = vector.load %arg8[%c1_21, %c1_22, %c0_23] : memref<18x18x128xf32, #tpu.memory_space<vmem>>, vector<16x16x128xf32>
    tpu.vector_store %arg8[%c1_21, %c1_22, %c0_23], %18 {strides = array<i32>} : memref<18x18x128xf32, #tpu.memory_space<vmem>>, vector<16x16x128xf32>,
    %c0_24 = arith.constant 0 : index
    %c0_25 = arith.constant 0 : index
    %c0_26 = arith.constant 0 : index
    %20 = vector.load %arg8[%c0_24, %c0_25, %c0_26] : memref<18x18x128xf32, #tpu.memory_space<vmem>>, vector<16x16x128xf32>
    %21 = vector.shape_cast %20 : vector<16x16x128xf32> to vector<256x128xf32>
    %22 = arith.truncf %21 : vector<256x128xf32> to vector<256x128xbf16>
    %c0_27 = arith.constant 0 : index
    %c1_28 = arith.constant 1 : index
    %c0_29 = arith.constant 0 : index
    %23 = vector.load %arg8[%c0_27, %c1_28, %c0_29] : memref<18x18x128xf32, #tpu.memory_space<vmem>>, vector<16x16x128xf32>
    %24 = vector.shape_cast %23 : vector<16x16x128xf32> to vector<256x128xf32>
    %25 = arith.truncf %24 : vector<256x128xf32> to vector<256x128xbf16>
    %c0_30 = arith.constant 0 : index
    %c2 = arith.constant 2 : index
    %c0_31 = arith.constant 0 : index
    %26 = vector.load %arg8[%c0_30, %c2, %c0_31] : memref<18x18x128xf32, #tpu.memory_space<vmem>>, vector<16x16x128xf32>
    %27 = vector.shape_cast %26 : vector<16x16x128xf32> to vector<256x128xf32>
    %28 = arith.truncf %27 : vector<256x128xf32> to vector<256x128xbf16>
    %c1_32 = arith.constant 1 : index
    %c0_33 = arith.constant 0 : index
    %c0_34 = arith.constant 0 : index
    %29 = vector.load %arg8[%c1_32, %c0_33, %c0_34] : memref<18x18x128xf32, #tpu.memory_space<vmem>>, vector<16x16x128xf32>
    %30 = vector.shape_cast %29 : vector<16x16x128xf32> to vector<256x128xf32>
    %31 = arith.truncf %30 : vector<256x128xf32> to vector<256x128xbf16>
    %c1_35 = arith.constant 1 : index
    %c1_36 = arith.constant 1 : index
    %c0_37 = arith.constant 0 : index
    %32 = vector.load %arg8[%c1_35, %c1_36, %c0_37] : memref<18x18x128xf32, #tpu.memory_space<vmem>>, vector<16x16x128xf32>
    %33 = vector.shape_cast %32 : vector<16x16x128xf32> to vector<256x128xf32>
    %34 = arith.truncf %33 : vector<256x128xf32> to vector<256x128xbf16>
    %c1_38 = arith.constant 1 : index
    %c2_39 = arith.constant 2 : index
    %c0_40 = arith.constant 0 : index
    %35 = vector.load %arg8[%c1_38, %c2_39, %c0_40] : memref<18x18x128xf32, #tpu.memory_space<vmem>>, vector<16x16x128xf32>
    %36 = vector.shape_cast %35 : vector<16x16x128xf32> to vector<256x128xf32>
    %37 = arith.truncf %36 : vector<256x128xf32> to vector<256x128xbf16>
    %c2_41 = arith.constant 2 : index
    %c0_42 = arith.constant 0 : index
    %c0_43 = arith.constant 0 : index
    %38 = vector.load %arg8[%c2_41, %c0_42, %c0_43] : memref<18x18x128xf32, #tpu.memory_space<vmem>>, vector<16x16x128xf32>
    %39 = vector.shape_cast %38 : vector<16x16x128xf32> to vector<256x128xf32>
    %40 = arith.truncf %39 : vector<256x128xf32> to vector<256x128xbf16>
    %c2_44 = arith.constant 2 : index
    %c1_45 = arith.constant 1 : index
    %c0_46 = arith.constant 0 : index
    %41 = vector.load %arg8[%c2_44, %c1_45, %c0_46] : memref<18x18x128xf32, #tpu.memory_space<vmem>>, vector<16x16x128xf32>
    %42 = vector.shape_cast %41 : vector<16x16x128xf32> to vector<256x128xf32>
    %43 = arith.truncf %42 : vector<256x128xf32> to vector<256x128xbf16>
    %c2_47 = arith.constant 2 : index
    %c2_48 = arith.constant 2 : index
    %c0_49 = arith.constant 0 : index
    %44 = vector.load %arg8[%c2_47, %c2_48, %c0_49] : memref<18x18x128xf32, #tpu.memory_space<vmem>>, vector<16x16x128xf32>
    %45 = vector.shape_cast %44 : vector<16x16x128xf32> to vector<256x128xf32>
    %46 = arith.truncf %45 : vector<256x128xf32> to vector<256x128xbf16>
    %47 = tpu.concatenate %22, %25, %28, %31, %34, %37, %40, %43, %46 in 1 : vector<256x128xbf16>, vector<256x128xbf16>, vector<256x128xbf16>, vector<256x128xbf16>, vector<256x128xbf16>, vector<256x128xbf16>, vector<256x128xbf16>, vector<256x128xbf16>, vector<256x128xbf16> -> vector<256x1152xbf16>
    %c0_50 = arith.constant 0 : index
    %c0_51 = arith.constant 0 : index
    %48 = vector.load %arg4[%c0_50, %c0_51] : memref<1152x128xbf16, #tpu.memory_space<vmem>>, vector<1152x128xbf16>
    %cst_52 = arith.constant dense<0.000000e+00> : vector<256x128xf32>
    %49 = tpu.matmul %47, %48, %cst_52 {dimension_numbers = #tpu.dot_dimension_numbers<[1], [0], [0], [1], [0, 0, 1, 1], [], []>} : vector<256x1152xbf16>, vector<1152x128xbf16>, vector<256x128xf32> -> vector<256x128xf32>
    %50 = vector.shape_cast %49 : vector<256x128xf32> to vector<1x16x16x128xf32>
    %c0_53 = arith.constant 0 : index
    %c0_54 = arith.constant 0 : index
    %c0_55 = arith.constant 0 : index
    %c0_56 = arith.constant 0 : index
    %51 = vector.load %arg5[%c0_53, %c0_54, %c0_55, %c0_56] : memref<1x16x16x128xf32, #tpu.memory_space<vmem>>, vector<1x16x16x128xf32>
    tpu.vector_store %arg5[%c0_53, %c0_54, %c0_55, %c0_56], %50 {strides = array<i32>} : memref<1x16x16x128xf32, #tpu.memory_space<vmem>>, vector<1x16x16x128xf32>,
    %cst_57 = arith.constant dense<0.000000e+00> : vector<128xf32>
    %52 = vector.multi_reduction <add>, %49, %cst_57 [0] : vector<256x128xf32> to vector<128xf32>
    %53 = vector.shape_cast %52 : vector<128xf32> to vector<1x128xf32>
    %54 = vector.shape_cast %53 : vector<1x128xf32> to vector<1x1x128xf32>
    %c0_58 = arith.constant 0 : index
    %c0_59 = arith.constant 0 : index
    %c0_60 = arith.constant 0 : index
    %55 = vector.load %arg6[%c0_58, %c0_59, %c0_60] : memref<1x1x128xf32, #tpu.memory_space<vmem>>, vector<1x1x128xf32>
    tpu.vector_store %arg6[%c0_58, %c0_59, %c0_60], %54 {strides = array<i32>} : memref<1x1x128xf32, #tpu.memory_space<vmem>>, vector<1x1x128xf32>,
    %56 = arith.mulf %49, %49 : vector<256x128xf32>
    %cst_61 = arith.constant dense<0.000000e+00> : vector<128xf32>
    %57 = vector.multi_reduction <add>, %56, %cst_61 [0] : vector<256x128xf32> to vector<128xf32>
    %58 = vector.shape_cast %57 : vector<128xf32> to vector<1x128xf32>
    %59 = vector.shape_cast %58 : vector<1x128xf32> to vector<1x1x128xf32>
    %c0_62 = arith.constant 0 : index
    %c0_63 = arith.constant 0 : index
    %c0_64 = arith.constant 0 : index
    %60 = vector.load %arg7[%c0_62, %c0_63, %c0_64] : memref<1x1x128xf32, #tpu.memory_space<vmem>>, vector<1x1x128xf32>
    tpu.vector_store %arg7[%c0_62, %c0_63, %c0_64], %59 {strides = array<i32>} : memref<1x1x128xf32, #tpu.memory_space<vmem>>, vector<1x1x128xf32>,
    return
  }
  func.func @transform_0(%arg0: i32) -> (i32, i32, i32, i32) {
    %c0_i32 = arith.constant 0 : i32
    %c0_i32_0 = arith.constant 0 : i32
    %c0_i32_1 = arith.constant 0 : i32
    %c0_i32_2 = arith.constant 0 : i32
    return %arg0, %c0_i32, %c0_i32_0, %c0_i32_1 : i32, i32, i32, i32
  }
  func.func @transform_1(%arg0: i32) -> (i32, i32) {
    %c0_i32 = arith.constant 0 : i32
    %c0_i32_0 = arith.constant 0 : i32
    %c0_i32_1 = arith.constant 0 : i32
    return %c0_i32, %c0_i32_0 : i32, i32
  }
  func.func @transform_2(%arg0: i32) -> (i32, i32) {
    %c0_i32 = arith.constant 0 : i32
    %c0_i32_0 = arith.constant 0 : i32
    %c0_i32_1 = arith.constant 0 : i32
    return %c0_i32, %c0_i32_0 : i32, i32
  }
  func.func @transform_3(%arg0: i32) -> (i32, i32) {
    %c0_i32 = arith.constant 0 : i32
    %c0_i32_0 = arith.constant 0 : i32
    %c0_i32_1 = arith.constant 0 : i32
    return %c0_i32, %c0_i32_0 : i32, i32
  }
  func.func @transform_4(%arg0: i32) -> (i32, i32, i32, i32) {
    %c0_i32 = arith.constant 0 : i32
    %c0_i32_0 = arith.constant 0 : i32
    %c0_i32_1 = arith.constant 0 : i32
    %c0_i32_2 = arith.constant 0 : i32
    return %arg0, %c0_i32, %c0_i32_0, %c0_i32_1 : i32, i32, i32, i32
  }
  func.func @transform_5(%arg0: i32) -> (i32, i32, i32) {
    %c0_i32 = arith.constant 0 : i32
    %c0_i32_0 = arith.constant 0 : i32
    %c0_i32_1 = arith.constant 0 : i32
    return %arg0, %c0_i32, %c0_i32_0 : i32, i32, i32
  }
  func.func @transform_6(%arg0: i32) -> (i32, i32, i32) {
    %c0_i32 = arith.constant 0 : i32
    %c0_i32_0 = arith.constant 0 : i32
    %c0_i32_1 = arith.constant 0 : i32
    return %arg0, %c0_i32, %c0_i32_0 : i32, i32, i32
  }
}

module attributes {stable_mosaic.version = 11 : i64} {
  func.func @_bn_residual_relu_kernel(%arg0: i32, %arg1: memref<1x16x16x512xf32, #tpu.memory_space<vmem>>, %arg2: memref<1x16x16x512xf32, #tpu.memory_space<vmem>>, %arg3: memref<1x512xf32, #tpu.memory_space<vmem>>, %arg4: memref<1x512xf32, #tpu.memory_space<vmem>>, %arg5: memref<1x16x16x512xf32, #tpu.memory_space<vmem>>) attributes {dimension_semantics = [#tpu.dimension_semantics<parallel>], iteration_bounds = array<i64: 2>, scalar_prefetch = 0 : i64, scratch_operands = 0 : i64, tpu.core_type = #tpu.core_type<tc>, window_params = [{transform_indices = @transform_0, window_bounds = array<i64: 1, 16, 16, 512>}, {transform_indices = @transform_1, window_bounds = array<i64: 1, 16, 16, 512>}, {pipeline_mode = #tpu.pipeline_mode<synchronous>, transform_indices = @transform_2, window_bounds = array<i64: 1, 512>}, {pipeline_mode = #tpu.pipeline_mode<synchronous>, transform_indices = @transform_3, window_bounds = array<i64: 1, 512>}, {transform_indices = @transform_4, window_bounds = array<i64: 1, 16, 16, 512>}]} {
    %c0 = arith.constant 0 : index
    %c0_0 = arith.constant 0 : index
    %c0_1 = arith.constant 0 : index
    %c0_2 = arith.constant 0 : index
    %0 = vector.load %arg1[%c0, %c0_0, %c0_1, %c0_2] : memref<1x16x16x512xf32, #tpu.memory_space<vmem>>, vector<1x16x16x512xf32>
    %1 = vector.shape_cast %0 : vector<1x16x16x512xf32> to vector<256x512xf32>
    %c0_3 = arith.constant 0 : index
    %c0_4 = arith.constant 0 : index
    %2 = vector.load %arg3[%c0_3, %c0_4] : memref<1x512xf32, #tpu.memory_space<vmem>>, vector<1x512xf32>
    %3 = vector.broadcast %2 : vector<1x512xf32> to vector<256x512xf32>
    %4 = arith.mulf %1, %3 : vector<256x512xf32>
    %c0_5 = arith.constant 0 : index
    %c0_6 = arith.constant 0 : index
    %5 = vector.load %arg4[%c0_5, %c0_6] : memref<1x512xf32, #tpu.memory_space<vmem>>, vector<1x512xf32>
    %6 = vector.broadcast %5 : vector<1x512xf32> to vector<256x512xf32>
    %7 = arith.addf %4, %6 : vector<256x512xf32>
    %c0_7 = arith.constant 0 : index
    %c0_8 = arith.constant 0 : index
    %c0_9 = arith.constant 0 : index
    %c0_10 = arith.constant 0 : index
    %8 = vector.load %arg2[%c0_7, %c0_8, %c0_9, %c0_10] : memref<1x16x16x512xf32, #tpu.memory_space<vmem>>, vector<1x16x16x512xf32>
    %9 = vector.shape_cast %8 : vector<1x16x16x512xf32> to vector<256x512xf32>
    %10 = arith.addf %7, %9 : vector<256x512xf32>
    %cst = arith.constant 0.000000e+00 : f32
    %11 = vector.broadcast %cst : f32 to vector<256x512xf32>
    %12 = arith.maximumf %10, %11 : vector<256x512xf32>
    %13 = vector.shape_cast %12 : vector<256x512xf32> to vector<1x16x16x512xf32>
    %c0_11 = arith.constant 0 : index
    %c0_12 = arith.constant 0 : index
    %c0_13 = arith.constant 0 : index
    %c0_14 = arith.constant 0 : index
    %14 = vector.load %arg5[%c0_11, %c0_12, %c0_13, %c0_14] : memref<1x16x16x512xf32, #tpu.memory_space<vmem>>, vector<1x16x16x512xf32>
    tpu.vector_store %arg5[%c0_11, %c0_12, %c0_13, %c0_14], %13 {strides = array<i32>} : memref<1x16x16x512xf32, #tpu.memory_space<vmem>>, vector<1x16x16x512xf32>,
    return
  }
  func.func @transform_0(%arg0: i32) -> (i32, i32, i32, i32) {
    %c0_i32 = arith.constant 0 : i32
    %c0_i32_0 = arith.constant 0 : i32
    %c0_i32_1 = arith.constant 0 : i32
    %c0_i32_2 = arith.constant 0 : i32
    return %arg0, %c0_i32, %c0_i32_0, %c0_i32_1 : i32, i32, i32, i32
  }
  func.func @transform_1(%arg0: i32) -> (i32, i32, i32, i32) {
    %c0_i32 = arith.constant 0 : i32
    %c0_i32_0 = arith.constant 0 : i32
    %c0_i32_1 = arith.constant 0 : i32
    %c0_i32_2 = arith.constant 0 : i32
    return %arg0, %c0_i32, %c0_i32_0, %c0_i32_1 : i32, i32, i32, i32
  }
  func.func @transform_2(%arg0: i32) -> (i32, i32) {
    %c0_i32 = arith.constant 0 : i32
    %c0_i32_0 = arith.constant 0 : i32
    %c0_i32_1 = arith.constant 0 : i32
    return %c0_i32, %c0_i32_0 : i32, i32
  }
  func.func @transform_3(%arg0: i32) -> (i32, i32) {
    %c0_i32 = arith.constant 0 : i32
    %c0_i32_0 = arith.constant 0 : i32
    %c0_i32_1 = arith.constant 0 : i32
    return %c0_i32, %c0_i32_0 : i32, i32
  }
  func.func @transform_4(%arg0: i32) -> (i32, i32, i32, i32) {
    %c0_i32 = arith.constant 0 : i32
    %c0_i32_0 = arith.constant 0 : i32
    %c0_i32_1 = arith.constant 0 : i32
    %c0_i32_2 = arith.constant 0 : i32
    return %arg0, %c0_i32, %c0_i32_0, %c0_i32_1 : i32, i32, i32, i32
  }
}

</mosaic_0001>

<llo_original>
// kernel: bottleneck_forward.4
$region0: #{bottleneck_forward.4}
  #allocation0 [shape = 'u32[]', space=smem, size = 0x4, offset = 0x4, fixed_abs, tag = 'smem constant byte address 0x4 - core index']
  #allocation1 [shape = 'u32[144,128]{1,0:T(1,128)}', space=vmem, size = 0x12000, scoped, tag = 'internal scratch']
  %s0 = inlined_call_operand.hbm [shape: f32[2,16,16,512], index: 0, kind: input, shape index: {}]
  %s1 = inlined_call_operand.vmem [shape: f32[512,128], index: 1, kind: input, shape index: {}]
  %s2 = inlined_call_operand.vmem [shape: f32[2,16,16,128], index: 2, kind: output, shape index: {0}]
  %s3 = inlined_call_operand.vmem [shape: f32[2,1,128], index: 3, kind: output, shape index: {1}]
  %s4 = inlined_call_operand.vmem [shape: f32[2,1,128], index: 4, kind: output, shape index: {2}]
  %5 = xla_tuple %s2, %s3, %s4
  %s6 = sld [smem:[#allocation0]]
  $region61: #{bottleneck_forward.4} parent=0
    _
  %s8 = ssub.s32 1, %s6
  %s9 = scalar_select 0, %s8, %s6
  $region1: #{bottleneck_forward.4} parent=0
    #allocation2 [shape = 'u8[1048576]{0}', space=vmem, size = 0x100000, scoped, tag = 'input window, operand 0']
    #allocation3 [shape = 's32[2]{0}', space=sflag, size = 0x8, scoped, tag = 'scoped memory for bottleneck_forward.4']
    %10 = vsyncpa [#allocation3], 0
    %s11 = scalar_lea.sflag [#allocation3], 1
    %12 = vsyncpa %s11, 0
    loop: start=0, step=1, limit=4
    $region2: #{bottleneck_forward.4} parent=1 // loop_pre_header
      _
    $region3: #{bottleneck_forward.4} parent=1 // loop_header
      %s14 = sphi 0, %s18
      %p15 = scmp.ge.s32.totalorder %s14, 4
      %s24 = sphi 0, %s26
      %s27 = sphi 0, %s24
      %s28 = sphi 0, %s27
      %s44 = sphi 0, %s28
      %s48 = sphi 0, %s48
      %s50 = sphi 0, %s48
      %s51 = sphi 0, %s50
      %s65 = sphi 0, %s51
      %s71 = sphi 0, %s73
      %s74 = sphi 0, %s71
      %s75 = sphi 0, %s74
      %s91 = sphi 0, %s75
      %s97 = sphi 0, %s99
      %s100 = sphi 0, %s97
      %s101 = sphi 0, %s100
      %s117 = sphi 0, %s101
      %s123 = sphi 0, %s125
      %s126 = sphi 0, %s123
      %s127 = sphi 0, %s126
      %s143 = sphi 0, %s127
    $region4: #{bottleneck_forward.4} parent=1 // loop_header_branch
      %17 = sbr.rel (%p15) target = $region8
    $region5: #{bottleneck_forward.4} parent=1 // loop_body
      %s19 = ssub.s32 %s14, 1
      %s20 = ssub.s32 %s14, 2
      %s21 = sadd.s32 %s14, 1
      %s22 = ssub.s32 %s14, %s21
      %p23 = scmp.eq.s32.totalorder %s22, 0
      %s25 = sadd.s32 %s24, 1
      %s26 = scalar_select %p23, %s24, %s25
      %p29 = pneg %p23
      %p30 = scmp.eq.s32.totalorder %s14, 1
      %p31 = por %p29, %p30
      %p32 = scmp.ne.s32.totalorder %s24, %s27
      %p33 = scmp.eq.s32.totalorder %s14, 0
      %p34 = por %p32, %p33
      %p35 = scmp.ne.s32.totalorder %s24, %s27
      %p36 = scmp.eq.s32.totalorder %s19, 1
      %p37 = por %p35, %p36
      %p38 = scmp.ne.s32.totalorder %s27, %s28
      %p39 = scmp.eq.s32.totalorder %s19, 0
      %p40 = por %p38, %p39
      %p41 = scmp.ne.s32.totalorder %s27, %s28
      %p42 = scmp.eq.s32.totalorder %s20, 1
      %p43 = por %p41, %p42
      %p45 = scmp.ne.s32.totalorder %s28, %s44
      %p46 = scmp.eq.s32.totalorder %s20, 0
      %p47 = por %p45, %p46
      %s49 = sadd.s32 %s48, 1
      %p52 = scmp.eq.s32.totalorder %s14, 1
      %p53 = scmp.ne.s32.totalorder %s48, %s50
      %p54 = scmp.eq.s32.totalorder %s14, 0
      %p55 = por %p53, %p54
      %p56 = scmp.ne.s32.totalorder %s48, %s50
      %p57 = scmp.eq.s32.totalorder %s19, 1
      %p58 = por %p56, %p57
      %p59 = scmp.ne.s32.totalorder %s50, %s51
      %p60 = scmp.eq.s32.totalorder %s19, 0
      %p61 = por %p59, %p60
      %p62 = scmp.ne.s32.totalorder %s50, %s51
      %p63 = scmp.eq.s32.totalorder %s20, 1
      %p64 = por %p62, %p63
      %p66 = scmp.ne.s32.totalorder %s51, %s65
      %p67 = scmp.eq.s32.totalorder %s20, 0
      %p68 = por %p66, %p67
      %s69 = ssub.s32 %s14, %s21
      %p70 = scmp.eq.s32.totalorder %s69, 0
      %s72 = sadd.s32 %s71, 1
      %s73 = scalar_select %p70, %s71, %s72
      %p76 = pneg %p70
      %p77 = scmp.eq.s32.totalorder %s14, 1
      %p78 = por %p76, %p77
      %p79 = scmp.ne.s32.totalorder %s71, %s74
      %p80 = scmp.eq.s32.totalorder %s14, 0
      %p81 = por %p79, %p80
      %p82 = scmp.ne.s32.totalorder %s71, %s74
      %p83 = scmp.eq.s32.totalorder %s19, 1
      %p84 = por %p82, %p83
      %p85 = scmp.ne.s32.totalorder %s74, %s75
      %p86 = scmp.eq.s32.totalorder %s19, 0
      %p87 = por %p85, %p86
      %p88 = scmp.ne.s32.totalorder %s74, %s75
      %p89 = scmp.eq.s32.totalorder %s20, 1
      %p90 = por %p88, %p89
      %p92 = scmp.ne.s32.totalorder %s75, %s91
      %p93 = scmp.eq.s32.totalorder %s20, 0
      %p94 = por %p92, %p93
      %s95 = ssub.s32 %s14, %s21
      %p96 = scmp.eq.s32.totalorder %s95, 0
      %s98 = sadd.s32 %s97, 1
      %s99 = scalar_select %p96, %s97, %s98
      %p102 = pneg %p96
      %p103 = scmp.eq.s32.totalorder %s14, 1
      %p104 = por %p102, %p103
      %p105 = scmp.ne.s32.totalorder %s97, %s100
      %p106 = scmp.eq.s32.totalorder %s14, 0
      %p107 = por %p105, %p106
      %p108 = scmp.ne.s32.totalorder %s97, %s100
      %p109 = scmp.eq.s32.totalorder %s19, 1
      %p110 = por %p108, %p109
      %p111 = scmp.ne.s32.totalorder %s100, %s101
      %p112 = scmp.eq.s32.totalorder %s19, 0
      %p113 = por %p111, %p112
      %p114 = scmp.ne.s32.totalorder %s100, %s101
      %p115 = scmp.eq.s32.totalorder %s20, 1
      %p116 = por %p114, %p115
      %p118 = scmp.ne.s32.totalorder %s101, %s117
      %p119 = scmp.eq.s32.totalorder %s20, 0
      %p120 = por %p118, %p119
      %s121 = ssub.s32 %s14, %s21
      %p122 = scmp.eq.s32.totalorder %s121, 0
      %s124 = sadd.s32 %s123, 1
      %s125 = scalar_select %p122, %s123, %s124
      %p128 = pneg %p122
      %p129 = scmp.eq.s32.totalorder %s14, 1
      %p130 = por %p128, %p129
      %p131 = scmp.ne.s32.totalorder %s123, %s126
      %p132 = scmp.eq.s32.totalorder %s14, 0
      %p133 = por %p131, %p132
      %p134 = scmp.ne.s32.totalorder %s123, %s126
      %p135 = scmp.eq.s32.totalorder %s19, 1
      %p136 = por %p134, %p135
      %p137 = scmp.ne.s32.totalorder %s126, %s127
      %p138 = scmp.eq.s32.totalorder %s19, 0
      %p139 = por %p137, %p138
      %p140 = scmp.ne.s32.totalorder %s126, %s127
      %p141 = scmp.eq.s32.totalorder %s20, 1
      %p142 = por %p140, %p141
      %p144 = scmp.ne.s32.totalorder %s127, %s143
      %p145 = scmp.eq.s32.totalorder %s20, 0
      %p146 = por %p144, %p145
      %p147 = scmp.le.s32.totalorder 1, %s14
      %p148 = scmp.lt.s32.totalorder %s14, 3
      %p149 = pnand %p147, %p148
      %p150 = pneg %p149
      // Predicated region
      $region9: #{bottleneck_forward.4} parent=5 // pred_check
        _
      $region10: #{bottleneck_forward.4} parent=5 // pred_check_branch
        %152 = sbr.rel (%p149) target = $region12
      $region11: #{bottleneck_forward.4} parent=5 // pred_region
        %s153 = ssub.s32 %s14, 1
        // Predicated region
        $region13: #{bottleneck_forward.4} parent=11 // pred_check
          %p154 = pneg %p61
        $region14: #{bottleneck_forward.4} parent=11 // pred_check_branch
          %156 = sbr.rel (%p154) target = $region16
        $region15: #{bottleneck_forward.4} parent=11 // pred_region
          _
        $region16: #{bottleneck_forward.4} parent=11 // pred_fallthru
          _
      $region12: #{bottleneck_forward.4} parent=5 // pred_fallthru
        _
      %p157 = scmp.lt.s32.totalorder %s14, 2
      // Predicated region
      $region17: #{bottleneck_forward.4} parent=5 // pred_check
        %p158 = pneg %p157
      $region18: #{bottleneck_forward.4} parent=5 // pred_check_branch
        %160 = sbr.rel (%p158) target = $region20
      $region19: #{bottleneck_forward.4} parent=5 // pred_region
        // Predicated region
        $region21: #{bottleneck_forward.4} parent=19 // pred_check
          %p161 = pneg %p34
        $region22: #{bottleneck_forward.4} parent=19 // pred_check_branch
          %163 = sbr.rel (%p161) target = $region24
        $region23: #{bottleneck_forward.4} parent=19 // pred_region
          %s164 = sand.u32 %s24, 1
          %s165 = scalar_lea.sflag [#allocation3], %s164
          %s166 = sand.u32 %s24, 1
          %s167 = smul.addr %s166, 1024
          %s168 = scalar_lea.vmem [#allocation2], %s167
          %s170 = ssub.s32 16384, 16384
          %171 = vsyncadd %s165, %s170
          %s172 = smul.addr %s14, 128
          %s173 = smul.addr %s172, 128
          %s174 = scalar_lea.hbm %s0, %s173
          %s175 = sshll.u32 %s168, 4
          %s176 = int_to_ptr.vmem [resolvable:$true] %s175
          %181 = dma.hbm_to_vmem [thread:$0]  %s174, 16384, %s176, %s165, 512, 512, 32
        $region24: #{bottleneck_forward.4} parent=19 // pred_fallthru
          _
      $region20: #{bottleneck_forward.4} parent=5 // pred_fallthru
        _
      %p182 = scmp.le.s32.totalorder 1, %s14
      %p183 = scmp.lt.s32.totalorder %s14, 3
      %p184 = pnand %p182, %p183
      %p185 = pneg %p184
      // Predicated region
      $region25: #{bottleneck_forward.4} parent=5 // pred_check
        _
      $region26: #{bottleneck_forward.4} parent=5 // pred_check_branch
        %187 = sbr.rel (%p184) target = $region28
      $region27: #{bottleneck_forward.4} parent=5 // pred_region
        %s188 = ssub.s32 %s14, 1
        %s189 = sand.u32 %s27, 1
        %s190 = scalar_lea.sflag [#allocation3], %s189
        %s191 = sand.u32 %s27, 1
        %s192 = smul.addr %s191, 1024
        %s193 = scalar_lea.vmem [#allocation2], %s192
        // Predicated region
        $region29: #{bottleneck_forward.4} parent=27 // pred_check
          %p194 = pneg %p40
        $region30: #{bottleneck_forward.4} parent=27 // pred_check_branch
          %196 = sbr.rel (%p194) target = $region32
        $region31: #{bottleneck_forward.4} parent=27 // pred_region
          %197 = dma.done %s190, 16384
        $region32: #{bottleneck_forward.4} parent=27 // pred_fallthru
          _
        %s198 = sand.u32 %s27, 1
        %s199 = scalar_lea.sflag [#allocation3], %s198
        %s200 = sand.u32 %s27, 1
        %s201 = smul.addr %s200, 1024
        %s202 = scalar_lea.vmem [#allocation2], %s201
        %p203 = pneg %p40
        %p204 = pneg %p37
        %p205 = pneg %p61
        %p206 = pneg %p58
        %p207 = pneg %p87
        %p208 = pneg %p84
        %p209 = scmp.lt.s32.totalorder %s19, 1
        %s210 = scalar_select %p209, %s19, 1
        %s211 = smul.addr %s210, 32
        %s212 = smul.addr %s211, 8
        %s213 = scalar_lea.vmem %s2, %s212
        %p214 = pneg %p113
        %p215 = pneg %p110
        %p216 = scmp.lt.s32.totalorder %s19, 1
        %s217 = scalar_select %p216, %s19, 1
        %s218 = scalar_lea.vmem %s3, %s217
        %p219 = pneg %p139
        %p220 = pneg %p136
        %p221 = scmp.lt.s32.totalorder %s19, 1
        %s222 = scalar_select %p221, %s19, 1
        %s223 = scalar_lea.vmem %s4, %s222
        %p224 = scmp.lt.s32.totalorder %s19, 1
        %s225 = scalar_select %p224, %s19, 1
        %s226 = smul.addr %s225, 32
        %s227 = smul.addr %s226, 8
        %s228 = scalar_lea.vmem %s2, %s227
        %p229 = scmp.lt.s32.totalorder %s19, 1
        %s230 = scalar_select %p229, %s19, 1
        %s231 = scalar_lea.vmem %s3, %s230
        %p232 = scmp.lt.s32.totalorder %s19, 1
        %s233 = scalar_select %p232, %s19, 1
        %s234 = scalar_lea.vmem %s4, %s233
        %v235 = vld [vmem:[%s193] sm:$0xff]
        %v236 = vld [vmem:[%s193 + $0x8] sm:$0xff]
        %v237 = vld [vmem:[%s193 + $0x10] sm:$0xff]
        %v238 = vld [vmem:[%s193 + $0x18] sm:$0xff]
        %v239 = vld [vmem:[%s193 + $0x20] sm:$0xff]
        %v240 = vld [vmem:[%s193 + $0x28] sm:$0xff]
        %v241 = vld [vmem:[%s193 + $0x30] sm:$0xff]
        %v242 = vld [vmem:[%s193 + $0x38] sm:$0xff]
        %v243 = vld [vmem:[%s193 + $0x40] sm:$0xff]
        %v244 = vld [vmem:[%s193 + $0x48] sm:$0xff]
        %v245 = vld [vmem:[%s193 + $0x50] sm:$0xff]
        %v246 = vld [vmem:[%s193 + $0x58] sm:$0xff]
        %v247 = vld [vmem:[%s193 + $0x60] sm:$0xff]
        %v248 = vld [vmem:[%s193 + $0x68] sm:$0xff]
        %v249 = vld [vmem:[%s193 + $0x70] sm:$0xff]
        %v250 = vld [vmem:[%s193 + $0x78] sm:$0xff]
        %v251 = vld [vmem:[%s193 + $0x80] sm:$0xff]
        %v252 = vld [vmem:[%s193 + $0x88] sm:$0xff]
        %v253 = vld [vmem:[%s193 + $0x90] sm:$0xff]
        %v254 = vld [vmem:[%s193 + $0x98] sm:$0xff]
        %v255 = vld [vmem:[%s193 + $0xa0] sm:$0xff]
        %v256 = vld [vmem:[%s193 + $0xa8] sm:$0xff]
        %v257 = vld [vmem:[%s193 + $0xb0] sm:$0xff]
        %v258 = vld [vmem:[%s193 + $0xb8] sm:$0xff]
        %v259 = vld [vmem:[%s193 + $0xc0] sm:$0xff]
        %v260 = vld [vmem:[%s193 + $0xc8] sm:$0xff]
        %v261 = vld [vmem:[%s193 + $0xd0] sm:$0xff]
        %v262 = vld [vmem:[%s193 + $0xd8] sm:$0xff]
        %v263 = vld [vmem:[%s193 + $0xe0] sm:$0xff]
        %v264 = vld [vmem:[%s193 + $0xe8] sm:$0xff]
        %v265 = vld [vmem:[%s193 + $0xf0] sm:$0xff]
        %v266 = vld [vmem:[%s193 + $0xf8] sm:$0xff]
        %v267 = vld [vmem:[%s193 + $0x100] sm:$0xff]
        %v268 = vld [vmem:[%s193 + $0x108] sm:$0xff]
        %v269 = vld [vmem:[%s193 + $0x110] sm:$0xff]
        %v270 = vld [vmem:[%s193 + $0x118] sm:$0xff]
        %v271 = vld [vmem:[%s193 + $0x120] sm:$0xff]
        %v272 = vld [vmem:[%s193 + $0x128] sm:$0xff]
        %v273 = vld [vmem:[%s193 + $0x130] sm:$0xff]
        %v274 = vld [vmem:[%s193 + $0x138] sm:$0xff]
        %v275 = vld [vmem:[%s193 + $0x140] sm:$0xff]
        %v276 = vld [vmem:[%s193 + $0x148] sm:$0xff]
        %v277 = vld [vmem:[%s193 + $0x150] sm:$0xff]
        %v278 = vld [vmem:[%s193 + $0x158] sm:$0xff]
        %v279 = vld [vmem:[%s193 + $0x160] sm:$0xff]
        %v280 = vld [vmem:[%s193 + $0x168] sm:$0xff]
        %v281 = vld [vmem:[%s193 + $0x170] sm:$0xff]
        %v282 = vld [vmem:[%s193 + $0x178] sm:$0xff]
        %v283 = vld [vmem:[%s193 + $0x180] sm:$0xff]
        %v284 = vld [vmem:[%s193 + $0x188] sm:$0xff]
        %v285 = vld [vmem:[%s193 + $0x190] sm:$0xff]
        %v286 = vld [vmem:[%s193 + $0x198] sm:$0xff]
        %v287 = vld [vmem:[%s193 + $0x1a0] sm:$0xff]
        %v288 = vld [vmem:[%s193 + $0x1a8] sm:$0xff]
        %v289 = vld [vmem:[%s193 + $0x1b0] sm:$0xff]
        %v290 = vld [vmem:[%s193 + $0x1b8] sm:$0xff]
        %v291 = vld [vmem:[%s193 + $0x1c0] sm:$0xff]
        %v292 = vld [vmem:[%s193 + $0x1c8] sm:$0xff]
        %v293 = vld [vmem:[%s193 + $0x1d0] sm:$0xff]
        %v294 = vld [vmem:[%s193 + $0x1d8] sm:$0xff]
        %v295 = vld [vmem:[%s193 + $0x1e0] sm:$0xff]
        %v296 = vld [vmem:[%s193 + $0x1e8] sm:$0xff]
        %v297 = vld [vmem:[%s193 + $0x1f0] sm:$0xff]
        %v298 = vld [vmem:[%s193 + $0x1f8] sm:$0xff]
        %v299 = vld [vmem:[%s193 + $0x200] sm:$0xff]
        %v300 = vld [vmem:[%s193 + $0x208] sm:$0xff]
        %v301 = vld [vmem:[%s193 + $0x210] sm:$0xff]
        %v302 = vld [vmem:[%s193 + $0x218] sm:$0xff]
        %v303 = vld [vmem:[%s193 + $0x220] sm:$0xff]
        %v304 = vld [vmem:[%s193 + $0x228] sm:$0xff]
        %v305 = vld [vmem:[%s193 + $0x230] sm:$0xff]
        %v306 = vld [vmem:[%s193 + $0x238] sm:$0xff]
        %v307 = vld [vmem:[%s193 + $0x240] sm:$0xff]
        %v308 = vld [vmem:[%s193 + $0x248] sm:$0xff]
        %v309 = vld [vmem:[%s193 + $0x250] sm:$0xff]
        %v310 = vld [vmem:[%s193 + $0x258] sm:$0xff]
        %v311 = vld [vmem:[%s193 + $0x260] sm:$0xff]
        %v312 = vld [vmem:[%s193 + $0x268] sm:$0xff]
        %v313 = vld [vmem:[%s193 + $0x270] sm:$0xff]
        %v314 = vld [vmem:[%s193 + $0x278] sm:$0xff]
        %v315 = vld [vmem:[%s193 + $0x280] sm:$0xff]
        %v316 = vld [vmem:[%s193 + $0x288] sm:$0xff]
        %v317 = vld [vmem:[%s193 + $0x290] sm:$0xff]
        %v318 = vld [vmem:[%s193 + $0x298] sm:$0xff]
        %v319 = vld [vmem:[%s193 + $0x2a0] sm:$0xff]
        %v320 = vld [vmem:[%s193 + $0x2a8] sm:$0xff]
        %v321 = vld [vmem:[%s193 + $0x2b0] sm:$0xff]
        %v322 = vld [vmem:[%s193 + $0x2b8] sm:$0xff]
        %v323 = vld [vmem:[%s193 + $0x2c0] sm:$0xff]
        %v324 = vld [vmem:[%s193 + $0x2c8] sm:$0xff]
        %v325 = vld [vmem:[%s193 + $0x2d0] sm:$0xff]
        %v326 = vld [vmem:[%s193 + $0x2d8] sm:$0xff]
        %v327 = vld [vmem:[%s193 + $0x2e0] sm:$0xff]
        %v328 = vld [vmem:[%s193 + $0x2e8] sm:$0xff]
        %v329 = vld [vmem:[%s193 + $0x2f0] sm:$0xff]
        %v330 = vld [vmem:[%s193 + $0x2f8] sm:$0xff]
        %v331 = vld [vmem:[%s193 + $0x300] sm:$0xff]
        %v332 = vld [vmem:[%s193 + $0x308] sm:$0xff]
        %v333 = vld [vmem:[%s193 + $0x310] sm:$0xff]
        %v334 = vld [vmem:[%s193 + $0x318] sm:$0xff]
        %v335 = vld [vmem:[%s193 + $0x320] sm:$0xff]
        %v336 = vld [vmem:[%s193 + $0x328] sm:$0xff]
        %v337 = vld [vmem:[%s193 + $0x330] sm:$0xff]
        %v338 = vld [vmem:[%s193 + $0x338] sm:$0xff]
        %v339 = vld [vmem:[%s193 + $0x340] sm:$0xff]
        %v340 = vld [vmem:[%s193 + $0x348] sm:$0xff]
        %v341 = vld [vmem:[%s193 + $0x350] sm:$0xff]
        %v342 = vld [vmem:[%s193 + $0x358] sm:$0xff]
        %v343 = vld [vmem:[%s193 + $0x360] sm:$0xff]
        %v344 = vld [vmem:[%s193 + $0x368] sm:$0xff]
        %v345 = vld [vmem:[%s193 + $0x370] sm:$0xff]
        %v346 = vld [vmem:[%s193 + $0x378] sm:$0xff]
        %v347 = vld [vmem:[%s193 + $0x380] sm:$0xff]
        %v348 = vld [vmem:[%s193 + $0x388] sm:$0xff]
        %v349 = vld [vmem:[%s193 + $0x390] sm:$0xff]
        %v350 = vld [vmem:[%s193 + $0x398] sm:$0xff]
        %v351 = vld [vmem:[%s193 + $0x3a0] sm:$0xff]
        %v352 = vld [vmem:[%s193 + $0x3a8] sm:$0xff]
        %v353 = vld [vmem:[%s193 + $0x3b0] sm:$0xff]
        %v354 = vld [vmem:[%s193 + $0x3b8] sm:$0xff]
        %v355 = vld [vmem:[%s193 + $0x3c0] sm:$0xff]
        %v356 = vld [vmem:[%s193 + $0x3c8] sm:$0xff]
        %v357 = vld [vmem:[%s193 + $0x3d0] sm:$0xff]
        %v358 = vld [vmem:[%s193 + $0x3d8] sm:$0xff]
        %v359 = vld [vmem:[%s193 + $0x3e0] sm:$0xff]
        %v360 = vld [vmem:[%s193 + $0x3e8] sm:$0xff]
        %v361 = vld [vmem:[%s193 + $0x3f0] sm:$0xff]
        %v362 = vld [vmem:[%s193 + $0x3f8] sm:$0xff]
        %v363 = vld [vmem:[%s1] sm:$0xff]
        %v364 = vld [vmem:[%s1 + $0x8] sm:$0xff]
        %v365 = vld [vmem:[%s1 + $0x10] sm:$0xff]
        %v366 = vld [vmem:[%s1 + $0x18] sm:$0xff]
        %v367 = vld [vmem:[%s1 + $0x20] sm:$0xff]
        %v368 = vld [vmem:[%s1 + $0x28] sm:$0xff]
        %v369 = vld [vmem:[%s1 + $0x30] sm:$0xff]
        %v370 = vld [vmem:[%s1 + $0x38] sm:$0xff]
        %v371 = vld [vmem:[%s1 + $0x40] sm:$0xff]
        %v372 = vld [vmem:[%s1 + $0x48] sm:$0xff]
        %v373 = vld [vmem:[%s1 + $0x50] sm:$0xff]
        %v374 = vld [vmem:[%s1 + $0x58] sm:$0xff]
        %v375 = vld [vmem:[%s1 + $0x60] sm:$0xff]
        %v376 = vld [vmem:[%s1 + $0x68] sm:$0xff]
        %v377 = vld [vmem:[%s1 + $0x70] sm:$0xff]
        %v378 = vld [vmem:[%s1 + $0x78] sm:$0xff]
        %v379 = vld [vmem:[%s1 + $0x80] sm:$0xff]
        %v380 = vld [vmem:[%s1 + $0x88] sm:$0xff]
        %v381 = vld [vmem:[%s1 + $0x90] sm:$0xff]
        %v382 = vld [vmem:[%s1 + $0x98] sm:$0xff]
        %v383 = vld [vmem:[%s1 + $0xa0] sm:$0xff]
        %v384 = vld [vmem:[%s1 + $0xa8] sm:$0xff]
        %v385 = vld [vmem:[%s1 + $0xb0] sm:$0xff]
        %v386 = vld [vmem:[%s1 + $0xb8] sm:$0xff]
        %v387 = vld [vmem:[%s1 + $0xc0] sm:$0xff]
        %v388 = vld [vmem:[%s1 + $0xc8] sm:$0xff]
        %v389 = vld [vmem:[%s1 + $0xd0] sm:$0xff]
        %v390 = vld [vmem:[%s1 + $0xd8] sm:$0xff]
        %v391 = vld [vmem:[%s1 + $0xe0] sm:$0xff]
        %v392 = vld [vmem:[%s1 + $0xe8] sm:$0xff]
        %v393 = vld [vmem:[%s1 + $0xf0] sm:$0xff]
        %v394 = vld [vmem:[%s1 + $0xf8] sm:$0xff]
        %v395 = vld [vmem:[%s1 + $0x100] sm:$0xff]
        %v396 = vld [vmem:[%s1 + $0x108] sm:$0xff]
        %v397 = vld [vmem:[%s1 + $0x110] sm:$0xff]
        %v398 = vld [vmem:[%s1 + $0x118] sm:$0xff]
        %v399 = vld [vmem:[%s1 + $0x120] sm:$0xff]
        %v400 = vld [vmem:[%s1 + $0x128] sm:$0xff]
        %v401 = vld [vmem:[%s1 + $0x130] sm:$0xff]
        %v402 = vld [vmem:[%s1 + $0x138] sm:$0xff]
        %v403 = vld [vmem:[%s1 + $0x140] sm:$0xff]
        %v404 = vld [vmem:[%s1 + $0x148] sm:$0xff]
        %v405 = vld [vmem:[%s1 + $0x150] sm:$0xff]
        %v406 = vld [vmem:[%s1 + $0x158] sm:$0xff]
        %v407 = vld [vmem:[%s1 + $0x160] sm:$0xff]
        %v408 = vld [vmem:[%s1 + $0x168] sm:$0xff]
        %v409 = vld [vmem:[%s1 + $0x170] sm:$0xff]
        %v410 = vld [vmem:[%s1 + $0x178] sm:$0xff]
        %v411 = vld [vmem:[%s1 + $0x180] sm:$0xff]
        %v412 = vld [vmem:[%s1 + $0x188] sm:$0xff]
        %v413 = vld [vmem:[%s1 + $0x190] sm:$0xff]
        %v414 = vld [vmem:[%s1 + $0x198] sm:$0xff]
        %v415 = vld [vmem:[%s1 + $0x1a0] sm:$0xff]
        %v416 = vld [vmem:[%s1 + $0x1a8] sm:$0xff]
        %v417 = vld [vmem:[%s1 + $0x1b0] sm:$0xff]
        %v418 = vld [vmem:[%s1 + $0x1b8] sm:$0xff]
        %v419 = vld [vmem:[%s1 + $0x1c0] sm:$0xff]
        %v420 = vld [vmem:[%s1 + $0x1c8] sm:$0xff]
        %v421 = vld [vmem:[%s1 + $0x1d0] sm:$0xff]
        %v422 = vld [vmem:[%s1 + $0x1d8] sm:$0xff]
        %v423 = vld [vmem:[%s1 + $0x1e0] sm:$0xff]
        %v424 = vld [vmem:[%s1 + $0x1e8] sm:$0xff]
        %v425 = vld [vmem:[%s1 + $0x1f0] sm:$0xff]
        %v426 = vld [vmem:[%s1 + $0x1f8] sm:$0xff]
        %427 = vmatprep.subr.mxu0 0.0
        %428 = vmatpush1.msra.mxu0 %v378
        %429 = vmatprep.subr.mxu0 0.0
        %430 = vmatpush1.msra.mxu0 %v377
        %431 = vmatprep.subr.mxu0 0.0
        %432 = vmatpush1.msra.mxu0 %v376
        %433 = vmatprep.subr.mxu0 0.0
        %434 = vmatpush1.msra.mxu0 %v375
        %435 = vmatprep.subr.mxu0 0.0
        %436 = vmatpush1.msra.mxu0 %v374
        %437 = vmatprep.subr.mxu0 0.0
        %438 = vmatpush1.msra.mxu0 %v373
        %439 = vmatprep.subr.mxu0 0.0
        %440 = vmatpush1.msra.mxu0 %v372
        %441 = vmatprep.subr.mxu0 0.0
        %442 = vmatpush1.msra.mxu0 %v371
        %443 = vmatprep.subr.mxu0 0.0
        %444 = vmatpush1.msra.mxu0 %v370
        %445 = vmatprep.subr.mxu0 0.0
        %446 = vmatpush1.msra.mxu0 %v369
        %447 = vmatprep.subr.mxu0 0.0
        %448 = vmatpush1.msra.mxu0 %v368
        %449 = vmatprep.subr.mxu0 0.0
        %450 = vmatpush1.msra.mxu0 %v367
        %451 = vmatprep.subr.mxu0 0.0
        %452 = vmatpush1.msra.mxu0 %v366
        %453 = vmatprep.subr.mxu0 0.0
        %454 = vmatpush1.msra.mxu0 %v365
        %455 = vmatprep.subr.mxu0 0.0
        %456 = vmatpush1.msra.mxu0 %v364
        %457 = vmatprep.subr.mxu0 0.0
        %458 = vmatpush1.msra.mxu0 %v363
        %459 = vmatprep.subr.mxu0 0.0
        %460 = vmatpush2.msra.mxu0 %v394
        %461 = vmatprep.subr.mxu0 0.0
        %462 = vmatpush2.msra.mxu0 %v393
        %463 = vmatprep.subr.mxu0 0.0
        %464 = vmatpush2.msra.mxu0 %v392
        %465 = vmatprep.subr.mxu0 0.0
        %466 = vmatpush2.msra.mxu0 %v391
        %467 = vmatprep.subr.mxu0 0.0
        %468 = vmatpush2.msra.mxu0 %v390
        %469 = vmatprep.subr.mxu0 0.0
        %470 = vmatpush2.msra.mxu0 %v389
        %471 = vmatprep.subr.mxu0 0.0
        %472 = vmatpush2.msra.mxu0 %v388
        %473 = vmatprep.subr.mxu0 0.0
        %474 = vmatpush2.msra.mxu0 %v387
        %475 = vmatprep.subr.mxu0 0.0
        %476 = vmatpush2.msra.mxu0 %v386
        %477 = vmatprep.subr.mxu0 0.0
        %478 = vmatpush2.msra.mxu0 %v385
        %479 = vmatprep.subr.mxu0 0.0
        %480 = vmatpush2.msra.mxu0 %v384
        %481 = vmatprep.subr.mxu0 0.0
        %482 = vmatpush2.msra.mxu0 %v383
        %483 = vmatprep.subr.mxu0 0.0
        %484 = vmatpush2.msra.mxu0 %v382
        %485 = vmatprep.subr.mxu0 0.0
        %486 = vmatpush2.msra.mxu0 %v381
        %487 = vmatprep.subr.mxu0 0.0
        %488 = vmatpush2.msra.mxu0 %v380
        %489 = vmatprep.subr.mxu0 0.0
        %490 = vmatpush2.msra.mxu0 %v379
        %491 = vmatprep.mubr.f32.mxu0 %v236
        %492 = vmatmul.mubr.f32.gmra.mxu0 %v235
        %v493 = vpop.f32.mrf.mxu0
        %v494 = vadd.f32 0.0, %v493
        %v495 = vpop.f32.mrf.mxu0
        %496 = vmatprep.mubr.f32.mxu0 %v240
        %497 = vmatmul.mubr.f32.gmra.mxu0 %v239
        %v498 = vpop.f32.mrf.mxu0
        %v499 = vadd.f32 0.0, %v498
        %v500 = vpop.f32.mrf.mxu0
        %501 = vmatprep.mubr.f32.mxu0 %v244
        %502 = vmatmul.mubr.f32.gmra.mxu0 %v243
        %v503 = vpop.f32.mrf.mxu0
        %v504 = vadd.f32 0.0, %v503
        %v505 = vpop.f32.mrf.mxu0
        %506 = vmatprep.mubr.f32.mxu0 %v248
        %507 = vmatmul.mubr.f32.gmra.mxu0 %v247
        %v508 = vpop.f32.mrf.mxu0
        %v509 = vadd.f32 0.0, %v508
        %v510 = vpop.f32.mrf.mxu0
        %511 = vmatprep.mubr.f32.mxu0 %v252
        %512 = vmatmul.mubr.f32.gmra.mxu0 %v251
        %v513 = vpop.f32.mrf.mxu0
        %v514 = vadd.f32 0.0, %v513
        %v515 = vpop.f32.mrf.mxu0
        %516 = vmatprep.mubr.f32.mxu0 %v256
        %517 = vmatmul.mubr.f32.gmra.mxu0 %v255
        %v518 = vpop.f32.mrf.mxu0
        %v519 = vadd.f32 0.0, %v518
        %v520 = vpop.f32.mrf.mxu0
        %521 = vmatprep.mubr.f32.mxu0 %v260
        %522 = vmatmul.mubr.f32.gmra.mxu0 %v259
        %v523 = vpop.f32.mrf.mxu0
        %v524 = vadd.f32 0.0, %v523
        %v525 = vpop.f32.mrf.mxu0
        %526 = vmatprep.mubr.f32.mxu0 %v264
        %527 = vmatmul.mubr.f32.gmra.mxu0 %v263
        %v528 = vpop.f32.mrf.mxu0
        %v529 = vadd.f32 0.0, %v528
        %v530 = vpop.f32.mrf.mxu0
        %531 = vmatprep.mubr.f32.mxu0 %v268
        %532 = vmatmul.mubr.f32.gmra.mxu0 %v267
        %v533 = vpop.f32.mrf.mxu0
        %v534 = vadd.f32 0.0, %v533
        %v535 = vpop.f32.mrf.mxu0
        %536 = vmatprep.mubr.f32.mxu0 %v272
        %537 = vmatmul.mubr.f32.gmra.mxu0 %v271
        %v538 = vpop.f32.mrf.mxu0
        %v539 = vadd.f32 0.0, %v538
        %v540 = vpop.f32.mrf.mxu0
        %541 = vmatprep.mubr.f32.mxu0 %v276
        %542 = vmatmul.mubr.f32.gmra.mxu0 %v275
        %v543 = vpop.f32.mrf.mxu0
        %v544 = vadd.f32 0.0, %v543
        %v545 = vpop.f32.mrf.mxu0
        %546 = vmatprep.mubr.f32.mxu0 %v280
        %547 = vmatmul.mubr.f32.gmra.mxu0 %v279
        %v548 = vpop.f32.mrf.mxu0
        %v549 = vadd.f32 0.0, %v548
        %v550 = vpop.f32.mrf.mxu0
        %551 = vmatprep.mubr.f32.mxu0 %v284
        %552 = vmatmul.mubr.f32.gmra.mxu0 %v283
        %v553 = vpop.f32.mrf.mxu0
        %v554 = vadd.f32 0.0, %v553
        %v555 = vpop.f32.mrf.mxu0
        %556 = vmatprep.mubr.f32.mxu0 %v288
        %557 = vmatmul.mubr.f32.gmra.mxu0 %v287
        %v558 = vpop.f32.mrf.mxu0
        %v559 = vadd.f32 0.0, %v558
        %v560 = vpop.f32.mrf.mxu0
        %561 = vmatprep.mubr.f32.mxu0 %v292
        %562 = vmatmul.mubr.f32.gmra.mxu0 %v291
        %v563 = vpop.f32.mrf.mxu0
        %v564 = vadd.f32 0.0, %v563
        %v565 = vpop.f32.mrf.mxu0
        %566 = vmatprep.mubr.f32.mxu0 %v296
        %567 = vmatmul.mubr.f32.gmra.mxu0 %v295
        %v568 = vpop.f32.mrf.mxu0
        %v569 = vadd.f32 0.0, %v568
        %v570 = vpop.f32.mrf.mxu0
        %571 = vmatprep.mubr.f32.mxu0 %v300
        %572 = vmatmul.mubr.f32.gmra.mxu0 %v299
        %v573 = vpop.f32.mrf.mxu0
        %v574 = vadd.f32 0.0, %v573
        %v575 = vpop.f32.mrf.mxu0
        %576 = vmatprep.mubr.f32.mxu0 %v304
        %577 = vmatmul.mubr.f32.gmra.mxu0 %v303
        %v578 = vpop.f32.mrf.mxu0
        %v579 = vadd.f32 0.0, %v578
        %v580 = vpop.f32.mrf.mxu0
        %581 = vmatprep.mubr.f32.mxu0 %v308
        %582 = vmatmul.mubr.f32.gmra.mxu0 %v307
        %v583 = vpop.f32.mrf.mxu0
        %v584 = vadd.f32 0.0, %v583
        %v585 = vpop.f32.mrf.mxu0
        %586 = vmatprep.mubr.f32.mxu0 %v312
        %587 = vmatmul.mubr.f32.gmra.mxu0 %v311
        %v588 = vpop.f32.mrf.mxu0
        %v589 = vadd.f32 0.0, %v588
        %v590 = vpop.f32.mrf.mxu0
        %591 = vmatprep.mubr.f32.mxu0 %v316
        %592 = vmatmul.mubr.f32.gmra.mxu0 %v315
        %v593 = vpop.f32.mrf.mxu0
        %v594 = vadd.f32 0.0, %v593
        %v595 = vpop.f32.mrf.mxu0
        %596 = vmatprep.mubr.f32.mxu0 %v320
        %597 = vmatmul.mubr.f32.gmra.mxu0 %v319
        %v598 = vpop.f32.mrf.mxu0
        %v599 = vadd.f32 0.0, %v598
        %v600 = vpop.f32.mrf.mxu0
        %601 = vmatprep.mubr.f32.mxu0 %v324
        %602 = vmatmul.mubr.f32.gmra.mxu0 %v323
        %v603 = vpop.f32.mrf.mxu0
        %v604 = vadd.f32 0.0, %v603
        %v605 = vpop.f32.mrf.mxu0
        %606 = vmatprep.mubr.f32.mxu0 %v328
        %607 = vmatmul.mubr.f32.gmra.mxu0 %v327
        %v608 = vpop.f32.mrf.mxu0
        %v609 = vadd.f32 0.0, %v608
        %v610 = vpop.f32.mrf.mxu0
        %611 = vmatprep.mubr.f32.mxu0 %v332
        %612 = vmatmul.mubr.f32.gmra.mxu0 %v331
        %v613 = vpop.f32.mrf.mxu0
        %v614 = vadd.f32 0.0, %v613
        %v615 = vpop.f32.mrf.mxu0
        %616 = vmatprep.mubr.f32.mxu0 %v336
        %617 = vmatmul.mubr.f32.gmra.mxu0 %v335
        %v618 = vpop.f32.mrf.mxu0
        %v619 = vadd.f32 0.0, %v618
        %v620 = vpop.f32.mrf.mxu0
        %621 = vmatprep.mubr.f32.mxu0 %v340
        %622 = vmatmul.mubr.f32.gmra.mxu0 %v339
        %v623 = vpop.f32.mrf.mxu0
        %v624 = vadd.f32 0.0, %v623
        %v625 = vpop.f32.mrf.mxu0
        %626 = vmatprep.mubr.f32.mxu0 %v344
        %627 = vmatmul.mubr.f32.gmra.mxu0 %v343
        %v628 = vpop.f32.mrf.mxu0
        %v629 = vadd.f32 0.0, %v628
        %v630 = vpop.f32.mrf.mxu0
        %631 = vmatprep.mubr.f32.mxu0 %v348
        %632 = vmatmul.mubr.f32.gmra.mxu0 %v347
        %v633 = vpop.f32.mrf.mxu0
        %v634 = vadd.f32 0.0, %v633
        %v635 = vpop.f32.mrf.mxu0
        %636 = vmatprep.mubr.f32.mxu0 %v352
        %637 = vmatmul.mubr.f32.gmra.mxu0 %v351
        %v638 = vpop.f32.mrf.mxu0
        %v639 = vadd.f32 0.0, %v638
        %v640 = vpop.f32.mrf.mxu0
        %641 = vmatprep.mubr.f32.mxu0 %v356
        %642 = vmatmul.mubr.f32.gmra.mxu0 %v355
        %v643 = vpop.f32.mrf.mxu0
        %v644 = vadd.f32 0.0, %v643
        %v645 = vpop.f32.mrf.mxu0
        %646 = vmatprep.mubr.f32.mxu0 %v360
        %647 = vmatmul.mubr.f32.gmra.mxu0 %v359
        %v648 = vpop.f32.mrf.mxu0
        %v649 = vadd.f32 0.0, %v648
        %v650 = vpop.f32.mrf.mxu0
        %651 = vdwg.mxu0
        %652 = vmatprep.subr.mxu0 0.0
        %653 = vmatpush1.msra.mxu0 %v410
        %654 = vmatprep.subr.mxu0 0.0
        %655 = vmatpush1.msra.mxu0 %v409
        %656 = vmatprep.subr.mxu0 0.0
        %657 = vmatpush1.msra.mxu0 %v408
        %658 = vmatprep.subr.mxu0 0.0
        %659 = vmatpush1.msra.mxu0 %v407
        %660 = vmatprep.subr.mxu0 0.0
        %661 = vmatpush1.msra.mxu0 %v406
        %662 = vmatprep.subr.mxu0 0.0
        %663 = vmatpush1.msra.mxu0 %v405
        %664 = vmatprep.subr.mxu0 0.0
        %665 = vmatpush1.msra.mxu0 %v404
        %666 = vmatprep.subr.mxu0 0.0
        %667 = vmatpush1.msra.mxu0 %v403
        %668 = vmatprep.subr.mxu0 0.0
        %669 = vmatpush1.msra.mxu0 %v402
        %670 = vmatprep.subr.mxu0 0.0
        %671 = vmatpush1.msra.mxu0 %v401
        %672 = vmatprep.subr.mxu0 0.0
        %673 = vmatpush1.msra.mxu0 %v400
        %674 = vmatprep.subr.mxu0 0.0
        %675 = vmatpush1.msra.mxu0 %v399
        %676 = vmatprep.subr.mxu0 0.0
        %677 = vmatpush1.msra.mxu0 %v398
        %678 = vmatprep.subr.mxu0 0.0
        %679 = vmatpush1.msra.mxu0 %v397
        %680 = vmatprep.subr.mxu0 0.0
        %681 = vmatpush1.msra.mxu0 %v396
        %682 = vmatprep.subr.mxu0 0.0
        %683 = vmatpush1.msra.mxu0 %v395
        %684 = vmatprep.subr.mxu0 0.0
        %685 = vmatpush2.msra.mxu0 %v426
        %686 = vmatprep.subr.mxu0 0.0
        %687 = vmatpush2.msra.mxu0 %v425
        %688 = vmatprep.subr.mxu0 0.0
        %689 = vmatpush2.msra.mxu0 %v424
        %690 = vmatprep.subr.mxu0 0.0
        %691 = vmatpush2.msra.mxu0 %v423
        %692 = vmatprep.subr.mxu0 0.0
        %693 = vmatpush2.msra.mxu0 %v422
        %694 = vmatprep.subr.mxu0 0.0
        %695 = vmatpush2.msra.mxu0 %v421
        %696 = vmatprep.subr.mxu0 0.0
        %697 = vmatpush2.msra.mxu0 %v420
        %698 = vmatprep.subr.mxu0 0.0
        %699 = vmatpush2.msra.mxu0 %v419
        %700 = vmatprep.subr.mxu0 0.0
        %701 = vmatpush2.msra.mxu0 %v418
        %702 = vmatprep.subr.mxu0 0.0
        %703 = vmatpush2.msra.mxu0 %v417
        %704 = vmatprep.subr.mxu0 0.0
        %705 = vmatpush2.msra.mxu0 %v416
        %706 = vmatprep.subr.mxu0 0.0
        %707 = vmatpush2.msra.mxu0 %v415
        %708 = vmatprep.subr.mxu0 0.0
        %709 = vmatpush2.msra.mxu0 %v414
        %710 = vmatprep.subr.mxu0 0.0
        %711 = vmatpush2.msra.mxu0 %v413
        %712 = vmatprep.subr.mxu0 0.0
        %713 = vmatpush2.msra.mxu0 %v412
        %714 = vmatprep.subr.mxu0 0.0
        %715 = vmatpush2.msra.mxu0 %v411
        %716 = vmatprep.mubr.f32.mxu0 %v238
        %717 = vmatmul.mubr.f32.gmra.mxu0 %v237
        %v718 = vpop.f32.mrf.mxu0
        %v719 = vadd.f32 %v494, %v718
        %v720 = vpop.f32.mrf.mxu0
        %721 = vmatprep.mubr.f32.mxu0 %v242
        %722 = vmatmul.mubr.f32.gmra.mxu0 %v241
        %v723 = vpop.f32.mrf.mxu0
        %v724 = vadd.f32 %v499, %v723
        %v725 = vpop.f32.mrf.mxu0
        %726 = vmatprep.mubr.f32.mxu0 %v246
        %727 = vmatmul.mubr.f32.gmra.mxu0 %v245
        %v728 = vpop.f32.mrf.mxu0
        %v729 = vadd.f32 %v504, %v728
        %v730 = vpop.f32.mrf.mxu0
        %731 = vmatprep.mubr.f32.mxu0 %v250
        %732 = vmatmul.mubr.f32.gmra.mxu0 %v249
        %v733 = vpop.f32.mrf.mxu0
        %v734 = vadd.f32 %v509, %v733
        %v735 = vpop.f32.mrf.mxu0
        %736 = vmatprep.mubr.f32.mxu0 %v254
        %737 = vmatmul.mubr.f32.gmra.mxu0 %v253
        %v738 = vpop.f32.mrf.mxu0
        %v739 = vadd.f32 %v514, %v738
        %v740 = vpop.f32.mrf.mxu0
        %741 = vmatprep.mubr.f32.mxu0 %v258
        %742 = vmatmul.mubr.f32.gmra.mxu0 %v257
        %v743 = vpop.f32.mrf.mxu0
        %v744 = vadd.f32 %v519, %v743
        %v745 = vpop.f32.mrf.mxu0
        %746 = vmatprep.mubr.f32.mxu0 %v262
        %747 = vmatmul.mubr.f32.gmra.mxu0 %v261
        %v748 = vpop.f32.mrf.mxu0
        %v749 = vadd.f32 %v524, %v748
        %v750 = vpop.f32.mrf.mxu0
        %751 = vmatprep.mubr.f32.mxu0 %v266
        %752 = vmatmul.mubr.f32.gmra.mxu0 %v265
        %v753 = vpop.f32.mrf.mxu0
        %v754 = vadd.f32 %v529, %v753
        %v755 = vpop.f32.mrf.mxu0
        %756 = vmatprep.mubr.f32.mxu0 %v270
        %757 = vmatmul.mubr.f32.gmra.mxu0 %v269
        %v758 = vpop.f32.mrf.mxu0
        %v759 = vadd.f32 %v534, %v758
        %v760 = vpop.f32.mrf.mxu0
        %761 = vmatprep.mubr.f32.mxu0 %v274
        %762 = vmatmul.mubr.f32.gmra.mxu0 %v273
        %v763 = vpop.f32.mrf.mxu0
        %v764 = vadd.f32 %v539, %v763
        %v765 = vpop.f32.mrf.mxu0
        %766 = vmatprep.mubr.f32.mxu0 %v278
        %767 = vmatmul.mubr.f32.gmra.mxu0 %v277
        %v768 = vpop.f32.mrf.mxu0
        %v769 = vadd.f32 %v544, %v768
        %v770 = vpop.f32.mrf.mxu0
        %771 = vmatprep.mubr.f32.mxu0 %v282
        %772 = vmatmul.mubr.f32.gmra.mxu0 %v281
        %v773 = vpop.f32.mrf.mxu0
        %v774 = vadd.f32 %v549, %v773
        %v775 = vpop.f32.mrf.mxu0
        %776 = vmatprep.mubr.f32.mxu0 %v286
        %777 = vmatmul.mubr.f32.gmra.mxu0 %v285
        %v778 = vpop.f32.mrf.mxu0
        %v779 = vadd.f32 %v554, %v778
        %v780 = vpop.f32.mrf.mxu0
        %781 = vmatprep.mubr.f32.mxu0 %v290
        %782 = vmatmul.mubr.f32.gmra.mxu0 %v289
        %v783 = vpop.f32.mrf.mxu0
        %v784 = vadd.f32 %v559, %v783
        %v785 = vpop.f32.mrf.mxu0
        %786 = vmatprep.mubr.f32.mxu0 %v294
        %787 = vmatmul.mubr.f32.gmra.mxu0 %v293
        %v788 = vpop.f32.mrf.mxu0
        %v789 = vadd.f32 %v564, %v788
        %v790 = vpop.f32.mrf.mxu0
        %791 = vmatprep.mubr.f32.mxu0 %v298
        %792 = vmatmul.mubr.f32.gmra.mxu0 %v297
        %v793 = vpop.f32.mrf.mxu0
        %v794 = vadd.f32 %v569, %v793
        %v795 = vpop.f32.mrf.mxu0
        %796 = vmatprep.mubr.f32.mxu0 %v302
        %797 = vmatmul.mubr.f32.gmra.mxu0 %v301
        %v798 = vpop.f32.mrf.mxu0
        %v799 = vadd.f32 %v574, %v798
        %v800 = vpop.f32.mrf.mxu0
        %801 = vmatprep.mubr.f32.mxu0 %v306
        %802 = vmatmul.mubr.f32.gmra.mxu0 %v305
        %v803 = vpop.f32.mrf.mxu0
        %v804 = vadd.f32 %v579, %v803
        %v805 = vpop.f32.mrf.mxu0
        %806 = vmatprep.mubr.f32.mxu0 %v310
        %807 = vmatmul.mubr.f32.gmra.mxu0 %v309
        %v808 = vpop.f32.mrf.mxu0
        %v809 = vadd.f32 %v584, %v808
        %v810 = vpop.f32.mrf.mxu0
        %811 = vmatprep.mubr.f32.mxu0 %v314
        %812 = vmatmul.mubr.f32.gmra.mxu0 %v313
        %v813 = vpop.f32.mrf.mxu0
        %v814 = vadd.f32 %v589, %v813
        %v815 = vpop.f32.mrf.mxu0
        %816 = vmatprep.mubr.f32.mxu0 %v318
        %817 = vmatmul.mubr.f32.gmra.mxu0 %v317
        %v818 = vpop.f32.mrf.mxu0
        %v819 = vadd.f32 %v594, %v818
        %v820 = vpop.f32.mrf.mxu0
        %821 = vmatprep.mubr.f32.mxu0 %v322
        %822 = vmatmul.mubr.f32.gmra.mxu0 %v321
        %v823 = vpop.f32.mrf.mxu0
        %v824 = vadd.f32 %v599, %v823
        %v825 = vpop.f32.mrf.mxu0
        %826 = vmatprep.mubr.f32.mxu0 %v326
        %827 = vmatmul.mubr.f32.gmra.mxu0 %v325
        %v828 = vpop.f32.mrf.mxu0
        %v829 = vadd.f32 %v604, %v828
        %v830 = vpop.f32.mrf.mxu0
        %831 = vmatprep.mubr.f32.mxu0 %v330
        %832 = vmatmul.mubr.f32.gmra.mxu0 %v329
        %v833 = vpop.f32.mrf.mxu0
        %v834 = vadd.f32 %v609, %v833
        %v835 = vpop.f32.mrf.mxu0
        %836 = vmatprep.mubr.f32.mxu0 %v334
        %837 = vmatmul.mubr.f32.gmra.mxu0 %v333
        %v838 = vpop.f32.mrf.mxu0
        %v839 = vadd.f32 %v614, %v838
        %v840 = vpop.f32.mrf.mxu0
        %841 = vmatprep.mubr.f32.mxu0 %v338
        %842 = vmatmul.mubr.f32.gmra.mxu0 %v337
        %v843 = vpop.f32.mrf.mxu0
        %v844 = vadd.f32 %v619, %v843
        %v845 = vpop.f32.mrf.mxu0
        %846 = vmatprep.mubr.f32.mxu0 %v342
        %847 = vmatmul.mubr.f32.gmra.mxu0 %v341
        %v848 = vpop.f32.mrf.mxu0
        %v849 = vadd.f32 %v624, %v848
        %v850 = vpop.f32.mrf.mxu0
        %851 = vmatprep.mubr.f32.mxu0 %v346
        %852 = vmatmul.mubr.f32.gmra.mxu0 %v345
        %v853 = vpop.f32.mrf.mxu0
        %v854 = vadd.f32 %v629, %v853
        %v855 = vpop.f32.mrf.mxu0
        %856 = vmatprep.mubr.f32.mxu0 %v350
        %857 = vmatmul.mubr.f32.gmra.mxu0 %v349
        %v858 = vpop.f32.mrf.mxu0
        %v859 = vadd.f32 %v634, %v858
        %v860 = vpop.f32.mrf.mxu0
        %861 = vmatprep.mubr.f32.mxu0 %v354
        %862 = vmatmul.mubr.f32.gmra.mxu0 %v353
        %v863 = vpop.f32.mrf.mxu0
        %v864 = vadd.f32 %v639, %v863
        %v865 = vpop.f32.mrf.mxu0
        %866 = vmatprep.mubr.f32.mxu0 %v358
        %867 = vmatmul.mubr.f32.gmra.mxu0 %v357
        %v868 = vpop.f32.mrf.mxu0
        %v869 = vadd.f32 %v644, %v868
        %v870 = vpop.f32.mrf.mxu0
        %871 = vmatprep.mubr.f32.mxu0 %v362
        %872 = vmatmul.mubr.f32.gmra.mxu0 %v361
        %v873 = vpop.f32.mrf.mxu0
        %v874 = vadd.f32 %v649, %v873
        %v875 = vpop.f32.mrf.mxu0
        %876 = vdwg.mxu0
        %877 = vst [vmem:[%s228] sm:$0xff] %v719
        %878 = vst [vmem:[%s228 + $0x8] sm:$0xff] %v724
        %879 = vst [vmem:[%s228 + $0x10] sm:$0xff] %v729
        %880 = vst [vmem:[%s228 + $0x18] sm:$0xff] %v734
        %881 = vst [vmem:[%s228 + $0x20] sm:$0xff] %v739
        %882 = vst [vmem:[%s228 + $0x28] sm:$0xff] %v744
        %883 = vst [vmem:[%s228 + $0x30] sm:$0xff] %v749
        %884 = vst [vmem:[%s228 + $0x38] sm:$0xff] %v754
        %885 = vst [vmem:[%s228 + $0x40] sm:$0xff] %v759
        %886 = vst [vmem:[%s228 + $0x48] sm:$0xff] %v764
        %887 = vst [vmem:[%s228 + $0x50] sm:$0xff] %v769
        %888 = vst [vmem:[%s228 + $0x58] sm:$0xff] %v774
        %889 = vst [vmem:[%s228 + $0x60] sm:$0xff] %v779
        %890 = vst [vmem:[%s228 + $0x68] sm:$0xff] %v784
        %891 = vst [vmem:[%s228 + $0x70] sm:$0xff] %v789
        %892 = vst [vmem:[%s228 + $0x78] sm:$0xff] %v794
        %893 = vst [vmem:[%s228 + $0x80] sm:$0xff] %v799
        %894 = vst [vmem:[%s228 + $0x88] sm:$0xff] %v804
        %895 = vst [vmem:[%s228 + $0x90] sm:$0xff] %v809
        %896 = vst [vmem:[%s228 + $0x98] sm:$0xff] %v814
        %897 = vst [vmem:[%s228 + $0xa0] sm:$0xff] %v819
        %898 = vst [vmem:[%s228 + $0xa8] sm:$0xff] %v824
        %899 = vst [vmem:[%s228 + $0xb0] sm:$0xff] %v829
        %900 = vst [vmem:[%s228 + $0xb8] sm:$0xff] %v834
        %901 = vst [vmem:[%s228 + $0xc0] sm:$0xff] %v839
        %902 = vst [vmem:[%s228 + $0xc8] sm:$0xff] %v844
        %903 = vst [vmem:[%s228 + $0xd0] sm:$0xff] %v849
        %904 = vst [vmem:[%s228 + $0xd8] sm:$0xff] %v854
        %905 = vst [vmem:[%s228 + $0xe0] sm:$0xff] %v859
        %906 = vst [vmem:[%s228 + $0xe8] sm:$0xff] %v864
        %907 = vst [vmem:[%s228 + $0xf0] sm:$0xff] %v869
        %908 = vst [vmem:[%s228 + $0xf8] sm:$0xff] %v874
        %v909 = vadd.f32 %v719, %v724
        %v910 = vadd.f32 %v909, %v729
        %v911 = vadd.f32 %v910, %v734
        %v912 = vadd.f32 %v911, %v739
        %v913 = vadd.f32 %v912, %v744
        %v914 = vadd.f32 %v913, %v749
        %v915 = vadd.f32 %v914, %v754
        %v916 = vadd.f32 %v915, %v759
        %v917 = vadd.f32 %v916, %v764
        %v918 = vadd.f32 %v917, %v769
        %v919 = vadd.f32 %v918, %v774
        %v920 = vadd.f32 %v919, %v779
        %v921 = vadd.f32 %v920, %v784
        %v922 = vadd.f32 %v921, %v789
        %v923 = vadd.f32 %v922, %v794
        %v924 = vadd.f32 %v923, %v799
        %v925 = vadd.f32 %v924, %v804
        %v926 = vadd.f32 %v925, %v809
        %v927 = vadd.f32 %v926, %v814
        %v928 = vadd.f32 %v927, %v819
        %v929 = vadd.f32 %v928, %v824
        %v930 = vadd.f32 %v929, %v829
        %v931 = vadd.f32 %v930, %v834
        %v932 = vadd.f32 %v931, %v839
        %v933 = vadd.f32 %v932, %v844
        %v934 = vadd.f32 %v933, %v849
        %v935 = vadd.f32 %v934, %v854
        %v936 = vadd.f32 %v935, %v859
        %v937 = vadd.f32 %v936, %v864
        %v938 = vadd.f32 %v937, %v869
        %v939 = vadd.f32 %v938, %v874
        %v940 = vrot.slane %v939, 4
        %v941 = vadd.f32 %v939, %v940
        %v942 = vrot.slane %v941, 2
        %v943 = vadd.f32 %v941, %v942
        %v944 = vrot.slane %v943, 1
        %v945 = vadd.f32 %v943, %v944
        %946 = vst [vmem:[%s231] sm:$0x1] %v945
        %v947 = vmul.f32 %v719, %v719
        %v948 = vmul.f32 %v724, %v724
        %v949 = vmul.f32 %v729, %v729
        %v950 = vmul.f32 %v734, %v734
        %v951 = vmul.f32 %v739, %v739
        %v952 = vmul.f32 %v744, %v744
        %v953 = vmul.f32 %v749, %v749
        %v954 = vmul.f32 %v754, %v754
        %v955 = vmul.f32 %v759, %v759
        %v956 = vmul.f32 %v764, %v764
        %v957 = vmul.f32 %v769, %v769
        %v958 = vmul.f32 %v774, %v774
        %v959 = vmul.f32 %v779, %v779
        %v960 = vmul.f32 %v784, %v784
        %v961 = vmul.f32 %v789, %v789
        %v962 = vmul.f32 %v794, %v794
        %v963 = vmul.f32 %v799, %v799
        %v964 = vmul.f32 %v804, %v804
        %v965 = vmul.f32 %v809, %v809
        %v966 = vmul.f32 %v814, %v814
        %v967 = vmul.f32 %v819, %v819
        %v968 = vmul.f32 %v824, %v824
        %v969 = vmul.f32 %v829, %v829
        %v970 = vmul.f32 %v834, %v834
        %v971 = vmul.f32 %v839, %v839
        %v972 = vmul.f32 %v844, %v844
        %v973 = vmul.f32 %v849, %v849
        %v974 = vmul.f32 %v854, %v854
        %v975 = vmul.f32 %v859, %v859
        %v976 = vmul.f32 %v864, %v864
        %v977 = vmul.f32 %v869, %v869
        %v978 = vmul.f32 %v874, %v874
        %v979 = vadd.f32 %v947, %v948
        %v980 = vadd.f32 %v979, %v949
        %v981 = vadd.f32 %v980, %v950
        %v982 = vadd.f32 %v981, %v951
        %v983 = vadd.f32 %v982, %v952
        %v984 = vadd.f32 %v983, %v953
        %v985 = vadd.f32 %v984, %v954
        %v986 = vadd.f32 %v985, %v955
        %v987 = vadd.f32 %v986, %v956
        %v988 = vadd.f32 %v987, %v957
        %v989 = vadd.f32 %v988, %v958
        %v990 = vadd.f32 %v989, %v959
        %v991 = vadd.f32 %v990, %v960
        %v992 = vadd.f32 %v991, %v961
        %v993 = vadd.f32 %v992, %v962
        %v994 = vadd.f32 %v993, %v963
        %v995 = vadd.f32 %v994, %v964
        %v996 = vadd.f32 %v995, %v965
        %v997 = vadd.f32 %v996, %v966
        %v998 = vadd.f32 %v997, %v967
        %v999 = vadd.f32 %v998, %v968
        %v1000 = vadd.f32 %v999, %v969
        %v1001 = vadd.f32 %v1000, %v970
        %v1002 = vadd.f32 %v1001, %v971
        %v1003 = vadd.f32 %v1002, %v972
        %v1004 = vadd.f32 %v1003, %v973
        %v1005 = vadd.f32 %v1004, %v974
        %v1006 = vadd.f32 %v1005, %v975
        %v1007 = vadd.f32 %v1006, %v976
        %v1008 = vadd.f32 %v1007, %v977
        %v1009 = vadd.f32 %v1008, %v978
        %v1010 = vrot.slane %v1009, 4
        %v1011 = vadd.f32 %v1009, %v1010
        %v1012 = vrot.slane %v1011, 2
        %v1013 = vadd.f32 %v1011, %v1012
        %v1014 = vrot.slane %v1013, 1
        %v1015 = vadd.f32 %v1013, %v1014
        %1016 = vst [vmem:[%s234] sm:$0x1] %v1015
        %p1017 = scmp.lt.s32.totalorder %s19, 1
        %s1018 = scalar_select %p1017, %s19, 1
        %s1019 = smul.addr %s1018, 32
        %s1020 = smul.addr %s1019, 8
        %s1021 = scalar_lea.vmem %s2, %s1020
        %p1022 = scmp.lt.s32.totalorder %s19, 1
        %s1023 = scalar_select %p1022, %s19, 1
        %s1024 = scalar_lea.vmem %s3, %s1023
        %p1025 = scmp.lt.s32.totalorder %s19, 1
        %s1026 = scalar_select %p1025, %s19, 1
        %s1027 = scalar_lea.vmem %s4, %s1026
        // Predicated region
        $region33: #{bottleneck_forward.4} parent=27 // pred_check
          %p1028 = pneg %p84
        $region34: #{bottleneck_forward.4} parent=27 // pred_check_branch
          %1030 = sbr.rel (%p1028) target = $region36
        $region35: #{bottleneck_forward.4} parent=27 // pred_region
          _
        $region36: #{bottleneck_forward.4} parent=27 // pred_fallthru
          _
        // Predicated region
        $region37: #{bottleneck_forward.4} parent=27 // pred_check
          %p1031 = pneg %p110
        $region38: #{bottleneck_forward.4} parent=27 // pred_check_branch
          %1033 = sbr.rel (%p1031) target = $region40
        $region39: #{bottleneck_forward.4} parent=27 // pred_region
          _
        $region40: #{bottleneck_forward.4} parent=27 // pred_fallthru
          _
        // Predicated region
        $region41: #{bottleneck_forward.4} parent=27 // pred_check
          %p1034 = pneg %p136
        $region42: #{bottleneck_forward.4} parent=27 // pred_check_branch
          %1036 = sbr.rel (%p1034) target = $region44
        $region43: #{bottleneck_forward.4} parent=27 // pred_region
          _
        $region44: #{bottleneck_forward.4} parent=27 // pred_fallthru
          _
      $region28: #{bottleneck_forward.4} parent=5 // pred_fallthru
        _
      %p1037 = scmp.le.s32.totalorder 2, %s14
      // Predicated region
      $region45: #{bottleneck_forward.4} parent=5 // pred_check
        %p1038 = pneg %p1037
      $region46: #{bottleneck_forward.4} parent=5 // pred_check_branch
        %1040 = sbr.rel (%p1038) target = $region48
      $region47: #{bottleneck_forward.4} parent=5 // pred_region
        %s1041 = ssub.s32 %s14, 2
        // Predicated region
        $region49: #{bottleneck_forward.4} parent=47 // pred_check
          %p1042 = pneg %p90
        $region50: #{bottleneck_forward.4} parent=47 // pred_check_branch
          %1044 = sbr.rel (%p1042) target = $region52
        $region51: #{bottleneck_forward.4} parent=47 // pred_region
          %p1045 = scmp.lt.s32.totalorder %s20, 1
          %s1046 = scalar_select %p1045, %s20, 1
          %s1047 = smul.addr %s1046, 32
          %s1048 = smul.addr %s1047, 8
          %s1049 = scalar_lea.vmem %s2, %s1048
        $region52: #{bottleneck_forward.4} parent=47 // pred_fallthru
          _
        // Predicated region
        $region53: #{bottleneck_forward.4} parent=47 // pred_check
          %p1050 = pneg %p116
        $region54: #{bottleneck_forward.4} parent=47 // pred_check_branch
          %1052 = sbr.rel (%p1050) target = $region56
        $region55: #{bottleneck_forward.4} parent=47 // pred_region
          %p1053 = scmp.lt.s32.totalorder %s20, 1
          %s1054 = scalar_select %p1053, %s20, 1
          %s1055 = scalar_lea.vmem %s3, %s1054
        $region56: #{bottleneck_forward.4} parent=47 // pred_fallthru
          _
        // Predicated region
        $region57: #{bottleneck_forward.4} parent=47 // pred_check
          %p1056 = pneg %p142
        $region58: #{bottleneck_forward.4} parent=47 // pred_check_branch
          %1058 = sbr.rel (%p1056) target = $region60
        $region59: #{bottleneck_forward.4} parent=47 // pred_region
          %p1059 = scmp.lt.s32.totalorder %s20, 1
          %s1060 = scalar_select %p1059, %s20, 1
          %s1061 = scalar_lea.vmem %s4, %s1060
        $region60: #{bottleneck_forward.4} parent=47 // pred_fallthru
          _
      $region48: #{bottleneck_forward.4} parent=5 // pred_fallthru
        _
    $region6: #{bottleneck_forward.4} parent=1 // loop_footer
      %s18 = sadd.s32 1, %s14
    $region7: #{bottleneck_forward.4} parent=1 // loop_footer_branch
      %13 = sbr.rel target = $region3
    $region8: #{bottleneck_forward.4} parent=1 // loop_exit
      _
    %1062 = vsyncpa [#allocation3], 1
    %s1063 = scalar_lea.sflag [#allocation3], 1
    %1064 = vsyncpa %s1063, 1

// kernel: bottleneck_forward.6
$region0: #{bottleneck_forward.6}
  #allocation0 [shape = 'u32[]', space=smem, size = 0x4, offset = 0x4, fixed_abs, tag = 'smem constant byte address 0x4 - core index']
  #allocation1 [shape = 'u32[144,128]{1,0:T(1,128)}', space=vmem, size = 0x12000, scoped, tag = 'internal scratch']
  %s0 = inlined_call_operand.vmem [shape: f32[2,16,16,128], index: 0, kind: input, shape index: {}]
  %s1 = inlined_call_operand.vmem [shape: f32[1,128], index: 1, kind: input, shape index: {}]
  %s2 = inlined_call_operand.vmem [shape: f32[1,128], index: 2, kind: input, shape index: {}]
  %s3 = inlined_call_operand.vmem [shape: bf16[128,512], index: 3, kind: input, shape index: {}]
  %s4 = inlined_call_operand.vmem [shape: f32[2,16,16,512], index: 4, kind: output, shape index: {0}]
  %s5 = inlined_call_operand.vmem [shape: f32[2,1,512], index: 5, kind: output, shape index: {1}]
  %s6 = inlined_call_operand.vmem [shape: f32[2,1,512], index: 6, kind: output, shape index: {2}]
  %7 = xla_tuple %s4, %s5, %s6
  %s8 = sld [smem:[#allocation0]]
  $region65: #{bottleneck_forward.6} parent=0
    _
  %s10 = ssub.s32 1, %s8
  %s11 = scalar_select 0, %s10, %s8
  loop: start=0, step=1, limit=4
  $region2: #{bottleneck_forward.6} parent=0 // loop_pre_header
    _
  $region3: #{bottleneck_forward.6} parent=0 // loop_header
    %s13 = sphi 0, %s17
    %p14 = scmp.ge.s32.totalorder %s13, 4
    %s23 = sphi 0, %s25
    %s26 = sphi 0, %s23
    %s27 = sphi 0, %s26
    %s43 = sphi 0, %s27
    %s47 = sphi 0, %s47
    %s49 = sphi 0, %s47
    %s50 = sphi 0, %s49
    %s64 = sphi 0, %s50
    %s68 = sphi 0, %s68
    %s70 = sphi 0, %s68
    %s71 = sphi 0, %s70
    %s85 = sphi 0, %s71
    %s89 = sphi 0, %s89
    %s91 = sphi 0, %s89
    %s92 = sphi 0, %s91
    %s106 = sphi 0, %s92
    %s112 = sphi 0, %s114
    %s115 = sphi 0, %s112
    %s116 = sphi 0, %s115
    %s132 = sphi 0, %s116
    %s138 = sphi 0, %s140
    %s141 = sphi 0, %s138
    %s142 = sphi 0, %s141
    %s158 = sphi 0, %s142
    %s164 = sphi 0, %s166
    %s167 = sphi 0, %s164
    %s168 = sphi 0, %s167
    %s184 = sphi 0, %s168
  $region4: #{bottleneck_forward.6} parent=0 // loop_header_branch
    %16 = sbr.rel (%p14) target = $region8
  $region5: #{bottleneck_forward.6} parent=0 // loop_body
    %s18 = ssub.s32 %s13, 1
    %s19 = ssub.s32 %s13, 2
    %s20 = sadd.s32 %s13, 1
    %s21 = ssub.s32 %s13, %s20
    %p22 = scmp.eq.s32.totalorder %s21, 0
    %s24 = sadd.s32 %s23, 1
    %s25 = scalar_select %p22, %s23, %s24
    %p28 = pneg %p22
    %p29 = scmp.eq.s32.totalorder %s13, 1
    %p30 = por %p28, %p29
    %p31 = scmp.ne.s32.totalorder %s23, %s26
    %p32 = scmp.eq.s32.totalorder %s13, 0
    %p33 = por %p31, %p32
    %p34 = scmp.ne.s32.totalorder %s23, %s26
    %p35 = scmp.eq.s32.totalorder %s18, 1
    %p36 = por %p34, %p35
    %p37 = scmp.ne.s32.totalorder %s26, %s27
    %p38 = scmp.eq.s32.totalorder %s18, 0
    %p39 = por %p37, %p38
    %p40 = scmp.ne.s32.totalorder %s26, %s27
    %p41 = scmp.eq.s32.totalorder %s19, 1
    %p42 = por %p40, %p41
    %p44 = scmp.ne.s32.totalorder %s27, %s43
    %p45 = scmp.eq.s32.totalorder %s19, 0
    %p46 = por %p44, %p45
    %s48 = sadd.s32 %s47, 1
    %p51 = scmp.eq.s32.totalorder %s13, 1
    %p52 = scmp.ne.s32.totalorder %s47, %s49
    %p53 = scmp.eq.s32.totalorder %s13, 0
    %p54 = por %p52, %p53
    %p55 = scmp.ne.s32.totalorder %s47, %s49
    %p56 = scmp.eq.s32.totalorder %s18, 1
    %p57 = por %p55, %p56
    %p58 = scmp.ne.s32.totalorder %s49, %s50
    %p59 = scmp.eq.s32.totalorder %s18, 0
    %p60 = por %p58, %p59
    %p61 = scmp.ne.s32.totalorder %s49, %s50
    %p62 = scmp.eq.s32.totalorder %s19, 1
    %p63 = por %p61, %p62
    %p65 = scmp.ne.s32.totalorder %s50, %s64
    %p66 = scmp.eq.s32.totalorder %s19, 0
    %p67 = por %p65, %p66
    %s69 = sadd.s32 %s68, 1
    %p72 = scmp.eq.s32.totalorder %s13, 1
    %p73 = scmp.ne.s32.totalorder %s68, %s70
    %p74 = scmp.eq.s32.totalorder %s13, 0
    %p75 = por %p73, %p74
    %p76 = scmp.ne.s32.totalorder %s68, %s70
    %p77 = scmp.eq.s32.totalorder %s18, 1
    %p78 = por %p76, %p77
    %p79 = scmp.ne.s32.totalorder %s70, %s71
    %p80 = scmp.eq.s32.totalorder %s18, 0
    %p81 = por %p79, %p80
    %p82 = scmp.ne.s32.totalorder %s70, %s71
    %p83 = scmp.eq.s32.totalorder %s19, 1
    %p84 = por %p82, %p83
    %p86 = scmp.ne.s32.totalorder %s71, %s85
    %p87 = scmp.eq.s32.totalorder %s19, 0
    %p88 = por %p86, %p87
    %s90 = sadd.s32 %s89, 1
    %p93 = scmp.eq.s32.totalorder %s13, 1
    %p94 = scmp.ne.s32.totalorder %s89, %s91
    %p95 = scmp.eq.s32.totalorder %s13, 0
    %p96 = por %p94, %p95
    %p97 = scmp.ne.s32.totalorder %s89, %s91
    %p98 = scmp.eq.s32.totalorder %s18, 1
    %p99 = por %p97, %p98
    %p100 = scmp.ne.s32.totalorder %s91, %s92
    %p101 = scmp.eq.s32.totalorder %s18, 0
    %p102 = por %p100, %p101
    %p103 = scmp.ne.s32.totalorder %s91, %s92
    %p104 = scmp.eq.s32.totalorder %s19, 1
    %p105 = por %p103, %p104
    %p107 = scmp.ne.s32.totalorder %s92, %s106
    %p108 = scmp.eq.s32.totalorder %s19, 0
    %p109 = por %p107, %p108
    %s110 = ssub.s32 %s13, %s20
    %p111 = scmp.eq.s32.totalorder %s110, 0
    %s113 = sadd.s32 %s112, 1
    %s114 = scalar_select %p111, %s112, %s113
    %p117 = pneg %p111
    %p118 = scmp.eq.s32.totalorder %s13, 1
    %p119 = por %p117, %p118
    %p120 = scmp.ne.s32.totalorder %s112, %s115
    %p121 = scmp.eq.s32.totalorder %s13, 0
    %p122 = por %p120, %p121
    %p123 = scmp.ne.s32.totalorder %s112, %s115
    %p124 = scmp.eq.s32.totalorder %s18, 1
    %p125 = por %p123, %p124
    %p126 = scmp.ne.s32.totalorder %s115, %s116
    %p127 = scmp.eq.s32.totalorder %s18, 0
    %p128 = por %p126, %p127
    %p129 = scmp.ne.s32.totalorder %s115, %s116
    %p130 = scmp.eq.s32.totalorder %s19, 1
    %p131 = por %p129, %p130
    %p133 = scmp.ne.s32.totalorder %s116, %s132
    %p134 = scmp.eq.s32.totalorder %s19, 0
    %p135 = por %p133, %p134
    %s136 = ssub.s32 %s13, %s20
    %p137 = scmp.eq.s32.totalorder %s136, 0
    %s139 = sadd.s32 %s138, 1
    %s140 = scalar_select %p137, %s138, %s139
    %p143 = pneg %p137
    %p144 = scmp.eq.s32.totalorder %s13, 1
    %p145 = por %p143, %p144
    %p146 = scmp.ne.s32.totalorder %s138, %s141
    %p147 = scmp.eq.s32.totalorder %s13, 0
    %p148 = por %p146, %p147
    %p149 = scmp.ne.s32.totalorder %s138, %s141
    %p150 = scmp.eq.s32.totalorder %s18, 1
    %p151 = por %p149, %p150
    %p152 = scmp.ne.s32.totalorder %s141, %s142
    %p153 = scmp.eq.s32.totalorder %s18, 0
    %p154 = por %p152, %p153
    %p155 = scmp.ne.s32.totalorder %s141, %s142
    %p156 = scmp.eq.s32.totalorder %s19, 1
    %p157 = por %p155, %p156
    %p159 = scmp.ne.s32.totalorder %s142, %s158
    %p160 = scmp.eq.s32.totalorder %s19, 0
    %p161 = por %p159, %p160
    %s162 = ssub.s32 %s13, %s20
    %p163 = scmp.eq.s32.totalorder %s162, 0
    %s165 = sadd.s32 %s164, 1
    %s166 = scalar_select %p163, %s164, %s165
    %p169 = pneg %p163
    %p170 = scmp.eq.s32.totalorder %s13, 1
    %p171 = por %p169, %p170
    %p172 = scmp.ne.s32.totalorder %s164, %s167
    %p173 = scmp.eq.s32.totalorder %s13, 0
    %p174 = por %p172, %p173
    %p175 = scmp.ne.s32.totalorder %s164, %s167
    %p176 = scmp.eq.s32.totalorder %s18, 1
    %p177 = por %p175, %p176
    %p178 = scmp.ne.s32.totalorder %s167, %s168
    %p179 = scmp.eq.s32.totalorder %s18, 0
    %p180 = por %p178, %p179
    %p181 = scmp.ne.s32.totalorder %s167, %s168
    %p182 = scmp.eq.s32.totalorder %s19, 1
    %p183 = por %p181, %p182
    %p185 = scmp.ne.s32.totalorder %s168, %s184
    %p186 = scmp.eq.s32.totalorder %s19, 0
    %p187 = por %p185, %p186
    %p188 = scmp.le.s32.totalorder 1, %s13
    %p189 = scmp.lt.s32.totalorder %s13, 3
    %p190 = pnand %p188, %p189
    %p191 = pneg %p190
    // Predicated region
    $region9: #{bottleneck_forward.6} parent=5 // pred_check
      _
    $region10: #{bottleneck_forward.6} parent=5 // pred_check_branch
      %193 = sbr.rel (%p190) target = $region12
    $region11: #{bottleneck_forward.6} parent=5 // pred_region
      %s194 = ssub.s32 %s13, 1
      // Predicated region
      $region13: #{bottleneck_forward.6} parent=11 // pred_check
        %p195 = pneg %p60
      $region14: #{bottleneck_forward.6} parent=11 // pred_check_branch
        %197 = sbr.rel (%p195) target = $region16
      $region15: #{bottleneck_forward.6} parent=11 // pred_region
        _
      $region16: #{bottleneck_forward.6} parent=11 // pred_fallthru
        _
      // Predicated region
      $region17: #{bottleneck_forward.6} parent=11 // pred_check
        %p198 = pneg %p81
      $region18: #{bottleneck_forward.6} parent=11 // pred_check_branch
        %200 = sbr.rel (%p198) target = $region20
      $region19: #{bottleneck_forward.6} parent=11 // pred_region
        _
      $region20: #{bottleneck_forward.6} parent=11 // pred_fallthru
        _
      // Predicated region
      $region21: #{bottleneck_forward.6} parent=11 // pred_check
        %p201 = pneg %p102
      $region22: #{bottleneck_forward.6} parent=11 // pred_check_branch
        %203 = sbr.rel (%p201) target = $region24
      $region23: #{bottleneck_forward.6} parent=11 // pred_region
        _
      $region24: #{bottleneck_forward.6} parent=11 // pred_fallthru
        _
    $region12: #{bottleneck_forward.6} parent=5 // pred_fallthru
      _
    %p204 = scmp.lt.s32.totalorder %s13, 2
    // Predicated region
    $region25: #{bottleneck_forward.6} parent=5 // pred_check
      %p205 = pneg %p204
    $region26: #{bottleneck_forward.6} parent=5 // pred_check_branch
      %207 = sbr.rel (%p205) target = $region28
    $region27: #{bottleneck_forward.6} parent=5 // pred_region
      // Predicated region
      $region29: #{bottleneck_forward.6} parent=27 // pred_check
        %p208 = pneg %p33
      $region30: #{bottleneck_forward.6} parent=27 // pred_check_branch
        %210 = sbr.rel (%p208) target = $region32
      $region31: #{bottleneck_forward.6} parent=27 // pred_region
        %p211 = scmp.lt.s32.totalorder %s13, 1
        %s212 = scalar_select %p211, %s13, 1
        %s213 = smul.addr %s212, 32
        %s214 = smul.addr %s213, 8
        %s215 = scalar_lea.vmem %s0, %s214
      $region32: #{bottleneck_forward.6} parent=27 // pred_fallthru
        _
    $region28: #{bottleneck_forward.6} parent=5 // pred_fallthru
      _
    %p216 = scmp.le.s32.totalorder 1, %s13
    %p217 = scmp.lt.s32.totalorder %s13, 3
    %p218 = pnand %p216, %p217
    %p219 = pneg %p218
    // Predicated region
    $region33: #{bottleneck_forward.6} parent=5 // pred_check
      _
    $region34: #{bottleneck_forward.6} parent=5 // pred_check_branch
      %221 = sbr.rel (%p218) target = $region36
    $region35: #{bottleneck_forward.6} parent=5 // pred_region
      %s222 = ssub.s32 %s13, 1
      %p223 = scmp.lt.s32.totalorder %s18, 1
      %s224 = scalar_select %p223, %s18, 1
      %s225 = smul.addr %s224, 32
      %s226 = smul.addr %s225, 8
      %s227 = scalar_lea.vmem %s0, %s226
      %p228 = pneg %p39
      %p229 = pneg %p36
      %p230 = pneg %p60
      %p231 = pneg %p57
      %p232 = pneg %p81
      %p233 = pneg %p78
      %p234 = pneg %p102
      %p235 = pneg %p99
      %p236 = pneg %p128
      %p237 = pneg %p125
      %p238 = scmp.lt.s32.totalorder %s18, 1
      %s239 = scalar_select %p238, %s18, 1
      %s240 = smul.addr %s239, 128
      %s241 = smul.addr %s240, 8
      %s242 = scalar_lea.vmem %s4, %s241
      %p243 = pneg %p154
      %p244 = pneg %p151
      %p245 = scmp.lt.s32.totalorder %s18, 1
      %s246 = scalar_select %p245, %s18, 1
      %s247 = smul.addr %s246, 4
      %s248 = scalar_lea.vmem %s5, %s247
      %p249 = pneg %p180
      %p250 = pneg %p177
      %p251 = scmp.lt.s32.totalorder %s18, 1
      %s252 = scalar_select %p251, %s18, 1
      %s253 = smul.addr %s252, 4
      %s254 = scalar_lea.vmem %s6, %s253
      %p255 = scmp.lt.s32.totalorder %s18, 1
      %s256 = scalar_select %p255, %s18, 1
      %s257 = smul.addr %s256, 32
      %s258 = smul.addr %s257, 8
      %s259 = scalar_lea.vmem %s0, %s258
      %p260 = scmp.lt.s32.totalorder %s18, 1
      %s261 = scalar_select %p260, %s18, 1
      %s262 = smul.addr %s261, 128
      %s263 = smul.addr %s262, 8
      %s264 = scalar_lea.vmem %s4, %s263
      %p265 = scmp.lt.s32.totalorder %s18, 1
      %s266 = scalar_select %p265, %s18, 1
      %s267 = smul.addr %s266, 4
      %s268 = scalar_lea.vmem %s5, %s267
      %p269 = scmp.lt.s32.totalorder %s18, 1
      %s270 = scalar_select %p269, %s18, 1
      %s271 = smul.addr %s270, 4
      %s272 = scalar_lea.vmem %s6, %s271
      %v274 = vld [vmem:[%s259] sm:$0xff]
      %v275 = vld [vmem:[%s259 + $0x8] sm:$0xff]
      %v276 = vld [vmem:[%s259 + $0x10] sm:$0xff]
      %v277 = vld [vmem:[%s259 + $0x18] sm:$0xff]
      %v278 = vld [vmem:[%s259 + $0x20] sm:$0xff]
      %v279 = vld [vmem:[%s259 + $0x28] sm:$0xff]
      %v280 = vld [vmem:[%s259 + $0x30] sm:$0xff]
      %v281 = vld [vmem:[%s259 + $0x38] sm:$0xff]
      %v282 = vld [vmem:[%s259 + $0x40] sm:$0xff]
      %v283 = vld [vmem:[%s259 + $0x48] sm:$0xff]
      %v284 = vld [vmem:[%s259 + $0x50] sm:$0xff]
      %v285 = vld [vmem:[%s259 + $0x58] sm:$0xff]
      %v286 = vld [vmem:[%s259 + $0x60] sm:$0xff]
      %v287 = vld [vmem:[%s259 + $0x68] sm:$0xff]
      %v288 = vld [vmem:[%s259 + $0x70] sm:$0xff]
      %v289 = vld [vmem:[%s259 + $0x78] sm:$0xff]
      %v290 = vld [vmem:[%s259 + $0x80] sm:$0xff]
      %v291 = vld [vmem:[%s259 + $0x88] sm:$0xff]
      %v292 = vld [vmem:[%s259 + $0x90] sm:$0xff]
      %v293 = vld [vmem:[%s259 + $0x98] sm:$0xff]
      %v294 = vld [vmem:[%s259 + $0xa0] sm:$0xff]
      %v295 = vld [vmem:[%s259 + $0xa8] sm:$0xff]
      %v296 = vld [vmem:[%s259 + $0xb0] sm:$0xff]
      %v297 = vld [vmem:[%s259 + $0xb8] sm:$0xff]
      %v298 = vld [vmem:[%s259 + $0xc0] sm:$0xff]
      %v299 = vld [vmem:[%s259 + $0xc8] sm:$0xff]
      %v300 = vld [vmem:[%s259 + $0xd0] sm:$0xff]
      %v301 = vld [vmem:[%s259 + $0xd8] sm:$0xff]
      %v302 = vld [vmem:[%s259 + $0xe0] sm:$0xff]
      %v303 = vld [vmem:[%s259 + $0xe8] sm:$0xff]
      %v304 = vld [vmem:[%s259 + $0xf0] sm:$0xff]
      %v305 = vld [vmem:[%s259 + $0xf8] sm:$0xff]
      %v306 = vld [vmem:[%s1] sm:$0x1]
      %v308 = vlaneseq
      %v309 = vshrl.u32 %v308, 7
      %v310 = vsub.s32 0, %v309
      %v311 = vrot.slane %v306, %v310
      %v313 = vmul.f32 %v274, %v311
      %v314 = vmul.f32 %v275, %v311
      %v315 = vmul.f32 %v276, %v311
      %v316 = vmul.f32 %v277, %v311
      %v317 = vmul.f32 %v278, %v311
      %v318 = vmul.f32 %v279, %v311
      %v319 = vmul.f32 %v280, %v311
      %v320 = vmul.f32 %v281, %v311
      %v321 = vmul.f32 %v282, %v311
      %v322 = vmul.f32 %v283, %v311
      %v323 = vmul.f32 %v284, %v311
      %v324 = vmul.f32 %v285, %v311
      %v325 = vmul.f32 %v286, %v311
      %v326 = vmul.f32 %v287, %v311
      %v327 = vmul.f32 %v288, %v311
      %v328 = vmul.f32 %v289, %v311
      %v329 = vmul.f32 %v290, %v311
      %v330 = vmul.f32 %v291, %v311
      %v331 = vmul.f32 %v292, %v311
      %v332 = vmul.f32 %v293, %v311
      %v333 = vmul.f32 %v294, %v311
      %v334 = vmul.f32 %v295, %v311
      %v335 = vmul.f32 %v296, %v311
      %v336 = vmul.f32 %v297, %v311
      %v337 = vmul.f32 %v298, %v311
      %v338 = vmul.f32 %v299, %v311
      %v339 = vmul.f32 %v300, %v311
      %v340 = vmul.f32 %v301, %v311
      %v341 = vmul.f32 %v302, %v311
      %v342 = vmul.f32 %v303, %v311
      %v343 = vmul.f32 %v304, %v311
      %v344 = vmul.f32 %v305, %v311
      %v345 = vld [vmem:[%s2] sm:$0x1]
      %v347 = vlaneseq
      %v348 = vshrl.u32 %v347, 7
      %v349 = vsub.s32 0, %v348
      %v350 = vrot.slane %v345, %v349
      %v352 = vadd.f32 %v313, %v350
      %v353 = vadd.f32 %v314, %v350
      %v354 = vadd.f32 %v315, %v350
      %v355 = vadd.f32 %v316, %v350
      %v356 = vadd.f32 %v317, %v350
      %v357 = vadd.f32 %v318, %v350
      %v358 = vadd.f32 %v319, %v350
      %v359 = vadd.f32 %v320, %v350
      %v360 = vadd.f32 %v321, %v350
      %v361 = vadd.f32 %v322, %v350
      %v362 = vadd.f32 %v323, %v350
      %v363 = vadd.f32 %v324, %v350
      %v364 = vadd.f32 %v325, %v350
      %v365 = vadd.f32 %v326, %v350
      %v366 = vadd.f32 %v327, %v350
      %v367 = vadd.f32 %v328, %v350
      %v368 = vadd.f32 %v329, %v350
      %v369 = vadd.f32 %v330, %v350
      %v370 = vadd.f32 %v331, %v350
      %v371 = vadd.f32 %v332, %v350
      %v372 = vadd.f32 %v333, %v350
      %v373 = vadd.f32 %v334, %v350
      %v374 = vadd.f32 %v335, %v350
      %v375 = vadd.f32 %v336, %v350
      %v376 = vadd.f32 %v337, %v350
      %v377 = vadd.f32 %v338, %v350
      %v378 = vadd.f32 %v339, %v350
      %v379 = vadd.f32 %v340, %v350
      %v380 = vadd.f32 %v341, %v350
      %v381 = vadd.f32 %v342, %v350
      %v382 = vadd.f32 %v343, %v350
      %v383 = vadd.f32 %v344, %v350
      %v384 = vmax.f32 %v352, 0.0
      %v385 = vmax.f32 %v353, 0.0
      %v386 = vmax.f32 %v354, 0.0
      %v387 = vmax.f32 %v355, 0.0
      %v388 = vmax.f32 %v356, 0.0
      %v389 = vmax.f32 %v357, 0.0
      %v390 = vmax.f32 %v358, 0.0
      %v391 = vmax.f32 %v359, 0.0
      %v392 = vmax.f32 %v360, 0.0
      %v393 = vmax.f32 %v361, 0.0
      %v394 = vmax.f32 %v362, 0.0
      %v395 = vmax.f32 %v363, 0.0
      %v396 = vmax.f32 %v364, 0.0
      %v397 = vmax.f32 %v365, 0.0
      %v398 = vmax.f32 %v366, 0.0
      %v399 = vmax.f32 %v367, 0.0
      %v400 = vmax.f32 %v368, 0.0
      %v401 = vmax.f32 %v369, 0.0
      %v402 = vmax.f32 %v370, 0.0
      %v403 = vmax.f32 %v371, 0.0
      %v404 = vmax.f32 %v372, 0.0
      %v405 = vmax.f32 %v373, 0.0
      %v406 = vmax.f32 %v374, 0.0
      %v407 = vmax.f32 %v375, 0.0
      %v408 = vmax.f32 %v376, 0.0
      %v409 = vmax.f32 %v377, 0.0
      %v410 = vmax.f32 %v378, 0.0
      %v411 = vmax.f32 %v379, 0.0
      %v412 = vmax.f32 %v380, 0.0
      %v413 = vmax.f32 %v381, 0.0
      %v414 = vmax.f32 %v382, 0.0
      %v415 = vmax.f32 %v383, 0.0
      %v416 = vpack.c.bf16 %v385, %v384
      %v417 = vpack.c.bf16 %v387, %v386
      %v418 = vpack.c.bf16 %v389, %v388
      %v419 = vpack.c.bf16 %v391, %v390
      %v420 = vpack.c.bf16 %v393, %v392
      %v421 = vpack.c.bf16 %v395, %v394
      %v422 = vpack.c.bf16 %v397, %v396
      %v423 = vpack.c.bf16 %v399, %v398
      %v424 = vpack.c.bf16 %v401, %v400
      %v425 = vpack.c.bf16 %v403, %v402
      %v426 = vpack.c.bf16 %v405, %v404
      %v427 = vpack.c.bf16 %v407, %v406
      %v428 = vpack.c.bf16 %v409, %v408
      %v429 = vpack.c.bf16 %v411, %v410
      %v430 = vpack.c.bf16 %v413, %v412
      %v431 = vpack.c.bf16 %v415, %v414
      %v432 = vld [vmem:[%s3] sm:$0xff]
      %v433 = vld [vmem:[%s3 + $0x8] sm:$0xff]
      %v434 = vld [vmem:[%s3 + $0x10] sm:$0xff]
      %v435 = vld [vmem:[%s3 + $0x18] sm:$0xff]
      %v436 = vld [vmem:[%s3 + $0x20] sm:$0xff]
      %v437 = vld [vmem:[%s3 + $0x28] sm:$0xff]
      %v438 = vld [vmem:[%s3 + $0x30] sm:$0xff]
      %v439 = vld [vmem:[%s3 + $0x38] sm:$0xff]
      %v440 = vld [vmem:[%s3 + $0x40] sm:$0xff]
      %v441 = vld [vmem:[%s3 + $0x48] sm:$0xff]
      %v442 = vld [vmem:[%s3 + $0x50] sm:$0xff]
      %v443 = vld [vmem:[%s3 + $0x58] sm:$0xff]
      %v444 = vld [vmem:[%s3 + $0x60] sm:$0xff]
      %v445 = vld [vmem:[%s3 + $0x68] sm:$0xff]
      %v446 = vld [vmem:[%s3 + $0x70] sm:$0xff]
      %v447 = vld [vmem:[%s3 + $0x78] sm:$0xff]
      %v448 = vld [vmem:[%s3 + $0x80] sm:$0xff]
      %v449 = vld [vmem:[%s3 + $0x88] sm:$0xff]
      %v450 = vld [vmem:[%s3 + $0x90] sm:$0xff]
      %v451 = vld [vmem:[%s3 + $0x98] sm:$0xff]
      %v452 = vld [vmem:[%s3 + $0xa0] sm:$0xff]
      %v453 = vld [vmem:[%s3 + $0xa8] sm:$0xff]
      %v454 = vld [vmem:[%s3 + $0xb0] sm:$0xff]
      %v455 = vld [vmem:[%s3 + $0xb8] sm:$0xff]
      %v456 = vld [vmem:[%s3 + $0xc0] sm:$0xff]
      %v457 = vld [vmem:[%s3 + $0xc8] sm:$0xff]
      %v458 = vld [vmem:[%s3 + $0xd0] sm:$0xff]
      %v459 = vld [vmem:[%s3 + $0xd8] sm:$0xff]
      %v460 = vld [vmem:[%s3 + $0xe0] sm:$0xff]
      %v461 = vld [vmem:[%s3 + $0xe8] sm:$0xff]
      %v462 = vld [vmem:[%s3 + $0xf0] sm:$0xff]
      %v463 = vld [vmem:[%s3 + $0xf8] sm:$0xff]
      %v496 = vunpack.c.l.b16 %v432
      %v497 = vunpack.c.h.b16 %v432
      %v498 = vunpack.c.l.b16 %v433
      %v499 = vunpack.c.h.b16 %v433
      %v500 = vunpack.c.l.b16 %v434
      %v501 = vunpack.c.h.b16 %v434
      %v502 = vunpack.c.l.b16 %v435
      %v503 = vunpack.c.h.b16 %v435
      %v504 = vunpack.c.l.b16 %v436
      %v505 = vunpack.c.h.b16 %v436
      %v506 = vunpack.c.l.b16 %v437
      %v507 = vunpack.c.h.b16 %v437
      %v508 = vunpack.c.l.b16 %v438
      %v509 = vunpack.c.h.b16 %v438
      %v510 = vunpack.c.l.b16 %v439
      %v511 = vunpack.c.h.b16 %v439
      %v512 = vunpack.c.l.b16 %v440
      %v513 = vunpack.c.h.b16 %v440
      %v514 = vunpack.c.l.b16 %v441
      %v515 = vunpack.c.h.b16 %v441
      %v516 = vunpack.c.l.b16 %v442
      %v517 = vunpack.c.h.b16 %v442
      %v518 = vunpack.c.l.b16 %v443
      %v519 = vunpack.c.h.b16 %v443
      %v520 = vunpack.c.l.b16 %v444
      %v521 = vunpack.c.h.b16 %v444
      %v522 = vunpack.c.l.b16 %v445
      %v523 = vunpack.c.h.b16 %v445
      %v524 = vunpack.c.l.b16 %v446
      %v525 = vunpack.c.h.b16 %v446
      %v526 = vunpack.c.l.b16 %v447
      %v527 = vunpack.c.h.b16 %v447
      %v528 = vunpack.c.l.b16 %v448
      %v529 = vunpack.c.h.b16 %v448
      %v530 = vunpack.c.l.b16 %v449
      %v531 = vunpack.c.h.b16 %v449
      %v532 = vunpack.c.l.b16 %v450
      %v533 = vunpack.c.h.b16 %v450
      %v534 = vunpack.c.l.b16 %v451
      %v535 = vunpack.c.h.b16 %v451
      %v536 = vunpack.c.l.b16 %v452
      %v537 = vunpack.c.h.b16 %v452
      %v538 = vunpack.c.l.b16 %v453
      %v539 = vunpack.c.h.b16 %v453
      %v540 = vunpack.c.l.b16 %v454
      %v541 = vunpack.c.h.b16 %v454
      %v542 = vunpack.c.l.b16 %v455
      %v543 = vunpack.c.h.b16 %v455
      %v544 = vunpack.c.l.b16 %v456
      %v545 = vunpack.c.h.b16 %v456
      %v546 = vunpack.c.l.b16 %v457
      %v547 = vunpack.c.h.b16 %v457
      %v548 = vunpack.c.l.b16 %v458
      %v549 = vunpack.c.h.b16 %v458
      %v550 = vunpack.c.l.b16 %v459
      %v551 = vunpack.c.h.b16 %v459
      %v552 = vunpack.c.l.b16 %v460
      %v553 = vunpack.c.h.b16 %v460
      %v554 = vunpack.c.l.b16 %v461
      %v555 = vunpack.c.h.b16 %v461
      %v556 = vunpack.c.l.b16 %v462
      %v557 = vunpack.c.h.b16 %v462
      %v558 = vunpack.c.l.b16 %v463
      %v559 = vunpack.c.h.b16 %v463
      %v560 = vpack.c.b16 %v500, %v496
      %v561 = vpack.c.b16 %v501, %v497
      %v562 = vpack.c.b16 %v502, %v498
      %v563 = vpack.c.b16 %v503, %v499
      %v564 = vpack.c.b16 %v508, %v504
      %v565 = vpack.c.b16 %v509, %v505
      %v566 = vpack.c.b16 %v510, %v506
      %v567 = vpack.c.b16 %v511, %v507
      %v568 = vpack.c.b16 %v516, %v512
      %v569 = vpack.c.b16 %v517, %v513
      %v570 = vpack.c.b16 %v518, %v514
      %v571 = vpack.c.b16 %v519, %v515
      %v572 = vpack.c.b16 %v524, %v520
      %v573 = vpack.c.b16 %v525, %v521
      %v574 = vpack.c.b16 %v526, %v522
      %v575 = vpack.c.b16 %v527, %v523
      %v576 = vpack.c.b16 %v532, %v528
      %v577 = vpack.c.b16 %v533, %v529
      %v578 = vpack.c.b16 %v534, %v530
      %v579 = vpack.c.b16 %v535, %v531
      %v580 = vpack.c.b16 %v540, %v536
      %v581 = vpack.c.b16 %v541, %v537
      %v582 = vpack.c.b16 %v542, %v538
      %v583 = vpack.c.b16 %v543, %v539
      %v584 = vpack.c.b16 %v548, %v544
      %v585 = vpack.c.b16 %v549, %v545
      %v586 = vpack.c.b16 %v550, %v546
      %v587 = vpack.c.b16 %v551, %v547
      %v588 = vpack.c.b16 %v556, %v552
      %v589 = vpack.c.b16 %v557, %v553
      %v590 = vpack.c.b16 %v558, %v554
      %v591 = vpack.c.b16 %v559, %v555
      %624 = vmatprep.subr.bf16.mxu0 %v589
      %625 = vmatpush1.bf16.msra.mxu0 %v588
      %626 = vmatprep.subr.bf16.mxu0 %v585
      %627 = vmatpush1.bf16.msra.mxu0 %v584
      %628 = vmatprep.subr.bf16.mxu0 %v581
      %629 = vmatpush1.bf16.msra.mxu0 %v580
      %630 = vmatprep.subr.bf16.mxu0 %v577
      %631 = vmatpush1.bf16.msra.mxu0 %v576
      %632 = vmatprep.subr.bf16.mxu0 %v573
      %633 = vmatpush1.bf16.msra.mxu0 %v572
      %634 = vmatprep.subr.bf16.mxu0 %v569
      %635 = vmatpush1.bf16.msra.mxu0 %v568
      %636 = vmatprep.subr.bf16.mxu0 %v565
      %637 = vmatpush1.bf16.msra.mxu0 %v564
      %638 = vmatprep.subr.bf16.mxu0 %v561
      %639 = vmatpush1.bf16.msra.mxu0 %v560
      %640 = vmatprep.subr.bf16.mxu0 0
      %641 = vmatpush2.bf16.msra.mxu0 0
      %642 = vmatprep.subr.bf16.mxu0 0
      %643 = vmatpush2.bf16.msra.mxu0 0
      %644 = vmatprep.subr.bf16.mxu0 0
      %645 = vmatpush2.bf16.msra.mxu0 0
      %646 = vmatprep.subr.bf16.mxu0 0
      %647 = vmatpush2.bf16.msra.mxu0 0
      %648 = vmatprep.subr.bf16.mxu0 0
      %649 = vmatpush2.bf16.msra.mxu0 0
      %650 = vmatprep.subr.bf16.mxu0 0
      %651 = vmatpush2.bf16.msra.mxu0 0
      %652 = vmatprep.subr.bf16.mxu0 0
      %653 = vmatpush2.bf16.msra.mxu0 0
      %654 = vmatprep.subr.bf16.mxu0 0
      %655 = vmatpush2.bf16.msra.mxu0 0
      %656 = vmatprep.mubr.bf16.mxu0 0
      %657 = vmatmul.mubr.bf16.gmra.mxu0 %v416
      %v658 = vpop.f32.mrf.mxu0
      %v659 = vadd.f32 0.0, %v658
      %v660 = vpop.f32.mrf.mxu0
      %v661 = vadd.f32 0.0, %v660
      %v662 = vpop.f32.mrf.mxu0
      %v663 = vadd.f32 0.0, %v662
      %v664 = vpop.f32.mrf.mxu0
      %v665 = vadd.f32 0.0, %v664
      %666 = vmatprep.mubr.bf16.mxu0 0
      %667 = vmatmul.mubr.bf16.gmra.mxu0 %v417
      %v668 = vpop.f32.mrf.mxu0
      %v669 = vadd.f32 0.0, %v668
      %v670 = vpop.f32.mrf.mxu0
      %v671 = vadd.f32 0.0, %v670
      %v672 = vpop.f32.mrf.mxu0
      %v673 = vadd.f32 0.0, %v672
      %v674 = vpop.f32.mrf.mxu0
      %v675 = vadd.f32 0.0, %v674
      %676 = vmatprep.mubr.bf16.mxu0 0
      %677 = vmatmul.mubr.bf16.gmra.mxu0 %v418
      %v678 = vpop.f32.mrf.mxu0
      %v679 = vadd.f32 0.0, %v678
      %v680 = vpop.f32.mrf.mxu0
      %v681 = vadd.f32 0.0, %v680
      %v682 = vpop.f32.mrf.mxu0
      %v683 = vadd.f32 0.0, %v682
      %v684 = vpop.f32.mrf.mxu0
      %v685 = vadd.f32 0.0, %v684
      %686 = vmatprep.mubr.bf16.mxu0 0
      %687 = vmatmul.mubr.bf16.gmra.mxu0 %v419
      %v688 = vpop.f32.mrf.mxu0
      %v689 = vadd.f32 0.0, %v688
      %v690 = vpop.f32.mrf.mxu0
      %v691 = vadd.f32 0.0, %v690
      %v692 = vpop.f32.mrf.mxu0
      %v693 = vadd.f32 0.0, %v692
      %v694 = vpop.f32.mrf.mxu0
      %v695 = vadd.f32 0.0, %v694
      %696 = vmatprep.mubr.bf16.mxu0 0
      %697 = vmatmul.mubr.bf16.gmra.mxu0 %v420
      %v698 = vpop.f32.mrf.mxu0
      %v699 = vadd.f32 0.0, %v698
      %v700 = vpop.f32.mrf.mxu0
      %v701 = vadd.f32 0.0, %v700
      %v702 = vpop.f32.mrf.mxu0
      %v703 = vadd.f32 0.0, %v702
      %v704 = vpop.f32.mrf.mxu0
      %v705 = vadd.f32 0.0, %v704
      %706 = vmatprep.mubr.bf16.mxu0 0
      %707 = vmatmul.mubr.bf16.gmra.mxu0 %v421
      %v708 = vpop.f32.mrf.mxu0
      %v709 = vadd.f32 0.0, %v708
      %v710 = vpop.f32.mrf.mxu0
      %v711 = vadd.f32 0.0, %v710
      %v712 = vpop.f32.mrf.mxu0
      %v713 = vadd.f32 0.0, %v712
      %v714 = vpop.f32.mrf.mxu0
      %v715 = vadd.f32 0.0, %v714
      %716 = vmatprep.mubr.bf16.mxu0 0
      %717 = vmatmul.mubr.bf16.gmra.mxu0 %v422
      %v718 = vpop.f32.mrf.mxu0
      %v719 = vadd.f32 0.0, %v718
      %v720 = vpop.f32.mrf.mxu0
      %v721 = vadd.f32 0.0, %v720
      %v722 = vpop.f32.mrf.mxu0
      %v723 = vadd.f32 0.0, %v722
      %v724 = vpop.f32.mrf.mxu0
      %v725 = vadd.f32 0.0, %v724
      %726 = vmatprep.mubr.bf16.mxu0 0
      %727 = vmatmul.mubr.bf16.gmra.mxu0 %v423
      %v728 = vpop.f32.mrf.mxu0
      %v729 = vadd.f32 0.0, %v728
      %v730 = vpop.f32.mrf.mxu0
      %v731 = vadd.f32 0.0, %v730
      %v732 = vpop.f32.mrf.mxu0
      %v733 = vadd.f32 0.0, %v732
      %v734 = vpop.f32.mrf.mxu0
      %v735 = vadd.f32 0.0, %v734
      %736 = vmatprep.mubr.bf16.mxu0 0
      %737 = vmatmul.mubr.bf16.gmra.mxu0 %v424
      %v738 = vpop.f32.mrf.mxu0
      %v739 = vadd.f32 0.0, %v738
      %v740 = vpop.f32.mrf.mxu0
      %v741 = vadd.f32 0.0, %v740
      %v742 = vpop.f32.mrf.mxu0
      %v743 = vadd.f32 0.0, %v742
      %v744 = vpop.f32.mrf.mxu0
      %v745 = vadd.f32 0.0, %v744
      %746 = vmatprep.mubr.bf16.mxu0 0
      %747 = vmatmul.mubr.bf16.gmra.mxu0 %v425
      %v748 = vpop.f32.mrf.mxu0
      %v749 = vadd.f32 0.0, %v748
      %v750 = vpop.f32.mrf.mxu0
      %v751 = vadd.f32 0.0, %v750
      %v752 = vpop.f32.mrf.mxu0
      %v753 = vadd.f32 0.0, %v752
      %v754 = vpop.f32.mrf.mxu0
      %v755 = vadd.f32 0.0, %v754
      %756 = vmatprep.mubr.bf16.mxu0 0
      %757 = vmatmul.mubr.bf16.gmra.mxu0 %v426
      %v758 = vpop.f32.mrf.mxu0
      %v759 = vadd.f32 0.0, %v758
      %v760 = vpop.f32.mrf.mxu0
      %v761 = vadd.f32 0.0, %v760
      %v762 = vpop.f32.mrf.mxu0
      %v763 = vadd.f32 0.0, %v762
      %v764 = vpop.f32.mrf.mxu0
      %v765 = vadd.f32 0.0, %v764
      %766 = vmatprep.mubr.bf16.mxu0 0
      %767 = vmatmul.mubr.bf16.gmra.mxu0 %v427
      %v768 = vpop.f32.mrf.mxu0
      %v769 = vadd.f32 0.0, %v768
      %v770 = vpop.f32.mrf.mxu0
      %v771 = vadd.f32 0.0, %v770
      %v772 = vpop.f32.mrf.mxu0
      %v773 = vadd.f32 0.0, %v772
      %v774 = vpop.f32.mrf.mxu0
      %v775 = vadd.f32 0.0, %v774
      %776 = vmatprep.mubr.bf16.mxu0 0
      %777 = vmatmul.mubr.bf16.gmra.mxu0 %v428
      %v778 = vpop.f32.mrf.mxu0
      %v779 = vadd.f32 0.0, %v778
      %v780 = vpop.f32.mrf.mxu0
      %v781 = vadd.f32 0.0, %v780
      %v782 = vpop.f32.mrf.mxu0
      %v783 = vadd.f32 0.0, %v782
      %v784 = vpop.f32.mrf.mxu0
      %v785 = vadd.f32 0.0, %v784
      %786 = vmatprep.mubr.bf16.mxu0 0
      %787 = vmatmul.mubr.bf16.gmra.mxu0 %v429
      %v788 = vpop.f32.mrf.mxu0
      %v789 = vadd.f32 0.0, %v788
      %v790 = vpop.f32.mrf.mxu0
      %v791 = vadd.f32 0.0, %v790
      %v792 = vpop.f32.mrf.mxu0
      %v793 = vadd.f32 0.0, %v792
      %v794 = vpop.f32.mrf.mxu0
      %v795 = vadd.f32 0.0, %v794
      %796 = vmatprep.mubr.bf16.mxu0 0
      %797 = vmatmul.mubr.bf16.gmra.mxu0 %v430
      %v798 = vpop.f32.mrf.mxu0
      %v799 = vadd.f32 0.0, %v798
      %v800 = vpop.f32.mrf.mxu0
      %v801 = vadd.f32 0.0, %v800
      %v802 = vpop.f32.mrf.mxu0
      %v803 = vadd.f32 0.0, %v802
      %v804 = vpop.f32.mrf.mxu0
      %v805 = vadd.f32 0.0, %v804
      %806 = vmatprep.mubr.bf16.mxu0 0
      %807 = vmatmul.mubr.bf16.gmra.mxu0 %v431
      %v808 = vpop.f32.mrf.mxu0
      %v809 = vadd.f32 0.0, %v808
      %v810 = vpop.f32.mrf.mxu0
      %v811 = vadd.f32 0.0, %v810
      %v812 = vpop.f32.mrf.mxu0
      %v813 = vadd.f32 0.0, %v812
      %v814 = vpop.f32.mrf.mxu0
      %v815 = vadd.f32 0.0, %v814
      %816 = vdwg.mxu0
      %817 = vmatprep.subr.bf16.mxu0 %v591
      %818 = vmatpush1.bf16.msra.mxu0 %v590
      %819 = vmatprep.subr.bf16.mxu0 %v587
      %820 = vmatpush1.bf16.msra.mxu0 %v586
      %821 = vmatprep.subr.bf16.mxu0 %v583
      %822 = vmatpush1.bf16.msra.mxu0 %v582
      %823 = vmatprep.subr.bf16.mxu0 %v579
      %824 = vmatpush1.bf16.msra.mxu0 %v578
      %825 = vmatprep.subr.bf16.mxu0 %v575
      %826 = vmatpush1.bf16.msra.mxu0 %v574
      %827 = vmatprep.subr.bf16.mxu0 %v571
      %828 = vmatpush1.bf16.msra.mxu0 %v570
      %829 = vmatprep.subr.bf16.mxu0 %v567
      %830 = vmatpush1.bf16.msra.mxu0 %v566
      %831 = vmatprep.subr.bf16.mxu0 %v563
      %832 = vmatpush1.bf16.msra.mxu0 %v562
      %833 = vmatprep.subr.bf16.mxu0 0
      %834 = vmatpush2.bf16.msra.mxu0 0
      %835 = vmatprep.subr.bf16.mxu0 0
      %836 = vmatpush2.bf16.msra.mxu0 0
      %837 = vmatprep.subr.bf16.mxu0 0
      %838 = vmatpush2.bf16.msra.mxu0 0
      %839 = vmatprep.subr.bf16.mxu0 0
      %840 = vmatpush2.bf16.msra.mxu0 0
      %841 = vmatprep.subr.bf16.mxu0 0
      %842 = vmatpush2.bf16.msra.mxu0 0
      %843 = vmatprep.subr.bf16.mxu0 0
      %844 = vmatpush2.bf16.msra.mxu0 0
      %845 = vmatprep.subr.bf16.mxu0 0
      %846 = vmatpush2.bf16.msra.mxu0 0
      %847 = vmatprep.subr.bf16.mxu0 0
      %848 = vmatpush2.bf16.msra.mxu0 0
      %849 = vmatprep.mubr.bf16.mxu0 0
      %850 = vmatmul.mubr.bf16.gmra.mxu0 %v416
      %v851 = vpop.f32.mrf.mxu0
      %v852 = vadd.f32 0.0, %v851
      %v853 = vpop.f32.mrf.mxu0
      %v854 = vadd.f32 0.0, %v853
      %v855 = vpop.f32.mrf.mxu0
      %v856 = vadd.f32 0.0, %v855
      %v857 = vpop.f32.mrf.mxu0
      %v858 = vadd.f32 0.0, %v857
      %859 = vmatprep.mubr.bf16.mxu0 0
      %860 = vmatmul.mubr.bf16.gmra.mxu0 %v417
      %v861 = vpop.f32.mrf.mxu0
      %v862 = vadd.f32 0.0, %v861
      %v863 = vpop.f32.mrf.mxu0
      %v864 = vadd.f32 0.0, %v863
      %v865 = vpop.f32.mrf.mxu0
      %v866 = vadd.f32 0.0, %v865
      %v867 = vpop.f32.mrf.mxu0
      %v868 = vadd.f32 0.0, %v867
      %869 = vmatprep.mubr.bf16.mxu0 0
      %870 = vmatmul.mubr.bf16.gmra.mxu0 %v418
      %v871 = vpop.f32.mrf.mxu0
      %v872 = vadd.f32 0.0, %v871
      %v873 = vpop.f32.mrf.mxu0
      %v874 = vadd.f32 0.0, %v873
      %v875 = vpop.f32.mrf.mxu0
      %v876 = vadd.f32 0.0, %v875
      %v877 = vpop.f32.mrf.mxu0
      %v878 = vadd.f32 0.0, %v877
      %879 = vmatprep.mubr.bf16.mxu0 0
      %880 = vmatmul.mubr.bf16.gmra.mxu0 %v419
      %v881 = vpop.f32.mrf.mxu0
      %v882 = vadd.f32 0.0, %v881
      %v883 = vpop.f32.mrf.mxu0
      %v884 = vadd.f32 0.0, %v883
      %v885 = vpop.f32.mrf.mxu0
      %v886 = vadd.f32 0.0, %v885
      %v887 = vpop.f32.mrf.mxu0
      %v888 = vadd.f32 0.0, %v887
      %889 = vmatprep.mubr.bf16.mxu0 0
      %890 = vmatmul.mubr.bf16.gmra.mxu0 %v420
      %v891 = vpop.f32.mrf.mxu0
      %v892 = vadd.f32 0.0, %v891
      %v893 = vpop.f32.mrf.mxu0
      %v894 = vadd.f32 0.0, %v893
      %v895 = vpop.f32.mrf.mxu0
      %v896 = vadd.f32 0.0, %v895
      %v897 = vpop.f32.mrf.mxu0
      %v898 = vadd.f32 0.0, %v897
      %899 = vmatprep.mubr.bf16.mxu0 0
      %900 = vmatmul.mubr.bf16.gmra.mxu0 %v421
      %v901 = vpop.f32.mrf.mxu0
      %v902 = vadd.f32 0.0, %v901
      %v903 = vpop.f32.mrf.mxu0
      %v904 = vadd.f32 0.0, %v903
      %v905 = vpop.f32.mrf.mxu0
      %v906 = vadd.f32 0.0, %v905
      %v907 = vpop.f32.mrf.mxu0
      %v908 = vadd.f32 0.0, %v907
      %909 = vmatprep.mubr.bf16.mxu0 0
      %910 = vmatmul.mubr.bf16.gmra.mxu0 %v422
      %v911 = vpop.f32.mrf.mxu0
      %v912 = vadd.f32 0.0, %v911
      %v913 = vpop.f32.mrf.mxu0
      %v914 = vadd.f32 0.0, %v913
      %v915 = vpop.f32.mrf.mxu0
      %v916 = vadd.f32 0.0, %v915
      %v917 = vpop.f32.mrf.mxu0
      %v918 = vadd.f32 0.0, %v917
      %919 = vmatprep.mubr.bf16.mxu0 0
      %920 = vmatmul.mubr.bf16.gmra.mxu0 %v423
      %v921 = vpop.f32.mrf.mxu0
      %v922 = vadd.f32 0.0, %v921
      %v923 = vpop.f32.mrf.mxu0
      %v924 = vadd.f32 0.0, %v923
      %v925 = vpop.f32.mrf.mxu0
      %v926 = vadd.f32 0.0, %v925
      %v927 = vpop.f32.mrf.mxu0
      %v928 = vadd.f32 0.0, %v927
      %929 = vmatprep.mubr.bf16.mxu0 0
      %930 = vmatmul.mubr.bf16.gmra.mxu0 %v424
      %v931 = vpop.f32.mrf.mxu0
      %v932 = vadd.f32 0.0, %v931
      %v933 = vpop.f32.mrf.mxu0
      %v934 = vadd.f32 0.0, %v933
      %v935 = vpop.f32.mrf.mxu0
      %v936 = vadd.f32 0.0, %v935
      %v937 = vpop.f32.mrf.mxu0
      %v938 = vadd.f32 0.0, %v937
      %939 = vmatprep.mubr.bf16.mxu0 0
      %940 = vmatmul.mubr.bf16.gmra.mxu0 %v425
      %v941 = vpop.f32.mrf.mxu0
      %v942 = vadd.f32 0.0, %v941
      %v943 = vpop.f32.mrf.mxu0
      %v944 = vadd.f32 0.0, %v943
      %v945 = vpop.f32.mrf.mxu0
      %v946 = vadd.f32 0.0, %v945
      %v947 = vpop.f32.mrf.mxu0
      %v948 = vadd.f32 0.0, %v947
      %949 = vmatprep.mubr.bf16.mxu0 0
      %950 = vmatmul.mubr.bf16.gmra.mxu0 %v426
      %v951 = vpop.f32.mrf.mxu0
      %v952 = vadd.f32 0.0, %v951
      %v953 = vpop.f32.mrf.mxu0
      %v954 = vadd.f32 0.0, %v953
      %v955 = vpop.f32.mrf.mxu0
      %v956 = vadd.f32 0.0, %v955
      %v957 = vpop.f32.mrf.mxu0
      %v958 = vadd.f32 0.0, %v957
      %959 = vmatprep.mubr.bf16.mxu0 0
      %960 = vmatmul.mubr.bf16.gmra.mxu0 %v427
      %v961 = vpop.f32.mrf.mxu0
      %v962 = vadd.f32 0.0, %v961
      %v963 = vpop.f32.mrf.mxu0
      %v964 = vadd.f32 0.0, %v963
      %v965 = vpop.f32.mrf.mxu0
      %v966 = vadd.f32 0.0, %v965
      %v967 = vpop.f32.mrf.mxu0
      %v968 = vadd.f32 0.0, %v967
      %969 = vmatprep.mubr.bf16.mxu0 0
      %970 = vmatmul.mubr.bf16.gmra.mxu0 %v428
      %v971 = vpop.f32.mrf.mxu0
      %v972 = vadd.f32 0.0, %v971
      %v973 = vpop.f32.mrf.mxu0
      %v974 = vadd.f32 0.0, %v973
      %v975 = vpop.f32.mrf.mxu0
      %v976 = vadd.f32 0.0, %v975
      %v977 = vpop.f32.mrf.mxu0
      %v978 = vadd.f32 0.0, %v977
      %979 = vmatprep.mubr.bf16.mxu0 0
      %980 = vmatmul.mubr.bf16.gmra.mxu0 %v429
      %v981 = vpop.f32.mrf.mxu0
      %v982 = vadd.f32 0.0, %v981
      %v983 = vpop.f32.mrf.mxu0
      %v984 = vadd.f32 0.0, %v983
      %v985 = vpop.f32.mrf.mxu0
      %v986 = vadd.f32 0.0, %v985
      %v987 = vpop.f32.mrf.mxu0
      %v988 = vadd.f32 0.0, %v987
      %989 = vmatprep.mubr.bf16.mxu0 0
      %990 = vmatmul.mubr.bf16.gmra.mxu0 %v430
      %v991 = vpop.f32.mrf.mxu0
      %v992 = vadd.f32 0.0, %v991
      %v993 = vpop.f32.mrf.mxu0
      %v994 = vadd.f32 0.0, %v993
      %v995 = vpop.f32.mrf.mxu0
      %v996 = vadd.f32 0.0, %v995
      %v997 = vpop.f32.mrf.mxu0
      %v998 = vadd.f32 0.0, %v997
      %999 = vmatprep.mubr.bf16.mxu0 0
      %1000 = vmatmul.mubr.bf16.gmra.mxu0 %v431
      %v1001 = vpop.f32.mrf.mxu0
      %v1002 = vadd.f32 0.0, %v1001
      %v1003 = vpop.f32.mrf.mxu0
      %v1004 = vadd.f32 0.0, %v1003
      %v1005 = vpop.f32.mrf.mxu0
      %v1006 = vadd.f32 0.0, %v1005
      %v1007 = vpop.f32.mrf.mxu0
      %v1008 = vadd.f32 0.0, %v1007
      %1009 = vdwg.mxu0
      %1010 = vst [vmem:[%s264] sm:$0xff] %v659
      %1011 = vst [vmem:[%s264 + $0x8] sm:$0xff] %v661
      %1012 = vst [vmem:[%s264 + $0x10] sm:$0xff] %v852
      %1013 = vst [vmem:[%s264 + $0x18] sm:$0xff] %v854
      %1014 = vst [vmem:[%s264 + $0x20] sm:$0xff] %v663
      %1015 = vst [vmem:[%s264 + $0x28] sm:$0xff] %v665
      %1016 = vst [vmem:[%s264 + $0x30] sm:$0xff] %v856
      %1017 = vst [vmem:[%s264 + $0x38] sm:$0xff] %v858
      %1018 = vst [vmem:[%s264 + $0x40] sm:$0xff] %v669
      %1019 = vst [vmem:[%s264 + $0x48] sm:$0xff] %v671
      %1020 = vst [vmem:[%s264 + $0x50] sm:$0xff] %v862
      %1021 = vst [vmem:[%s264 + $0x58] sm:$0xff] %v864
      %1022 = vst [vmem:[%s264 + $0x60] sm:$0xff] %v673
      %1023 = vst [vmem:[%s264 + $0x68] sm:$0xff] %v675
      %1024 = vst [vmem:[%s264 + $0x70] sm:$0xff] %v866
      %1025 = vst [vmem:[%s264 + $0x78] sm:$0xff] %v868
      %1026 = vst [vmem:[%s264 + $0x80] sm:$0xff] %v679
      %1027 = vst [vmem:[%s264 + $0x88] sm:$0xff] %v681
      %1028 = vst [vmem:[%s264 + $0x90] sm:$0xff] %v872
      %1029 = vst [vmem:[%s264 + $0x98] sm:$0xff] %v874
      %1030 = vst [vmem:[%s264 + $0xa0] sm:$0xff] %v683
      %1031 = vst [vmem:[%s264 + $0xa8] sm:$0xff] %v685
      %1032 = vst [vmem:[%s264 + $0xb0] sm:$0xff] %v876
      %1033 = vst [vmem:[%s264 + $0xb8] sm:$0xff] %v878
      %1034 = vst [vmem:[%s264 + $0xc0] sm:$0xff] %v689
      %1035 = vst [vmem:[%s264 + $0xc8] sm:$0xff] %v691
      %1036 = vst [vmem:[%s264 + $0xd0] sm:$0xff] %v882
      %1037 = vst [vmem:[%s264 + $0xd8] sm:$0xff] %v884
      %1038 = vst [vmem:[%s264 + $0xe0] sm:$0xff] %v693
      %1039 = vst [vmem:[%s264 + $0xe8] sm:$0xff] %v695
      %1040 = vst [vmem:[%s264 + $0xf0] sm:$0xff] %v886
      %1041 = vst [vmem:[%s264 + $0xf8] sm:$0xff] %v888
      %1042 = vst [vmem:[%s264 + $0x100] sm:$0xff] %v699
      %1043 = vst [vmem:[%s264 + $0x108] sm:$0xff] %v701
      %1044 = vst [vmem:[%s264 + $0x110] sm:$0xff] %v892
      %1045 = vst [vmem:[%s264 + $0x118] sm:$0xff] %v894
      %1046 = vst [vmem:[%s264 + $0x120] sm:$0xff] %v703
      %1047 = vst [vmem:[%s264 + $0x128] sm:$0xff] %v705
      %1048 = vst [vmem:[%s264 + $0x130] sm:$0xff] %v896
      %1049 = vst [vmem:[%s264 + $0x138] sm:$0xff] %v898
      %1050 = vst [vmem:[%s264 + $0x140] sm:$0xff] %v709
      %1051 = vst [vmem:[%s264 + $0x148] sm:$0xff] %v711
      %1052 = vst [vmem:[%s264 + $0x150] sm:$0xff] %v902
      %1053 = vst [vmem:[%s264 + $0x158] sm:$0xff] %v904
      %1054 = vst [vmem:[%s264 + $0x160] sm:$0xff] %v713
      %1055 = vst [vmem:[%s264 + $0x168] sm:$0xff] %v715
      %1056 = vst [vmem:[%s264 + $0x170] sm:$0xff] %v906
      %1057 = vst [vmem:[%s264 + $0x178] sm:$0xff] %v908
      %1058 = vst [vmem:[%s264 + $0x180] sm:$0xff] %v719
      %1059 = vst [vmem:[%s264 + $0x188] sm:$0xff] %v721
      %1060 = vst [vmem:[%s264 + $0x190] sm:$0xff] %v912
      %1061 = vst [vmem:[%s264 + $0x198] sm:$0xff] %v914
      %1062 = vst [vmem:[%s264 + $0x1a0] sm:$0xff] %v723
      %1063 = vst [vmem:[%s264 + $0x1a8] sm:$0xff] %v725
      %1064 = vst [vmem:[%s264 + $0x1b0] sm:$0xff] %v916
      %1065 = vst [vmem:[%s264 + $0x1b8] sm:$0xff] %v918
      %1066 = vst [vmem:[%s264 + $0x1c0] sm:$0xff] %v729
      %1067 = vst [vmem:[%s264 + $0x1c8] sm:$0xff] %v731
      %1068 = vst [vmem:[%s264 + $0x1d0] sm:$0xff] %v922
      %1069 = vst [vmem:[%s264 + $0x1d8] sm:$0xff] %v924
      %1070 = vst [vmem:[%s264 + $0x1e0] sm:$0xff] %v733
      %1071 = vst [vmem:[%s264 + $0x1e8] sm:$0xff] %v735
      %1072 = vst [vmem:[%s264 + $0x1f0] sm:$0xff] %v926
      %1073 = vst [vmem:[%s264 + $0x1f8] sm:$0xff] %v928
      %1074 = vst [vmem:[%s264 + $0x200] sm:$0xff] %v739
      %1075 = vst [vmem:[%s264 + $0x208] sm:$0xff] %v741
      %1076 = vst [vmem:[%s264 + $0x210] sm:$0xff] %v932
      %1077 = vst [vmem:[%s264 + $0x218] sm:$0xff] %v934
      %1078 = vst [vmem:[%s264 + $0x220] sm:$0xff] %v743
      %1079 = vst [vmem:[%s264 + $0x228] sm:$0xff] %v745
      %1080 = vst [vmem:[%s264 + $0x230] sm:$0xff] %v936
      %1081 = vst [vmem:[%s264 + $0x238] sm:$0xff] %v938
      %1082 = vst [vmem:[%s264 + $0x240] sm:$0xff] %v749
      %1083 = vst [vmem:[%s264 + $0x248] sm:$0xff] %v751
      %1084 = vst [vmem:[%s264 + $0x250] sm:$0xff] %v942
      %1085 = vst [vmem:[%s264 + $0x258] sm:$0xff] %v944
      %1086 = vst [vmem:[%s264 + $0x260] sm:$0xff] %v753
      %1087 = vst [vmem:[%s264 + $0x268] sm:$0xff] %v755
      %1088 = vst [vmem:[%s264 + $0x270] sm:$0xff] %v946
      %1089 = vst [vmem:[%s264 + $0x278] sm:$0xff] %v948
      %1090 = vst [vmem:[%s264 + $0x280] sm:$0xff] %v759
      %1091 = vst [vmem:[%s264 + $0x288] sm:$0xff] %v761
      %1092 = vst [vmem:[%s264 + $0x290] sm:$0xff] %v952
      %1093 = vst [vmem:[%s264 + $0x298] sm:$0xff] %v954
      %1094 = vst [vmem:[%s264 + $0x2a0] sm:$0xff] %v763
      %1095 = vst [vmem:[%s264 + $0x2a8] sm:$0xff] %v765
      %1096 = vst [vmem:[%s264 + $0x2b0] sm:$0xff] %v956
      %1097 = vst [vmem:[%s264 + $0x2b8] sm:$0xff] %v958
      %1098 = vst [vmem:[%s264 + $0x2c0] sm:$0xff] %v769
      %1099 = vst [vmem:[%s264 + $0x2c8] sm:$0xff] %v771
      %1100 = vst [vmem:[%s264 + $0x2d0] sm:$0xff] %v962
      %1101 = vst [vmem:[%s264 + $0x2d8] sm:$0xff] %v964
      %1102 = vst [vmem:[%s264 + $0x2e0] sm:$0xff] %v773
      %1103 = vst [vmem:[%s264 + $0x2e8] sm:$0xff] %v775
      %1104 = vst [vmem:[%s264 + $0x2f0] sm:$0xff] %v966
      %1105 = vst [vmem:[%s264 + $0x2f8] sm:$0xff] %v968
      %1106 = vst [vmem:[%s264 + $0x300] sm:$0xff] %v779
      %1107 = vst [vmem:[%s264 + $0x308] sm:$0xff] %v781
      %1108 = vst [vmem:[%s264 + $0x310] sm:$0xff] %v972
      %1109 = vst [vmem:[%s264 + $0x318] sm:$0xff] %v974
      %1110 = vst [vmem:[%s264 + $0x320] sm:$0xff] %v783
      %1111 = vst [vmem:[%s264 + $0x328] sm:$0xff] %v785
      %1112 = vst [vmem:[%s264 + $0x330] sm:$0xff] %v976
      %1113 = vst [vmem:[%s264 + $0x338] sm:$0xff] %v978
      %1114 = vst [vmem:[%s264 + $0x340] sm:$0xff] %v789
      %1115 = vst [vmem:[%s264 + $0x348] sm:$0xff] %v791
      %1116 = vst [vmem:[%s264 + $0x350] sm:$0xff] %v982
      %1117 = vst [vmem:[%s264 + $0x358] sm:$0xff] %v984
      %1118 = vst [vmem:[%s264 + $0x360] sm:$0xff] %v793
      %1119 = vst [vmem:[%s264 + $0x368] sm:$0xff] %v795
      %1120 = vst [vmem:[%s264 + $0x370] sm:$0xff] %v986
      %1121 = vst [vmem:[%s264 + $0x378] sm:$0xff] %v988
      %1122 = vst [vmem:[%s264 + $0x380] sm:$0xff] %v799
      %1123 = vst [vmem:[%s264 + $0x388] sm:$0xff] %v801
      %1124 = vst [vmem:[%s264 + $0x390] sm:$0xff] %v992
      %1125 = vst [vmem:[%s264 + $0x398] sm:$0xff] %v994
      %1126 = vst [vmem:[%s264 + $0x3a0] sm:$0xff] %v803
      %1127 = vst [vmem:[%s264 + $0x3a8] sm:$0xff] %v805
      %1128 = vst [vmem:[%s264 + $0x3b0] sm:$0xff] %v996
      %1129 = vst [vmem:[%s264 + $0x3b8] sm:$0xff] %v998
      %1130 = vst [vmem:[%s264 + $0x3c0] sm:$0xff] %v809
      %1131 = vst [vmem:[%s264 + $0x3c8] sm:$0xff] %v811
      %1132 = vst [vmem:[%s264 + $0x3d0] sm:$0xff] %v1002
      %1133 = vst [vmem:[%s264 + $0x3d8] sm:$0xff] %v1004
      %1134 = vst [vmem:[%s264 + $0x3e0] sm:$0xff] %v813
      %1135 = vst [vmem:[%s264 + $0x3e8] sm:$0xff] %v815
      %1136 = vst [vmem:[%s264 + $0x3f0] sm:$0xff] %v1006
      %1137 = vst [vmem:[%s264 + $0x3f8] sm:$0xff] %v1008
      %v1138 = vadd.f32 %v659, %v663
      %v1139 = vadd.f32 %v1138, %v669
      %v1140 = vadd.f32 %v1139, %v673
      %v1141 = vadd.f32 %v1140, %v679
      %v1142 = vadd.f32 %v1141, %v683
      %v1143 = vadd.f32 %v1142, %v689
      %v1144 = vadd.f32 %v1143, %v693
      %v1145 = vadd.f32 %v1144, %v699
      %v1146 = vadd.f32 %v1145, %v703
      %v1147 = vadd.f32 %v1146, %v709
      %v1148 = vadd.f32 %v1147, %v713
      %v1149 = vadd.f32 %v1148, %v719
      %v1150 = vadd.f32 %v1149, %v723
      %v1151 = vadd.f32 %v1150, %v729
      %v1152 = vadd.f32 %v1151, %v733
      %v1153 = vadd.f32 %v1152, %v739
      %v1154 = vadd.f32 %v1153, %v743
      %v1155 = vadd.f32 %v1154, %v749
      %v1156 = vadd.f32 %v1155, %v753
      %v1157 = vadd.f32 %v1156, %v759
      %v1158 = vadd.f32 %v1157, %v763
      %v1159 = vadd.f32 %v1158, %v769
      %v1160 = vadd.f32 %v1159, %v773
      %v1161 = vadd.f32 %v1160, %v779
      %v1162 = vadd.f32 %v1161, %v783
      %v1163 = vadd.f32 %v1162, %v789
      %v1164 = vadd.f32 %v1163, %v793
      %v1165 = vadd.f32 %v1164, %v799
      %v1166 = vadd.f32 %v1165, %v803
      %v1167 = vadd.f32 %v1166, %v809
      %v1168 = vadd.f32 %v1167, %v813
      %v1169 = vrot.slane %v1168, 4
      %v1170 = vadd.f32 %v1168, %v1169
      %v1171 = vrot.slane %v1170, 2
      %v1172 = vadd.f32 %v1170, %v1171
      %v1173 = vrot.slane %v1172, 1
      %v1174 = vadd.f32 %v1172, %v1173
      %v1175 = vadd.f32 %v661, %v665
      %v1176 = vadd.f32 %v1175, %v671
      %v1177 = vadd.f32 %v1176, %v675
      %v1178 = vadd.f32 %v1177, %v681
      %v1179 = vadd.f32 %v1178, %v685
      %v1180 = vadd.f32 %v1179, %v691
      %v1181 = vadd.f32 %v1180, %v695
      %v1182 = vadd.f32 %v1181, %v701
      %v1183 = vadd.f32 %v1182, %v705
      %v1184 = vadd.f32 %v1183, %v711
      %v1185 = vadd.f32 %v1184, %v715
      %v1186 = vadd.f32 %v1185, %v721
      %v1187 = vadd.f32 %v1186, %v725
      %v1188 = vadd.f32 %v1187, %v731
      %v1189 = vadd.f32 %v1188, %v735
      %v1190 = vadd.f32 %v1189, %v741
      %v1191 = vadd.f32 %v1190, %v745
      %v1192 = vadd.f32 %v1191, %v751
      %v1193 = vadd.f32 %v1192, %v755
      %v1194 = vadd.f32 %v1193, %v761
      %v1195 = vadd.f32 %v1194, %v765
      %v1196 = vadd.f32 %v1195, %v771
      %v1197 = vadd.f32 %v1196, %v775
      %v1198 = vadd.f32 %v1197, %v781
      %v1199 = vadd.f32 %v1198, %v785
      %v1200 = vadd.f32 %v1199, %v791
      %v1201 = vadd.f32 %v1200, %v795
      %v1202 = vadd.f32 %v1201, %v801
      %v1203 = vadd.f32 %v1202, %v805
      %v1204 = vadd.f32 %v1203, %v811
      %v1205 = vadd.f32 %v1204, %v815
      %v1206 = vrot.slane %v1205, 4
      %v1207 = vadd.f32 %v1205, %v1206
      %v1208 = vrot.slane %v1207, 2
      %v1209 = vadd.f32 %v1207, %v1208
      %v1210 = vrot.slane %v1209, 1
      %v1211 = vadd.f32 %v1209, %v1210
      %v1212 = vadd.f32 %v852, %v856
      %v1213 = vadd.f32 %v1212, %v862
      %v1214 = vadd.f32 %v1213, %v866
      %v1215 = vadd.f32 %v1214, %v872
      %v1216 = vadd.f32 %v1215, %v876
      %v1217 = vadd.f32 %v1216, %v882
      %v1218 = vadd.f32 %v1217, %v886
      %v1219 = vadd.f32 %v1218, %v892
      %v1220 = vadd.f32 %v1219, %v896
      %v1221 = vadd.f32 %v1220, %v902
      %v1222 = vadd.f32 %v1221, %v906
      %v1223 = vadd.f32 %v1222, %v912
      %v1224 = vadd.f32 %v1223, %v916
      %v1225 = vadd.f32 %v1224, %v922
      %v1226 = vadd.f32 %v1225, %v926
      %v1227 = vadd.f32 %v1226, %v932
      %v1228 = vadd.f32 %v1227, %v936
      %v1229 = vadd.f32 %v1228, %v942
      %v1230 = vadd.f32 %v1229, %v946
      %v1231 = vadd.f32 %v1230, %v952
      %v1232 = vadd.f32 %v1231, %v956
      %v1233 = vadd.f32 %v1232, %v962
      %v1234 = vadd.f32 %v1233, %v966
      %v1235 = vadd.f32 %v1234, %v972
      %v1236 = vadd.f32 %v1235, %v976
      %v1237 = vadd.f32 %v1236, %v982
      %v1238 = vadd.f32 %v1237, %v986
      %v1239 = vadd.f32 %v1238, %v992
      %v1240 = vadd.f32 %v1239, %v996
      %v1241 = vadd.f32 %v1240, %v1002
      %v1242 = vadd.f32 %v1241, %v1006
      %v1243 = vrot.slane %v1242, 4
      %v1244 = vadd.f32 %v1242, %v1243
      %v1245 = vrot.slane %v1244, 2
      %v1246 = vadd.f32 %v1244, %v1245
      %v1247 = vrot.slane %v1246, 1
      %v1248 = vadd.f32 %v1246, %v1247
      %v1249 = vadd.f32 %v854, %v858
      %v1250 = vadd.f32 %v1249, %v864
      %v1251 = vadd.f32 %v1250, %v868
      %v1252 = vadd.f32 %v1251, %v874
      %v1253 = vadd.f32 %v1252, %v878
      %v1254 = vadd.f32 %v1253, %v884
      %v1255 = vadd.f32 %v1254, %v888
      %v1256 = vadd.f32 %v1255, %v894
      %v1257 = vadd.f32 %v1256, %v898
      %v1258 = vadd.f32 %v1257, %v904
      %v1259 = vadd.f32 %v1258, %v908
      %v1260 = vadd.f32 %v1259, %v914
      %v1261 = vadd.f32 %v1260, %v918
      %v1262 = vadd.f32 %v1261, %v924
      %v1263 = vadd.f32 %v1262, %v928
      %v1264 = vadd.f32 %v1263, %v934
      %v1265 = vadd.f32 %v1264, %v938
      %v1266 = vadd.f32 %v1265, %v944
      %v1267 = vadd.f32 %v1266, %v948
      %v1268 = vadd.f32 %v1267, %v954
      %v1269 = vadd.f32 %v1268, %v958
      %v1270 = vadd.f32 %v1269, %v964
      %v1271 = vadd.f32 %v1270, %v968
      %v1272 = vadd.f32 %v1271, %v974
      %v1273 = vadd.f32 %v1272, %v978
      %v1274 = vadd.f32 %v1273, %v984
      %v1275 = vadd.f32 %v1274, %v988
      %v1276 = vadd.f32 %v1275, %v994
      %v1277 = vadd.f32 %v1276, %v998
      %v1278 = vadd.f32 %v1277, %v1004
      %v1279 = vadd.f32 %v1278, %v1008
      %v1280 = vrot.slane %v1279, 4
      %v1281 = vadd.f32 %v1279, %v1280
      %v1282 = vrot.slane %v1281, 2
      %v1283 = vadd.f32 %v1281, %v1282
      %v1284 = vrot.slane %v1283, 1
      %v1285 = vadd.f32 %v1283, %v1284
      %v1290 = vcombine.low %v1174, %v1211
      %v1291 = vcombine.low %v1248, %v1285
      %v1293 = vunpack.c.l.s4 1966171168
      %v1294 = vunpack.c.0.s8 %v1293
      %v1295 = vlaneseq
      %v1296 = vshrl.u32 %v1295, 7
      %v1297 = vsub.s32 %v1294, %v1296
      %v1298 = vrot.slane %v1290, %v1297
      %v1300 = vunpack.c.l.s4 1966171168
      %v1301 = vunpack.c.0.s8 %v1300
      %v1302 = vlaneseq
      %v1303 = vshrl.u32 %v1302, 7
      %v1304 = vsub.s32 %v1301, %v1303
      %v1305 = vrot.slane %v1291, %v1304
      %v1306 = vcombine.low %v1298, %v1305
      %v1308 = vunpack.c.l.s4 1966171168
      %v1309 = vunpack.c.0.s8 %v1308
      %v1310 = vlaneseq
      %v1311 = vshrl.u32 %v1310, 7
      %v1312 = vsub.s32 %v1309, %v1311
      %v1313 = vrot.slane %v1306, %v1312
      %v1315 = vlaneseq
      %vm1316 = vcmp.ge.s32.totalorder %v1315, 0
      %vm1317 = vcmp.lt.s32.totalorder %v1315, 512
      %vm1318 = vmand %vm1316, %vm1317
      %1319 = vst.msk [vmem:[%s268] sm:$0xf] %vm1318, %v1313
      %v1320 = vmul.f32 %v659, %v659
      %v1321 = vmul.f32 %v661, %v661
      %v1322 = vmul.f32 %v852, %v852
      %v1323 = vmul.f32 %v854, %v854
      %v1324 = vmul.f32 %v663, %v663
      %v1325 = vmul.f32 %v665, %v665
      %v1326 = vmul.f32 %v856, %v856
      %v1327 = vmul.f32 %v858, %v858
      %v1328 = vmul.f32 %v669, %v669
      %v1329 = vmul.f32 %v671, %v671
      %v1330 = vmul.f32 %v862, %v862
      %v1331 = vmul.f32 %v864, %v864
      %v1332 = vmul.f32 %v673, %v673
      %v1333 = vmul.f32 %v675, %v675
      %v1334 = vmul.f32 %v866, %v866
      %v1335 = vmul.f32 %v868, %v868
      %v1336 = vmul.f32 %v679, %v679
      %v1337 = vmul.f32 %v681, %v681
      %v1338 = vmul.f32 %v872, %v872
      %v1339 = vmul.f32 %v874, %v874
      %v1340 = vmul.f32 %v683, %v683
      %v1341 = vmul.f32 %v685, %v685
      %v1342 = vmul.f32 %v876, %v876
      %v1343 = vmul.f32 %v878, %v878
      %v1344 = vmul.f32 %v689, %v689
      %v1345 = vmul.f32 %v691, %v691
      %v1346 = vmul.f32 %v882, %v882
      %v1347 = vmul.f32 %v884, %v884
      %v1348 = vmul.f32 %v693, %v693
      %v1349 = vmul.f32 %v695, %v695
      %v1350 = vmul.f32 %v886, %v886
      %v1351 = vmul.f32 %v888, %v888
      %v1352 = vmul.f32 %v699, %v699
      %v1353 = vmul.f32 %v701, %v701
      %v1354 = vmul.f32 %v892, %v892
      %v1355 = vmul.f32 %v894, %v894
      %v1356 = vmul.f32 %v703, %v703
      %v1357 = vmul.f32 %v705, %v705
      %v1358 = vmul.f32 %v896, %v896
      %v1359 = vmul.f32 %v898, %v898
      %v1360 = vmul.f32 %v709, %v709
      %v1361 = vmul.f32 %v711, %v711
      %v1362 = vmul.f32 %v902, %v902
      %v1363 = vmul.f32 %v904, %v904
      %v1364 = vmul.f32 %v713, %v713
      %v1365 = vmul.f32 %v715, %v715
      %v1366 = vmul.f32 %v906, %v906
      %v1367 = vmul.f32 %v908, %v908
      %v1368 = vmul.f32 %v719, %v719
      %v1369 = vmul.f32 %v721, %v721
      %v1370 = vmul.f32 %v912, %v912
      %v1371 = vmul.f32 %v914, %v914
      %v1372 = vmul.f32 %v723, %v723
      %v1373 = vmul.f32 %v725, %v725
      %v1374 = vmul.f32 %v916, %v916
      %v1375 = vmul.f32 %v918, %v918
      %v1376 = vmul.f32 %v729, %v729
      %v1377 = vmul.f32 %v731, %v731
      %v1378 = vmul.f32 %v922, %v922
      %v1379 = vmul.f32 %v924, %v924
      %v1380 = vmul.f32 %v733, %v733
      %v1381 = vmul.f32 %v735, %v735
      %v1382 = vmul.f32 %v926, %v926
      %v1383 = vmul.f32 %v928, %v928
      %v1384 = vmul.f32 %v739, %v739
      %v1385 = vmul.f32 %v741, %v741
      %v1386 = vmul.f32 %v932, %v932
      %v1387 = vmul.f32 %v934, %v934
      %v1388 = vmul.f32 %v743, %v743
      %v1389 = vmul.f32 %v745, %v745
      %v1390 = vmul.f32 %v936, %v936
      %v1391 = vmul.f32 %v938, %v938
      %v1392 = vmul.f32 %v749, %v749
      %v1393 = vmul.f32 %v751, %v751
      %v1394 = vmul.f32 %v942, %v942
      %v1395 = vmul.f32 %v944, %v944
      %v1396 = vmul.f32 %v753, %v753
      %v1397 = vmul.f32 %v755, %v755
      %v1398 = vmul.f32 %v946, %v946
      %v1399 = vmul.f32 %v948, %v948
      %v1400 = vmul.f32 %v759, %v759
      %v1401 = vmul.f32 %v761, %v761
      %v1402 = vmul.f32 %v952, %v952
      %v1403 = vmul.f32 %v954, %v954
      %v1404 = vmul.f32 %v763, %v763
      %v1405 = vmul.f32 %v765, %v765
      %v1406 = vmul.f32 %v956, %v956
      %v1407 = vmul.f32 %v958, %v958
      %v1408 = vmul.f32 %v769, %v769
      %v1409 = vmul.f32 %v771, %v771
      %v1410 = vmul.f32 %v962, %v962
      %v1411 = vmul.f32 %v964, %v964
      %v1412 = vmul.f32 %v773, %v773
      %v1413 = vmul.f32 %v775, %v775
      %v1414 = vmul.f32 %v966, %v966
      %v1415 = vmul.f32 %v968, %v968
      %v1416 = vmul.f32 %v779, %v779
      %v1417 = vmul.f32 %v781, %v781
      %v1418 = vmul.f32 %v972, %v972
      %v1419 = vmul.f32 %v974, %v974
      %v1420 = vmul.f32 %v783, %v783
      %v1421 = vmul.f32 %v785, %v785
      %v1422 = vmul.f32 %v976, %v976
      %v1423 = vmul.f32 %v978, %v978
      %v1424 = vmul.f32 %v789, %v789
      %v1425 = vmul.f32 %v791, %v791
      %v1426 = vmul.f32 %v982, %v982
      %v1427 = vmul.f32 %v984, %v984
      %v1428 = vmul.f32 %v793, %v793
      %v1429 = vmul.f32 %v795, %v795
      %v1430 = vmul.f32 %v986, %v986
      %v1431 = vmul.f32 %v988, %v988
      %v1432 = vmul.f32 %v799, %v799
      %v1433 = vmul.f32 %v801, %v801
      %v1434 = vmul.f32 %v992, %v992
      %v1435 = vmul.f32 %v994, %v994
      %v1436 = vmul.f32 %v803, %v803
      %v1437 = vmul.f32 %v805, %v805
      %v1438 = vmul.f32 %v996, %v996
      %v1439 = vmul.f32 %v998, %v998
      %v1440 = vmul.f32 %v809, %v809
      %v1441 = vmul.f32 %v811, %v811
      %v1442 = vmul.f32 %v1002, %v1002
      %v1443 = vmul.f32 %v1004, %v1004
      %v1444 = vmul.f32 %v813, %v813
      %v1445 = vmul.f32 %v815, %v815
      %v1446 = vmul.f32 %v1006, %v1006
      %v1447 = vmul.f32 %v1008, %v1008
      %v1448 = vadd.f32 %v1320, %v1324
      %v1449 = vadd.f32 %v1448, %v1328
      %v1450 = vadd.f32 %v1449, %v1332
      %v1451 = vadd.f32 %v1450, %v1336
      %v1452 = vadd.f32 %v1451, %v1340
      %v1453 = vadd.f32 %v1452, %v1344
      %v1454 = vadd.f32 %v1453, %v1348
      %v1455 = vadd.f32 %v1454, %v1352
      %v1456 = vadd.f32 %v1455, %v1356
      %v1457 = vadd.f32 %v1456, %v1360
      %v1458 = vadd.f32 %v1457, %v1364
      %v1459 = vadd.f32 %v1458, %v1368
      %v1460 = vadd.f32 %v1459, %v1372
      %v1461 = vadd.f32 %v1460, %v1376
      %v1462 = vadd.f32 %v1461, %v1380
      %v1463 = vadd.f32 %v1462, %v1384
      %v1464 = vadd.f32 %v1463, %v1388
      %v1465 = vadd.f32 %v1464, %v1392
      %v1466 = vadd.f32 %v1465, %v1396
      %v1467 = vadd.f32 %v1466, %v1400
      %v1468 = vadd.f32 %v1467, %v1404
      %v1469 = vadd.f32 %v1468, %v1408
      %v1470 = vadd.f32 %v1469, %v1412
      %v1471 = vadd.f32 %v1470, %v1416
      %v1472 = vadd.f32 %v1471, %v1420
      %v1473 = vadd.f32 %v1472, %v1424
      %v1474 = vadd.f32 %v1473, %v1428
      %v1475 = vadd.f32 %v1474, %v1432
      %v1476 = vadd.f32 %v1475, %v1436
      %v1477 = vadd.f32 %v1476, %v1440
      %v1478 = vadd.f32 %v1477, %v1444
      %v1479 = vrot.slane %v1478, 4
      %v1480 = vadd.f32 %v1478, %v1479
      %v1481 = vrot.slane %v1480, 2
      %v1482 = vadd.f32 %v1480, %v1481
      %v1483 = vrot.slane %v1482, 1
      %v1484 = vadd.f32 %v1482, %v1483
      %v1485 = vadd.f32 %v1321, %v1325
      %v1486 = vadd.f32 %v1485, %v1329
      %v1487 = vadd.f32 %v1486, %v1333
      %v1488 = vadd.f32 %v1487, %v1337
      %v1489 = vadd.f32 %v1488, %v1341
      %v1490 = vadd.f32 %v1489, %v1345
      %v1491 = vadd.f32 %v1490, %v1349
      %v1492 = vadd.f32 %v1491, %v1353
      %v1493 = vadd.f32 %v1492, %v1357
      %v1494 = vadd.f32 %v1493, %v1361
      %v1495 = vadd.f32 %v1494, %v1365
      %v1496 = vadd.f32 %v1495, %v1369
      %v1497 = vadd.f32 %v1496, %v1373
      %v1498 = vadd.f32 %v1497, %v1377
      %v1499 = vadd.f32 %v1498, %v1381
      %v1500 = vadd.f32 %v1499, %v1385
      %v1501 = vadd.f32 %v1500, %v1389
      %v1502 = vadd.f32 %v1501, %v1393
      %v1503 = vadd.f32 %v1502, %v1397
      %v1504 = vadd.f32 %v1503, %v1401
      %v1505 = vadd.f32 %v1504, %v1405
      %v1506 = vadd.f32 %v1505, %v1409
      %v1507 = vadd.f32 %v1506, %v1413
      %v1508 = vadd.f32 %v1507, %v1417
      %v1509 = vadd.f32 %v1508, %v1421
      %v1510 = vadd.f32 %v1509, %v1425
      %v1511 = vadd.f32 %v1510, %v1429
      %v1512 = vadd.f32 %v1511, %v1433
      %v1513 = vadd.f32 %v1512, %v1437
      %v1514 = vadd.f32 %v1513, %v1441
      %v1515 = vadd.f32 %v1514, %v1445
      %v1516 = vrot.slane %v1515, 4
      %v1517 = vadd.f32 %v1515, %v1516
      %v1518 = vrot.slane %v1517, 2
      %v1519 = vadd.f32 %v1517, %v1518
      %v1520 = vrot.slane %v1519, 1
      %v1521 = vadd.f32 %v1519, %v1520
      %v1522 = vadd.f32 %v1322, %v1326
      %v1523 = vadd.f32 %v1522, %v1330
      %v1524 = vadd.f32 %v1523, %v1334
      %v1525 = vadd.f32 %v1524, %v1338
      %v1526 = vadd.f32 %v1525, %v1342
      %v1527 = vadd.f32 %v1526, %v1346
      %v1528 = vadd.f32 %v1527, %v1350
      %v1529 = vadd.f32 %v1528, %v1354
      %v1530 = vadd.f32 %v1529, %v1358
      %v1531 = vadd.f32 %v1530, %v1362
      %v1532 = vadd.f32 %v1531, %v1366
      %v1533 = vadd.f32 %v1532, %v1370
      %v1534 = vadd.f32 %v1533, %v1374
      %v1535 = vadd.f32 %v1534, %v1378
      %v1536 = vadd.f32 %v1535, %v1382
      %v1537 = vadd.f32 %v1536, %v1386
      %v1538 = vadd.f32 %v1537, %v1390
      %v1539 = vadd.f32 %v1538, %v1394
      %v1540 = vadd.f32 %v1539, %v1398
      %v1541 = vadd.f32 %v1540, %v1402
      %v1542 = vadd.f32 %v1541, %v1406
      %v1543 = vadd.f32 %v1542, %v1410
      %v1544 = vadd.f32 %v1543, %v1414
      %v1545 = vadd.f32 %v1544, %v1418
      %v1546 = vadd.f32 %v1545, %v1422
      %v1547 = vadd.f32 %v1546, %v1426
      %v1548 = vadd.f32 %v1547, %v1430
      %v1549 = vadd.f32 %v1548, %v1434
      %v1550 = vadd.f32 %v1549, %v1438
      %v1551 = vadd.f32 %v1550, %v1442
      %v1552 = vadd.f32 %v1551, %v1446
      %v1553 = vrot.slane %v1552, 4
      %v1554 = vadd.f32 %v1552, %v1553
      %v1555 = vrot.slane %v1554, 2
      %v1556 = vadd.f32 %v1554, %v1555
      %v1557 = vrot.slane %v1556, 1
      %v1558 = vadd.f32 %v1556, %v1557
      %v1559 = vadd.f32 %v1323, %v1327
      %v1560 = vadd.f32 %v1559, %v1331
      %v1561 = vadd.f32 %v1560, %v1335
      %v1562 = vadd.f32 %v1561, %v1339
      %v1563 = vadd.f32 %v1562, %v1343
      %v1564 = vadd.f32 %v1563, %v1347
      %v1565 = vadd.f32 %v1564, %v1351
      %v1566 = vadd.f32 %v1565, %v1355
      %v1567 = vadd.f32 %v1566, %v1359
      %v1568 = vadd.f32 %v1567, %v1363
      %v1569 = vadd.f32 %v1568, %v1367
      %v1570 = vadd.f32 %v1569, %v1371
      %v1571 = vadd.f32 %v1570, %v1375
      %v1572 = vadd.f32 %v1571, %v1379
      %v1573 = vadd.f32 %v1572, %v1383
      %v1574 = vadd.f32 %v1573, %v1387
      %v1575 = vadd.f32 %v1574, %v1391
      %v1576 = vadd.f32 %v1575, %v1395
      %v1577 = vadd.f32 %v1576, %v1399
      %v1578 = vadd.f32 %v1577, %v1403
      %v1579 = vadd.f32 %v1578, %v1407
      %v1580 = vadd.f32 %v1579, %v1411
      %v1581 = vadd.f32 %v1580, %v1415
      %v1582 = vadd.f32 %v1581, %v1419
      %v1583 = vadd.f32 %v1582, %v1423
      %v1584 = vadd.f32 %v1583, %v1427
      %v1585 = vadd.f32 %v1584, %v1431
      %v1586 = vadd.f32 %v1585, %v1435
      %v1587 = vadd.f32 %v1586, %v1439
      %v1588 = vadd.f32 %v1587, %v1443
      %v1589 = vadd.f32 %v1588, %v1447
      %v1590 = vrot.slane %v1589, 4
      %v1591 = vadd.f32 %v1589, %v1590
      %v1592 = vrot.slane %v1591, 2
      %v1593 = vadd.f32 %v1591, %v1592
      %v1594 = vrot.slane %v1593, 1
      %v1595 = vadd.f32 %v1593, %v1594
      %v1600 = vcombine.low %v1484, %v1521
      %v1601 = vcombine.low %v1558, %v1595
      %v1603 = vunpack.c.l.s4 1966171168
      %v1604 = vunpack.c.0.s8 %v1603
      %v1605 = vlaneseq
      %v1606 = vshrl.u32 %v1605, 7
      %v1607 = vsub.s32 %v1604, %v1606
      %v1608 = vrot.slane %v1600, %v1607
      %v1610 = vunpack.c.l.s4 1966171168
      %v1611 = vunpack.c.0.s8 %v1610
      %v1612 = vlaneseq
      %v1613 = vshrl.u32 %v1612, 7
      %v1614 = vsub.s32 %v1611, %v1613
      %v1615 = vrot.slane %v1601, %v1614
      %v1616 = vcombine.low %v1608, %v1615
      %v1618 = vunpack.c.l.s4 1966171168
      %v1619 = vunpack.c.0.s8 %v1618
      %v1620 = vlaneseq
      %v1621 = vshrl.u32 %v1620, 7
      %v1622 = vsub.s32 %v1619, %v1621
      %v1623 = vrot.slane %v1616, %v1622
      %1625 = vst.msk [vmem:[%s272] sm:$0xf] %vm1318, %v1623
      %p1626 = scmp.lt.s32.totalorder %s18, 1
      %s1627 = scalar_select %p1626, %s18, 1
      %s1628 = smul.addr %s1627, 128
      %s1629 = smul.addr %s1628, 8
      %s1630 = scalar_lea.vmem %s4, %s1629
      %p1631 = scmp.lt.s32.totalorder %s18, 1
      %s1632 = scalar_select %p1631, %s18, 1
      %s1633 = smul.addr %s1632, 4
      %s1634 = scalar_lea.vmem %s5, %s1633
      %p1635 = scmp.lt.s32.totalorder %s18, 1
      %s1636 = scalar_select %p1635, %s18, 1
      %s1637 = smul.addr %s1636, 4
      %s1638 = scalar_lea.vmem %s6, %s1637
      // Predicated region
      $region37: #{bottleneck_forward.6} parent=35 // pred_check
        %p1639 = pneg %p125
      $region38: #{bottleneck_forward.6} parent=35 // pred_check_branch
        %1641 = sbr.rel (%p1639) target = $region40
      $region39: #{bottleneck_forward.6} parent=35 // pred_region
        _
      $region40: #{bottleneck_forward.6} parent=35 // pred_fallthru
        _
      // Predicated region
      $region41: #{bottleneck_forward.6} parent=35 // pred_check
        %p1642 = pneg %p151
      $region42: #{bottleneck_forward.6} parent=35 // pred_check_branch
        %1644 = sbr.rel (%p1642) target = $region44
      $region43: #{bottleneck_forward.6} parent=35 // pred_region
        _
      $region44: #{bottleneck_forward.6} parent=35 // pred_fallthru
        _
      // Predicated region
      $region45: #{bottleneck_forward.6} parent=35 // pred_check
        %p1645 = pneg %p177
      $region46: #{bottleneck_forward.6} parent=35 // pred_check_branch
        %1647 = sbr.rel (%p1645) target = $region48
      $region47: #{bottleneck_forward.6} parent=35 // pred_region
        _
      $region48: #{bottleneck_forward.6} parent=35 // pred_fallthru
        _
    $region36: #{bottleneck_forward.6} parent=5 // pred_fallthru
      _
    %p1648 = scmp.le.s32.totalorder 2, %s13
    // Predicated region
    $region49: #{bottleneck_forward.6} parent=5 // pred_check
      %p1649 = pneg %p1648
    $region50: #{bottleneck_forward.6} parent=5 // pred_check_branch
      %1651 = sbr.rel (%p1649) target = $region52
    $region51: #{bottleneck_forward.6} parent=5 // pred_region
      %s1652 = ssub.s32 %s13, 2
      // Predicated region
      $region53: #{bottleneck_forward.6} parent=51 // pred_check
        %p1653 = pneg %p131
      $region54: #{bottleneck_forward.6} parent=51 // pred_check_branch
        %1655 = sbr.rel (%p1653) target = $region56
      $region55: #{bottleneck_forward.6} parent=51 // pred_region
        %p1656 = scmp.lt.s32.totalorder %s19, 1
        %s1657 = scalar_select %p1656, %s19, 1
        %s1658 = smul.addr %s1657, 128
        %s1659 = smul.addr %s1658, 8
        %s1660 = scalar_lea.vmem %s4, %s1659
      $region56: #{bottleneck_forward.6} parent=51 // pred_fallthru
        _
      // Predicated region
      $region57: #{bottleneck_forward.6} parent=51 // pred_check
        %p1661 = pneg %p157
      $region58: #{bottleneck_forward.6} parent=51 // pred_check_branch
        %1663 = sbr.rel (%p1661) target = $region60
      $region59: #{bottleneck_forward.6} parent=51 // pred_region
        %p1664 = scmp.lt.s32.totalorder %s19, 1
        %s1665 = scalar_select %p1664, %s19, 1
        %s1666 = smul.addr %s1665, 4
        %s1667 = scalar_lea.vmem %s5, %s1666
      $region60: #{bottleneck_forward.6} parent=51 // pred_fallthru
        _
      // Predicated region
      $region61: #{bottleneck_forward.6} parent=51 // pred_check
        %p1668 = pneg %p183
      $region62: #{bottleneck_forward.6} parent=51 // pred_check_branch
        %1670 = sbr.rel (%p1668) target = $region64
      $region63: #{bottleneck_forward.6} parent=51 // pred_region
        %p1671 = scmp.lt.s32.totalorder %s19, 1
        %s1672 = scalar_select %p1671, %s19, 1
        %s1673 = smul.addr %s1672, 4
        %s1674 = scalar_lea.vmem %s6, %s1673
      $region64: #{bottleneck_forward.6} parent=51 // pred_fallthru
        _
    $region52: #{bottleneck_forward.6} parent=5 // pred_fallthru
      _
  $region6: #{bottleneck_forward.6} parent=0 // loop_footer
    %s17 = sadd.s32 1, %s13
  $region7: #{bottleneck_forward.6} parent=0 // loop_footer_branch
    %12 = sbr.rel target = $region3
  $region8: #{bottleneck_forward.6} parent=0 // loop_exit
    _

// kernel: bottleneck_forward.7
$region0: #{bottleneck_forward.7}
  #allocation0 [shape = 'u32[]', space=smem, size = 0x4, offset = 0x4, fixed_abs, tag = 'smem constant byte address 0x4 - core index']
  #allocation1 [shape = 'u32[144,128]{1,0:T(1,128)}', space=vmem, size = 0x12000, scoped, tag = 'internal scratch']
  %s0 = inlined_call_operand.vmem [shape: f32[2,16,16,512], index: 0, kind: input, shape index: {}]
  %s1 = inlined_call_operand.vmem [shape: f32[2,16,16,512], index: 1, kind: input, shape index: {}]
  %s2 = inlined_call_operand.vmem [shape: f32[1,512], index: 2, kind: input, shape index: {}]
  %s3 = inlined_call_operand.vmem [shape: f32[1,512], index: 3, kind: input, shape index: {}]
  %s4 = inlined_call_operand.hbm [shape: f32[2,16,16,512], index: 4, kind: output, shape index: {}]
  %s5 = sld [smem:[#allocation0]]
  $region49: #{bottleneck_forward.7} parent=0
    _
  %s7 = ssub.s32 1, %s5
  %s8 = scalar_select 0, %s7, %s5
  $region1: #{bottleneck_forward.7} parent=0
    #allocation2 [shape = 'u8[1048576]{0}', space=vmem, size = 0x100000, scoped, tag = 'output window, operand 0']
    #allocation3 [shape = 's32[2]{0}', space=sflag, size = 0x8, scoped, tag = 'scoped memory for bottleneck_forward.7']
    %9 = vsyncpa [#allocation3], 0
    %s10 = scalar_lea.sflag [#allocation3], 1
    %11 = vsyncpa %s10, 0
    loop: start=0, step=1, limit=4
    $region2: #{bottleneck_forward.7} parent=1 // loop_pre_header
      _
    $region3: #{bottleneck_forward.7} parent=1 // loop_header
      %s13 = sphi 0, %s17
      %p14 = scmp.ge.s32.totalorder %s13, 4
      %s23 = sphi 0, %s25
      %s26 = sphi 0, %s23
      %s27 = sphi 0, %s26
      %s43 = sphi 0, %s27
      %s49 = sphi 0, %s51
      %s52 = sphi 0, %s49
      %s53 = sphi 0, %s52
      %s69 = sphi 0, %s53
      %s73 = sphi 0, %s73
      %s75 = sphi 0, %s73
      %s76 = sphi 0, %s75
      %s90 = sphi 0, %s76
      %s94 = sphi 0, %s94
      %s96 = sphi 0, %s94
      %s97 = sphi 0, %s96
      %s111 = sphi 0, %s97
      %s117 = sphi 0, %s119
      %s120 = sphi 0, %s117
      %s121 = sphi 0, %s120
      %s137 = sphi 0, %s121
    $region4: #{bottleneck_forward.7} parent=1 // loop_header_branch
      %16 = sbr.rel (%p14) target = $region8
    $region5: #{bottleneck_forward.7} parent=1 // loop_body
      %s18 = ssub.s32 %s13, 1
      %s19 = ssub.s32 %s13, 2
      %s20 = sadd.s32 %s13, 1
      %s21 = ssub.s32 %s13, %s20
      %p22 = scmp.eq.s32.totalorder %s21, 0
      %s24 = sadd.s32 %s23, 1
      %s25 = scalar_select %p22, %s23, %s24
      %p28 = pneg %p22
      %p29 = scmp.eq.s32.totalorder %s13, 1
      %p30 = por %p28, %p29
      %p31 = scmp.ne.s32.totalorder %s23, %s26
      %p32 = scmp.eq.s32.totalorder %s13, 0
      %p33 = por %p31, %p32
      %p34 = scmp.ne.s32.totalorder %s23, %s26
      %p35 = scmp.eq.s32.totalorder %s18, 1
      %p36 = por %p34, %p35
      %p37 = scmp.ne.s32.totalorder %s26, %s27
      %p38 = scmp.eq.s32.totalorder %s18, 0
      %p39 = por %p37, %p38
      %p40 = scmp.ne.s32.totalorder %s26, %s27
      %p41 = scmp.eq.s32.totalorder %s19, 1
      %p42 = por %p40, %p41
      %p44 = scmp.ne.s32.totalorder %s27, %s43
      %p45 = scmp.eq.s32.totalorder %s19, 0
      %p46 = por %p44, %p45
      %s47 = ssub.s32 %s13, %s20
      %p48 = scmp.eq.s32.totalorder %s47, 0
      %s50 = sadd.s32 %s49, 1
      %s51 = scalar_select %p48, %s49, %s50
      %p54 = pneg %p48
      %p55 = scmp.eq.s32.totalorder %s13, 1
      %p56 = por %p54, %p55
      %p57 = scmp.ne.s32.totalorder %s49, %s52
      %p58 = scmp.eq.s32.totalorder %s13, 0
      %p59 = por %p57, %p58
      %p60 = scmp.ne.s32.totalorder %s49, %s52
      %p61 = scmp.eq.s32.totalorder %s18, 1
      %p62 = por %p60, %p61
      %p63 = scmp.ne.s32.totalorder %s52, %s53
      %p64 = scmp.eq.s32.totalorder %s18, 0
      %p65 = por %p63, %p64
      %p66 = scmp.ne.s32.totalorder %s52, %s53
      %p67 = scmp.eq.s32.totalorder %s19, 1
      %p68 = por %p66, %p67
      %p70 = scmp.ne.s32.totalorder %s53, %s69
      %p71 = scmp.eq.s32.totalorder %s19, 0
      %p72 = por %p70, %p71
      %s74 = sadd.s32 %s73, 1
      %p77 = scmp.eq.s32.totalorder %s13, 1
      %p78 = scmp.ne.s32.totalorder %s73, %s75
      %p79 = scmp.eq.s32.totalorder %s13, 0
      %p80 = por %p78, %p79
      %p81 = scmp.ne.s32.totalorder %s73, %s75
      %p82 = scmp.eq.s32.totalorder %s18, 1
      %p83 = por %p81, %p82
      %p84 = scmp.ne.s32.totalorder %s75, %s76
      %p85 = scmp.eq.s32.totalorder %s18, 0
      %p86 = por %p84, %p85
      %p87 = scmp.ne.s32.totalorder %s75, %s76
      %p88 = scmp.eq.s32.totalorder %s19, 1
      %p89 = por %p87, %p88
      %p91 = scmp.ne.s32.totalorder %s76, %s90
      %p92 = scmp.eq.s32.totalorder %s19, 0
      %p93 = por %p91, %p92
      %s95 = sadd.s32 %s94, 1
      %p98 = scmp.eq.s32.totalorder %s13, 1
      %p99 = scmp.ne.s32.totalorder %s94, %s96
      %p100 = scmp.eq.s32.totalorder %s13, 0
      %p101 = por %p99, %p100
      %p102 = scmp.ne.s32.totalorder %s94, %s96
      %p103 = scmp.eq.s32.totalorder %s18, 1
      %p104 = por %p102, %p103
      %p105 = scmp.ne.s32.totalorder %s96, %s97
      %p106 = scmp.eq.s32.totalorder %s18, 0
      %p107 = por %p105, %p106
      %p108 = scmp.ne.s32.totalorder %s96, %s97
      %p109 = scmp.eq.s32.totalorder %s19, 1
      %p110 = por %p108, %p109
      %p112 = scmp.ne.s32.totalorder %s97, %s111
      %p113 = scmp.eq.s32.totalorder %s19, 0
      %p114 = por %p112, %p113
      %s115 = ssub.s32 %s13, %s20
      %p116 = scmp.eq.s32.totalorder %s115, 0
      %s118 = sadd.s32 %s117, 1
      %s119 = scalar_select %p116, %s117, %s118
      %p122 = pneg %p116
      %p123 = scmp.eq.s32.totalorder %s13, 1
      %p124 = por %p122, %p123
      %p125 = scmp.ne.s32.totalorder %s117, %s120
      %p126 = scmp.eq.s32.totalorder %s13, 0
      %p127 = por %p125, %p126
      %p128 = scmp.ne.s32.totalorder %s117, %s120
      %p129 = scmp.eq.s32.totalorder %s18, 1
      %p130 = por %p128, %p129
      %p131 = scmp.ne.s32.totalorder %s120, %s121
      %p132 = scmp.eq.s32.totalorder %s18, 0
      %p133 = por %p131, %p132
      %p134 = scmp.ne.s32.totalorder %s120, %s121
      %p135 = scmp.eq.s32.totalorder %s19, 1
      %p136 = por %p134, %p135
      %p138 = scmp.ne.s32.totalorder %s121, %s137
      %p139 = scmp.eq.s32.totalorder %s19, 0
      %p140 = por %p138, %p139
      %p141 = scmp.le.s32.totalorder 1, %s13
      %p142 = scmp.lt.s32.totalorder %s13, 3
      %p143 = pnand %p141, %p142
      %p144 = pneg %p143
      // Predicated region
      $region9: #{bottleneck_forward.7} parent=5 // pred_check
        _
      $region10: #{bottleneck_forward.7} parent=5 // pred_check_branch
        %146 = sbr.rel (%p143) target = $region12
      $region11: #{bottleneck_forward.7} parent=5 // pred_region
        %s147 = ssub.s32 %s13, 1
        // Predicated region
        $region13: #{bottleneck_forward.7} parent=11 // pred_check
          %p148 = pneg %p86
        $region14: #{bottleneck_forward.7} parent=11 // pred_check_branch
          %150 = sbr.rel (%p148) target = $region16
        $region15: #{bottleneck_forward.7} parent=11 // pred_region
          _
        $region16: #{bottleneck_forward.7} parent=11 // pred_fallthru
          _
        // Predicated region
        $region17: #{bottleneck_forward.7} parent=11 // pred_check
          %p151 = pneg %p107
        $region18: #{bottleneck_forward.7} parent=11 // pred_check_branch
          %153 = sbr.rel (%p151) target = $region20
        $region19: #{bottleneck_forward.7} parent=11 // pred_region
          _
        $region20: #{bottleneck_forward.7} parent=11 // pred_fallthru
          _
      $region12: #{bottleneck_forward.7} parent=5 // pred_fallthru
        _
      %p154 = scmp.lt.s32.totalorder %s13, 2
      // Predicated region
      $region21: #{bottleneck_forward.7} parent=5 // pred_check
        %p155 = pneg %p154
      $region22: #{bottleneck_forward.7} parent=5 // pred_check_branch
        %157 = sbr.rel (%p155) target = $region24
      $region23: #{bottleneck_forward.7} parent=5 // pred_region
        // Predicated region
        $region25: #{bottleneck_forward.7} parent=23 // pred_check
          %p158 = pneg %p33
        $region26: #{bottleneck_forward.7} parent=23 // pred_check_branch
          %160 = sbr.rel (%p158) target = $region28
        $region27: #{bottleneck_forward.7} parent=23 // pred_region
          %p161 = scmp.lt.s32.totalorder %s13, 1
          %s162 = scalar_select %p161, %s13, 1
          %s163 = smul.addr %s162, 128
          %s164 = smul.addr %s163, 8
          %s165 = scalar_lea.vmem %s0, %s164
        $region28: #{bottleneck_forward.7} parent=23 // pred_fallthru
          _
        // Predicated region
        $region29: #{bottleneck_forward.7} parent=23 // pred_check
          %p166 = pneg %p59
        $region30: #{bottleneck_forward.7} parent=23 // pred_check_branch
          %168 = sbr.rel (%p166) target = $region32
        $region31: #{bottleneck_forward.7} parent=23 // pred_region
          %p169 = scmp.lt.s32.totalorder %s13, 1
          %s170 = scalar_select %p169, %s13, 1
          %s171 = smul.addr %s170, 128
          %s172 = smul.addr %s171, 8
          %s173 = scalar_lea.vmem %s1, %s172
        $region32: #{bottleneck_forward.7} parent=23 // pred_fallthru
          _
      $region24: #{bottleneck_forward.7} parent=5 // pred_fallthru
        _
      %p174 = scmp.le.s32.totalorder 1, %s13
      %p175 = scmp.lt.s32.totalorder %s13, 3
      %p176 = pnand %p174, %p175
      %p177 = pneg %p176
      // Predicated region
      $region33: #{bottleneck_forward.7} parent=5 // pred_check
        _
      $region34: #{bottleneck_forward.7} parent=5 // pred_check_branch
        %179 = sbr.rel (%p176) target = $region36
      $region35: #{bottleneck_forward.7} parent=5 // pred_region
        %s180 = ssub.s32 %s13, 1
        %p181 = scmp.lt.s32.totalorder %s18, 1
        %s182 = scalar_select %p181, %s18, 1
        %s183 = smul.addr %s182, 128
        %s184 = smul.addr %s183, 8
        %s185 = scalar_lea.vmem %s0, %s184
        %p186 = pneg %p39
        %p187 = pneg %p36
        %p188 = scmp.lt.s32.totalorder %s18, 1
        %s189 = scalar_select %p188, %s18, 1
        %s190 = smul.addr %s189, 128
        %s191 = smul.addr %s190, 8
        %s192 = scalar_lea.vmem %s1, %s191
        %p193 = pneg %p65
        %p194 = pneg %p62
        %p195 = pneg %p86
        %p196 = pneg %p83
        %p197 = pneg %p107
        %p198 = pneg %p104
        %p199 = pneg %p133
        %p200 = pneg %p130
        %s201 = sand.u32 %s120, 1
        %s202 = scalar_lea.sflag [#allocation3], %s201
        %s203 = sand.u32 %s120, 1
        %s204 = smul.addr %s203, 1024
        %s205 = scalar_lea.vmem [#allocation2], %s204
        %p206 = scmp.lt.s32.totalorder %s18, 1
        %s207 = scalar_select %p206, %s18, 1
        %s208 = smul.addr %s207, 128
        %s209 = smul.addr %s208, 8
        %s210 = scalar_lea.vmem %s0, %s209
        %p211 = scmp.lt.s32.totalorder %s18, 1
        %s212 = scalar_select %p211, %s18, 1
        %s213 = smul.addr %s212, 128
        %s214 = smul.addr %s213, 8
        %s215 = scalar_lea.vmem %s1, %s214
        %v216 = vld [vmem:[%s210] sm:$0xff]
        %v217 = vld [vmem:[%s210 + $0x8] sm:$0xff]
        %v218 = vld [vmem:[%s210 + $0x10] sm:$0xff]
        %v219 = vld [vmem:[%s210 + $0x18] sm:$0xff]
        %v220 = vld [vmem:[%s210 + $0x20] sm:$0xff]
        %v221 = vld [vmem:[%s210 + $0x28] sm:$0xff]
        %v222 = vld [vmem:[%s210 + $0x30] sm:$0xff]
        %v223 = vld [vmem:[%s210 + $0x38] sm:$0xff]
        %v224 = vld [vmem:[%s210 + $0x40] sm:$0xff]
        %v225 = vld [vmem:[%s210 + $0x48] sm:$0xff]
        %v226 = vld [vmem:[%s210 + $0x50] sm:$0xff]
        %v227 = vld [vmem:[%s210 + $0x58] sm:$0xff]
        %v228 = vld [vmem:[%s210 + $0x60] sm:$0xff]
        %v229 = vld [vmem:[%s210 + $0x68] sm:$0xff]
        %v230 = vld [vmem:[%s210 + $0x70] sm:$0xff]
        %v231 = vld [vmem:[%s210 + $0x78] sm:$0xff]
        %v232 = vld [vmem:[%s210 + $0x80] sm:$0xff]
        %v233 = vld [vmem:[%s210 + $0x88] sm:$0xff]
        %v234 = vld [vmem:[%s210 + $0x90] sm:$0xff]
        %v235 = vld [vmem:[%s210 + $0x98] sm:$0xff]
        %v236 = vld [vmem:[%s210 + $0xa0] sm:$0xff]
        %v237 = vld [vmem:[%s210 + $0xa8] sm:$0xff]
        %v238 = vld [vmem:[%s210 + $0xb0] sm:$0xff]
        %v239 = vld [vmem:[%s210 + $0xb8] sm:$0xff]
        %v240 = vld [vmem:[%s210 + $0xc0] sm:$0xff]
        %v241 = vld [vmem:[%s210 + $0xc8] sm:$0xff]
        %v242 = vld [vmem:[%s210 + $0xd0] sm:$0xff]
        %v243 = vld [vmem:[%s210 + $0xd8] sm:$0xff]
        %v244 = vld [vmem:[%s210 + $0xe0] sm:$0xff]
        %v245 = vld [vmem:[%s210 + $0xe8] sm:$0xff]
        %v246 = vld [vmem:[%s210 + $0xf0] sm:$0xff]
        %v247 = vld [vmem:[%s210 + $0xf8] sm:$0xff]
        %v248 = vld [vmem:[%s210 + $0x100] sm:$0xff]
        %v249 = vld [vmem:[%s210 + $0x108] sm:$0xff]
        %v250 = vld [vmem:[%s210 + $0x110] sm:$0xff]
        %v251 = vld [vmem:[%s210 + $0x118] sm:$0xff]
        %v252 = vld [vmem:[%s210 + $0x120] sm:$0xff]
        %v253 = vld [vmem:[%s210 + $0x128] sm:$0xff]
        %v254 = vld [vmem:[%s210 + $0x130] sm:$0xff]
        %v255 = vld [vmem:[%s210 + $0x138] sm:$0xff]
        %v256 = vld [vmem:[%s210 + $0x140] sm:$0xff]
        %v257 = vld [vmem:[%s210 + $0x148] sm:$0xff]
        %v258 = vld [vmem:[%s210 + $0x150] sm:$0xff]
        %v259 = vld [vmem:[%s210 + $0x158] sm:$0xff]
        %v260 = vld [vmem:[%s210 + $0x160] sm:$0xff]
        %v261 = vld [vmem:[%s210 + $0x168] sm:$0xff]
        %v262 = vld [vmem:[%s210 + $0x170] sm:$0xff]
        %v263 = vld [vmem:[%s210 + $0x178] sm:$0xff]
        %v264 = vld [vmem:[%s210 + $0x180] sm:$0xff]
        %v265 = vld [vmem:[%s210 + $0x188] sm:$0xff]
        %v266 = vld [vmem:[%s210 + $0x190] sm:$0xff]
        %v267 = vld [vmem:[%s210 + $0x198] sm:$0xff]
        %v268 = vld [vmem:[%s210 + $0x1a0] sm:$0xff]
        %v269 = vld [vmem:[%s210 + $0x1a8] sm:$0xff]
        %v270 = vld [vmem:[%s210 + $0x1b0] sm:$0xff]
        %v271 = vld [vmem:[%s210 + $0x1b8] sm:$0xff]
        %v272 = vld [vmem:[%s210 + $0x1c0] sm:$0xff]
        %v273 = vld [vmem:[%s210 + $0x1c8] sm:$0xff]
        %v274 = vld [vmem:[%s210 + $0x1d0] sm:$0xff]
        %v275 = vld [vmem:[%s210 + $0x1d8] sm:$0xff]
        %v276 = vld [vmem:[%s210 + $0x1e0] sm:$0xff]
        %v277 = vld [vmem:[%s210 + $0x1e8] sm:$0xff]
        %v278 = vld [vmem:[%s210 + $0x1f0] sm:$0xff]
        %v279 = vld [vmem:[%s210 + $0x1f8] sm:$0xff]
        %v280 = vld [vmem:[%s210 + $0x200] sm:$0xff]
        %v281 = vld [vmem:[%s210 + $0x208] sm:$0xff]
        %v282 = vld [vmem:[%s210 + $0x210] sm:$0xff]
        %v283 = vld [vmem:[%s210 + $0x218] sm:$0xff]
        %v284 = vld [vmem:[%s210 + $0x220] sm:$0xff]
        %v285 = vld [vmem:[%s210 + $0x228] sm:$0xff]
        %v286 = vld [vmem:[%s210 + $0x230] sm:$0xff]
        %v287 = vld [vmem:[%s210 + $0x238] sm:$0xff]
        %v288 = vld [vmem:[%s210 + $0x240] sm:$0xff]
        %v289 = vld [vmem:[%s210 + $0x248] sm:$0xff]
        %v290 = vld [vmem:[%s210 + $0x250] sm:$0xff]
        %v291 = vld [vmem:[%s210 + $0x258] sm:$0xff]
        %v292 = vld [vmem:[%s210 + $0x260] sm:$0xff]
        %v293 = vld [vmem:[%s210 + $0x268] sm:$0xff]
        %v294 = vld [vmem:[%s210 + $0x270] sm:$0xff]
        %v295 = vld [vmem:[%s210 + $0x278] sm:$0xff]
        %v296 = vld [vmem:[%s210 + $0x280] sm:$0xff]
        %v297 = vld [vmem:[%s210 + $0x288] sm:$0xff]
        %v298 = vld [vmem:[%s210 + $0x290] sm:$0xff]
        %v299 = vld [vmem:[%s210 + $0x298] sm:$0xff]
        %v300 = vld [vmem:[%s210 + $0x2a0] sm:$0xff]
        %v301 = vld [vmem:[%s210 + $0x2a8] sm:$0xff]
        %v302 = vld [vmem:[%s210 + $0x2b0] sm:$0xff]
        %v303 = vld [vmem:[%s210 + $0x2b8] sm:$0xff]
        %v304 = vld [vmem:[%s210 + $0x2c0] sm:$0xff]
        %v305 = vld [vmem:[%s210 + $0x2c8] sm:$0xff]
        %v306 = vld [vmem:[%s210 + $0x2d0] sm:$0xff]
        %v307 = vld [vmem:[%s210 + $0x2d8] sm:$0xff]
        %v308 = vld [vmem:[%s210 + $0x2e0] sm:$0xff]
        %v309 = vld [vmem:[%s210 + $0x2e8] sm:$0xff]
        %v310 = vld [vmem:[%s210 + $0x2f0] sm:$0xff]
        %v311 = vld [vmem:[%s210 + $0x2f8] sm:$0xff]
        %v312 = vld [vmem:[%s210 + $0x300] sm:$0xff]
        %v313 = vld [vmem:[%s210 + $0x308] sm:$0xff]
        %v314 = vld [vmem:[%s210 + $0x310] sm:$0xff]
        %v315 = vld [vmem:[%s210 + $0x318] sm:$0xff]
        %v316 = vld [vmem:[%s210 + $0x320] sm:$0xff]
        %v317 = vld [vmem:[%s210 + $0x328] sm:$0xff]
        %v318 = vld [vmem:[%s210 + $0x330] sm:$0xff]
        %v319 = vld [vmem:[%s210 + $0x338] sm:$0xff]
        %v320 = vld [vmem:[%s210 + $0x340] sm:$0xff]
        %v321 = vld [vmem:[%s210 + $0x348] sm:$0xff]
        %v322 = vld [vmem:[%s210 + $0x350] sm:$0xff]
        %v323 = vld [vmem:[%s210 + $0x358] sm:$0xff]
        %v324 = vld [vmem:[%s210 + $0x360] sm:$0xff]
        %v325 = vld [vmem:[%s210 + $0x368] sm:$0xff]
        %v326 = vld [vmem:[%s210 + $0x370] sm:$0xff]
        %v327 = vld [vmem:[%s210 + $0x378] sm:$0xff]
        %v328 = vld [vmem:[%s210 + $0x380] sm:$0xff]
        %v329 = vld [vmem:[%s210 + $0x388] sm:$0xff]
        %v330 = vld [vmem:[%s210 + $0x390] sm:$0xff]
        %v331 = vld [vmem:[%s210 + $0x398] sm:$0xff]
        %v332 = vld [vmem:[%s210 + $0x3a0] sm:$0xff]
        %v333 = vld [vmem:[%s210 + $0x3a8] sm:$0xff]
        %v334 = vld [vmem:[%s210 + $0x3b0] sm:$0xff]
        %v335 = vld [vmem:[%s210 + $0x3b8] sm:$0xff]
        %v336 = vld [vmem:[%s210 + $0x3c0] sm:$0xff]
        %v337 = vld [vmem:[%s210 + $0x3c8] sm:$0xff]
        %v338 = vld [vmem:[%s210 + $0x3d0] sm:$0xff]
        %v339 = vld [vmem:[%s210 + $0x3d8] sm:$0xff]
        %v340 = vld [vmem:[%s210 + $0x3e0] sm:$0xff]
        %v341 = vld [vmem:[%s210 + $0x3e8] sm:$0xff]
        %v342 = vld [vmem:[%s210 + $0x3f0] sm:$0xff]
        %v343 = vld [vmem:[%s210 + $0x3f8] sm:$0xff]
        %v344 = vld [vmem:[%s2] sm:$0xf]
        %v346 = vlaneseq
        %v347 = vshrl.u32 %v346, 7
        %v348 = vsub.s32 0, %v347
        %v349 = vrot.slane %v344, %v348
        %v350 = vlaneseq
        %v351 = vshrl.u32 %v350, 7
        %v352 = vsub.s32 1, %v351
        %v353 = vrot.slane %v344, %v352
        %v354 = vlaneseq
        %v355 = vshrl.u32 %v354, 7
        %v356 = vsub.s32 2, %v355
        %v357 = vrot.slane %v344, %v356
        %v358 = vlaneseq
        %v359 = vshrl.u32 %v358, 7
        %v360 = vsub.s32 3, %v359
        %v361 = vrot.slane %v344, %v360
        %v366 = vmul.f32 %v216, %v349
        %v367 = vmul.f32 %v217, %v353
        %v368 = vmul.f32 %v218, %v357
        %v369 = vmul.f32 %v219, %v361
        %v370 = vmul.f32 %v220, %v349
        %v371 = vmul.f32 %v221, %v353
        %v372 = vmul.f32 %v222, %v357
        %v373 = vmul.f32 %v223, %v361
        %v374 = vmul.f32 %v224, %v349
        %v375 = vmul.f32 %v225, %v353
        %v376 = vmul.f32 %v226, %v357
        %v377 = vmul.f32 %v227, %v361
        %v378 = vmul.f32 %v228, %v349
        %v379 = vmul.f32 %v229, %v353
        %v380 = vmul.f32 %v230, %v357
        %v381 = vmul.f32 %v231, %v361
        %v382 = vmul.f32 %v232, %v349
        %v383 = vmul.f32 %v233, %v353
        %v384 = vmul.f32 %v234, %v357
        %v385 = vmul.f32 %v235, %v361
        %v386 = vmul.f32 %v236, %v349
        %v387 = vmul.f32 %v237, %v353
        %v388 = vmul.f32 %v238, %v357
        %v389 = vmul.f32 %v239, %v361
        %v390 = vmul.f32 %v240, %v349
        %v391 = vmul.f32 %v241, %v353
        %v392 = vmul.f32 %v242, %v357
        %v393 = vmul.f32 %v243, %v361
        %v394 = vmul.f32 %v244, %v349
        %v395 = vmul.f32 %v245, %v353
        %v396 = vmul.f32 %v246, %v357
        %v397 = vmul.f32 %v247, %v361
        %v398 = vmul.f32 %v248, %v349
        %v399 = vmul.f32 %v249, %v353
        %v400 = vmul.f32 %v250, %v357
        %v401 = vmul.f32 %v251, %v361
        %v402 = vmul.f32 %v252, %v349
        %v403 = vmul.f32 %v253, %v353
        %v404 = vmul.f32 %v254, %v357
        %v405 = vmul.f32 %v255, %v361
        %v406 = vmul.f32 %v256, %v349
        %v407 = vmul.f32 %v257, %v353
        %v408 = vmul.f32 %v258, %v357
        %v409 = vmul.f32 %v259, %v361
        %v410 = vmul.f32 %v260, %v349
        %v411 = vmul.f32 %v261, %v353
        %v412 = vmul.f32 %v262, %v357
        %v413 = vmul.f32 %v263, %v361
        %v414 = vmul.f32 %v264, %v349
        %v415 = vmul.f32 %v265, %v353
        %v416 = vmul.f32 %v266, %v357
        %v417 = vmul.f32 %v267, %v361
        %v418 = vmul.f32 %v268, %v349
        %v419 = vmul.f32 %v269, %v353
        %v420 = vmul.f32 %v270, %v357
        %v421 = vmul.f32 %v271, %v361
        %v422 = vmul.f32 %v272, %v349
        %v423 = vmul.f32 %v273, %v353
        %v424 = vmul.f32 %v274, %v357
        %v425 = vmul.f32 %v275, %v361
        %v426 = vmul.f32 %v276, %v349
        %v427 = vmul.f32 %v277, %v353
        %v428 = vmul.f32 %v278, %v357
        %v429 = vmul.f32 %v279, %v361
        %v430 = vmul.f32 %v280, %v349
        %v431 = vmul.f32 %v281, %v353
        %v432 = vmul.f32 %v282, %v357
        %v433 = vmul.f32 %v283, %v361
        %v434 = vmul.f32 %v284, %v349
        %v435 = vmul.f32 %v285, %v353
        %v436 = vmul.f32 %v286, %v357
        %v437 = vmul.f32 %v287, %v361
        %v438 = vmul.f32 %v288, %v349
        %v439 = vmul.f32 %v289, %v353
        %v440 = vmul.f32 %v290, %v357
        %v441 = vmul.f32 %v291, %v361
        %v442 = vmul.f32 %v292, %v349
        %v443 = vmul.f32 %v293, %v353
        %v444 = vmul.f32 %v294, %v357
        %v445 = vmul.f32 %v295, %v361
        %v446 = vmul.f32 %v296, %v349
        %v447 = vmul.f32 %v297, %v353
        %v448 = vmul.f32 %v298, %v357
        %v449 = vmul.f32 %v299, %v361
        %v450 = vmul.f32 %v300, %v349
        %v451 = vmul.f32 %v301, %v353
        %v452 = vmul.f32 %v302, %v357
        %v453 = vmul.f32 %v303, %v361
        %v454 = vmul.f32 %v304, %v349
        %v455 = vmul.f32 %v305, %v353
        %v456 = vmul.f32 %v306, %v357
        %v457 = vmul.f32 %v307, %v361
        %v458 = vmul.f32 %v308, %v349
        %v459 = vmul.f32 %v309, %v353
        %v460 = vmul.f32 %v310, %v357
        %v461 = vmul.f32 %v311, %v361
        %v462 = vmul.f32 %v312, %v349
        %v463 = vmul.f32 %v313, %v353
        %v464 = vmul.f32 %v314, %v357
        %v465 = vmul.f32 %v315, %v361
        %v466 = vmul.f32 %v316, %v349
        %v467 = vmul.f32 %v317, %v353
        %v468 = vmul.f32 %v318, %v357
        %v469 = vmul.f32 %v319, %v361
        %v470 = vmul.f32 %v320, %v349
        %v471 = vmul.f32 %v321, %v353
        %v472 = vmul.f32 %v322, %v357
        %v473 = vmul.f32 %v323, %v361
        %v474 = vmul.f32 %v324, %v349
        %v475 = vmul.f32 %v325, %v353
        %v476 = vmul.f32 %v326, %v357
        %v477 = vmul.f32 %v327, %v361
        %v478 = vmul.f32 %v328, %v349
        %v479 = vmul.f32 %v329, %v353
        %v480 = vmul.f32 %v330, %v357
        %v481 = vmul.f32 %v331, %v361
        %v482 = vmul.f32 %v332, %v349
        %v483 = vmul.f32 %v333, %v353
        %v484 = vmul.f32 %v334, %v357
        %v485 = vmul.f32 %v335, %v361
        %v486 = vmul.f32 %v336, %v349
        %v487 = vmul.f32 %v337, %v353
        %v488 = vmul.f32 %v338, %v357
        %v489 = vmul.f32 %v339, %v361
        %v490 = vmul.f32 %v340, %v349
        %v491 = vmul.f32 %v341, %v353
        %v492 = vmul.f32 %v342, %v357
        %v493 = vmul.f32 %v343, %v361
        %v494 = vld [vmem:[%s3] sm:$0xf]
        %v496 = vlaneseq
        %v497 = vshrl.u32 %v496, 7
        %v498 = vsub.s32 0, %v497
        %v499 = vrot.slane %v494, %v498
        %v500 = vlaneseq
        %v501 = vshrl.u32 %v500, 7
        %v502 = vsub.s32 1, %v501
        %v503 = vrot.slane %v494, %v502
        %v504 = vlaneseq
        %v505 = vshrl.u32 %v504, 7
        %v506 = vsub.s32 2, %v505
        %v507 = vrot.slane %v494, %v506
        %v508 = vlaneseq
        %v509 = vshrl.u32 %v508, 7
        %v510 = vsub.s32 3, %v509
        %v511 = vrot.slane %v494, %v510
        %v516 = vadd.f32 %v366, %v499
        %v517 = vadd.f32 %v367, %v503
        %v518 = vadd.f32 %v368, %v507
        %v519 = vadd.f32 %v369, %v511
        %v520 = vadd.f32 %v370, %v499
        %v521 = vadd.f32 %v371, %v503
        %v522 = vadd.f32 %v372, %v507
        %v523 = vadd.f32 %v373, %v511
        %v524 = vadd.f32 %v374, %v499
        %v525 = vadd.f32 %v375, %v503
        %v526 = vadd.f32 %v376, %v507
        %v527 = vadd.f32 %v377, %v511
        %v528 = vadd.f32 %v378, %v499
        %v529 = vadd.f32 %v379, %v503
        %v530 = vadd.f32 %v380, %v507
        %v531 = vadd.f32 %v381, %v511
        %v532 = vadd.f32 %v382, %v499
        %v533 = vadd.f32 %v383, %v503
        %v534 = vadd.f32 %v384, %v507
        %v535 = vadd.f32 %v385, %v511
        %v536 = vadd.f32 %v386, %v499
        %v537 = vadd.f32 %v387, %v503
        %v538 = vadd.f32 %v388, %v507
        %v539 = vadd.f32 %v389, %v511
        %v540 = vadd.f32 %v390, %v499
        %v541 = vadd.f32 %v391, %v503
        %v542 = vadd.f32 %v392, %v507
        %v543 = vadd.f32 %v393, %v511
        %v544 = vadd.f32 %v394, %v499
        %v545 = vadd.f32 %v395, %v503
        %v546 = vadd.f32 %v396, %v507
        %v547 = vadd.f32 %v397, %v511
        %v548 = vadd.f32 %v398, %v499
        %v549 = vadd.f32 %v399, %v503
        %v550 = vadd.f32 %v400, %v507
        %v551 = vadd.f32 %v401, %v511
        %v552 = vadd.f32 %v402, %v499
        %v553 = vadd.f32 %v403, %v503
        %v554 = vadd.f32 %v404, %v507
        %v555 = vadd.f32 %v405, %v511
        %v556 = vadd.f32 %v406, %v499
        %v557 = vadd.f32 %v407, %v503
        %v558 = vadd.f32 %v408, %v507
        %v559 = vadd.f32 %v409, %v511
        %v560 = vadd.f32 %v410, %v499
        %v561 = vadd.f32 %v411, %v503
        %v562 = vadd.f32 %v412, %v507
        %v563 = vadd.f32 %v413, %v511
        %v564 = vadd.f32 %v414, %v499
        %v565 = vadd.f32 %v415, %v503
        %v566 = vadd.f32 %v416, %v507
        %v567 = vadd.f32 %v417, %v511
        %v568 = vadd.f32 %v418, %v499
        %v569 = vadd.f32 %v419, %v503
        %v570 = vadd.f32 %v420, %v507
        %v571 = vadd.f32 %v421, %v511
        %v572 = vadd.f32 %v422, %v499
        %v573 = vadd.f32 %v423, %v503
        %v574 = vadd.f32 %v424, %v507
        %v575 = vadd.f32 %v425, %v511
        %v576 = vadd.f32 %v426, %v499
        %v577 = vadd.f32 %v427, %v503
        %v578 = vadd.f32 %v428, %v507
        %v579 = vadd.f32 %v429, %v511
        %v580 = vadd.f32 %v430, %v499
        %v581 = vadd.f32 %v431, %v503
        %v582 = vadd.f32 %v432, %v507
        %v583 = vadd.f32 %v433, %v511
        %v584 = vadd.f32 %v434, %v499
        %v585 = vadd.f32 %v435, %v503
        %v586 = vadd.f32 %v436, %v507
        %v587 = vadd.f32 %v437, %v511
        %v588 = vadd.f32 %v438, %v499
        %v589 = vadd.f32 %v439, %v503
        %v590 = vadd.f32 %v440, %v507
        %v591 = vadd.f32 %v441, %v511
        %v592 = vadd.f32 %v442, %v499
        %v593 = vadd.f32 %v443, %v503
        %v594 = vadd.f32 %v444, %v507
        %v595 = vadd.f32 %v445, %v511
        %v596 = vadd.f32 %v446, %v499
        %v597 = vadd.f32 %v447, %v503
        %v598 = vadd.f32 %v448, %v507
        %v599 = vadd.f32 %v449, %v511
        %v600 = vadd.f32 %v450, %v499
        %v601 = vadd.f32 %v451, %v503
        %v602 = vadd.f32 %v452, %v507
        %v603 = vadd.f32 %v453, %v511
        %v604 = vadd.f32 %v454, %v499
        %v605 = vadd.f32 %v455, %v503
        %v606 = vadd.f32 %v456, %v507
        %v607 = vadd.f32 %v457, %v511
        %v608 = vadd.f32 %v458, %v499
        %v609 = vadd.f32 %v459, %v503
        %v610 = vadd.f32 %v460, %v507
        %v611 = vadd.f32 %v461, %v511
        %v612 = vadd.f32 %v462, %v499
        %v613 = vadd.f32 %v463, %v503
        %v614 = vadd.f32 %v464, %v507
        %v615 = vadd.f32 %v465, %v511
        %v616 = vadd.f32 %v466, %v499
        %v617 = vadd.f32 %v467, %v503
        %v618 = vadd.f32 %v468, %v507
        %v619 = vadd.f32 %v469, %v511
        %v620 = vadd.f32 %v470, %v499
        %v621 = vadd.f32 %v471, %v503
        %v622 = vadd.f32 %v472, %v507
        %v623 = vadd.f32 %v473, %v511
        %v624 = vadd.f32 %v474, %v499
        %v625 = vadd.f32 %v475, %v503
        %v626 = vadd.f32 %v476, %v507
        %v627 = vadd.f32 %v477, %v511
        %v628 = vadd.f32 %v478, %v499
        %v629 = vadd.f32 %v479, %v503
        %v630 = vadd.f32 %v480, %v507
        %v631 = vadd.f32 %v481, %v511
        %v632 = vadd.f32 %v482, %v499
        %v633 = vadd.f32 %v483, %v503
        %v634 = vadd.f32 %v484, %v507
        %v635 = vadd.f32 %v485, %v511
        %v636 = vadd.f32 %v486, %v499
        %v637 = vadd.f32 %v487, %v503
        %v638 = vadd.f32 %v488, %v507
        %v639 = vadd.f32 %v489, %v511
        %v640 = vadd.f32 %v490, %v499
        %v641 = vadd.f32 %v491, %v503
        %v642 = vadd.f32 %v492, %v507
        %v643 = vadd.f32 %v493, %v511
        %v644 = vld [vmem:[%s215] sm:$0xff]
        %v645 = vld [vmem:[%s215 + $0x8] sm:$0xff]
        %v646 = vld [vmem:[%s215 + $0x10] sm:$0xff]
        %v647 = vld [vmem:[%s215 + $0x18] sm:$0xff]
        %v648 = vld [vmem:[%s215 + $0x20] sm:$0xff]
        %v649 = vld [vmem:[%s215 + $0x28] sm:$0xff]
        %v650 = vld [vmem:[%s215 + $0x30] sm:$0xff]
        %v651 = vld [vmem:[%s215 + $0x38] sm:$0xff]
        %v652 = vld [vmem:[%s215 + $0x40] sm:$0xff]
        %v653 = vld [vmem:[%s215 + $0x48] sm:$0xff]
        %v654 = vld [vmem:[%s215 + $0x50] sm:$0xff]
        %v655 = vld [vmem:[%s215 + $0x58] sm:$0xff]
        %v656 = vld [vmem:[%s215 + $0x60] sm:$0xff]
        %v657 = vld [vmem:[%s215 + $0x68] sm:$0xff]
        %v658 = vld [vmem:[%s215 + $0x70] sm:$0xff]
        %v659 = vld [vmem:[%s215 + $0x78] sm:$0xff]
        %v660 = vld [vmem:[%s215 + $0x80] sm:$0xff]
        %v661 = vld [vmem:[%s215 + $0x88] sm:$0xff]
        %v662 = vld [vmem:[%s215 + $0x90] sm:$0xff]
        %v663 = vld [vmem:[%s215 + $0x98] sm:$0xff]
        %v664 = vld [vmem:[%s215 + $0xa0] sm:$0xff]
        %v665 = vld [vmem:[%s215 + $0xa8] sm:$0xff]
        %v666 = vld [vmem:[%s215 + $0xb0] sm:$0xff]
        %v667 = vld [vmem:[%s215 + $0xb8] sm:$0xff]
        %v668 = vld [vmem:[%s215 + $0xc0] sm:$0xff]
        %v669 = vld [vmem:[%s215 + $0xc8] sm:$0xff]
        %v670 = vld [vmem:[%s215 + $0xd0] sm:$0xff]
        %v671 = vld [vmem:[%s215 + $0xd8] sm:$0xff]
        %v672 = vld [vmem:[%s215 + $0xe0] sm:$0xff]
        %v673 = vld [vmem:[%s215 + $0xe8] sm:$0xff]
        %v674 = vld [vmem:[%s215 + $0xf0] sm:$0xff]
        %v675 = vld [vmem:[%s215 + $0xf8] sm:$0xff]
        %v676 = vld [vmem:[%s215 + $0x100] sm:$0xff]
        %v677 = vld [vmem:[%s215 + $0x108] sm:$0xff]
        %v678 = vld [vmem:[%s215 + $0x110] sm:$0xff]
        %v679 = vld [vmem:[%s215 + $0x118] sm:$0xff]
        %v680 = vld [vmem:[%s215 + $0x120] sm:$0xff]
        %v681 = vld [vmem:[%s215 + $0x128] sm:$0xff]
        %v682 = vld [vmem:[%s215 + $0x130] sm:$0xff]
        %v683 = vld [vmem:[%s215 + $0x138] sm:$0xff]
        %v684 = vld [vmem:[%s215 + $0x140] sm:$0xff]
        %v685 = vld [vmem:[%s215 + $0x148] sm:$0xff]
        %v686 = vld [vmem:[%s215 + $0x150] sm:$0xff]
        %v687 = vld [vmem:[%s215 + $0x158] sm:$0xff]
        %v688 = vld [vmem:[%s215 + $0x160] sm:$0xff]
        %v689 = vld [vmem:[%s215 + $0x168] sm:$0xff]
        %v690 = vld [vmem:[%s215 + $0x170] sm:$0xff]
        %v691 = vld [vmem:[%s215 + $0x178] sm:$0xff]
        %v692 = vld [vmem:[%s215 + $0x180] sm:$0xff]
        %v693 = vld [vmem:[%s215 + $0x188] sm:$0xff]
        %v694 = vld [vmem:[%s215 + $0x190] sm:$0xff]
        %v695 = vld [vmem:[%s215 + $0x198] sm:$0xff]
        %v696 = vld [vmem:[%s215 + $0x1a0] sm:$0xff]
        %v697 = vld [vmem:[%s215 + $0x1a8] sm:$0xff]
        %v698 = vld [vmem:[%s215 + $0x1b0] sm:$0xff]
        %v699 = vld [vmem:[%s215 + $0x1b8] sm:$0xff]
        %v700 = vld [vmem:[%s215 + $0x1c0] sm:$0xff]
        %v701 = vld [vmem:[%s215 + $0x1c8] sm:$0xff]
        %v702 = vld [vmem:[%s215 + $0x1d0] sm:$0xff]
        %v703 = vld [vmem:[%s215 + $0x1d8] sm:$0xff]
        %v704 = vld [vmem:[%s215 + $0x1e0] sm:$0xff]
        %v705 = vld [vmem:[%s215 + $0x1e8] sm:$0xff]
        %v706 = vld [vmem:[%s215 + $0x1f0] sm:$0xff]
        %v707 = vld [vmem:[%s215 + $0x1f8] sm:$0xff]
        %v708 = vld [vmem:[%s215 + $0x200] sm:$0xff]
        %v709 = vld [vmem:[%s215 + $0x208] sm:$0xff]
        %v710 = vld [vmem:[%s215 + $0x210] sm:$0xff]
        %v711 = vld [vmem:[%s215 + $0x218] sm:$0xff]
        %v712 = vld [vmem:[%s215 + $0x220] sm:$0xff]
        %v713 = vld [vmem:[%s215 + $0x228] sm:$0xff]
        %v714 = vld [vmem:[%s215 + $0x230] sm:$0xff]
        %v715 = vld [vmem:[%s215 + $0x238] sm:$0xff]
        %v716 = vld [vmem:[%s215 + $0x240] sm:$0xff]
        %v717 = vld [vmem:[%s215 + $0x248] sm:$0xff]
        %v718 = vld [vmem:[%s215 + $0x250] sm:$0xff]
        %v719 = vld [vmem:[%s215 + $0x258] sm:$0xff]
        %v720 = vld [vmem:[%s215 + $0x260] sm:$0xff]
        %v721 = vld [vmem:[%s215 + $0x268] sm:$0xff]
        %v722 = vld [vmem:[%s215 + $0x270] sm:$0xff]
        %v723 = vld [vmem:[%s215 + $0x278] sm:$0xff]
        %v724 = vld [vmem:[%s215 + $0x280] sm:$0xff]
        %v725 = vld [vmem:[%s215 + $0x288] sm:$0xff]
        %v726 = vld [vmem:[%s215 + $0x290] sm:$0xff]
        %v727 = vld [vmem:[%s215 + $0x298] sm:$0xff]
        %v728 = vld [vmem:[%s215 + $0x2a0] sm:$0xff]
        %v729 = vld [vmem:[%s215 + $0x2a8] sm:$0xff]
        %v730 = vld [vmem:[%s215 + $0x2b0] sm:$0xff]
        %v731 = vld [vmem:[%s215 + $0x2b8] sm:$0xff]
        %v732 = vld [vmem:[%s215 + $0x2c0] sm:$0xff]
        %v733 = vld [vmem:[%s215 + $0x2c8] sm:$0xff]
        %v734 = vld [vmem:[%s215 + $0x2d0] sm:$0xff]
        %v735 = vld [vmem:[%s215 + $0x2d8] sm:$0xff]
        %v736 = vld [vmem:[%s215 + $0x2e0] sm:$0xff]
        %v737 = vld [vmem:[%s215 + $0x2e8] sm:$0xff]
        %v738 = vld [vmem:[%s215 + $0x2f0] sm:$0xff]
        %v739 = vld [vmem:[%s215 + $0x2f8] sm:$0xff]
        %v740 = vld [vmem:[%s215 + $0x300] sm:$0xff]
        %v741 = vld [vmem:[%s215 + $0x308] sm:$0xff]
        %v742 = vld [vmem:[%s215 + $0x310] sm:$0xff]
        %v743 = vld [vmem:[%s215 + $0x318] sm:$0xff]
        %v744 = vld [vmem:[%s215 + $0x320] sm:$0xff]
        %v745 = vld [vmem:[%s215 + $0x328] sm:$0xff]
        %v746 = vld [vmem:[%s215 + $0x330] sm:$0xff]
        %v747 = vld [vmem:[%s215 + $0x338] sm:$0xff]
        %v748 = vld [vmem:[%s215 + $0x340] sm:$0xff]
        %v749 = vld [vmem:[%s215 + $0x348] sm:$0xff]
        %v750 = vld [vmem:[%s215 + $0x350] sm:$0xff]
        %v751 = vld [vmem:[%s215 + $0x358] sm:$0xff]
        %v752 = vld [vmem:[%s215 + $0x360] sm:$0xff]
        %v753 = vld [vmem:[%s215 + $0x368] sm:$0xff]
        %v754 = vld [vmem:[%s215 + $0x370] sm:$0xff]
        %v755 = vld [vmem:[%s215 + $0x378] sm:$0xff]
        %v756 = vld [vmem:[%s215 + $0x380] sm:$0xff]
        %v757 = vld [vmem:[%s215 + $0x388] sm:$0xff]
        %v758 = vld [vmem:[%s215 + $0x390] sm:$0xff]
        %v759 = vld [vmem:[%s215 + $0x398] sm:$0xff]
        %v760 = vld [vmem:[%s215 + $0x3a0] sm:$0xff]
        %v761 = vld [vmem:[%s215 + $0x3a8] sm:$0xff]
        %v762 = vld [vmem:[%s215 + $0x3b0] sm:$0xff]
        %v763 = vld [vmem:[%s215 + $0x3b8] sm:$0xff]
        %v764 = vld [vmem:[%s215 + $0x3c0] sm:$0xff]
        %v765 = vld [vmem:[%s215 + $0x3c8] sm:$0xff]
        %v766 = vld [vmem:[%s215 + $0x3d0] sm:$0xff]
        %v767 = vld [vmem:[%s215 + $0x3d8] sm:$0xff]
        %v768 = vld [vmem:[%s215 + $0x3e0] sm:$0xff]
        %v769 = vld [vmem:[%s215 + $0x3e8] sm:$0xff]
        %v770 = vld [vmem:[%s215 + $0x3f0] sm:$0xff]
        %v771 = vld [vmem:[%s215 + $0x3f8] sm:$0xff]
        %v772 = vadd.f32 %v516, %v644
        %v773 = vadd.f32 %v517, %v645
        %v774 = vadd.f32 %v518, %v646
        %v775 = vadd.f32 %v519, %v647
        %v776 = vadd.f32 %v520, %v648
        %v777 = vadd.f32 %v521, %v649
        %v778 = vadd.f32 %v522, %v650
        %v779 = vadd.f32 %v523, %v651
        %v780 = vadd.f32 %v524, %v652
        %v781 = vadd.f32 %v525, %v653
        %v782 = vadd.f32 %v526, %v654
        %v783 = vadd.f32 %v527, %v655
        %v784 = vadd.f32 %v528, %v656
        %v785 = vadd.f32 %v529, %v657
        %v786 = vadd.f32 %v530, %v658
        %v787 = vadd.f32 %v531, %v659
        %v788 = vadd.f32 %v532, %v660
        %v789 = vadd.f32 %v533, %v661
        %v790 = vadd.f32 %v534, %v662
        %v791 = vadd.f32 %v535, %v663
        %v792 = vadd.f32 %v536, %v664
        %v793 = vadd.f32 %v537, %v665
        %v794 = vadd.f32 %v538, %v666
        %v795 = vadd.f32 %v539, %v667
        %v796 = vadd.f32 %v540, %v668
        %v797 = vadd.f32 %v541, %v669
        %v798 = vadd.f32 %v542, %v670
        %v799 = vadd.f32 %v543, %v671
        %v800 = vadd.f32 %v544, %v672
        %v801 = vadd.f32 %v545, %v673
        %v802 = vadd.f32 %v546, %v674
        %v803 = vadd.f32 %v547, %v675
        %v804 = vadd.f32 %v548, %v676
        %v805 = vadd.f32 %v549, %v677
        %v806 = vadd.f32 %v550, %v678
        %v807 = vadd.f32 %v551, %v679
        %v808 = vadd.f32 %v552, %v680
        %v809 = vadd.f32 %v553, %v681
        %v810 = vadd.f32 %v554, %v682
        %v811 = vadd.f32 %v555, %v683
        %v812 = vadd.f32 %v556, %v684
        %v813 = vadd.f32 %v557, %v685
        %v814 = vadd.f32 %v558, %v686
        %v815 = vadd.f32 %v559, %v687
        %v816 = vadd.f32 %v560, %v688
        %v817 = vadd.f32 %v561, %v689
        %v818 = vadd.f32 %v562, %v690
        %v819 = vadd.f32 %v563, %v691
        %v820 = vadd.f32 %v564, %v692
        %v821 = vadd.f32 %v565, %v693
        %v822 = vadd.f32 %v566, %v694
        %v823 = vadd.f32 %v567, %v695
        %v824 = vadd.f32 %v568, %v696
        %v825 = vadd.f32 %v569, %v697
        %v826 = vadd.f32 %v570, %v698
        %v827 = vadd.f32 %v571, %v699
        %v828 = vadd.f32 %v572, %v700
        %v829 = vadd.f32 %v573, %v701
        %v830 = vadd.f32 %v574, %v702
        %v831 = vadd.f32 %v575, %v703
        %v832 = vadd.f32 %v576, %v704
        %v833 = vadd.f32 %v577, %v705
        %v834 = vadd.f32 %v578, %v706
        %v835 = vadd.f32 %v579, %v707
        %v836 = vadd.f32 %v580, %v708
        %v837 = vadd.f32 %v581, %v709
        %v838 = vadd.f32 %v582, %v710
        %v839 = vadd.f32 %v583, %v711
        %v840 = vadd.f32 %v584, %v712
        %v841 = vadd.f32 %v585, %v713
        %v842 = vadd.f32 %v586, %v714
        %v843 = vadd.f32 %v587, %v715
        %v844 = vadd.f32 %v588, %v716
        %v845 = vadd.f32 %v589, %v717
        %v846 = vadd.f32 %v590, %v718
        %v847 = vadd.f32 %v591, %v719
        %v848 = vadd.f32 %v592, %v720
        %v849 = vadd.f32 %v593, %v721
        %v850 = vadd.f32 %v594, %v722
        %v851 = vadd.f32 %v595, %v723
        %v852 = vadd.f32 %v596, %v724
        %v853 = vadd.f32 %v597, %v725
        %v854 = vadd.f32 %v598, %v726
        %v855 = vadd.f32 %v599, %v727
        %v856 = vadd.f32 %v600, %v728
        %v857 = vadd.f32 %v601, %v729
        %v858 = vadd.f32 %v602, %v730
        %v859 = vadd.f32 %v603, %v731
        %v860 = vadd.f32 %v604, %v732
        %v861 = vadd.f32 %v605, %v733
        %v862 = vadd.f32 %v606, %v734
        %v863 = vadd.f32 %v607, %v735
        %v864 = vadd.f32 %v608, %v736
        %v865 = vadd.f32 %v609, %v737
        %v866 = vadd.f32 %v610, %v738
        %v867 = vadd.f32 %v611, %v739
        %v868 = vadd.f32 %v612, %v740
        %v869 = vadd.f32 %v613, %v741
        %v870 = vadd.f32 %v614, %v742
        %v871 = vadd.f32 %v615, %v743
        %v872 = vadd.f32 %v616, %v744
        %v873 = vadd.f32 %v617, %v745
        %v874 = vadd.f32 %v618, %v746
        %v875 = vadd.f32 %v619, %v747
        %v876 = vadd.f32 %v620, %v748
        %v877 = vadd.f32 %v621, %v749
        %v878 = vadd.f32 %v622, %v750
        %v879 = vadd.f32 %v623, %v751
        %v880 = vadd.f32 %v624, %v752
        %v881 = vadd.f32 %v625, %v753
        %v882 = vadd.f32 %v626, %v754
        %v883 = vadd.f32 %v627, %v755
        %v884 = vadd.f32 %v628, %v756
        %v885 = vadd.f32 %v629, %v757
        %v886 = vadd.f32 %v630, %v758
        %v887 = vadd.f32 %v631, %v759
        %v888 = vadd.f32 %v632, %v760
        %v889 = vadd.f32 %v633, %v761
        %v890 = vadd.f32 %v634, %v762
        %v891 = vadd.f32 %v635, %v763
        %v892 = vadd.f32 %v636, %v764
        %v893 = vadd.f32 %v637, %v765
        %v894 = vadd.f32 %v638, %v766
        %v895 = vadd.f32 %v639, %v767
        %v896 = vadd.f32 %v640, %v768
        %v897 = vadd.f32 %v641, %v769
        %v898 = vadd.f32 %v642, %v770
        %v899 = vadd.f32 %v643, %v771
        %v900 = vmax.f32 %v772, 0.0
        %v901 = vmax.f32 %v773, 0.0
        %v902 = vmax.f32 %v774, 0.0
        %v903 = vmax.f32 %v775, 0.0
        %v904 = vmax.f32 %v776, 0.0
        %v905 = vmax.f32 %v777, 0.0
        %v906 = vmax.f32 %v778, 0.0
        %v907 = vmax.f32 %v779, 0.0
        %v908 = vmax.f32 %v780, 0.0
        %v909 = vmax.f32 %v781, 0.0
        %v910 = vmax.f32 %v782, 0.0
        %v911 = vmax.f32 %v783, 0.0
        %v912 = vmax.f32 %v784, 0.0
        %v913 = vmax.f32 %v785, 0.0
        %v914 = vmax.f32 %v786, 0.0
        %v915 = vmax.f32 %v787, 0.0
        %v916 = vmax.f32 %v788, 0.0
        %v917 = vmax.f32 %v789, 0.0
        %v918 = vmax.f32 %v790, 0.0
        %v919 = vmax.f32 %v791, 0.0
        %v920 = vmax.f32 %v792, 0.0
        %v921 = vmax.f32 %v793, 0.0
        %v922 = vmax.f32 %v794, 0.0
        %v923 = vmax.f32 %v795, 0.0
        %v924 = vmax.f32 %v796, 0.0
        %v925 = vmax.f32 %v797, 0.0
        %v926 = vmax.f32 %v798, 0.0
        %v927 = vmax.f32 %v799, 0.0
        %v928 = vmax.f32 %v800, 0.0
        %v929 = vmax.f32 %v801, 0.0
        %v930 = vmax.f32 %v802, 0.0
        %v931 = vmax.f32 %v803, 0.0
        %v932 = vmax.f32 %v804, 0.0
        %v933 = vmax.f32 %v805, 0.0
        %v934 = vmax.f32 %v806, 0.0
        %v935 = vmax.f32 %v807, 0.0
        %v936 = vmax.f32 %v808, 0.0
        %v937 = vmax.f32 %v809, 0.0
        %v938 = vmax.f32 %v810, 0.0
        %v939 = vmax.f32 %v811, 0.0
        %v940 = vmax.f32 %v812, 0.0
        %v941 = vmax.f32 %v813, 0.0
        %v942 = vmax.f32 %v814, 0.0
        %v943 = vmax.f32 %v815, 0.0
        %v944 = vmax.f32 %v816, 0.0
        %v945 = vmax.f32 %v817, 0.0
        %v946 = vmax.f32 %v818, 0.0
        %v947 = vmax.f32 %v819, 0.0
        %v948 = vmax.f32 %v820, 0.0
        %v949 = vmax.f32 %v821, 0.0
        %v950 = vmax.f32 %v822, 0.0
        %v951 = vmax.f32 %v823, 0.0
        %v952 = vmax.f32 %v824, 0.0
        %v953 = vmax.f32 %v825, 0.0
        %v954 = vmax.f32 %v826, 0.0
        %v955 = vmax.f32 %v827, 0.0
        %v956 = vmax.f32 %v828, 0.0
        %v957 = vmax.f32 %v829, 0.0
        %v958 = vmax.f32 %v830, 0.0
        %v959 = vmax.f32 %v831, 0.0
        %v960 = vmax.f32 %v832, 0.0
        %v961 = vmax.f32 %v833, 0.0
        %v962 = vmax.f32 %v834, 0.0
        %v963 = vmax.f32 %v835, 0.0
        %v964 = vmax.f32 %v836, 0.0
        %v965 = vmax.f32 %v837, 0.0
        %v966 = vmax.f32 %v838, 0.0
        %v967 = vmax.f32 %v839, 0.0
        %v968 = vmax.f32 %v840, 0.0
        %v969 = vmax.f32 %v841, 0.0
        %v970 = vmax.f32 %v842, 0.0
        %v971 = vmax.f32 %v843, 0.0
        %v972 = vmax.f32 %v844, 0.0
        %v973 = vmax.f32 %v845, 0.0
        %v974 = vmax.f32 %v846, 0.0
        %v975 = vmax.f32 %v847, 0.0
        %v976 = vmax.f32 %v848, 0.0
        %v977 = vmax.f32 %v849, 0.0
        %v978 = vmax.f32 %v850, 0.0
        %v979 = vmax.f32 %v851, 0.0
        %v980 = vmax.f32 %v852, 0.0
        %v981 = vmax.f32 %v853, 0.0
        %v982 = vmax.f32 %v854, 0.0
        %v983 = vmax.f32 %v855, 0.0
        %v984 = vmax.f32 %v856, 0.0
        %v985 = vmax.f32 %v857, 0.0
        %v986 = vmax.f32 %v858, 0.0
        %v987 = vmax.f32 %v859, 0.0
        %v988 = vmax.f32 %v860, 0.0
        %v989 = vmax.f32 %v861, 0.0
        %v990 = vmax.f32 %v862, 0.0
        %v991 = vmax.f32 %v863, 0.0
        %v992 = vmax.f32 %v864, 0.0
        %v993 = vmax.f32 %v865, 0.0
        %v994 = vmax.f32 %v866, 0.0
        %v995 = vmax.f32 %v867, 0.0
        %v996 = vmax.f32 %v868, 0.0
        %v997 = vmax.f32 %v869, 0.0
        %v998 = vmax.f32 %v870, 0.0
        %v999 = vmax.f32 %v871, 0.0
        %v1000 = vmax.f32 %v872, 0.0
        %v1001 = vmax.f32 %v873, 0.0
        %v1002 = vmax.f32 %v874, 0.0
        %v1003 = vmax.f32 %v875, 0.0
        %v1004 = vmax.f32 %v876, 0.0
        %v1005 = vmax.f32 %v877, 0.0
        %v1006 = vmax.f32 %v878, 0.0
        %v1007 = vmax.f32 %v879, 0.0
        %v1008 = vmax.f32 %v880, 0.0
        %v1009 = vmax.f32 %v881, 0.0
        %v1010 = vmax.f32 %v882, 0.0
        %v1011 = vmax.f32 %v883, 0.0
        %v1012 = vmax.f32 %v884, 0.0
        %v1013 = vmax.f32 %v885, 0.0
        %v1014 = vmax.f32 %v886, 0.0
        %v1015 = vmax.f32 %v887, 0.0
        %v1016 = vmax.f32 %v888, 0.0
        %v1017 = vmax.f32 %v889, 0.0
        %v1018 = vmax.f32 %v890, 0.0
        %v1019 = vmax.f32 %v891, 0.0
        %v1020 = vmax.f32 %v892, 0.0
        %v1021 = vmax.f32 %v893, 0.0
        %v1022 = vmax.f32 %v894, 0.0
        %v1023 = vmax.f32 %v895, 0.0
        %v1024 = vmax.f32 %v896, 0.0
        %v1025 = vmax.f32 %v897, 0.0
        %v1026 = vmax.f32 %v898, 0.0
        %v1027 = vmax.f32 %v899, 0.0
        %1028 = vst [vmem:[%s205] sm:$0xff] %v900
        %1029 = vst [vmem:[%s205 + $0x8] sm:$0xff] %v901
        %1030 = vst [vmem:[%s205 + $0x10] sm:$0xff] %v902
        %1031 = vst [vmem:[%s205 + $0x18] sm:$0xff] %v903
        %1032 = vst [vmem:[%s205 + $0x20] sm:$0xff] %v904
        %1033 = vst [vmem:[%s205 + $0x28] sm:$0xff] %v905
        %1034 = vst [vmem:[%s205 + $0x30] sm:$0xff] %v906
        %1035 = vst [vmem:[%s205 + $0x38] sm:$0xff] %v907
        %1036 = vst [vmem:[%s205 + $0x40] sm:$0xff] %v908
        %1037 = vst [vmem:[%s205 + $0x48] sm:$0xff] %v909
        %1038 = vst [vmem:[%s205 + $0x50] sm:$0xff] %v910
        %1039 = vst [vmem:[%s205 + $0x58] sm:$0xff] %v911
        %1040 = vst [vmem:[%s205 + $0x60] sm:$0xff] %v912
        %1041 = vst [vmem:[%s205 + $0x68] sm:$0xff] %v913
        %1042 = vst [vmem:[%s205 + $0x70] sm:$0xff] %v914
        %1043 = vst [vmem:[%s205 + $0x78] sm:$0xff] %v915
        %1044 = vst [vmem:[%s205 + $0x80] sm:$0xff] %v916
        %1045 = vst [vmem:[%s205 + $0x88] sm:$0xff] %v917
        %1046 = vst [vmem:[%s205 + $0x90] sm:$0xff] %v918
        %1047 = vst [vmem:[%s205 + $0x98] sm:$0xff] %v919
        %1048 = vst [vmem:[%s205 + $0xa0] sm:$0xff] %v920
        %1049 = vst [vmem:[%s205 + $0xa8] sm:$0xff] %v921
        %1050 = vst [vmem:[%s205 + $0xb0] sm:$0xff] %v922
        %1051 = vst [vmem:[%s205 + $0xb8] sm:$0xff] %v923
        %1052 = vst [vmem:[%s205 + $0xc0] sm:$0xff] %v924
        %1053 = vst [vmem:[%s205 + $0xc8] sm:$0xff] %v925
        %1054 = vst [vmem:[%s205 + $0xd0] sm:$0xff] %v926
        %1055 = vst [vmem:[%s205 + $0xd8] sm:$0xff] %v927
        %1056 = vst [vmem:[%s205 + $0xe0] sm:$0xff] %v928
        %1057 = vst [vmem:[%s205 + $0xe8] sm:$0xff] %v929
        %1058 = vst [vmem:[%s205 + $0xf0] sm:$0xff] %v930
        %1059 = vst [vmem:[%s205 + $0xf8] sm:$0xff] %v931
        %1060 = vst [vmem:[%s205 + $0x100] sm:$0xff] %v932
        %1061 = vst [vmem:[%s205 + $0x108] sm:$0xff] %v933
        %1062 = vst [vmem:[%s205 + $0x110] sm:$0xff] %v934
        %1063 = vst [vmem:[%s205 + $0x118] sm:$0xff] %v935
        %1064 = vst [vmem:[%s205 + $0x120] sm:$0xff] %v936
        %1065 = vst [vmem:[%s205 + $0x128] sm:$0xff] %v937
        %1066 = vst [vmem:[%s205 + $0x130] sm:$0xff] %v938
        %1067 = vst [vmem:[%s205 + $0x138] sm:$0xff] %v939
        %1068 = vst [vmem:[%s205 + $0x140] sm:$0xff] %v940
        %1069 = vst [vmem:[%s205 + $0x148] sm:$0xff] %v941
        %1070 = vst [vmem:[%s205 + $0x150] sm:$0xff] %v942
        %1071 = vst [vmem:[%s205 + $0x158] sm:$0xff] %v943
        %1072 = vst [vmem:[%s205 + $0x160] sm:$0xff] %v944
        %1073 = vst [vmem:[%s205 + $0x168] sm:$0xff] %v945
        %1074 = vst [vmem:[%s205 + $0x170] sm:$0xff] %v946
        %1075 = vst [vmem:[%s205 + $0x178] sm:$0xff] %v947
        %1076 = vst [vmem:[%s205 + $0x180] sm:$0xff] %v948
        %1077 = vst [vmem:[%s205 + $0x188] sm:$0xff] %v949
        %1078 = vst [vmem:[%s205 + $0x190] sm:$0xff] %v950
        %1079 = vst [vmem:[%s205 + $0x198] sm:$0xff] %v951
        %1080 = vst [vmem:[%s205 + $0x1a0] sm:$0xff] %v952
        %1081 = vst [vmem:[%s205 + $0x1a8] sm:$0xff] %v953
        %1082 = vst [vmem:[%s205 + $0x1b0] sm:$0xff] %v954
        %1083 = vst [vmem:[%s205 + $0x1b8] sm:$0xff] %v955
        %1084 = vst [vmem:[%s205 + $0x1c0] sm:$0xff] %v956
        %1085 = vst [vmem:[%s205 + $0x1c8] sm:$0xff] %v957
        %1086 = vst [vmem:[%s205 + $0x1d0] sm:$0xff] %v958
        %1087 = vst [vmem:[%s205 + $0x1d8] sm:$0xff] %v959
        %1088 = vst [vmem:[%s205 + $0x1e0] sm:$0xff] %v960
        %1089 = vst [vmem:[%s205 + $0x1e8] sm:$0xff] %v961
        %1090 = vst [vmem:[%s205 + $0x1f0] sm:$0xff] %v962
        %1091 = vst [vmem:[%s205 + $0x1f8] sm:$0xff] %v963
        %1092 = vst [vmem:[%s205 + $0x200] sm:$0xff] %v964
        %1093 = vst [vmem:[%s205 + $0x208] sm:$0xff] %v965
        %1094 = vst [vmem:[%s205 + $0x210] sm:$0xff] %v966
        %1095 = vst [vmem:[%s205 + $0x218] sm:$0xff] %v967
        %1096 = vst [vmem:[%s205 + $0x220] sm:$0xff] %v968
        %1097 = vst [vmem:[%s205 + $0x228] sm:$0xff] %v969
        %1098 = vst [vmem:[%s205 + $0x230] sm:$0xff] %v970
        %1099 = vst [vmem:[%s205 + $0x238] sm:$0xff] %v971
        %1100 = vst [vmem:[%s205 + $0x240] sm:$0xff] %v972
        %1101 = vst [vmem:[%s205 + $0x248] sm:$0xff] %v973
        %1102 = vst [vmem:[%s205 + $0x250] sm:$0xff] %v974
        %1103 = vst [vmem:[%s205 + $0x258] sm:$0xff] %v975
        %1104 = vst [vmem:[%s205 + $0x260] sm:$0xff] %v976
        %1105 = vst [vmem:[%s205 + $0x268] sm:$0xff] %v977
        %1106 = vst [vmem:[%s205 + $0x270] sm:$0xff] %v978
        %1107 = vst [vmem:[%s205 + $0x278] sm:$0xff] %v979
        %1108 = vst [vmem:[%s205 + $0x280] sm:$0xff] %v980
        %1109 = vst [vmem:[%s205 + $0x288] sm:$0xff] %v981
        %1110 = vst [vmem:[%s205 + $0x290] sm:$0xff] %v982
        %1111 = vst [vmem:[%s205 + $0x298] sm:$0xff] %v983
        %1112 = vst [vmem:[%s205 + $0x2a0] sm:$0xff] %v984
        %1113 = vst [vmem:[%s205 + $0x2a8] sm:$0xff] %v985
        %1114 = vst [vmem:[%s205 + $0x2b0] sm:$0xff] %v986
        %1115 = vst [vmem:[%s205 + $0x2b8] sm:$0xff] %v987
        %1116 = vst [vmem:[%s205 + $0x2c0] sm:$0xff] %v988
        %1117 = vst [vmem:[%s205 + $0x2c8] sm:$0xff] %v989
        %1118 = vst [vmem:[%s205 + $0x2d0] sm:$0xff] %v990
        %1119 = vst [vmem:[%s205 + $0x2d8] sm:$0xff] %v991
        %1120 = vst [vmem:[%s205 + $0x2e0] sm:$0xff] %v992
        %1121 = vst [vmem:[%s205 + $0x2e8] sm:$0xff] %v993
        %1122 = vst [vmem:[%s205 + $0x2f0] sm:$0xff] %v994
        %1123 = vst [vmem:[%s205 + $0x2f8] sm:$0xff] %v995
        %1124 = vst [vmem:[%s205 + $0x300] sm:$0xff] %v996
        %1125 = vst [vmem:[%s205 + $0x308] sm:$0xff] %v997
        %1126 = vst [vmem:[%s205 + $0x310] sm:$0xff] %v998
        %1127 = vst [vmem:[%s205 + $0x318] sm:$0xff] %v999
        %1128 = vst [vmem:[%s205 + $0x320] sm:$0xff] %v1000
        %1129 = vst [vmem:[%s205 + $0x328] sm:$0xff] %v1001
        %1130 = vst [vmem:[%s205 + $0x330] sm:$0xff] %v1002
        %1131 = vst [vmem:[%s205 + $0x338] sm:$0xff] %v1003
        %1132 = vst [vmem:[%s205 + $0x340] sm:$0xff] %v1004
        %1133 = vst [vmem:[%s205 + $0x348] sm:$0xff] %v1005
        %1134 = vst [vmem:[%s205 + $0x350] sm:$0xff] %v1006
        %1135 = vst [vmem:[%s205 + $0x358] sm:$0xff] %v1007
        %1136 = vst [vmem:[%s205 + $0x360] sm:$0xff] %v1008
        %1137 = vst [vmem:[%s205 + $0x368] sm:$0xff] %v1009
        %1138 = vst [vmem:[%s205 + $0x370] sm:$0xff] %v1010
        %1139 = vst [vmem:[%s205 + $0x378] sm:$0xff] %v1011
        %1140 = vst [vmem:[%s205 + $0x380] sm:$0xff] %v1012
        %1141 = vst [vmem:[%s205 + $0x388] sm:$0xff] %v1013
        %1142 = vst [vmem:[%s205 + $0x390] sm:$0xff] %v1014
        %1143 = vst [vmem:[%s205 + $0x398] sm:$0xff] %v1015
        %1144 = vst [vmem:[%s205 + $0x3a0] sm:$0xff] %v1016
        %1145 = vst [vmem:[%s205 + $0x3a8] sm:$0xff] %v1017
        %1146 = vst [vmem:[%s205 + $0x3b0] sm:$0xff] %v1018
        %1147 = vst [vmem:[%s205 + $0x3b8] sm:$0xff] %v1019
        %1148 = vst [vmem:[%s205 + $0x3c0] sm:$0xff] %v1020
        %1149 = vst [vmem:[%s205 + $0x3c8] sm:$0xff] %v1021
        %1150 = vst [vmem:[%s205 + $0x3d0] sm:$0xff] %v1022
        %1151 = vst [vmem:[%s205 + $0x3d8] sm:$0xff] %v1023
        %1152 = vst [vmem:[%s205 + $0x3e0] sm:$0xff] %v1024
        %1153 = vst [vmem:[%s205 + $0x3e8] sm:$0xff] %v1025
        %1154 = vst [vmem:[%s205 + $0x3f0] sm:$0xff] %v1026
        %1155 = vst [vmem:[%s205 + $0x3f8] sm:$0xff] %v1027
        %s1156 = sand.u32 %s120, 1
        %s1157 = scalar_lea.sflag [#allocation3], %s1156
        %s1158 = sand.u32 %s120, 1
        %s1159 = smul.addr %s1158, 1024
        %s1160 = scalar_lea.vmem [#allocation2], %s1159
        // Predicated region
        $region37: #{bottleneck_forward.7} parent=35 // pred_check
          %p1161 = pneg %p130
        $region38: #{bottleneck_forward.7} parent=35 // pred_check_branch
          %1163 = sbr.rel (%p1161) target = $region40
        $region39: #{bottleneck_forward.7} parent=35 // pred_region
          %s1165 = ssub.s32 16384, 16384
          %1166 = vsyncadd %s1157, %s1165
          %s1167 = smul.addr %s18, 128
          %s1168 = smul.addr %s1167, 128
          %s1169 = scalar_lea.hbm %s4, %s1168
          %s1170 = sshll.u32 %s1160, 4
          %s1171 = int_to_ptr.vmem [resolvable:$true] %s1170
          %1176 = dma.vmem_to_hbm [thread:$0]  %s1171, 16384, %s1169, %s1157, 512, 512, 32
        $region40: #{bottleneck_forward.7} parent=35 // pred_fallthru
          _
      $region36: #{bottleneck_forward.7} parent=5 // pred_fallthru
        _
      %p1177 = scmp.le.s32.totalorder 2, %s13
      // Predicated region
      $region41: #{bottleneck_forward.7} parent=5 // pred_check
        %p1178 = pneg %p1177
      $region42: #{bottleneck_forward.7} parent=5 // pred_check_branch
        %1180 = sbr.rel (%p1178) target = $region44
      $region43: #{bottleneck_forward.7} parent=5 // pred_region
        %s1181 = ssub.s32 %s13, 2
        // Predicated region
        $region45: #{bottleneck_forward.7} parent=43 // pred_check
          %p1182 = pneg %p136
        $region46: #{bottleneck_forward.7} parent=43 // pred_check_branch
          %1184 = sbr.rel (%p1182) target = $region48
        $region47: #{bottleneck_forward.7} parent=43 // pred_region
          %s1185 = sand.u32 %s121, 1
          %s1186 = scalar_lea.sflag [#allocation3], %s1185
          %s1187 = sand.u32 %s121, 1
          %s1188 = smul.addr %s1187, 1024
          %s1189 = scalar_lea.vmem [#allocation2], %s1188
          %1190 = dma.done %s1186, 16384
        $region48: #{bottleneck_forward.7} parent=43 // pred_fallthru
          _
      $region44: #{bottleneck_forward.7} parent=5 // pred_fallthru
        _
    $region6: #{bottleneck_forward.7} parent=1 // loop_footer
      %s17 = sadd.s32 1, %s13
    $region7: #{bottleneck_forward.7} parent=1 // loop_footer_branch
      %12 = sbr.rel target = $region3
    $region8: #{bottleneck_forward.7} parent=1 // loop_exit
      _
    %1191 = vsyncpa [#allocation3], 1
    %s1192 = scalar_lea.sflag [#allocation3], 1
    %1193 = vsyncpa %s1192, 1

// kernel: bottleneck_forward.5
$region0: #{bottleneck_forward.5}
  #allocation0 [shape = 'u32[]', space=smem, size = 0x4, offset = 0x4, fixed_abs, tag = 'smem constant byte address 0x4 - core index']
  #allocation1 [shape = 'u32[144,128]{1,0:T(1,128)}', space=vmem, size = 0x12000, scoped, tag = 'internal scratch']
  #allocation2 [shape = 'f32[18,18,128]{2,1,0:T(8,128)}', space=vmem, size = 0x36000, scoped, tag = 'scratch operand']
  %s0 = inlined_call_operand.vmem [shape: f32[2,16,16,128], index: 0, kind: input, shape index: {}]
  %s1 = inlined_call_operand.vmem [shape: f32[1,128], index: 1, kind: input, shape index: {}]
  %s2 = inlined_call_operand.vmem [shape: f32[1,128], index: 2, kind: input, shape index: {}]
  %s3 = inlined_call_operand.vmem [shape: bf16[1152,128], index: 3, kind: input, shape index: {}]
  %s4 = inlined_call_operand.vmem [shape: f32[2,16,16,128], index: 4, kind: output, shape index: {0}]
  %s5 = inlined_call_operand.vmem [shape: f32[2,1,128], index: 5, kind: output, shape index: {1}]
  %s6 = inlined_call_operand.vmem [shape: f32[2,1,128], index: 6, kind: output, shape index: {2}]
  %7 = xla_tuple %s4, %s5, %s6
  %s8 = sld [smem:[#allocation0]]
  $region65: #{bottleneck_forward.5} parent=0
    _
  %s10 = ssub.s32 1, %s8
  %s11 = scalar_select 0, %s10, %s8
  loop: start=0, step=1, limit=4
  $region2: #{bottleneck_forward.5} parent=0 // loop_pre_header
    _
  $region3: #{bottleneck_forward.5} parent=0 // loop_header
    %s13 = sphi 0, %s17
    %p14 = scmp.ge.s32.totalorder %s13, 4
    %s23 = sphi 0, %s25
    %s26 = sphi 0, %s23
    %s27 = sphi 0, %s26
    %s43 = sphi 0, %s27
    %s47 = sphi 0, %s47
    %s49 = sphi 0, %s47
    %s50 = sphi 0, %s49
    %s64 = sphi 0, %s50
    %s68 = sphi 0, %s68
    %s70 = sphi 0, %s68
    %s71 = sphi 0, %s70
    %s85 = sphi 0, %s71
    %s89 = sphi 0, %s89
    %s91 = sphi 0, %s89
    %s92 = sphi 0, %s91
    %s106 = sphi 0, %s92
    %s112 = sphi 0, %s114
    %s115 = sphi 0, %s112
    %s116 = sphi 0, %s115
    %s132 = sphi 0, %s116
    %s138 = sphi 0, %s140
    %s141 = sphi 0, %s138
    %s142 = sphi 0, %s141
    %s158 = sphi 0, %s142
    %s164 = sphi 0, %s166
    %s167 = sphi 0, %s164
    %s168 = sphi 0, %s167
    %s184 = sphi 0, %s168
  $region4: #{bottleneck_forward.5} parent=0 // loop_header_branch
    %16 = sbr.rel (%p14) target = $region8
  $region5: #{bottleneck_forward.5} parent=0 // loop_body
    %s18 = ssub.s32 %s13, 1
    %s19 = ssub.s32 %s13, 2
    %s20 = sadd.s32 %s13, 1
    %s21 = ssub.s32 %s13, %s20
    %p22 = scmp.eq.s32.totalorder %s21, 0
    %s24 = sadd.s32 %s23, 1
    %s25 = scalar_select %p22, %s23, %s24
    %p28 = pneg %p22
    %p29 = scmp.eq.s32.totalorder %s13, 1
    %p30 = por %p28, %p29
    %p31 = scmp.ne.s32.totalorder %s23, %s26
    %p32 = scmp.eq.s32.totalorder %s13, 0
    %p33 = por %p31, %p32
    %p34 = scmp.ne.s32.totalorder %s23, %s26
    %p35 = scmp.eq.s32.totalorder %s18, 1
    %p36 = por %p34, %p35
    %p37 = scmp.ne.s32.totalorder %s26, %s27
    %p38 = scmp.eq.s32.totalorder %s18, 0
    %p39 = por %p37, %p38
    %p40 = scmp.ne.s32.totalorder %s26, %s27
    %p41 = scmp.eq.s32.totalorder %s19, 1
    %p42 = por %p40, %p41
    %p44 = scmp.ne.s32.totalorder %s27, %s43
    %p45 = scmp.eq.s32.totalorder %s19, 0
    %p46 = por %p44, %p45
    %s48 = sadd.s32 %s47, 1
    %p51 = scmp.eq.s32.totalorder %s13, 1
    %p52 = scmp.ne.s32.totalorder %s47, %s49
    %p53 = scmp.eq.s32.totalorder %s13, 0
    %p54 = por %p52, %p53
    %p55 = scmp.ne.s32.totalorder %s47, %s49
    %p56 = scmp.eq.s32.totalorder %s18, 1
    %p57 = por %p55, %p56
    %p58 = scmp.ne.s32.totalorder %s49, %s50
    %p59 = scmp.eq.s32.totalorder %s18, 0
    %p60 = por %p58, %p59
    %p61 = scmp.ne.s32.totalorder %s49, %s50
    %p62 = scmp.eq.s32.totalorder %s19, 1
    %p63 = por %p61, %p62
    %p65 = scmp.ne.s32.totalorder %s50, %s64
    %p66 = scmp.eq.s32.totalorder %s19, 0
    %p67 = por %p65, %p66
    %s69 = sadd.s32 %s68, 1
    %p72 = scmp.eq.s32.totalorder %s13, 1
    %p73 = scmp.ne.s32.totalorder %s68, %s70
    %p74 = scmp.eq.s32.totalorder %s13, 0
    %p75 = por %p73, %p74
    %p76 = scmp.ne.s32.totalorder %s68, %s70
    %p77 = scmp.eq.s32.totalorder %s18, 1
    %p78 = por %p76, %p77
    %p79 = scmp.ne.s32.totalorder %s70, %s71
    %p80 = scmp.eq.s32.totalorder %s18, 0
    %p81 = por %p79, %p80
    %p82 = scmp.ne.s32.totalorder %s70, %s71
    %p83 = scmp.eq.s32.totalorder %s19, 1
    %p84 = por %p82, %p83
    %p86 = scmp.ne.s32.totalorder %s71, %s85
    %p87 = scmp.eq.s32.totalorder %s19, 0
    %p88 = por %p86, %p87
    %s90 = sadd.s32 %s89, 1
    %p93 = scmp.eq.s32.totalorder %s13, 1
    %p94 = scmp.ne.s32.totalorder %s89, %s91
    %p95 = scmp.eq.s32.totalorder %s13, 0
    %p96 = por %p94, %p95
    %p97 = scmp.ne.s32.totalorder %s89, %s91
    %p98 = scmp.eq.s32.totalorder %s18, 1
    %p99 = por %p97, %p98
    %p100 = scmp.ne.s32.totalorder %s91, %s92
    %p101 = scmp.eq.s32.totalorder %s18, 0
    %p102 = por %p100, %p101
    %p103 = scmp.ne.s32.totalorder %s91, %s92
    %p104 = scmp.eq.s32.totalorder %s19, 1
    %p105 = por %p103, %p104
    %p107 = scmp.ne.s32.totalorder %s92, %s106
    %p108 = scmp.eq.s32.totalorder %s19, 0
    %p109 = por %p107, %p108
    %s110 = ssub.s32 %s13, %s20
    %p111 = scmp.eq.s32.totalorder %s110, 0
    %s113 = sadd.s32 %s112, 1
    %s114 = scalar_select %p111, %s112, %s113
    %p117 = pneg %p111
    %p118 = scmp.eq.s32.totalorder %s13, 1
    %p119 = por %p117, %p118
    %p120 = scmp.ne.s32.totalorder %s112, %s115
    %p121 = scmp.eq.s32.totalorder %s13, 0
    %p122 = por %p120, %p121
    %p123 = scmp.ne.s32.totalorder %s112, %s115
    %p124 = scmp.eq.s32.totalorder %s18, 1
    %p125 = por %p123, %p124
    %p126 = scmp.ne.s32.totalorder %s115, %s116
    %p127 = scmp.eq.s32.totalorder %s18, 0
    %p128 = por %p126, %p127
    %p129 = scmp.ne.s32.totalorder %s115, %s116
    %p130 = scmp.eq.s32.totalorder %s19, 1
    %p131 = por %p129, %p130
    %p133 = scmp.ne.s32.totalorder %s116, %s132
    %p134 = scmp.eq.s32.totalorder %s19, 0
    %p135 = por %p133, %p134
    %s136 = ssub.s32 %s13, %s20
    %p137 = scmp.eq.s32.totalorder %s136, 0
    %s139 = sadd.s32 %s138, 1
    %s140 = scalar_select %p137, %s138, %s139
    %p143 = pneg %p137
    %p144 = scmp.eq.s32.totalorder %s13, 1
    %p145 = por %p143, %p144
    %p146 = scmp.ne.s32.totalorder %s138, %s141
    %p147 = scmp.eq.s32.totalorder %s13, 0
    %p148 = por %p146, %p147
    %p149 = scmp.ne.s32.totalorder %s138, %s141
    %p150 = scmp.eq.s32.totalorder %s18, 1
    %p151 = por %p149, %p150
    %p152 = scmp.ne.s32.totalorder %s141, %s142
    %p153 = scmp.eq.s32.totalorder %s18, 0
    %p154 = por %p152, %p153
    %p155 = scmp.ne.s32.totalorder %s141, %s142
    %p156 = scmp.eq.s32.totalorder %s19, 1
    %p157 = por %p155, %p156
    %p159 = scmp.ne.s32.totalorder %s142, %s158
    %p160 = scmp.eq.s32.totalorder %s19, 0
    %p161 = por %p159, %p160
    %s162 = ssub.s32 %s13, %s20
    %p163 = scmp.eq.s32.totalorder %s162, 0
    %s165 = sadd.s32 %s164, 1
    %s166 = scalar_select %p163, %s164, %s165
    %p169 = pneg %p163
    %p170 = scmp.eq.s32.totalorder %s13, 1
    %p171 = por %p169, %p170
    %p172 = scmp.ne.s32.totalorder %s164, %s167
    %p173 = scmp.eq.s32.totalorder %s13, 0
    %p174 = por %p172, %p173
    %p175 = scmp.ne.s32.totalorder %s164, %s167
    %p176 = scmp.eq.s32.totalorder %s18, 1
    %p177 = por %p175, %p176
    %p178 = scmp.ne.s32.totalorder %s167, %s168
    %p179 = scmp.eq.s32.totalorder %s18, 0
    %p180 = por %p178, %p179
    %p181 = scmp.ne.s32.totalorder %s167, %s168
    %p182 = scmp.eq.s32.totalorder %s19, 1
    %p183 = por %p181, %p182
    %p185 = scmp.ne.s32.totalorder %s168, %s184
    %p186 = scmp.eq.s32.totalorder %s19, 0
    %p187 = por %p185, %p186
    %p188 = scmp.le.s32.totalorder 1, %s13
    %p189 = scmp.lt.s32.totalorder %s13, 3
    %p190 = pnand %p188, %p189
    %p191 = pneg %p190
    // Predicated region
    $region9: #{bottleneck_forward.5} parent=5 // pred_check
      _
    $region10: #{bottleneck_forward.5} parent=5 // pred_check_branch
      %193 = sbr.rel (%p190) target = $region12
    $region11: #{bottleneck_forward.5} parent=5 // pred_region
      %s194 = ssub.s32 %s13, 1
      // Predicated region
      $region13: #{bottleneck_forward.5} parent=11 // pred_check
        %p195 = pneg %p60
      $region14: #{bottleneck_forward.5} parent=11 // pred_check_branch
        %197 = sbr.rel (%p195) target = $region16
      $region15: #{bottleneck_forward.5} parent=11 // pred_region
        _
      $region16: #{bottleneck_forward.5} parent=11 // pred_fallthru
        _
      // Predicated region
      $region17: #{bottleneck_forward.5} parent=11 // pred_check
        %p198 = pneg %p81
      $region18: #{bottleneck_forward.5} parent=11 // pred_check_branch
        %200 = sbr.rel (%p198) target = $region20
      $region19: #{bottleneck_forward.5} parent=11 // pred_region
        _
      $region20: #{bottleneck_forward.5} parent=11 // pred_fallthru
        _
      // Predicated region
      $region21: #{bottleneck_forward.5} parent=11 // pred_check
        %p201 = pneg %p102
      $region22: #{bottleneck_forward.5} parent=11 // pred_check_branch
        %203 = sbr.rel (%p201) target = $region24
      $region23: #{bottleneck_forward.5} parent=11 // pred_region
        _
      $region24: #{bottleneck_forward.5} parent=11 // pred_fallthru
        _
    $region12: #{bottleneck_forward.5} parent=5 // pred_fallthru
      _
    %p204 = scmp.lt.s32.totalorder %s13, 2
    // Predicated region
    $region25: #{bottleneck_forward.5} parent=5 // pred_check
      %p205 = pneg %p204
    $region26: #{bottleneck_forward.5} parent=5 // pred_check_branch
      %207 = sbr.rel (%p205) target = $region28
    $region27: #{bottleneck_forward.5} parent=5 // pred_region
      // Predicated region
      $region29: #{bottleneck_forward.5} parent=27 // pred_check
        %p208 = pneg %p33
      $region30: #{bottleneck_forward.5} parent=27 // pred_check_branch
        %210 = sbr.rel (%p208) target = $region32
      $region31: #{bottleneck_forward.5} parent=27 // pred_region
        %p211 = scmp.lt.s32.totalorder %s13, 1
        %s212 = scalar_select %p211, %s13, 1
        %s213 = smul.addr %s212, 32
        %s214 = smul.addr %s213, 8
        %s215 = scalar_lea.vmem %s0, %s214
      $region32: #{bottleneck_forward.5} parent=27 // pred_fallthru
        _
    $region28: #{bottleneck_forward.5} parent=5 // pred_fallthru
      _
    %p216 = scmp.le.s32.totalorder 1, %s13
    %p217 = scmp.lt.s32.totalorder %s13, 3
    %p218 = pnand %p216, %p217
    %p219 = pneg %p218
    // Predicated region
    $region33: #{bottleneck_forward.5} parent=5 // pred_check
      _
    $region34: #{bottleneck_forward.5} parent=5 // pred_check_branch
      %221 = sbr.rel (%p218) target = $region36
    $region35: #{bottleneck_forward.5} parent=5 // pred_region
      %s222 = ssub.s32 %s13, 1
      %p223 = scmp.lt.s32.totalorder %s18, 1
      %s224 = scalar_select %p223, %s18, 1
      %s225 = smul.addr %s224, 32
      %s226 = smul.addr %s225, 8
      %s227 = scalar_lea.vmem %s0, %s226
      %p228 = pneg %p39
      %p229 = pneg %p36
      %p230 = pneg %p60
      %p231 = pneg %p57
      %p232 = pneg %p81
      %p233 = pneg %p78
      %p234 = pneg %p102
      %p235 = pneg %p99
      %p236 = pneg %p128
      %p237 = pneg %p125
      %p238 = scmp.lt.s32.totalorder %s18, 1
      %s239 = scalar_select %p238, %s18, 1
      %s240 = smul.addr %s239, 32
      %s241 = smul.addr %s240, 8
      %s242 = scalar_lea.vmem %s4, %s241
      %p243 = pneg %p154
      %p244 = pneg %p151
      %p245 = scmp.lt.s32.totalorder %s18, 1
      %s246 = scalar_select %p245, %s18, 1
      %s247 = scalar_lea.vmem %s5, %s246
      %p248 = pneg %p180
      %p249 = pneg %p177
      %p250 = scmp.lt.s32.totalorder %s18, 1
      %s251 = scalar_select %p250, %s18, 1
      %s252 = scalar_lea.vmem %s6, %s251
      %p253 = scmp.lt.s32.totalorder %s18, 1
      %s254 = scalar_select %p253, %s18, 1
      %s255 = smul.addr %s254, 32
      %s256 = smul.addr %s255, 8
      %s257 = scalar_lea.vmem %s0, %s256
      %p258 = scmp.lt.s32.totalorder %s18, 1
      %s259 = scalar_select %p258, %s18, 1
      %s260 = smul.addr %s259, 32
      %s261 = smul.addr %s260, 8
      %s262 = scalar_lea.vmem %s4, %s261
      %p263 = scmp.lt.s32.totalorder %s18, 1
      %s264 = scalar_select %p263, %s18, 1
      %s265 = scalar_lea.vmem %s5, %s264
      %p266 = scmp.lt.s32.totalorder %s18, 1
      %s267 = scalar_select %p266, %s18, 1
      %s268 = scalar_lea.vmem %s6, %s267
      %v270 = vld [vmem:[%s257] sm:$0xff]
      %v271 = vld [vmem:[%s257 + $0x8] sm:$0xff]
      %v272 = vld [vmem:[%s257 + $0x10] sm:$0xff]
      %v273 = vld [vmem:[%s257 + $0x18] sm:$0xff]
      %v274 = vld [vmem:[%s257 + $0x20] sm:$0xff]
      %v275 = vld [vmem:[%s257 + $0x28] sm:$0xff]
      %v276 = vld [vmem:[%s257 + $0x30] sm:$0xff]
      %v277 = vld [vmem:[%s257 + $0x38] sm:$0xff]
      %v278 = vld [vmem:[%s257 + $0x40] sm:$0xff]
      %v279 = vld [vmem:[%s257 + $0x48] sm:$0xff]
      %v280 = vld [vmem:[%s257 + $0x50] sm:$0xff]
      %v281 = vld [vmem:[%s257 + $0x58] sm:$0xff]
      %v282 = vld [vmem:[%s257 + $0x60] sm:$0xff]
      %v283 = vld [vmem:[%s257 + $0x68] sm:$0xff]
      %v284 = vld [vmem:[%s257 + $0x70] sm:$0xff]
      %v285 = vld [vmem:[%s257 + $0x78] sm:$0xff]
      %v286 = vld [vmem:[%s257 + $0x80] sm:$0xff]
      %v287 = vld [vmem:[%s257 + $0x88] sm:$0xff]
      %v288 = vld [vmem:[%s257 + $0x90] sm:$0xff]
      %v289 = vld [vmem:[%s257 + $0x98] sm:$0xff]
      %v290 = vld [vmem:[%s257 + $0xa0] sm:$0xff]
      %v291 = vld [vmem:[%s257 + $0xa8] sm:$0xff]
      %v292 = vld [vmem:[%s257 + $0xb0] sm:$0xff]
      %v293 = vld [vmem:[%s257 + $0xb8] sm:$0xff]
      %v294 = vld [vmem:[%s257 + $0xc0] sm:$0xff]
      %v295 = vld [vmem:[%s257 + $0xc8] sm:$0xff]
      %v296 = vld [vmem:[%s257 + $0xd0] sm:$0xff]
      %v297 = vld [vmem:[%s257 + $0xd8] sm:$0xff]
      %v298 = vld [vmem:[%s257 + $0xe0] sm:$0xff]
      %v299 = vld [vmem:[%s257 + $0xe8] sm:$0xff]
      %v300 = vld [vmem:[%s257 + $0xf0] sm:$0xff]
      %v301 = vld [vmem:[%s257 + $0xf8] sm:$0xff]
      %v302 = vld [vmem:[%s1] sm:$0x1]
      %v304 = vlaneseq
      %v305 = vshrl.u32 %v304, 7
      %v306 = vsub.s32 0, %v305
      %v307 = vrot.slane %v302, %v306
      %v309 = vmul.f32 %v270, %v307
      %v310 = vmul.f32 %v271, %v307
      %v311 = vmul.f32 %v272, %v307
      %v312 = vmul.f32 %v273, %v307
      %v313 = vmul.f32 %v274, %v307
      %v314 = vmul.f32 %v275, %v307
      %v315 = vmul.f32 %v276, %v307
      %v316 = vmul.f32 %v277, %v307
      %v317 = vmul.f32 %v278, %v307
      %v318 = vmul.f32 %v279, %v307
      %v319 = vmul.f32 %v280, %v307
      %v320 = vmul.f32 %v281, %v307
      %v321 = vmul.f32 %v282, %v307
      %v322 = vmul.f32 %v283, %v307
      %v323 = vmul.f32 %v284, %v307
      %v324 = vmul.f32 %v285, %v307
      %v325 = vmul.f32 %v286, %v307
      %v326 = vmul.f32 %v287, %v307
      %v327 = vmul.f32 %v288, %v307
      %v328 = vmul.f32 %v289, %v307
      %v329 = vmul.f32 %v290, %v307
      %v330 = vmul.f32 %v291, %v307
      %v331 = vmul.f32 %v292, %v307
      %v332 = vmul.f32 %v293, %v307
      %v333 = vmul.f32 %v294, %v307
      %v334 = vmul.f32 %v295, %v307
      %v335 = vmul.f32 %v296, %v307
      %v336 = vmul.f32 %v297, %v307
      %v337 = vmul.f32 %v298, %v307
      %v338 = vmul.f32 %v299, %v307
      %v339 = vmul.f32 %v300, %v307
      %v340 = vmul.f32 %v301, %v307
      %v341 = vld [vmem:[%s2] sm:$0x1]
      %v343 = vlaneseq
      %v344 = vshrl.u32 %v343, 7
      %v345 = vsub.s32 0, %v344
      %v346 = vrot.slane %v341, %v345
      %v348 = vadd.f32 %v309, %v346
      %v349 = vadd.f32 %v310, %v346
      %v350 = vadd.f32 %v311, %v346
      %v351 = vadd.f32 %v312, %v346
      %v352 = vadd.f32 %v313, %v346
      %v353 = vadd.f32 %v314, %v346
      %v354 = vadd.f32 %v315, %v346
      %v355 = vadd.f32 %v316, %v346
      %v356 = vadd.f32 %v317, %v346
      %v357 = vadd.f32 %v318, %v346
      %v358 = vadd.f32 %v319, %v346
      %v359 = vadd.f32 %v320, %v346
      %v360 = vadd.f32 %v321, %v346
      %v361 = vadd.f32 %v322, %v346
      %v362 = vadd.f32 %v323, %v346
      %v363 = vadd.f32 %v324, %v346
      %v364 = vadd.f32 %v325, %v346
      %v365 = vadd.f32 %v326, %v346
      %v366 = vadd.f32 %v327, %v346
      %v367 = vadd.f32 %v328, %v346
      %v368 = vadd.f32 %v329, %v346
      %v369 = vadd.f32 %v330, %v346
      %v370 = vadd.f32 %v331, %v346
      %v371 = vadd.f32 %v332, %v346
      %v372 = vadd.f32 %v333, %v346
      %v373 = vadd.f32 %v334, %v346
      %v374 = vadd.f32 %v335, %v346
      %v375 = vadd.f32 %v336, %v346
      %v376 = vadd.f32 %v337, %v346
      %v377 = vadd.f32 %v338, %v346
      %v378 = vadd.f32 %v339, %v346
      %v379 = vadd.f32 %v340, %v346
      %v380 = vmax.f32 %v348, 0.0
      %v381 = vmax.f32 %v349, 0.0
      %v382 = vmax.f32 %v350, 0.0
      %v383 = vmax.f32 %v351, 0.0
      %v384 = vmax.f32 %v352, 0.0
      %v385 = vmax.f32 %v353, 0.0
      %v386 = vmax.f32 %v354, 0.0
      %v387 = vmax.f32 %v355, 0.0
      %v388 = vmax.f32 %v356, 0.0
      %v389 = vmax.f32 %v357, 0.0
      %v390 = vmax.f32 %v358, 0.0
      %v391 = vmax.f32 %v359, 0.0
      %v392 = vmax.f32 %v360, 0.0
      %v393 = vmax.f32 %v361, 0.0
      %v394 = vmax.f32 %v362, 0.0
      %v395 = vmax.f32 %v363, 0.0
      %v396 = vmax.f32 %v364, 0.0
      %v397 = vmax.f32 %v365, 0.0
      %v398 = vmax.f32 %v366, 0.0
      %v399 = vmax.f32 %v367, 0.0
      %v400 = vmax.f32 %v368, 0.0
      %v401 = vmax.f32 %v369, 0.0
      %v402 = vmax.f32 %v370, 0.0
      %v403 = vmax.f32 %v371, 0.0
      %v404 = vmax.f32 %v372, 0.0
      %v405 = vmax.f32 %v373, 0.0
      %v406 = vmax.f32 %v374, 0.0
      %v407 = vmax.f32 %v375, 0.0
      %v408 = vmax.f32 %v376, 0.0
      %v409 = vmax.f32 %v377, 0.0
      %v410 = vmax.f32 %v378, 0.0
      %v411 = vmax.f32 %v379, 0.0
      %412 = vst [vmem:[#allocation2] sm:$0xff] 0.0
      %413 = vst [vmem:[#allocation2 + $0x8] sm:$0xff] 0.0
      %414 = vst [vmem:[#allocation2 + $0x10] sm:$0x3] 0.0
      %s415 = scalar_lea.vmem [#allocation2], 408
      %416 = vst [vmem:[%s415] sm:$0xff] 0.0
      %417 = vst [vmem:[%s415 + $0x8] sm:$0xff] 0.0
      %418 = vst [vmem:[%s415 + $0x10] sm:$0x3] 0.0
      %s419 = scalar_lea.vmem [#allocation2], 24
      %420 = vst [vmem:[%s419] sm:$0x1] 0.0
      %421 = vst [vmem:[%s419 + $0x18] sm:$0x1] 0.0
      %422 = vst [vmem:[%s419 + $0x30] sm:$0x1] 0.0
      %423 = vst [vmem:[%s419 + $0x48] sm:$0x1] 0.0
      %424 = vst [vmem:[%s419 + $0x60] sm:$0x1] 0.0
      %425 = vst [vmem:[%s419 + $0x78] sm:$0x1] 0.0
      %426 = vst [vmem:[%s419 + $0x90] sm:$0x1] 0.0
      %427 = vst [vmem:[%s419 + $0xa8] sm:$0x1] 0.0
      %428 = vst [vmem:[%s419 + $0xc0] sm:$0x1] 0.0
      %429 = vst [vmem:[%s419 + $0xd8] sm:$0x1] 0.0
      %430 = vst [vmem:[%s419 + $0xf0] sm:$0x1] 0.0
      %431 = vst [vmem:[%s419 + $0x108] sm:$0x1] 0.0
      %432 = vst [vmem:[%s419 + $0x120] sm:$0x1] 0.0
      %433 = vst [vmem:[%s419 + $0x138] sm:$0x1] 0.0
      %434 = vst [vmem:[%s419 + $0x150] sm:$0x1] 0.0
      %435 = vst [vmem:[%s419 + $0x168] sm:$0x1] 0.0
      %436 = vst [vmem:[%s419 + $0x11] sm:$0x1] 0.0
      %437 = vst [vmem:[%s419 + $0x29] sm:$0x1] 0.0
      %438 = vst [vmem:[%s419 + $0x41] sm:$0x1] 0.0
      %439 = vst [vmem:[%s419 + $0x59] sm:$0x1] 0.0
      %440 = vst [vmem:[%s419 + $0x71] sm:$0x1] 0.0
      %441 = vst [vmem:[%s419 + $0x89] sm:$0x1] 0.0
      %442 = vst [vmem:[%s419 + $0xa1] sm:$0x1] 0.0
      %443 = vst [vmem:[%s419 + $0xb9] sm:$0x1] 0.0
      %444 = vst [vmem:[%s419 + $0xd1] sm:$0x1] 0.0
      %445 = vst [vmem:[%s419 + $0xe9] sm:$0x1] 0.0
      %446 = vst [vmem:[%s419 + $0x101] sm:$0x1] 0.0
      %447 = vst [vmem:[%s419 + $0x119] sm:$0x1] 0.0
      %448 = vst [vmem:[%s419 + $0x131] sm:$0x1] 0.0
      %449 = vst [vmem:[%s419 + $0x149] sm:$0x1] 0.0
      %450 = vst [vmem:[%s419 + $0x161] sm:$0x1] 0.0
      %451 = vst [vmem:[%s419 + $0x179] sm:$0x1] 0.0
      %452 = vst [vmem:[%s419 + $0x1] sm:$0xff] %v380
      %453 = vst [vmem:[%s419 + $0x9] sm:$0xff] %v381
      %454 = vst [vmem:[%s419 + $0x19] sm:$0xff] %v382
      %455 = vst [vmem:[%s419 + $0x21] sm:$0xff] %v383
      %456 = vst [vmem:[%s419 + $0x31] sm:$0xff] %v384
      %457 = vst [vmem:[%s419 + $0x39] sm:$0xff] %v385
      %458 = vst [vmem:[%s419 + $0x49] sm:$0xff] %v386
      %459 = vst [vmem:[%s419 + $0x51] sm:$0xff] %v387
      %460 = vst [vmem:[%s419 + $0x61] sm:$0xff] %v388
      %461 = vst [vmem:[%s419 + $0x69] sm:$0xff] %v389
      %462 = vst [vmem:[%s419 + $0x79] sm:$0xff] %v390
      %463 = vst [vmem:[%s419 + $0x81] sm:$0xff] %v391
      %464 = vst [vmem:[%s419 + $0x91] sm:$0xff] %v392
      %465 = vst [vmem:[%s419 + $0x99] sm:$0xff] %v393
      %466 = vst [vmem:[%s419 + $0xa9] sm:$0xff] %v394
      %467 = vst [vmem:[%s419 + $0xb1] sm:$0xff] %v395
      %468 = vst [vmem:[%s419 + $0xc1] sm:$0xff] %v396
      %469 = vst [vmem:[%s419 + $0xc9] sm:$0xff] %v397
      %470 = vst [vmem:[%s419 + $0xd9] sm:$0xff] %v398
      %471 = vst [vmem:[%s419 + $0xe1] sm:$0xff] %v399
      %472 = vst [vmem:[%s419 + $0xf1] sm:$0xff] %v400
      %473 = vst [vmem:[%s419 + $0xf9] sm:$0xff] %v401
      %474 = vst [vmem:[%s419 + $0x109] sm:$0xff] %v402
      %475 = vst [vmem:[%s419 + $0x111] sm:$0xff] %v403
      %476 = vst [vmem:[%s419 + $0x121] sm:$0xff] %v404
      %477 = vst [vmem:[%s419 + $0x129] sm:$0xff] %v405
      %478 = vst [vmem:[%s419 + $0x139] sm:$0xff] %v406
      %479 = vst [vmem:[%s419 + $0x141] sm:$0xff] %v407
      %480 = vst [vmem:[%s419 + $0x151] sm:$0xff] %v408
      %481 = vst [vmem:[%s419 + $0x159] sm:$0xff] %v409
      %482 = vst [vmem:[%s419 + $0x169] sm:$0xff] %v410
      %483 = vst [vmem:[%s419 + $0x171] sm:$0xff] %v411
      %v484 = vld [vmem:[#allocation2] sm:$0xff]
      %v485 = vld [vmem:[#allocation2 + $0x8] sm:$0xff]
      %v486 = vld [vmem:[#allocation2 + $0x18] sm:$0xff]
      %v487 = vld [vmem:[#allocation2 + $0x20] sm:$0xff]
      %v488 = vld [vmem:[#allocation2 + $0x30] sm:$0xff]
      %v489 = vld [vmem:[#allocation2 + $0x38] sm:$0xff]
      %v490 = vld [vmem:[#allocation2 + $0x48] sm:$0xff]
      %v491 = vld [vmem:[#allocation2 + $0x50] sm:$0xff]
      %v492 = vld [vmem:[#allocation2 + $0x60] sm:$0xff]
      %v493 = vld [vmem:[#allocation2 + $0x68] sm:$0xff]
      %v494 = vld [vmem:[#allocation2 + $0x78] sm:$0xff]
      %v495 = vld [vmem:[#allocation2 + $0x80] sm:$0xff]
      %v496 = vld [vmem:[#allocation2 + $0x90] sm:$0xff]
      %v497 = vld [vmem:[#allocation2 + $0x98] sm:$0xff]
      %v498 = vld [vmem:[#allocation2 + $0xa8] sm:$0xff]
      %v499 = vld [vmem:[#allocation2 + $0xb0] sm:$0xff]
      %v500 = vld [vmem:[#allocation2 + $0xc0] sm:$0xff]
      %v501 = vld [vmem:[#allocation2 + $0xc8] sm:$0xff]
      %v502 = vld [vmem:[#allocation2 + $0xd8] sm:$0xff]
      %v503 = vld [vmem:[#allocation2 + $0xe0] sm:$0xff]
      %v504 = vld [vmem:[#allocation2 + $0xf0] sm:$0xff]
      %v505 = vld [vmem:[#allocation2 + $0xf8] sm:$0xff]
      %v506 = vld [vmem:[#allocation2 + $0x108] sm:$0xff]
      %v507 = vld [vmem:[#allocation2 + $0x110] sm:$0xff]
      %v508 = vld [vmem:[#allocation2 + $0x120] sm:$0xff]
      %v509 = vld [vmem:[#allocation2 + $0x128] sm:$0xff]
      %v510 = vld [vmem:[#allocation2 + $0x138] sm:$0xff]
      %v511 = vld [vmem:[#allocation2 + $0x140] sm:$0xff]
      %v512 = vld [vmem:[#allocation2 + $0x150] sm:$0xff]
      %v513 = vld [vmem:[#allocation2 + $0x158] sm:$0xff]
      %v514 = vld [vmem:[#allocation2 + $0x168] sm:$0xff]
      %v515 = vld [vmem:[#allocation2 + $0x170] sm:$0xff]
      %v516 = vpack.c.bf16 %v485, %v484
      %v517 = vpack.c.bf16 %v487, %v486
      %v518 = vpack.c.bf16 %v489, %v488
      %v519 = vpack.c.bf16 %v491, %v490
      %v520 = vpack.c.bf16 %v493, %v492
      %v521 = vpack.c.bf16 %v495, %v494
      %v522 = vpack.c.bf16 %v497, %v496
      %v523 = vpack.c.bf16 %v499, %v498
      %v524 = vpack.c.bf16 %v501, %v500
      %v525 = vpack.c.bf16 %v503, %v502
      %v526 = vpack.c.bf16 %v505, %v504
      %v527 = vpack.c.bf16 %v507, %v506
      %v528 = vpack.c.bf16 %v509, %v508
      %v529 = vpack.c.bf16 %v511, %v510
      %v530 = vpack.c.bf16 %v513, %v512
      %v531 = vpack.c.bf16 %v515, %v514
      %v532 = vld [vmem:[#allocation2 + $0x1] sm:$0xff]
      %v533 = vld [vmem:[#allocation2 + $0x9] sm:$0xff]
      %v534 = vld [vmem:[#allocation2 + $0x19] sm:$0xff]
      %v535 = vld [vmem:[#allocation2 + $0x21] sm:$0xff]
      %v536 = vld [vmem:[#allocation2 + $0x31] sm:$0xff]
      %v537 = vld [vmem:[#allocation2 + $0x39] sm:$0xff]
      %v538 = vld [vmem:[#allocation2 + $0x49] sm:$0xff]
      %v539 = vld [vmem:[#allocation2 + $0x51] sm:$0xff]
      %v540 = vld [vmem:[#allocation2 + $0x61] sm:$0xff]
      %v541 = vld [vmem:[#allocation2 + $0x69] sm:$0xff]
      %v542 = vld [vmem:[#allocation2 + $0x79] sm:$0xff]
      %v543 = vld [vmem:[#allocation2 + $0x81] sm:$0xff]
      %v544 = vld [vmem:[#allocation2 + $0x91] sm:$0xff]
      %v545 = vld [vmem:[#allocation2 + $0x99] sm:$0xff]
      %v546 = vld [vmem:[#allocation2 + $0xa9] sm:$0xff]
      %v547 = vld [vmem:[#allocation2 + $0xb1] sm:$0xff]
      %v548 = vld [vmem:[#allocation2 + $0xc1] sm:$0xff]
      %v549 = vld [vmem:[#allocation2 + $0xc9] sm:$0xff]
      %v550 = vld [vmem:[#allocation2 + $0xd9] sm:$0xff]
      %v551 = vld [vmem:[#allocation2 + $0xe1] sm:$0xff]
      %v552 = vld [vmem:[#allocation2 + $0xf1] sm:$0xff]
      %v553 = vld [vmem:[#allocation2 + $0xf9] sm:$0xff]
      %v554 = vld [vmem:[#allocation2 + $0x109] sm:$0xff]
      %v555 = vld [vmem:[#allocation2 + $0x111] sm:$0xff]
      %v556 = vld [vmem:[#allocation2 + $0x121] sm:$0xff]
      %v557 = vld [vmem:[#allocation2 + $0x129] sm:$0xff]
      %v558 = vld [vmem:[#allocation2 + $0x139] sm:$0xff]
      %v559 = vld [vmem:[#allocation2 + $0x141] sm:$0xff]
      %v560 = vld [vmem:[#allocation2 + $0x151] sm:$0xff]
      %v561 = vld [vmem:[#allocation2 + $0x159] sm:$0xff]
      %v562 = vld [vmem:[#allocation2 + $0x169] sm:$0xff]
      %v563 = vld [vmem:[#allocation2 + $0x171] sm:$0xff]
      %v564 = vpack.c.bf16 %v533, %v532
      %v565 = vpack.c.bf16 %v535, %v534
      %v566 = vpack.c.bf16 %v537, %v536
      %v567 = vpack.c.bf16 %v539, %v538
      %v568 = vpack.c.bf16 %v541, %v540
      %v569 = vpack.c.bf16 %v543, %v542
      %v570 = vpack.c.bf16 %v545, %v544
      %v571 = vpack.c.bf16 %v547, %v546
      %v572 = vpack.c.bf16 %v549, %v548
      %v573 = vpack.c.bf16 %v551, %v550
      %v574 = vpack.c.bf16 %v553, %v552
      %v575 = vpack.c.bf16 %v555, %v554
      %v576 = vpack.c.bf16 %v557, %v556
      %v577 = vpack.c.bf16 %v559, %v558
      %v578 = vpack.c.bf16 %v561, %v560
      %v579 = vpack.c.bf16 %v563, %v562
      %v580 = vld [vmem:[#allocation2 + $0x2] sm:$0xff]
      %v581 = vld [vmem:[#allocation2 + $0xa] sm:$0xff]
      %v582 = vld [vmem:[#allocation2 + $0x1a] sm:$0xff]
      %v583 = vld [vmem:[#allocation2 + $0x22] sm:$0xff]
      %v584 = vld [vmem:[#allocation2 + $0x32] sm:$0xff]
      %v585 = vld [vmem:[#allocation2 + $0x3a] sm:$0xff]
      %v586 = vld [vmem:[#allocation2 + $0x4a] sm:$0xff]
      %v587 = vld [vmem:[#allocation2 + $0x52] sm:$0xff]
      %v588 = vld [vmem:[#allocation2 + $0x62] sm:$0xff]
      %v589 = vld [vmem:[#allocation2 + $0x6a] sm:$0xff]
      %v590 = vld [vmem:[#allocation2 + $0x7a] sm:$0xff]
      %v591 = vld [vmem:[#allocation2 + $0x82] sm:$0xff]
      %v592 = vld [vmem:[#allocation2 + $0x92] sm:$0xff]
      %v593 = vld [vmem:[#allocation2 + $0x9a] sm:$0xff]
      %v594 = vld [vmem:[#allocation2 + $0xaa] sm:$0xff]
      %v595 = vld [vmem:[#allocation2 + $0xb2] sm:$0xff]
      %v596 = vld [vmem:[#allocation2 + $0xc2] sm:$0xff]
      %v597 = vld [vmem:[#allocation2 + $0xca] sm:$0xff]
      %v598 = vld [vmem:[#allocation2 + $0xda] sm:$0xff]
      %v599 = vld [vmem:[#allocation2 + $0xe2] sm:$0xff]
      %v600 = vld [vmem:[#allocation2 + $0xf2] sm:$0xff]
      %v601 = vld [vmem:[#allocation2 + $0xfa] sm:$0xff]
      %v602 = vld [vmem:[#allocation2 + $0x10a] sm:$0xff]
      %v603 = vld [vmem:[#allocation2 + $0x112] sm:$0xff]
      %v604 = vld [vmem:[#allocation2 + $0x122] sm:$0xff]
      %v605 = vld [vmem:[#allocation2 + $0x12a] sm:$0xff]
      %v606 = vld [vmem:[#allocation2 + $0x13a] sm:$0xff]
      %v607 = vld [vmem:[#allocation2 + $0x142] sm:$0xff]
      %v608 = vld [vmem:[#allocation2 + $0x152] sm:$0xff]
      %v609 = vld [vmem:[#allocation2 + $0x15a] sm:$0xff]
      %v610 = vld [vmem:[#allocation2 + $0x16a] sm:$0xff]
      %v611 = vld [vmem:[#allocation2 + $0x172] sm:$0xff]
      %v612 = vpack.c.bf16 %v581, %v580
      %v613 = vpack.c.bf16 %v583, %v582
      %v614 = vpack.c.bf16 %v585, %v584
      %v615 = vpack.c.bf16 %v587, %v586
      %v616 = vpack.c.bf16 %v589, %v588
      %v617 = vpack.c.bf16 %v591, %v590
      %v618 = vpack.c.bf16 %v593, %v592
      %v619 = vpack.c.bf16 %v595, %v594
      %v620 = vpack.c.bf16 %v597, %v596
      %v621 = vpack.c.bf16 %v599, %v598
      %v622 = vpack.c.bf16 %v601, %v600
      %v623 = vpack.c.bf16 %v603, %v602
      %v624 = vpack.c.bf16 %v605, %v604
      %v625 = vpack.c.bf16 %v607, %v606
      %v626 = vpack.c.bf16 %v609, %v608
      %v627 = vpack.c.bf16 %v611, %v610
      %v628 = vld [vmem:[%s419] sm:$0xff]
      %v629 = vld [vmem:[%s419 + $0x8] sm:$0xff]
      %v630 = vld [vmem:[%s419 + $0x18] sm:$0xff]
      %v631 = vld [vmem:[%s419 + $0x20] sm:$0xff]
      %v632 = vld [vmem:[%s419 + $0x30] sm:$0xff]
      %v633 = vld [vmem:[%s419 + $0x38] sm:$0xff]
      %v634 = vld [vmem:[%s419 + $0x48] sm:$0xff]
      %v635 = vld [vmem:[%s419 + $0x50] sm:$0xff]
      %v636 = vld [vmem:[%s419 + $0x60] sm:$0xff]
      %v637 = vld [vmem:[%s419 + $0x68] sm:$0xff]
      %v638 = vld [vmem:[%s419 + $0x78] sm:$0xff]
      %v639 = vld [vmem:[%s419 + $0x80] sm:$0xff]
      %v640 = vld [vmem:[%s419 + $0x90] sm:$0xff]
      %v641 = vld [vmem:[%s419 + $0x98] sm:$0xff]
      %v642 = vld [vmem:[%s419 + $0xa8] sm:$0xff]
      %v643 = vld [vmem:[%s419 + $0xb0] sm:$0xff]
      %v644 = vld [vmem:[%s419 + $0xc0] sm:$0xff]
      %v645 = vld [vmem:[%s419 + $0xc8] sm:$0xff]
      %v646 = vld [vmem:[%s419 + $0xd8] sm:$0xff]
      %v647 = vld [vmem:[%s419 + $0xe0] sm:$0xff]
      %v648 = vld [vmem:[%s419 + $0xf0] sm:$0xff]
      %v649 = vld [vmem:[%s419 + $0xf8] sm:$0xff]
      %v650 = vld [vmem:[%s419 + $0x108] sm:$0xff]
      %v651 = vld [vmem:[%s419 + $0x110] sm:$0xff]
      %v652 = vld [vmem:[%s419 + $0x120] sm:$0xff]
      %v653 = vld [vmem:[%s419 + $0x128] sm:$0xff]
      %v654 = vld [vmem:[%s419 + $0x138] sm:$0xff]
      %v655 = vld [vmem:[%s419 + $0x140] sm:$0xff]
      %v656 = vld [vmem:[%s419 + $0x150] sm:$0xff]
      %v657 = vld [vmem:[%s419 + $0x158] sm:$0xff]
      %v658 = vld [vmem:[%s419 + $0x168] sm:$0xff]
      %v659 = vld [vmem:[%s419 + $0x170] sm:$0xff]
      %v660 = vpack.c.bf16 %v629, %v628
      %v661 = vpack.c.bf16 %v631, %v630
      %v662 = vpack.c.bf16 %v633, %v632
      %v663 = vpack.c.bf16 %v635, %v634
      %v664 = vpack.c.bf16 %v637, %v636
      %v665 = vpack.c.bf16 %v639, %v638
      %v666 = vpack.c.bf16 %v641, %v640
      %v667 = vpack.c.bf16 %v643, %v642
      %v668 = vpack.c.bf16 %v645, %v644
      %v669 = vpack.c.bf16 %v647, %v646
      %v670 = vpack.c.bf16 %v649, %v648
      %v671 = vpack.c.bf16 %v651, %v650
      %v672 = vpack.c.bf16 %v653, %v652
      %v673 = vpack.c.bf16 %v655, %v654
      %v674 = vpack.c.bf16 %v657, %v656
      %v675 = vpack.c.bf16 %v659, %v658
      %v676 = vld [vmem:[%s419 + $0x1] sm:$0xff]
      %v677 = vld [vmem:[%s419 + $0x9] sm:$0xff]
      %v678 = vld [vmem:[%s419 + $0x19] sm:$0xff]
      %v679 = vld [vmem:[%s419 + $0x21] sm:$0xff]
      %v680 = vld [vmem:[%s419 + $0x31] sm:$0xff]
      %v681 = vld [vmem:[%s419 + $0x39] sm:$0xff]
      %v682 = vld [vmem:[%s419 + $0x49] sm:$0xff]
      %v683 = vld [vmem:[%s419 + $0x51] sm:$0xff]
      %v684 = vld [vmem:[%s419 + $0x61] sm:$0xff]
      %v685 = vld [vmem:[%s419 + $0x69] sm:$0xff]
      %v686 = vld [vmem:[%s419 + $0x79] sm:$0xff]
      %v687 = vld [vmem:[%s419 + $0x81] sm:$0xff]
      %v688 = vld [vmem:[%s419 + $0x91] sm:$0xff]
      %v689 = vld [vmem:[%s419 + $0x99] sm:$0xff]
      %v690 = vld [vmem:[%s419 + $0xa9] sm:$0xff]
      %v691 = vld [vmem:[%s419 + $0xb1] sm:$0xff]
      %v692 = vld [vmem:[%s419 + $0xc1] sm:$0xff]
      %v693 = vld [vmem:[%s419 + $0xc9] sm:$0xff]
      %v694 = vld [vmem:[%s419 + $0xd9] sm:$0xff]
      %v695 = vld [vmem:[%s419 + $0xe1] sm:$0xff]
      %v696 = vld [vmem:[%s419 + $0xf1] sm:$0xff]
      %v697 = vld [vmem:[%s419 + $0xf9] sm:$0xff]
      %v698 = vld [vmem:[%s419 + $0x109] sm:$0xff]
      %v699 = vld [vmem:[%s419 + $0x111] sm:$0xff]
      %v700 = vld [vmem:[%s419 + $0x121] sm:$0xff]
      %v701 = vld [vmem:[%s419 + $0x129] sm:$0xff]
      %v702 = vld [vmem:[%s419 + $0x139] sm:$0xff]
      %v703 = vld [vmem:[%s419 + $0x141] sm:$0xff]
      %v704 = vld [vmem:[%s419 + $0x151] sm:$0xff]
      %v705 = vld [vmem:[%s419 + $0x159] sm:$0xff]
      %v706 = vld [vmem:[%s419 + $0x169] sm:$0xff]
      %v707 = vld [vmem:[%s419 + $0x171] sm:$0xff]
      %v708 = vpack.c.bf16 %v677, %v676
      %v709 = vpack.c.bf16 %v679, %v678
      %v710 = vpack.c.bf16 %v681, %v680
      %v711 = vpack.c.bf16 %v683, %v682
      %v712 = vpack.c.bf16 %v685, %v684
      %v713 = vpack.c.bf16 %v687, %v686
      %v714 = vpack.c.bf16 %v689, %v688
      %v715 = vpack.c.bf16 %v691, %v690
      %v716 = vpack.c.bf16 %v693, %v692
      %v717 = vpack.c.bf16 %v695, %v694
      %v718 = vpack.c.bf16 %v697, %v696
      %v719 = vpack.c.bf16 %v699, %v698
      %v720 = vpack.c.bf16 %v701, %v700
      %v721 = vpack.c.bf16 %v703, %v702
      %v722 = vpack.c.bf16 %v705, %v704
      %v723 = vpack.c.bf16 %v707, %v706
      %v724 = vld [vmem:[%s419 + $0x2] sm:$0xff]
      %v725 = vld [vmem:[%s419 + $0xa] sm:$0xff]
      %v726 = vld [vmem:[%s419 + $0x1a] sm:$0xff]
      %v727 = vld [vmem:[%s419 + $0x22] sm:$0xff]
      %v728 = vld [vmem:[%s419 + $0x32] sm:$0xff]
      %v729 = vld [vmem:[%s419 + $0x3a] sm:$0xff]
      %v730 = vld [vmem:[%s419 + $0x4a] sm:$0xff]
      %v731 = vld [vmem:[%s419 + $0x52] sm:$0xff]
      %v732 = vld [vmem:[%s419 + $0x62] sm:$0xff]
      %v733 = vld [vmem:[%s419 + $0x6a] sm:$0xff]
      %v734 = vld [vmem:[%s419 + $0x7a] sm:$0xff]
      %v735 = vld [vmem:[%s419 + $0x82] sm:$0xff]
      %v736 = vld [vmem:[%s419 + $0x92] sm:$0xff]
      %v737 = vld [vmem:[%s419 + $0x9a] sm:$0xff]
      %v738 = vld [vmem:[%s419 + $0xaa] sm:$0xff]
      %v739 = vld [vmem:[%s419 + $0xb2] sm:$0xff]
      %v740 = vld [vmem:[%s419 + $0xc2] sm:$0xff]
      %v741 = vld [vmem:[%s419 + $0xca] sm:$0xff]
      %v742 = vld [vmem:[%s419 + $0xda] sm:$0xff]
      %v743 = vld [vmem:[%s419 + $0xe2] sm:$0xff]
      %v744 = vld [vmem:[%s419 + $0xf2] sm:$0xff]
      %v745 = vld [vmem:[%s419 + $0xfa] sm:$0xff]
      %v746 = vld [vmem:[%s419 + $0x10a] sm:$0xff]
      %v747 = vld [vmem:[%s419 + $0x112] sm:$0xff]
      %v748 = vld [vmem:[%s419 + $0x122] sm:$0xff]
      %v749 = vld [vmem:[%s419 + $0x12a] sm:$0xff]
      %v750 = vld [vmem:[%s419 + $0x13a] sm:$0xff]
      %v751 = vld [vmem:[%s419 + $0x142] sm:$0xff]
      %v752 = vld [vmem:[%s419 + $0x152] sm:$0xff]
      %v753 = vld [vmem:[%s419 + $0x15a] sm:$0xff]
      %v754 = vld [vmem:[%s419 + $0x16a] sm:$0xff]
      %v755 = vld [vmem:[%s419 + $0x172] sm:$0xff]
      %v756 = vpack.c.bf16 %v725, %v724
      %v757 = vpack.c.bf16 %v727, %v726
      %v758 = vpack.c.bf16 %v729, %v728
      %v759 = vpack.c.bf16 %v731, %v730
      %v760 = vpack.c.bf16 %v733, %v732
      %v761 = vpack.c.bf16 %v735, %v734
      %v762 = vpack.c.bf16 %v737, %v736
      %v763 = vpack.c.bf16 %v739, %v738
      %v764 = vpack.c.bf16 %v741, %v740
      %v765 = vpack.c.bf16 %v743, %v742
      %v766 = vpack.c.bf16 %v745, %v744
      %v767 = vpack.c.bf16 %v747, %v746
      %v768 = vpack.c.bf16 %v749, %v748
      %v769 = vpack.c.bf16 %v751, %v750
      %v770 = vpack.c.bf16 %v753, %v752
      %v771 = vpack.c.bf16 %v755, %v754
      %s772 = scalar_lea.vmem [#allocation2], 48
      %v773 = vld [vmem:[%s772] sm:$0xff]
      %v774 = vld [vmem:[%s772 + $0x8] sm:$0xff]
      %v775 = vld [vmem:[%s772 + $0x18] sm:$0xff]
      %v776 = vld [vmem:[%s772 + $0x20] sm:$0xff]
      %v777 = vld [vmem:[%s772 + $0x30] sm:$0xff]
      %v778 = vld [vmem:[%s772 + $0x38] sm:$0xff]
      %v779 = vld [vmem:[%s772 + $0x48] sm:$0xff]
      %v780 = vld [vmem:[%s772 + $0x50] sm:$0xff]
      %v781 = vld [vmem:[%s772 + $0x60] sm:$0xff]
      %v782 = vld [vmem:[%s772 + $0x68] sm:$0xff]
      %v783 = vld [vmem:[%s772 + $0x78] sm:$0xff]
      %v784 = vld [vmem:[%s772 + $0x80] sm:$0xff]
      %v785 = vld [vmem:[%s772 + $0x90] sm:$0xff]
      %v786 = vld [vmem:[%s772 + $0x98] sm:$0xff]
      %v787 = vld [vmem:[%s772 + $0xa8] sm:$0xff]
      %v788 = vld [vmem:[%s772 + $0xb0] sm:$0xff]
      %v789 = vld [vmem:[%s772 + $0xc0] sm:$0xff]
      %v790 = vld [vmem:[%s772 + $0xc8] sm:$0xff]
      %v791 = vld [vmem:[%s772 + $0xd8] sm:$0xff]
      %v792 = vld [vmem:[%s772 + $0xe0] sm:$0xff]
      %v793 = vld [vmem:[%s772 + $0xf0] sm:$0xff]
      %v794 = vld [vmem:[%s772 + $0xf8] sm:$0xff]
      %v795 = vld [vmem:[%s772 + $0x108] sm:$0xff]
      %v796 = vld [vmem:[%s772 + $0x110] sm:$0xff]
      %v797 = vld [vmem:[%s772 + $0x120] sm:$0xff]
      %v798 = vld [vmem:[%s772 + $0x128] sm:$0xff]
      %v799 = vld [vmem:[%s772 + $0x138] sm:$0xff]
      %v800 = vld [vmem:[%s772 + $0x140] sm:$0xff]
      %v801 = vld [vmem:[%s772 + $0x150] sm:$0xff]
      %v802 = vld [vmem:[%s772 + $0x158] sm:$0xff]
      %v803 = vld [vmem:[%s772 + $0x168] sm:$0xff]
      %v804 = vld [vmem:[%s772 + $0x170] sm:$0xff]
      %v805 = vpack.c.bf16 %v774, %v773
      %v806 = vpack.c.bf16 %v776, %v775
      %v807 = vpack.c.bf16 %v778, %v777
      %v808 = vpack.c.bf16 %v780, %v779
      %v809 = vpack.c.bf16 %v782, %v781
      %v810 = vpack.c.bf16 %v784, %v783
      %v811 = vpack.c.bf16 %v786, %v785
      %v812 = vpack.c.bf16 %v788, %v787
      %v813 = vpack.c.bf16 %v790, %v789
      %v814 = vpack.c.bf16 %v792, %v791
      %v815 = vpack.c.bf16 %v794, %v793
      %v816 = vpack.c.bf16 %v796, %v795
      %v817 = vpack.c.bf16 %v798, %v797
      %v818 = vpack.c.bf16 %v800, %v799
      %v819 = vpack.c.bf16 %v802, %v801
      %v820 = vpack.c.bf16 %v804, %v803
      %v821 = vld [vmem:[%s772 + $0x1] sm:$0xff]
      %v822 = vld [vmem:[%s772 + $0x9] sm:$0xff]
      %v823 = vld [vmem:[%s772 + $0x19] sm:$0xff]
      %v824 = vld [vmem:[%s772 + $0x21] sm:$0xff]
      %v825 = vld [vmem:[%s772 + $0x31] sm:$0xff]
      %v826 = vld [vmem:[%s772 + $0x39] sm:$0xff]
      %v827 = vld [vmem:[%s772 + $0x49] sm:$0xff]
      %v828 = vld [vmem:[%s772 + $0x51] sm:$0xff]
      %v829 = vld [vmem:[%s772 + $0x61] sm:$0xff]
      %v830 = vld [vmem:[%s772 + $0x69] sm:$0xff]
      %v831 = vld [vmem:[%s772 + $0x79] sm:$0xff]
      %v832 = vld [vmem:[%s772 + $0x81] sm:$0xff]
      %v833 = vld [vmem:[%s772 + $0x91] sm:$0xff]
      %v834 = vld [vmem:[%s772 + $0x99] sm:$0xff]
      %v835 = vld [vmem:[%s772 + $0xa9] sm:$0xff]
      %v836 = vld [vmem:[%s772 + $0xb1] sm:$0xff]
      %v837 = vld [vmem:[%s772 + $0xc1] sm:$0xff]
      %v838 = vld [vmem:[%s772 + $0xc9] sm:$0xff]
      %v839 = vld [vmem:[%s772 + $0xd9] sm:$0xff]
      %v840 = vld [vmem:[%s772 + $0xe1] sm:$0xff]
      %v841 = vld [vmem:[%s772 + $0xf1] sm:$0xff]
      %v842 = vld [vmem:[%s772 + $0xf9] sm:$0xff]
      %v843 = vld [vmem:[%s772 + $0x109] sm:$0xff]
      %v844 = vld [vmem:[%s772 + $0x111] sm:$0xff]
      %v845 = vld [vmem:[%s772 + $0x121] sm:$0xff]
      %v846 = vld [vmem:[%s772 + $0x129] sm:$0xff]
      %v847 = vld [vmem:[%s772 + $0x139] sm:$0xff]
      %v848 = vld [vmem:[%s772 + $0x141] sm:$0xff]
      %v849 = vld [vmem:[%s772 + $0x151] sm:$0xff]
      %v850 = vld [vmem:[%s772 + $0x159] sm:$0xff]
      %v851 = vld [vmem:[%s772 + $0x169] sm:$0xff]
      %v852 = vld [vmem:[%s772 + $0x171] sm:$0xff]
      %v853 = vpack.c.bf16 %v822, %v821
      %v854 = vpack.c.bf16 %v824, %v823
      %v855 = vpack.c.bf16 %v826, %v825
      %v856 = vpack.c.bf16 %v828, %v827
      %v857 = vpack.c.bf16 %v830, %v829
      %v858 = vpack.c.bf16 %v832, %v831
      %v859 = vpack.c.bf16 %v834, %v833
      %v860 = vpack.c.bf16 %v836, %v835
      %v861 = vpack.c.bf16 %v838, %v837
      %v862 = vpack.c.bf16 %v840, %v839
      %v863 = vpack.c.bf16 %v842, %v841
      %v864 = vpack.c.bf16 %v844, %v843
      %v865 = vpack.c.bf16 %v846, %v845
      %v866 = vpack.c.bf16 %v848, %v847
      %v867 = vpack.c.bf16 %v850, %v849
      %v868 = vpack.c.bf16 %v852, %v851
      %v869 = vld [vmem:[%s772 + $0x2] sm:$0xff]
      %v870 = vld [vmem:[%s772 + $0xa] sm:$0xff]
      %v871 = vld [vmem:[%s772 + $0x1a] sm:$0xff]
      %v872 = vld [vmem:[%s772 + $0x22] sm:$0xff]
      %v873 = vld [vmem:[%s772 + $0x32] sm:$0xff]
      %v874 = vld [vmem:[%s772 + $0x3a] sm:$0xff]
      %v875 = vld [vmem:[%s772 + $0x4a] sm:$0xff]
      %v876 = vld [vmem:[%s772 + $0x52] sm:$0xff]
      %v877 = vld [vmem:[%s772 + $0x62] sm:$0xff]
      %v878 = vld [vmem:[%s772 + $0x6a] sm:$0xff]
      %v879 = vld [vmem:[%s772 + $0x7a] sm:$0xff]
      %v880 = vld [vmem:[%s772 + $0x82] sm:$0xff]
      %v881 = vld [vmem:[%s772 + $0x92] sm:$0xff]
      %v882 = vld [vmem:[%s772 + $0x9a] sm:$0xff]
      %v883 = vld [vmem:[%s772 + $0xaa] sm:$0xff]
      %v884 = vld [vmem:[%s772 + $0xb2] sm:$0xff]
      %v885 = vld [vmem:[%s772 + $0xc2] sm:$0xff]
      %v886 = vld [vmem:[%s772 + $0xca] sm:$0xff]
      %v887 = vld [vmem:[%s772 + $0xda] sm:$0xff]
      %v888 = vld [vmem:[%s772 + $0xe2] sm:$0xff]
      %v889 = vld [vmem:[%s772 + $0xf2] sm:$0xff]
      %v890 = vld [vmem:[%s772 + $0xfa] sm:$0xff]
      %v891 = vld [vmem:[%s772 + $0x10a] sm:$0xff]
      %v892 = vld [vmem:[%s772 + $0x112] sm:$0xff]
      %v893 = vld [vmem:[%s772 + $0x122] sm:$0xff]
      %v894 = vld [vmem:[%s772 + $0x12a] sm:$0xff]
      %v895 = vld [vmem:[%s772 + $0x13a] sm:$0xff]
      %v896 = vld [vmem:[%s772 + $0x142] sm:$0xff]
      %v897 = vld [vmem:[%s772 + $0x152] sm:$0xff]
      %v898 = vld [vmem:[%s772 + $0x15a] sm:$0xff]
      %v899 = vld [vmem:[%s772 + $0x16a] sm:$0xff]
      %v900 = vld [vmem:[%s772 + $0x172] sm:$0xff]
      %v901 = vpack.c.bf16 %v870, %v869
      %v902 = vpack.c.bf16 %v872, %v871
      %v903 = vpack.c.bf16 %v874, %v873
      %v904 = vpack.c.bf16 %v876, %v875
      %v905 = vpack.c.bf16 %v878, %v877
      %v906 = vpack.c.bf16 %v880, %v879
      %v907 = vpack.c.bf16 %v882, %v881
      %v908 = vpack.c.bf16 %v884, %v883
      %v909 = vpack.c.bf16 %v886, %v885
      %v910 = vpack.c.bf16 %v888, %v887
      %v911 = vpack.c.bf16 %v890, %v889
      %v912 = vpack.c.bf16 %v892, %v891
      %v913 = vpack.c.bf16 %v894, %v893
      %v914 = vpack.c.bf16 %v896, %v895
      %v915 = vpack.c.bf16 %v898, %v897
      %v916 = vpack.c.bf16 %v900, %v899
      %v917 = vld [vmem:[%s3] sm:$0xf]
      %v918 = vld [vmem:[%s3 + $0x4] sm:$0xf]
      %v919 = vld [vmem:[%s3 + $0x8] sm:$0xf]
      %v920 = vld [vmem:[%s3 + $0xc] sm:$0xf]
      %v921 = vld [vmem:[%s3 + $0x10] sm:$0xf]
      %v922 = vld [vmem:[%s3 + $0x14] sm:$0xf]
      %v923 = vld [vmem:[%s3 + $0x18] sm:$0xf]
      %v924 = vld [vmem:[%s3 + $0x1c] sm:$0xf]
      %v925 = vld [vmem:[%s3 + $0x20] sm:$0xf]
      %v926 = vld [vmem:[%s3 + $0x24] sm:$0xf]
      %v927 = vld [vmem:[%s3 + $0x28] sm:$0xf]
      %v928 = vld [vmem:[%s3 + $0x2c] sm:$0xf]
      %v929 = vld [vmem:[%s3 + $0x30] sm:$0xf]
      %v930 = vld [vmem:[%s3 + $0x34] sm:$0xf]
      %v931 = vld [vmem:[%s3 + $0x38] sm:$0xf]
      %v932 = vld [vmem:[%s3 + $0x3c] sm:$0xf]
      %v933 = vld [vmem:[%s3 + $0x40] sm:$0xf]
      %v934 = vld [vmem:[%s3 + $0x44] sm:$0xf]
      %v935 = vld [vmem:[%s3 + $0x48] sm:$0xf]
      %v936 = vld [vmem:[%s3 + $0x4c] sm:$0xf]
      %v937 = vld [vmem:[%s3 + $0x50] sm:$0xf]
      %v938 = vld [vmem:[%s3 + $0x54] sm:$0xf]
      %v939 = vld [vmem:[%s3 + $0x58] sm:$0xf]
      %v940 = vld [vmem:[%s3 + $0x5c] sm:$0xf]
      %v941 = vld [vmem:[%s3 + $0x60] sm:$0xf]
      %v942 = vld [vmem:[%s3 + $0x64] sm:$0xf]
      %v943 = vld [vmem:[%s3 + $0x68] sm:$0xf]
      %v944 = vld [vmem:[%s3 + $0x6c] sm:$0xf]
      %v945 = vld [vmem:[%s3 + $0x70] sm:$0xf]
      %v946 = vld [vmem:[%s3 + $0x74] sm:$0xf]
      %v947 = vld [vmem:[%s3 + $0x78] sm:$0xf]
      %v948 = vld [vmem:[%s3 + $0x7c] sm:$0xf]
      %v949 = vld [vmem:[%s3 + $0x80] sm:$0xf]
      %v950 = vld [vmem:[%s3 + $0x84] sm:$0xf]
      %v951 = vld [vmem:[%s3 + $0x88] sm:$0xf]
      %v952 = vld [vmem:[%s3 + $0x8c] sm:$0xf]
      %v953 = vld [vmem:[%s3 + $0x90] sm:$0xf]
      %v954 = vld [vmem:[%s3 + $0x94] sm:$0xf]
      %v955 = vld [vmem:[%s3 + $0x98] sm:$0xf]
      %v956 = vld [vmem:[%s3 + $0x9c] sm:$0xf]
      %v957 = vld [vmem:[%s3 + $0xa0] sm:$0xf]
      %v958 = vld [vmem:[%s3 + $0xa4] sm:$0xf]
      %v959 = vld [vmem:[%s3 + $0xa8] sm:$0xf]
      %v960 = vld [vmem:[%s3 + $0xac] sm:$0xf]
      %v961 = vld [vmem:[%s3 + $0xb0] sm:$0xf]
      %v962 = vld [vmem:[%s3 + $0xb4] sm:$0xf]
      %v963 = vld [vmem:[%s3 + $0xb8] sm:$0xf]
      %v964 = vld [vmem:[%s3 + $0xbc] sm:$0xf]
      %v965 = vld [vmem:[%s3 + $0xc0] sm:$0xf]
      %v966 = vld [vmem:[%s3 + $0xc4] sm:$0xf]
      %v967 = vld [vmem:[%s3 + $0xc8] sm:$0xf]
      %v968 = vld [vmem:[%s3 + $0xcc] sm:$0xf]
      %v969 = vld [vmem:[%s3 + $0xd0] sm:$0xf]
      %v970 = vld [vmem:[%s3 + $0xd4] sm:$0xf]
      %v971 = vld [vmem:[%s3 + $0xd8] sm:$0xf]
      %v972 = vld [vmem:[%s3 + $0xdc] sm:$0xf]
      %v973 = vld [vmem:[%s3 + $0xe0] sm:$0xf]
      %v974 = vld [vmem:[%s3 + $0xe4] sm:$0xf]
      %v975 = vld [vmem:[%s3 + $0xe8] sm:$0xf]
      %v976 = vld [vmem:[%s3 + $0xec] sm:$0xf]
      %v977 = vld [vmem:[%s3 + $0xf0] sm:$0xf]
      %v978 = vld [vmem:[%s3 + $0xf4] sm:$0xf]
      %v979 = vld [vmem:[%s3 + $0xf8] sm:$0xf]
      %v980 = vld [vmem:[%s3 + $0xfc] sm:$0xf]
      %v981 = vld [vmem:[%s3 + $0x100] sm:$0xf]
      %v982 = vld [vmem:[%s3 + $0x104] sm:$0xf]
      %v983 = vld [vmem:[%s3 + $0x108] sm:$0xf]
      %v984 = vld [vmem:[%s3 + $0x10c] sm:$0xf]
      %v985 = vld [vmem:[%s3 + $0x110] sm:$0xf]
      %v986 = vld [vmem:[%s3 + $0x114] sm:$0xf]
      %v987 = vld [vmem:[%s3 + $0x118] sm:$0xf]
      %v988 = vld [vmem:[%s3 + $0x11c] sm:$0xf]
      %v989 = vld [vmem:[%s3 + $0x120] sm:$0xf]
      %v990 = vld [vmem:[%s3 + $0x124] sm:$0xf]
      %v991 = vld [vmem:[%s3 + $0x128] sm:$0xf]
      %v992 = vld [vmem:[%s3 + $0x12c] sm:$0xf]
      %v993 = vld [vmem:[%s3 + $0x130] sm:$0xf]
      %v994 = vld [vmem:[%s3 + $0x134] sm:$0xf]
      %v995 = vld [vmem:[%s3 + $0x138] sm:$0xf]
      %v996 = vld [vmem:[%s3 + $0x13c] sm:$0xf]
      %v997 = vld [vmem:[%s3 + $0x140] sm:$0xf]
      %v998 = vld [vmem:[%s3 + $0x144] sm:$0xf]
      %v999 = vld [vmem:[%s3 + $0x148] sm:$0xf]
      %v1000 = vld [vmem:[%s3 + $0x14c] sm:$0xf]
      %v1001 = vld [vmem:[%s3 + $0x150] sm:$0xf]
      %v1002 = vld [vmem:[%s3 + $0x154] sm:$0xf]
      %v1003 = vld [vmem:[%s3 + $0x158] sm:$0xf]
      %v1004 = vld [vmem:[%s3 + $0x15c] sm:$0xf]
      %v1005 = vld [vmem:[%s3 + $0x160] sm:$0xf]
      %v1006 = vld [vmem:[%s3 + $0x164] sm:$0xf]
      %v1007 = vld [vmem:[%s3 + $0x168] sm:$0xf]
      %v1008 = vld [vmem:[%s3 + $0x16c] sm:$0xf]
      %v1009 = vld [vmem:[%s3 + $0x170] sm:$0xf]
      %v1010 = vld [vmem:[%s3 + $0x174] sm:$0xf]
      %v1011 = vld [vmem:[%s3 + $0x178] sm:$0xf]
      %v1012 = vld [vmem:[%s3 + $0x17c] sm:$0xf]
      %v1013 = vld [vmem:[%s3 + $0x180] sm:$0xf]
      %v1014 = vld [vmem:[%s3 + $0x184] sm:$0xf]
      %v1015 = vld [vmem:[%s3 + $0x188] sm:$0xf]
      %v1016 = vld [vmem:[%s3 + $0x18c] sm:$0xf]
      %v1017 = vld [vmem:[%s3 + $0x190] sm:$0xf]
      %v1018 = vld [vmem:[%s3 + $0x194] sm:$0xf]
      %v1019 = vld [vmem:[%s3 + $0x198] sm:$0xf]
      %v1020 = vld [vmem:[%s3 + $0x19c] sm:$0xf]
      %v1021 = vld [vmem:[%s3 + $0x1a0] sm:$0xf]
      %v1022 = vld [vmem:[%s3 + $0x1a4] sm:$0xf]
      %v1023 = vld [vmem:[%s3 + $0x1a8] sm:$0xf]
      %v1024 = vld [vmem:[%s3 + $0x1ac] sm:$0xf]
      %v1025 = vld [vmem:[%s3 + $0x1b0] sm:$0xf]
      %v1026 = vld [vmem:[%s3 + $0x1b4] sm:$0xf]
      %v1027 = vld [vmem:[%s3 + $0x1b8] sm:$0xf]
      %v1028 = vld [vmem:[%s3 + $0x1bc] sm:$0xf]
      %v1029 = vld [vmem:[%s3 + $0x1c0] sm:$0xf]
      %v1030 = vld [vmem:[%s3 + $0x1c4] sm:$0xf]
      %v1031 = vld [vmem:[%s3 + $0x1c8] sm:$0xf]
      %v1032 = vld [vmem:[%s3 + $0x1cc] sm:$0xf]
      %v1033 = vld [vmem:[%s3 + $0x1d0] sm:$0xf]
      %v1034 = vld [vmem:[%s3 + $0x1d4] sm:$0xf]
      %v1035 = vld [vmem:[%s3 + $0x1d8] sm:$0xf]
      %v1036 = vld [vmem:[%s3 + $0x1dc] sm:$0xf]
      %v1037 = vld [vmem:[%s3 + $0x1e0] sm:$0xf]
      %v1038 = vld [vmem:[%s3 + $0x1e4] sm:$0xf]
      %v1039 = vld [vmem:[%s3 + $0x1e8] sm:$0xf]
      %v1040 = vld [vmem:[%s3 + $0x1ec] sm:$0xf]
      %v1041 = vld [vmem:[%s3 + $0x1f0] sm:$0xf]
      %v1042 = vld [vmem:[%s3 + $0x1f4] sm:$0xf]
      %v1043 = vld [vmem:[%s3 + $0x1f8] sm:$0xf]
      %v1044 = vld [vmem:[%s3 + $0x1fc] sm:$0xf]
      %v1045 = vld [vmem:[%s3 + $0x200] sm:$0xf]
      %v1046 = vld [vmem:[%s3 + $0x204] sm:$0xf]
      %v1047 = vld [vmem:[%s3 + $0x208] sm:$0xf]
      %v1048 = vld [vmem:[%s3 + $0x20c] sm:$0xf]
      %v1049 = vld [vmem:[%s3 + $0x210] sm:$0xf]
      %v1050 = vld [vmem:[%s3 + $0x214] sm:$0xf]
      %v1051 = vld [vmem:[%s3 + $0x218] sm:$0xf]
      %v1052 = vld [vmem:[%s3 + $0x21c] sm:$0xf]
      %v1053 = vld [vmem:[%s3 + $0x220] sm:$0xf]
      %v1054 = vld [vmem:[%s3 + $0x224] sm:$0xf]
      %v1055 = vld [vmem:[%s3 + $0x228] sm:$0xf]
      %v1056 = vld [vmem:[%s3 + $0x22c] sm:$0xf]
      %v1057 = vld [vmem:[%s3 + $0x230] sm:$0xf]
      %v1058 = vld [vmem:[%s3 + $0x234] sm:$0xf]
      %v1059 = vld [vmem:[%s3 + $0x238] sm:$0xf]
      %v1060 = vld [vmem:[%s3 + $0x23c] sm:$0xf]
      %v1205 = vunpack.c.l.b16 %v917
      %v1206 = vunpack.c.l.b16 %v918
      %v1207 = vunpack.c.l.b16 %v919
      %v1208 = vunpack.c.l.b16 %v920
      %v1209 = vunpack.c.l.b16 %v921
      %v1210 = vunpack.c.l.b16 %v922
      %v1211 = vunpack.c.l.b16 %v923
      %v1212 = vunpack.c.l.b16 %v924
      %v1213 = vunpack.c.l.b16 %v925
      %v1214 = vunpack.c.l.b16 %v926
      %v1215 = vunpack.c.l.b16 %v927
      %v1216 = vunpack.c.l.b16 %v928
      %v1217 = vunpack.c.l.b16 %v929
      %v1218 = vunpack.c.l.b16 %v930
      %v1219 = vunpack.c.l.b16 %v931
      %v1220 = vunpack.c.l.b16 %v932
      %v1221 = vunpack.c.l.b16 %v933
      %v1222 = vunpack.c.l.b16 %v934
      %v1223 = vunpack.c.l.b16 %v935
      %v1224 = vunpack.c.l.b16 %v936
      %v1225 = vunpack.c.l.b16 %v937
      %v1226 = vunpack.c.l.b16 %v938
      %v1227 = vunpack.c.l.b16 %v939
      %v1228 = vunpack.c.l.b16 %v940
      %v1229 = vunpack.c.l.b16 %v941
      %v1230 = vunpack.c.l.b16 %v942
      %v1231 = vunpack.c.l.b16 %v943
      %v1232 = vunpack.c.l.b16 %v944
      %v1233 = vunpack.c.l.b16 %v945
      %v1234 = vunpack.c.l.b16 %v946
      %v1235 = vunpack.c.l.b16 %v947
      %v1236 = vunpack.c.l.b16 %v948
      %v1237 = vunpack.c.l.b16 %v949
      %v1238 = vunpack.c.l.b16 %v950
      %v1239 = vunpack.c.l.b16 %v951
      %v1240 = vunpack.c.l.b16 %v952
      %v1241 = vunpack.c.l.b16 %v953
      %v1242 = vunpack.c.l.b16 %v954
      %v1243 = vunpack.c.l.b16 %v955
      %v1244 = vunpack.c.l.b16 %v956
      %v1245 = vunpack.c.l.b16 %v957
      %v1246 = vunpack.c.l.b16 %v958
      %v1247 = vunpack.c.l.b16 %v959
      %v1248 = vunpack.c.l.b16 %v960
      %v1249 = vunpack.c.l.b16 %v961
      %v1250 = vunpack.c.l.b16 %v962
      %v1251 = vunpack.c.l.b16 %v963
      %v1252 = vunpack.c.l.b16 %v964
      %v1253 = vunpack.c.l.b16 %v965
      %v1254 = vunpack.c.l.b16 %v966
      %v1255 = vunpack.c.l.b16 %v967
      %v1256 = vunpack.c.l.b16 %v968
      %v1257 = vunpack.c.l.b16 %v969
      %v1258 = vunpack.c.l.b16 %v970
      %v1259 = vunpack.c.l.b16 %v971
      %v1260 = vunpack.c.l.b16 %v972
      %v1261 = vunpack.c.l.b16 %v973
      %v1262 = vunpack.c.l.b16 %v974
      %v1263 = vunpack.c.l.b16 %v975
      %v1264 = vunpack.c.l.b16 %v976
      %v1265 = vunpack.c.l.b16 %v977
      %v1266 = vunpack.c.l.b16 %v978
      %v1267 = vunpack.c.l.b16 %v979
      %v1268 = vunpack.c.l.b16 %v980
      %v1269 = vunpack.c.l.b16 %v981
      %v1270 = vunpack.c.l.b16 %v982
      %v1271 = vunpack.c.l.b16 %v983
      %v1272 = vunpack.c.l.b16 %v984
      %v1273 = vunpack.c.l.b16 %v985
      %v1274 = vunpack.c.l.b16 %v986
      %v1275 = vunpack.c.l.b16 %v987
      %v1276 = vunpack.c.l.b16 %v988
      %v1277 = vunpack.c.l.b16 %v989
      %v1278 = vunpack.c.l.b16 %v990
      %v1279 = vunpack.c.l.b16 %v991
      %v1280 = vunpack.c.l.b16 %v992
      %v1281 = vunpack.c.l.b16 %v993
      %v1282 = vunpack.c.l.b16 %v994
      %v1283 = vunpack.c.l.b16 %v995
      %v1284 = vunpack.c.l.b16 %v996
      %v1285 = vunpack.c.l.b16 %v997
      %v1286 = vunpack.c.l.b16 %v998
      %v1287 = vunpack.c.l.b16 %v999
      %v1288 = vunpack.c.l.b16 %v1000
      %v1289 = vunpack.c.l.b16 %v1001
      %v1290 = vunpack.c.l.b16 %v1002
      %v1291 = vunpack.c.l.b16 %v1003
      %v1292 = vunpack.c.l.b16 %v1004
      %v1293 = vunpack.c.l.b16 %v1005
      %v1294 = vunpack.c.l.b16 %v1006
      %v1295 = vunpack.c.l.b16 %v1007
      %v1296 = vunpack.c.l.b16 %v1008
      %v1297 = vunpack.c.l.b16 %v1009
      %v1298 = vunpack.c.l.b16 %v1010
      %v1299 = vunpack.c.l.b16 %v1011
      %v1300 = vunpack.c.l.b16 %v1012
      %v1301 = vunpack.c.l.b16 %v1013
      %v1302 = vunpack.c.l.b16 %v1014
      %v1303 = vunpack.c.l.b16 %v1015
      %v1304 = vunpack.c.l.b16 %v1016
      %v1305 = vunpack.c.l.b16 %v1017
      %v1306 = vunpack.c.l.b16 %v1018
      %v1307 = vunpack.c.l.b16 %v1019
      %v1308 = vunpack.c.l.b16 %v1020
      %v1309 = vunpack.c.l.b16 %v1021
      %v1310 = vunpack.c.l.b16 %v1022
      %v1311 = vunpack.c.l.b16 %v1023
      %v1312 = vunpack.c.l.b16 %v1024
      %v1313 = vunpack.c.l.b16 %v1025
      %v1314 = vunpack.c.l.b16 %v1026
      %v1315 = vunpack.c.l.b16 %v1027
      %v1316 = vunpack.c.l.b16 %v1028
      %v1317 = vunpack.c.l.b16 %v1029
      %v1318 = vunpack.c.l.b16 %v1030
      %v1319 = vunpack.c.l.b16 %v1031
      %v1320 = vunpack.c.l.b16 %v1032
      %v1321 = vunpack.c.l.b16 %v1033
      %v1322 = vunpack.c.l.b16 %v1034
      %v1323 = vunpack.c.l.b16 %v1035
      %v1324 = vunpack.c.l.b16 %v1036
      %v1325 = vunpack.c.l.b16 %v1037
      %v1326 = vunpack.c.l.b16 %v1038
      %v1327 = vunpack.c.l.b16 %v1039
      %v1328 = vunpack.c.l.b16 %v1040
      %v1329 = vunpack.c.l.b16 %v1041
      %v1330 = vunpack.c.l.b16 %v1042
      %v1331 = vunpack.c.l.b16 %v1043
      %v1332 = vunpack.c.l.b16 %v1044
      %v1333 = vunpack.c.l.b16 %v1045
      %v1334 = vunpack.c.l.b16 %v1046
      %v1335 = vunpack.c.l.b16 %v1047
      %v1336 = vunpack.c.l.b16 %v1048
      %v1337 = vunpack.c.l.b16 %v1049
      %v1338 = vunpack.c.l.b16 %v1050
      %v1339 = vunpack.c.l.b16 %v1051
      %v1340 = vunpack.c.l.b16 %v1052
      %v1341 = vunpack.c.l.b16 %v1053
      %v1342 = vunpack.c.l.b16 %v1054
      %v1343 = vunpack.c.l.b16 %v1055
      %v1344 = vunpack.c.l.b16 %v1056
      %v1345 = vunpack.c.l.b16 %v1057
      %v1346 = vunpack.c.l.b16 %v1058
      %v1347 = vunpack.c.l.b16 %v1059
      %v1348 = vunpack.c.l.b16 %v1060
      %v1349 = vpack.c.b16 %v1206, %v1205
      %v1350 = vpack.c.b16 %v1208, %v1207
      %v1351 = vpack.c.b16 %v1210, %v1209
      %v1352 = vpack.c.b16 %v1212, %v1211
      %v1353 = vpack.c.b16 %v1214, %v1213
      %v1354 = vpack.c.b16 %v1216, %v1215
      %v1355 = vpack.c.b16 %v1218, %v1217
      %v1356 = vpack.c.b16 %v1220, %v1219
      %v1357 = vpack.c.b16 %v1222, %v1221
      %v1358 = vpack.c.b16 %v1224, %v1223
      %v1359 = vpack.c.b16 %v1226, %v1225
      %v1360 = vpack.c.b16 %v1228, %v1227
      %v1361 = vpack.c.b16 %v1230, %v1229
      %v1362 = vpack.c.b16 %v1232, %v1231
      %v1363 = vpack.c.b16 %v1234, %v1233
      %v1364 = vpack.c.b16 %v1236, %v1235
      %v1365 = vpack.c.b16 %v1238, %v1237
      %v1366 = vpack.c.b16 %v1240, %v1239
      %v1367 = vpack.c.b16 %v1242, %v1241
      %v1368 = vpack.c.b16 %v1244, %v1243
      %v1369 = vpack.c.b16 %v1246, %v1245
      %v1370 = vpack.c.b16 %v1248, %v1247
      %v1371 = vpack.c.b16 %v1250, %v1249
      %v1372 = vpack.c.b16 %v1252, %v1251
      %v1373 = vpack.c.b16 %v1254, %v1253
      %v1374 = vpack.c.b16 %v1256, %v1255
      %v1375 = vpack.c.b16 %v1258, %v1257
      %v1376 = vpack.c.b16 %v1260, %v1259
      %v1377 = vpack.c.b16 %v1262, %v1261
      %v1378 = vpack.c.b16 %v1264, %v1263
      %v1379 = vpack.c.b16 %v1266, %v1265
      %v1380 = vpack.c.b16 %v1268, %v1267
      %v1381 = vpack.c.b16 %v1270, %v1269
      %v1382 = vpack.c.b16 %v1272, %v1271
      %v1383 = vpack.c.b16 %v1274, %v1273
      %v1384 = vpack.c.b16 %v1276, %v1275
      %v1385 = vpack.c.b16 %v1278, %v1277
      %v1386 = vpack.c.b16 %v1280, %v1279
      %v1387 = vpack.c.b16 %v1282, %v1281
      %v1388 = vpack.c.b16 %v1284, %v1283
      %v1389 = vpack.c.b16 %v1286, %v1285
      %v1390 = vpack.c.b16 %v1288, %v1287
      %v1391 = vpack.c.b16 %v1290, %v1289
      %v1392 = vpack.c.b16 %v1292, %v1291
      %v1393 = vpack.c.b16 %v1294, %v1293
      %v1394 = vpack.c.b16 %v1296, %v1295
      %v1395 = vpack.c.b16 %v1298, %v1297
      %v1396 = vpack.c.b16 %v1300, %v1299
      %v1397 = vpack.c.b16 %v1302, %v1301
      %v1398 = vpack.c.b16 %v1304, %v1303
      %v1399 = vpack.c.b16 %v1306, %v1305
      %v1400 = vpack.c.b16 %v1308, %v1307
      %v1401 = vpack.c.b16 %v1310, %v1309
      %v1402 = vpack.c.b16 %v1312, %v1311
      %v1403 = vpack.c.b16 %v1314, %v1313
      %v1404 = vpack.c.b16 %v1316, %v1315
      %v1405 = vpack.c.b16 %v1318, %v1317
      %v1406 = vpack.c.b16 %v1320, %v1319
      %v1407 = vpack.c.b16 %v1322, %v1321
      %v1408 = vpack.c.b16 %v1324, %v1323
      %v1409 = vpack.c.b16 %v1326, %v1325
      %v1410 = vpack.c.b16 %v1328, %v1327
      %v1411 = vpack.c.b16 %v1330, %v1329
      %v1412 = vpack.c.b16 %v1332, %v1331
      %v1413 = vpack.c.b16 %v1334, %v1333
      %v1414 = vpack.c.b16 %v1336, %v1335
      %v1415 = vpack.c.b16 %v1338, %v1337
      %v1416 = vpack.c.b16 %v1340, %v1339
      %v1417 = vpack.c.b16 %v1342, %v1341
      %v1418 = vpack.c.b16 %v1344, %v1343
      %v1419 = vpack.c.b16 %v1346, %v1345
      %v1420 = vpack.c.b16 %v1348, %v1347
      %1493 = vmatprep.subr.bf16.mxu0 0
      %1494 = vmatpush1.bf16.msra.mxu0 %v1356
      %1495 = vmatprep.subr.bf16.mxu0 0
      %1496 = vmatpush1.bf16.msra.mxu0 %v1355
      %1497 = vmatprep.subr.bf16.mxu0 0
      %1498 = vmatpush1.bf16.msra.mxu0 %v1354
      %1499 = vmatprep.subr.bf16.mxu0 0
      %1500 = vmatpush1.bf16.msra.mxu0 %v1353
      %1501 = vmatprep.subr.bf16.mxu0 0
      %1502 = vmatpush1.bf16.msra.mxu0 %v1352
      %1503 = vmatprep.subr.bf16.mxu0 0
      %1504 = vmatpush1.bf16.msra.mxu0 %v1351
      %1505 = vmatprep.subr.bf16.mxu0 0
      %1506 = vmatpush1.bf16.msra.mxu0 %v1350
      %1507 = vmatprep.subr.bf16.mxu0 0
      %1508 = vmatpush1.bf16.msra.mxu0 %v1349
      %1509 = vmatprep.subr.bf16.mxu0 0
      %1510 = vmatpush2.bf16.msra.mxu0 %v1364
      %1511 = vmatprep.subr.bf16.mxu0 0
      %1512 = vmatpush2.bf16.msra.mxu0 %v1363
      %1513 = vmatprep.subr.bf16.mxu0 0
      %1514 = vmatpush2.bf16.msra.mxu0 %v1362
      %1515 = vmatprep.subr.bf16.mxu0 0
      %1516 = vmatpush2.bf16.msra.mxu0 %v1361
      %1517 = vmatprep.subr.bf16.mxu0 0
      %1518 = vmatpush2.bf16.msra.mxu0 %v1360
      %1519 = vmatprep.subr.bf16.mxu0 0
      %1520 = vmatpush2.bf16.msra.mxu0 %v1359
      %1521 = vmatprep.subr.bf16.mxu0 0
      %1522 = vmatpush2.bf16.msra.mxu0 %v1358
      %1523 = vmatprep.subr.bf16.mxu0 0
      %1524 = vmatpush2.bf16.msra.mxu0 %v1357
      %1525 = vmatprep.mubr.bf16.mxu0 %v564
      %1526 = vmatmul.mubr.bf16.gmra.mxu0 %v516
      %v1527 = vpop.f32.mrf.mxu0
      %v1528 = vadd.f32 0.0, %v1527
      %v1529 = vpop.f32.mrf.mxu0
      %v1530 = vpop.f32.mrf.mxu0
      %v1531 = vadd.f32 0.0, %v1530
      %v1532 = vpop.f32.mrf.mxu0
      %1533 = vmatprep.mubr.bf16.mxu0 %v565
      %1534 = vmatmul.mubr.bf16.gmra.mxu0 %v517
      %v1535 = vpop.f32.mrf.mxu0
      %v1536 = vadd.f32 0.0, %v1535
      %v1537 = vpop.f32.mrf.mxu0
      %v1538 = vpop.f32.mrf.mxu0
      %v1539 = vadd.f32 0.0, %v1538
      %v1540 = vpop.f32.mrf.mxu0
      %1541 = vmatprep.mubr.bf16.mxu0 %v566
      %1542 = vmatmul.mubr.bf16.gmra.mxu0 %v518
      %v1543 = vpop.f32.mrf.mxu0
      %v1544 = vadd.f32 0.0, %v1543
      %v1545 = vpop.f32.mrf.mxu0
      %v1546 = vpop.f32.mrf.mxu0
      %v1547 = vadd.f32 0.0, %v1546
      %v1548 = vpop.f32.mrf.mxu0
      %1549 = vmatprep.mubr.bf16.mxu0 %v567
      %1550 = vmatmul.mubr.bf16.gmra.mxu0 %v519
      %v1551 = vpop.f32.mrf.mxu0
      %v1552 = vadd.f32 0.0, %v1551
      %v1553 = vpop.f32.mrf.mxu0
      %v1554 = vpop.f32.mrf.mxu0
      %v1555 = vadd.f32 0.0, %v1554
      %v1556 = vpop.f32.mrf.mxu0
      %1557 = vmatprep.mubr.bf16.mxu0 %v568
      %1558 = vmatmul.mubr.bf16.gmra.mxu0 %v520
      %v1559 = vpop.f32.mrf.mxu0
      %v1560 = vadd.f32 0.0, %v1559
      %v1561 = vpop.f32.mrf.mxu0
      %v1562 = vpop.f32.mrf.mxu0
      %v1563 = vadd.f32 0.0, %v1562
      %v1564 = vpop.f32.mrf.mxu0
      %1565 = vmatprep.mubr.bf16.mxu0 %v569
      %1566 = vmatmul.mubr.bf16.gmra.mxu0 %v521
      %v1567 = vpop.f32.mrf.mxu0
      %v1568 = vadd.f32 0.0, %v1567
      %v1569 = vpop.f32.mrf.mxu0
      %v1570 = vpop.f32.mrf.mxu0
      %v1571 = vadd.f32 0.0, %v1570
      %v1572 = vpop.f32.mrf.mxu0
      %1573 = vmatprep.mubr.bf16.mxu0 %v570
      %1574 = vmatmul.mubr.bf16.gmra.mxu0 %v522
      %v1575 = vpop.f32.mrf.mxu0
      %v1576 = vadd.f32 0.0, %v1575
      %v1577 = vpop.f32.mrf.mxu0
      %v1578 = vpop.f32.mrf.mxu0
      %v1579 = vadd.f32 0.0, %v1578
      %v1580 = vpop.f32.mrf.mxu0
      %1581 = vmatprep.mubr.bf16.mxu0 %v571
      %1582 = vmatmul.mubr.bf16.gmra.mxu0 %v523
      %v1583 = vpop.f32.mrf.mxu0
      %v1584 = vadd.f32 0.0, %v1583
      %v1585 = vpop.f32.mrf.mxu0
      %v1586 = vpop.f32.mrf.mxu0
      %v1587 = vadd.f32 0.0, %v1586
      %v1588 = vpop.f32.mrf.mxu0
      %1589 = vmatprep.mubr.bf16.mxu0 %v572
      %1590 = vmatmul.mubr.bf16.gmra.mxu0 %v524
      %v1591 = vpop.f32.mrf.mxu0
      %v1592 = vadd.f32 0.0, %v1591
      %v1593 = vpop.f32.mrf.mxu0
      %v1594 = vpop.f32.mrf.mxu0
      %v1595 = vadd.f32 0.0, %v1594
      %v1596 = vpop.f32.mrf.mxu0
      %1597 = vmatprep.mubr.bf16.mxu0 %v573
      %1598 = vmatmul.mubr.bf16.gmra.mxu0 %v525
      %v1599 = vpop.f32.mrf.mxu0
      %v1600 = vadd.f32 0.0, %v1599
      %v1601 = vpop.f32.mrf.mxu0
      %v1602 = vpop.f32.mrf.mxu0
      %v1603 = vadd.f32 0.0, %v1602
      %v1604 = vpop.f32.mrf.mxu0
      %1605 = vmatprep.mubr.bf16.mxu0 %v574
      %1606 = vmatmul.mubr.bf16.gmra.mxu0 %v526
      %v1607 = vpop.f32.mrf.mxu0
      %v1608 = vadd.f32 0.0, %v1607
      %v1609 = vpop.f32.mrf.mxu0
      %v1610 = vpop.f32.mrf.mxu0
      %v1611 = vadd.f32 0.0, %v1610
      %v1612 = vpop.f32.mrf.mxu0
      %1613 = vmatprep.mubr.bf16.mxu0 %v575
      %1614 = vmatmul.mubr.bf16.gmra.mxu0 %v527
      %v1615 = vpop.f32.mrf.mxu0
      %v1616 = vadd.f32 0.0, %v1615
      %v1617 = vpop.f32.mrf.mxu0
      %v1618 = vpop.f32.mrf.mxu0
      %v1619 = vadd.f32 0.0, %v1618
      %v1620 = vpop.f32.mrf.mxu0
      %1621 = vmatprep.mubr.bf16.mxu0 %v576
      %1622 = vmatmul.mubr.bf16.gmra.mxu0 %v528
      %v1623 = vpop.f32.mrf.mxu0
      %v1624 = vadd.f32 0.0, %v1623
      %v1625 = vpop.f32.mrf.mxu0
      %v1626 = vpop.f32.mrf.mxu0
      %v1627 = vadd.f32 0.0, %v1626
      %v1628 = vpop.f32.mrf.mxu0
      %1629 = vmatprep.mubr.bf16.mxu0 %v577
      %1630 = vmatmul.mubr.bf16.gmra.mxu0 %v529
      %v1631 = vpop.f32.mrf.mxu0
      %v1632 = vadd.f32 0.0, %v1631
      %v1633 = vpop.f32.mrf.mxu0
      %v1634 = vpop.f32.mrf.mxu0
      %v1635 = vadd.f32 0.0, %v1634
      %v1636 = vpop.f32.mrf.mxu0
      %1637 = vmatprep.mubr.bf16.mxu0 %v578
      %1638 = vmatmul.mubr.bf16.gmra.mxu0 %v530
      %v1639 = vpop.f32.mrf.mxu0
      %v1640 = vadd.f32 0.0, %v1639
      %v1641 = vpop.f32.mrf.mxu0
      %v1642 = vpop.f32.mrf.mxu0
      %v1643 = vadd.f32 0.0, %v1642
      %v1644 = vpop.f32.mrf.mxu0
      %1645 = vmatprep.mubr.bf16.mxu0 %v579
      %1646 = vmatmul.mubr.bf16.gmra.mxu0 %v531
      %v1647 = vpop.f32.mrf.mxu0
      %v1648 = vadd.f32 0.0, %v1647
      %v1649 = vpop.f32.mrf.mxu0
      %v1650 = vpop.f32.mrf.mxu0
      %v1651 = vadd.f32 0.0, %v1650
      %v1652 = vpop.f32.mrf.mxu0
      %1653 = vdwg.mxu0
      %1654 = vmatprep.subr.bf16.mxu0 0
      %1655 = vmatpush1.bf16.msra.mxu0 %v1372
      %1656 = vmatprep.subr.bf16.mxu0 0
      %1657 = vmatpush1.bf16.msra.mxu0 %v1371
      %1658 = vmatprep.subr.bf16.mxu0 0
      %1659 = vmatpush1.bf16.msra.mxu0 %v1370
      %1660 = vmatprep.subr.bf16.mxu0 0
      %1661 = vmatpush1.bf16.msra.mxu0 %v1369
      %1662 = vmatprep.subr.bf16.mxu0 0
      %1663 = vmatpush1.bf16.msra.mxu0 %v1368
      %1664 = vmatprep.subr.bf16.mxu0 0
      %1665 = vmatpush1.bf16.msra.mxu0 %v1367
      %1666 = vmatprep.subr.bf16.mxu0 0
      %1667 = vmatpush1.bf16.msra.mxu0 %v1366
      %1668 = vmatprep.subr.bf16.mxu0 0
      %1669 = vmatpush1.bf16.msra.mxu0 %v1365
      %1670 = vmatprep.subr.bf16.mxu0 0
      %1671 = vmatpush2.bf16.msra.mxu0 %v1380
      %1672 = vmatprep.subr.bf16.mxu0 0
      %1673 = vmatpush2.bf16.msra.mxu0 %v1379
      %1674 = vmatprep.subr.bf16.mxu0 0
      %1675 = vmatpush2.bf16.msra.mxu0 %v1378
      %1676 = vmatprep.subr.bf16.mxu0 0
      %1677 = vmatpush2.bf16.msra.mxu0 %v1377
      %1678 = vmatprep.subr.bf16.mxu0 0
      %1679 = vmatpush2.bf16.msra.mxu0 %v1376
      %1680 = vmatprep.subr.bf16.mxu0 0
      %1681 = vmatpush2.bf16.msra.mxu0 %v1375
      %1682 = vmatprep.subr.bf16.mxu0 0
      %1683 = vmatpush2.bf16.msra.mxu0 %v1374
      %1684 = vmatprep.subr.bf16.mxu0 0
      %1685 = vmatpush2.bf16.msra.mxu0 %v1373
      %1686 = vmatprep.mubr.bf16.mxu0 %v660
      %1687 = vmatmul.mubr.bf16.gmra.mxu0 %v612
      %v1688 = vpop.f32.mrf.mxu0
      %v1689 = vadd.f32 %v1528, %v1688
      %v1690 = vpop.f32.mrf.mxu0
      %v1691 = vpop.f32.mrf.mxu0
      %v1692 = vadd.f32 %v1531, %v1691
      %v1693 = vpop.f32.mrf.mxu0
      %1694 = vmatprep.mubr.bf16.mxu0 %v661
      %1695 = vmatmul.mubr.bf16.gmra.mxu0 %v613
      %v1696 = vpop.f32.mrf.mxu0
      %v1697 = vadd.f32 %v1536, %v1696
      %v1698 = vpop.f32.mrf.mxu0
      %v1699 = vpop.f32.mrf.mxu0
      %v1700 = vadd.f32 %v1539, %v1699
      %v1701 = vpop.f32.mrf.mxu0
      %1702 = vmatprep.mubr.bf16.mxu0 %v662
      %1703 = vmatmul.mubr.bf16.gmra.mxu0 %v614
      %v1704 = vpop.f32.mrf.mxu0
      %v1705 = vadd.f32 %v1544, %v1704
      %v1706 = vpop.f32.mrf.mxu0
      %v1707 = vpop.f32.mrf.mxu0
      %v1708 = vadd.f32 %v1547, %v1707
      %v1709 = vpop.f32.mrf.mxu0
      %1710 = vmatprep.mubr.bf16.mxu0 %v663
      %1711 = vmatmul.mubr.bf16.gmra.mxu0 %v615
      %v1712 = vpop.f32.mrf.mxu0
      %v1713 = vadd.f32 %v1552, %v1712
      %v1714 = vpop.f32.mrf.mxu0
      %v1715 = vpop.f32.mrf.mxu0
      %v1716 = vadd.f32 %v1555, %v1715
      %v1717 = vpop.f32.mrf.mxu0
      %1718 = vmatprep.mubr.bf16.mxu0 %v664
      %1719 = vmatmul.mubr.bf16.gmra.mxu0 %v616
      %v1720 = vpop.f32.mrf.mxu0
      %v1721 = vadd.f32 %v1560, %v1720
      %v1722 = vpop.f32.mrf.mxu0
      %v1723 = vpop.f32.mrf.mxu0
      %v1724 = vadd.f32 %v1563, %v1723
      %v1725 = vpop.f32.mrf.mxu0
      %1726 = vmatprep.mubr.bf16.mxu0 %v665
      %1727 = vmatmul.mubr.bf16.gmra.mxu0 %v617
      %v1728 = vpop.f32.mrf.mxu0
      %v1729 = vadd.f32 %v1568, %v1728
      %v1730 = vpop.f32.mrf.mxu0
      %v1731 = vpop.f32.mrf.mxu0
      %v1732 = vadd.f32 %v1571, %v1731
      %v1733 = vpop.f32.mrf.mxu0
      %1734 = vmatprep.mubr.bf16.mxu0 %v666
      %1735 = vmatmul.mubr.bf16.gmra.mxu0 %v618
      %v1736 = vpop.f32.mrf.mxu0
      %v1737 = vadd.f32 %v1576, %v1736
      %v1738 = vpop.f32.mrf.mxu0
      %v1739 = vpop.f32.mrf.mxu0
      %v1740 = vadd.f32 %v1579, %v1739
      %v1741 = vpop.f32.mrf.mxu0
      %1742 = vmatprep.mubr.bf16.mxu0 %v667
      %1743 = vmatmul.mubr.bf16.gmra.mxu0 %v619
      %v1744 = vpop.f32.mrf.mxu0
      %v1745 = vadd.f32 %v1584, %v1744
      %v1746 = vpop.f32.mrf.mxu0
      %v1747 = vpop.f32.mrf.mxu0
      %v1748 = vadd.f32 %v1587, %v1747
      %v1749 = vpop.f32.mrf.mxu0
      %1750 = vmatprep.mubr.bf16.mxu0 %v668
      %1751 = vmatmul.mubr.bf16.gmra.mxu0 %v620
      %v1752 = vpop.f32.mrf.mxu0
      %v1753 = vadd.f32 %v1592, %v1752
      %v1754 = vpop.f32.mrf.mxu0
      %v1755 = vpop.f32.mrf.mxu0
      %v1756 = vadd.f32 %v1595, %v1755
      %v1757 = vpop.f32.mrf.mxu0
      %1758 = vmatprep.mubr.bf16.mxu0 %v669
      %1759 = vmatmul.mubr.bf16.gmra.mxu0 %v621
      %v1760 = vpop.f32.mrf.mxu0
      %v1761 = vadd.f32 %v1600, %v1760
      %v1762 = vpop.f32.mrf.mxu0
      %v1763 = vpop.f32.mrf.mxu0
      %v1764 = vadd.f32 %v1603, %v1763
      %v1765 = vpop.f32.mrf.mxu0
      %1766 = vmatprep.mubr.bf16.mxu0 %v670
      %1767 = vmatmul.mubr.bf16.gmra.mxu0 %v622
      %v1768 = vpop.f32.mrf.mxu0
      %v1769 = vadd.f32 %v1608, %v1768
      %v1770 = vpop.f32.mrf.mxu0
      %v1771 = vpop.f32.mrf.mxu0
      %v1772 = vadd.f32 %v1611, %v1771
      %v1773 = vpop.f32.mrf.mxu0
      %1774 = vmatprep.mubr.bf16.mxu0 %v671
      %1775 = vmatmul.mubr.bf16.gmra.mxu0 %v623
      %v1776 = vpop.f32.mrf.mxu0
      %v1777 = vadd.f32 %v1616, %v1776
      %v1778 = vpop.f32.mrf.mxu0
      %v1779 = vpop.f32.mrf.mxu0
      %v1780 = vadd.f32 %v1619, %v1779
      %v1781 = vpop.f32.mrf.mxu0
      %1782 = vmatprep.mubr.bf16.mxu0 %v672
      %1783 = vmatmul.mubr.bf16.gmra.mxu0 %v624
      %v1784 = vpop.f32.mrf.mxu0
      %v1785 = vadd.f32 %v1624, %v1784
      %v1786 = vpop.f32.mrf.mxu0
      %v1787 = vpop.f32.mrf.mxu0
      %v1788 = vadd.f32 %v1627, %v1787
      %v1789 = vpop.f32.mrf.mxu0
      %1790 = vmatprep.mubr.bf16.mxu0 %v673
      %1791 = vmatmul.mubr.bf16.gmra.mxu0 %v625
      %v1792 = vpop.f32.mrf.mxu0
      %v1793 = vadd.f32 %v1632, %v1792
      %v1794 = vpop.f32.mrf.mxu0
      %v1795 = vpop.f32.mrf.mxu0
      %v1796 = vadd.f32 %v1635, %v1795
      %v1797 = vpop.f32.mrf.mxu0
      %1798 = vmatprep.mubr.bf16.mxu0 %v674
      %1799 = vmatmul.mubr.bf16.gmra.mxu0 %v626
      %v1800 = vpop.f32.mrf.mxu0
      %v1801 = vadd.f32 %v1640, %v1800
      %v1802 = vpop.f32.mrf.mxu0
      %v1803 = vpop.f32.mrf.mxu0
      %v1804 = vadd.f32 %v1643, %v1803
      %v1805 = vpop.f32.mrf.mxu0
      %1806 = vmatprep.mubr.bf16.mxu0 %v675
      %1807 = vmatmul.mubr.bf16.gmra.mxu0 %v627
      %v1808 = vpop.f32.mrf.mxu0
      %v1809 = vadd.f32 %v1648, %v1808
      %v1810 = vpop.f32.mrf.mxu0
      %v1811 = vpop.f32.mrf.mxu0
      %v1812 = vadd.f32 %v1651, %v1811
      %v1813 = vpop.f32.mrf.mxu0
      %1814 = vdwg.mxu0
      %1815 = vmatprep.subr.bf16.mxu0 0
      %1816 = vmatpush1.bf16.msra.mxu0 %v1388
      %1817 = vmatprep.subr.bf16.mxu0 0
      %1818 = vmatpush1.bf16.msra.mxu0 %v1387
      %1819 = vmatprep.subr.bf16.mxu0 0
      %1820 = vmatpush1.bf16.msra.mxu0 %v1386
      %1821 = vmatprep.subr.bf16.mxu0 0
      %1822 = vmatpush1.bf16.msra.mxu0 %v1385
      %1823 = vmatprep.subr.bf16.mxu0 0
      %1824 = vmatpush1.bf16.msra.mxu0 %v1384
      %1825 = vmatprep.subr.bf16.mxu0 0
      %1826 = vmatpush1.bf16.msra.mxu0 %v1383
      %1827 = vmatprep.subr.bf16.mxu0 0
      %1828 = vmatpush1.bf16.msra.mxu0 %v1382
      %1829 = vmatprep.subr.bf16.mxu0 0
      %1830 = vmatpush1.bf16.msra.mxu0 %v1381
      %1831 = vmatprep.subr.bf16.mxu0 0
      %1832 = vmatpush2.bf16.msra.mxu0 %v1396
      %1833 = vmatprep.subr.bf16.mxu0 0
      %1834 = vmatpush2.bf16.msra.mxu0 %v1395
      %1835 = vmatprep.subr.bf16.mxu0 0
      %1836 = vmatpush2.bf16.msra.mxu0 %v1394
      %1837 = vmatprep.subr.bf16.mxu0 0
      %1838 = vmatpush2.bf16.msra.mxu0 %v1393
      %1839 = vmatprep.subr.bf16.mxu0 0
      %1840 = vmatpush2.bf16.msra.mxu0 %v1392
      %1841 = vmatprep.subr.bf16.mxu0 0
      %1842 = vmatpush2.bf16.msra.mxu0 %v1391
      %1843 = vmatprep.subr.bf16.mxu0 0
      %1844 = vmatpush2.bf16.msra.mxu0 %v1390
      %1845 = vmatprep.subr.bf16.mxu0 0
      %1846 = vmatpush2.bf16.msra.mxu0 %v1389
      %1847 = vmatprep.mubr.bf16.mxu0 %v756
      %1848 = vmatmul.mubr.bf16.gmra.mxu0 %v708
      %v1849 = vpop.f32.mrf.mxu0
      %v1850 = vadd.f32 %v1689, %v1849
      %v1851 = vpop.f32.mrf.mxu0
      %v1852 = vpop.f32.mrf.mxu0
      %v1853 = vadd.f32 %v1692, %v1852
      %v1854 = vpop.f32.mrf.mxu0
      %1855 = vmatprep.mubr.bf16.mxu0 %v757
      %1856 = vmatmul.mubr.bf16.gmra.mxu0 %v709
      %v1857 = vpop.f32.mrf.mxu0
      %v1858 = vadd.f32 %v1697, %v1857
      %v1859 = vpop.f32.mrf.mxu0
      %v1860 = vpop.f32.mrf.mxu0
      %v1861 = vadd.f32 %v1700, %v1860
      %v1862 = vpop.f32.mrf.mxu0
      %1863 = vmatprep.mubr.bf16.mxu0 %v758
      %1864 = vmatmul.mubr.bf16.gmra.mxu0 %v710
      %v1865 = vpop.f32.mrf.mxu0
      %v1866 = vadd.f32 %v1705, %v1865
      %v1867 = vpop.f32.mrf.mxu0
      %v1868 = vpop.f32.mrf.mxu0
      %v1869 = vadd.f32 %v1708, %v1868
      %v1870 = vpop.f32.mrf.mxu0
      %1871 = vmatprep.mubr.bf16.mxu0 %v759
      %1872 = vmatmul.mubr.bf16.gmra.mxu0 %v711
      %v1873 = vpop.f32.mrf.mxu0
      %v1874 = vadd.f32 %v1713, %v1873
      %v1875 = vpop.f32.mrf.mxu0
      %v1876 = vpop.f32.mrf.mxu0
      %v1877 = vadd.f32 %v1716, %v1876
      %v1878 = vpop.f32.mrf.mxu0
      %1879 = vmatprep.mubr.bf16.mxu0 %v760
      %1880 = vmatmul.mubr.bf16.gmra.mxu0 %v712
      %v1881 = vpop.f32.mrf.mxu0
      %v1882 = vadd.f32 %v1721, %v1881
      %v1883 = vpop.f32.mrf.mxu0
      %v1884 = vpop.f32.mrf.mxu0
      %v1885 = vadd.f32 %v1724, %v1884
      %v1886 = vpop.f32.mrf.mxu0
      %1887 = vmatprep.mubr.bf16.mxu0 %v761
      %1888 = vmatmul.mubr.bf16.gmra.mxu0 %v713
      %v1889 = vpop.f32.mrf.mxu0
      %v1890 = vadd.f32 %v1729, %v1889
      %v1891 = vpop.f32.mrf.mxu0
      %v1892 = vpop.f32.mrf.mxu0
      %v1893 = vadd.f32 %v1732, %v1892
      %v1894 = vpop.f32.mrf.mxu0
      %1895 = vmatprep.mubr.bf16.mxu0 %v762
      %1896 = vmatmul.mubr.bf16.gmra.mxu0 %v714
      %v1897 = vpop.f32.mrf.mxu0
      %v1898 = vadd.f32 %v1737, %v1897
      %v1899 = vpop.f32.mrf.mxu0
      %v1900 = vpop.f32.mrf.mxu0
      %v1901 = vadd.f32 %v1740, %v1900
      %v1902 = vpop.f32.mrf.mxu0
      %1903 = vmatprep.mubr.bf16.mxu0 %v763
      %1904 = vmatmul.mubr.bf16.gmra.mxu0 %v715
      %v1905 = vpop.f32.mrf.mxu0
      %v1906 = vadd.f32 %v1745, %v1905
      %v1907 = vpop.f32.mrf.mxu0
      %v1908 = vpop.f32.mrf.mxu0
      %v1909 = vadd.f32 %v1748, %v1908
      %v1910 = vpop.f32.mrf.mxu0
      %1911 = vmatprep.mubr.bf16.mxu0 %v764
      %1912 = vmatmul.mubr.bf16.gmra.mxu0 %v716
      %v1913 = vpop.f32.mrf.mxu0
      %v1914 = vadd.f32 %v1753, %v1913
      %v1915 = vpop.f32.mrf.mxu0
      %v1916 = vpop.f32.mrf.mxu0
      %v1917 = vadd.f32 %v1756, %v1916
      %v1918 = vpop.f32.mrf.mxu0
      %1919 = vmatprep.mubr.bf16.mxu0 %v765
      %1920 = vmatmul.mubr.bf16.gmra.mxu0 %v717
      %v1921 = vpop.f32.mrf.mxu0
      %v1922 = vadd.f32 %v1761, %v1921
      %v1923 = vpop.f32.mrf.mxu0
      %v1924 = vpop.f32.mrf.mxu0
      %v1925 = vadd.f32 %v1764, %v1924
      %v1926 = vpop.f32.mrf.mxu0
      %1927 = vmatprep.mubr.bf16.mxu0 %v766
      %1928 = vmatmul.mubr.bf16.gmra.mxu0 %v718
      %v1929 = vpop.f32.mrf.mxu0
      %v1930 = vadd.f32 %v1769, %v1929
      %v1931 = vpop.f32.mrf.mxu0
      %v1932 = vpop.f32.mrf.mxu0
      %v1933 = vadd.f32 %v1772, %v1932
      %v1934 = vpop.f32.mrf.mxu0
      %1935 = vmatprep.mubr.bf16.mxu0 %v767
      %1936 = vmatmul.mubr.bf16.gmra.mxu0 %v719
      %v1937 = vpop.f32.mrf.mxu0
      %v1938 = vadd.f32 %v1777, %v1937
      %v1939 = vpop.f32.mrf.mxu0
      %v1940 = vpop.f32.mrf.mxu0
      %v1941 = vadd.f32 %v1780, %v1940
      %v1942 = vpop.f32.mrf.mxu0
      %1943 = vmatprep.mubr.bf16.mxu0 %v768
      %1944 = vmatmul.mubr.bf16.gmra.mxu0 %v720
      %v1945 = vpop.f32.mrf.mxu0
      %v1946 = vadd.f32 %v1785, %v1945
      %v1947 = vpop.f32.mrf.mxu0
      %v1948 = vpop.f32.mrf.mxu0
      %v1949 = vadd.f32 %v1788, %v1948
      %v1950 = vpop.f32.mrf.mxu0
      %1951 = vmatprep.mubr.bf16.mxu0 %v769
      %1952 = vmatmul.mubr.bf16.gmra.mxu0 %v721
      %v1953 = vpop.f32.mrf.mxu0
      %v1954 = vadd.f32 %v1793, %v1953
      %v1955 = vpop.f32.mrf.mxu0
      %v1956 = vpop.f32.mrf.mxu0
      %v1957 = vadd.f32 %v1796, %v1956
      %v1958 = vpop.f32.mrf.mxu0
      %1959 = vmatprep.mubr.bf16.mxu0 %v770
      %1960 = vmatmul.mubr.bf16.gmra.mxu0 %v722
      %v1961 = vpop.f32.mrf.mxu0
      %v1962 = vadd.f32 %v1801, %v1961
      %v1963 = vpop.f32.mrf.mxu0
      %v1964 = vpop.f32.mrf.mxu0
      %v1965 = vadd.f32 %v1804, %v1964
      %v1966 = vpop.f32.mrf.mxu0
      %1967 = vmatprep.mubr.bf16.mxu0 %v771
      %1968 = vmatmul.mubr.bf16.gmra.mxu0 %v723
      %v1969 = vpop.f32.mrf.mxu0
      %v1970 = vadd.f32 %v1809, %v1969
      %v1971 = vpop.f32.mrf.mxu0
      %v1972 = vpop.f32.mrf.mxu0
      %v1973 = vadd.f32 %v1812, %v1972
      %v1974 = vpop.f32.mrf.mxu0
      %1975 = vdwg.mxu0
      %1976 = vmatprep.subr.bf16.mxu0 0
      %1977 = vmatpush1.bf16.msra.mxu0 %v1404
      %1978 = vmatprep.subr.bf16.mxu0 0
      %1979 = vmatpush1.bf16.msra.mxu0 %v1403
      %1980 = vmatprep.subr.bf16.mxu0 0
      %1981 = vmatpush1.bf16.msra.mxu0 %v1402
      %1982 = vmatprep.subr.bf16.mxu0 0
      %1983 = vmatpush1.bf16.msra.mxu0 %v1401
      %1984 = vmatprep.subr.bf16.mxu0 0
      %1985 = vmatpush1.bf16.msra.mxu0 %v1400
      %1986 = vmatprep.subr.bf16.mxu0 0
      %1987 = vmatpush1.bf16.msra.mxu0 %v1399
      %1988 = vmatprep.subr.bf16.mxu0 0
      %1989 = vmatpush1.bf16.msra.mxu0 %v1398
      %1990 = vmatprep.subr.bf16.mxu0 0
      %1991 = vmatpush1.bf16.msra.mxu0 %v1397
      %1992 = vmatprep.subr.bf16.mxu0 0
      %1993 = vmatpush2.bf16.msra.mxu0 %v1412
      %1994 = vmatprep.subr.bf16.mxu0 0
      %1995 = vmatpush2.bf16.msra.mxu0 %v1411
      %1996 = vmatprep.subr.bf16.mxu0 0
      %1997 = vmatpush2.bf16.msra.mxu0 %v1410
      %1998 = vmatprep.subr.bf16.mxu0 0
      %1999 = vmatpush2.bf16.msra.mxu0 %v1409
      %2000 = vmatprep.subr.bf16.mxu0 0
      %2001 = vmatpush2.bf16.msra.mxu0 %v1408
      %2002 = vmatprep.subr.bf16.mxu0 0
      %2003 = vmatpush2.bf16.msra.mxu0 %v1407
      %2004 = vmatprep.subr.bf16.mxu0 0
      %2005 = vmatpush2.bf16.msra.mxu0 %v1406
      %2006 = vmatprep.subr.bf16.mxu0 0
      %2007 = vmatpush2.bf16.msra.mxu0 %v1405
      %2008 = vmatprep.mubr.bf16.mxu0 %v853
      %2009 = vmatmul.mubr.bf16.gmra.mxu0 %v805
      %v2010 = vpop.f32.mrf.mxu0
      %v2011 = vadd.f32 %v1850, %v2010
      %v2012 = vpop.f32.mrf.mxu0
      %v2013 = vpop.f32.mrf.mxu0
      %v2014 = vadd.f32 %v1853, %v2013
      %v2015 = vpop.f32.mrf.mxu0
      %2016 = vmatprep.mubr.bf16.mxu0 %v854
      %2017 = vmatmul.mubr.bf16.gmra.mxu0 %v806
      %v2018 = vpop.f32.mrf.mxu0
      %v2019 = vadd.f32 %v1858, %v2018
      %v2020 = vpop.f32.mrf.mxu0
      %v2021 = vpop.f32.mrf.mxu0
      %v2022 = vadd.f32 %v1861, %v2021
      %v2023 = vpop.f32.mrf.mxu0
      %2024 = vmatprep.mubr.bf16.mxu0 %v855
      %2025 = vmatmul.mubr.bf16.gmra.mxu0 %v807
      %v2026 = vpop.f32.mrf.mxu0
      %v2027 = vadd.f32 %v1866, %v2026
      %v2028 = vpop.f32.mrf.mxu0
      %v2029 = vpop.f32.mrf.mxu0
      %v2030 = vadd.f32 %v1869, %v2029
      %v2031 = vpop.f32.mrf.mxu0
      %2032 = vmatprep.mubr.bf16.mxu0 %v856
      %2033 = vmatmul.mubr.bf16.gmra.mxu0 %v808
      %v2034 = vpop.f32.mrf.mxu0
      %v2035 = vadd.f32 %v1874, %v2034
      %v2036 = vpop.f32.mrf.mxu0
      %v2037 = vpop.f32.mrf.mxu0
      %v2038 = vadd.f32 %v1877, %v2037
      %v2039 = vpop.f32.mrf.mxu0
      %2040 = vmatprep.mubr.bf16.mxu0 %v857
      %2041 = vmatmul.mubr.bf16.gmra.mxu0 %v809
      %v2042 = vpop.f32.mrf.mxu0
      %v2043 = vadd.f32 %v1882, %v2042
      %v2044 = vpop.f32.mrf.mxu0
      %v2045 = vpop.f32.mrf.mxu0
      %v2046 = vadd.f32 %v1885, %v2045
      %v2047 = vpop.f32.mrf.mxu0
      %2048 = vmatprep.mubr.bf16.mxu0 %v858
      %2049 = vmatmul.mubr.bf16.gmra.mxu0 %v810
      %v2050 = vpop.f32.mrf.mxu0
      %v2051 = vadd.f32 %v1890, %v2050
      %v2052 = vpop.f32.mrf.mxu0
      %v2053 = vpop.f32.mrf.mxu0
      %v2054 = vadd.f32 %v1893, %v2053
      %v2055 = vpop.f32.mrf.mxu0
      %2056 = vmatprep.mubr.bf16.mxu0 %v859
      %2057 = vmatmul.mubr.bf16.gmra.mxu0 %v811
      %v2058 = vpop.f32.mrf.mxu0
      %v2059 = vadd.f32 %v1898, %v2058
      %v2060 = vpop.f32.mrf.mxu0
      %v2061 = vpop.f32.mrf.mxu0
      %v2062 = vadd.f32 %v1901, %v2061
      %v2063 = vpop.f32.mrf.mxu0
      %2064 = vmatprep.mubr.bf16.mxu0 %v860
      %2065 = vmatmul.mubr.bf16.gmra.mxu0 %v812
      %v2066 = vpop.f32.mrf.mxu0
      %v2067 = vadd.f32 %v1906, %v2066
      %v2068 = vpop.f32.mrf.mxu0
      %v2069 = vpop.f32.mrf.mxu0
      %v2070 = vadd.f32 %v1909, %v2069
      %v2071 = vpop.f32.mrf.mxu0
      %2072 = vmatprep.mubr.bf16.mxu0 %v861
      %2073 = vmatmul.mubr.bf16.gmra.mxu0 %v813
      %v2074 = vpop.f32.mrf.mxu0
      %v2075 = vadd.f32 %v1914, %v2074
      %v2076 = vpop.f32.mrf.mxu0
      %v2077 = vpop.f32.mrf.mxu0
      %v2078 = vadd.f32 %v1917, %v2077
      %v2079 = vpop.f32.mrf.mxu0
      %2080 = vmatprep.mubr.bf16.mxu0 %v862
      %2081 = vmatmul.mubr.bf16.gmra.mxu0 %v814
      %v2082 = vpop.f32.mrf.mxu0
      %v2083 = vadd.f32 %v1922, %v2082
      %v2084 = vpop.f32.mrf.mxu0
      %v2085 = vpop.f32.mrf.mxu0
      %v2086 = vadd.f32 %v1925, %v2085
      %v2087 = vpop.f32.mrf.mxu0
      %2088 = vmatprep.mubr.bf16.mxu0 %v863
      %2089 = vmatmul.mubr.bf16.gmra.mxu0 %v815
      %v2090 = vpop.f32.mrf.mxu0
      %v2091 = vadd.f32 %v1930, %v2090
      %v2092 = vpop.f32.mrf.mxu0
      %v2093 = vpop.f32.mrf.mxu0
      %v2094 = vadd.f32 %v1933, %v2093
      %v2095 = vpop.f32.mrf.mxu0
      %2096 = vmatprep.mubr.bf16.mxu0 %v864
      %2097 = vmatmul.mubr.bf16.gmra.mxu0 %v816
      %v2098 = vpop.f32.mrf.mxu0
      %v2099 = vadd.f32 %v1938, %v2098
      %v2100 = vpop.f32.mrf.mxu0
      %v2101 = vpop.f32.mrf.mxu0
      %v2102 = vadd.f32 %v1941, %v2101
      %v2103 = vpop.f32.mrf.mxu0
      %2104 = vmatprep.mubr.bf16.mxu0 %v865
      %2105 = vmatmul.mubr.bf16.gmra.mxu0 %v817
      %v2106 = vpop.f32.mrf.mxu0
      %v2107 = vadd.f32 %v1946, %v2106
      %v2108 = vpop.f32.mrf.mxu0
      %v2109 = vpop.f32.mrf.mxu0
      %v2110 = vadd.f32 %v1949, %v2109
      %v2111 = vpop.f32.mrf.mxu0
      %2112 = vmatprep.mubr.bf16.mxu0 %v866
      %2113 = vmatmul.mubr.bf16.gmra.mxu0 %v818
      %v2114 = vpop.f32.mrf.mxu0
      %v2115 = vadd.f32 %v1954, %v2114
      %v2116 = vpop.f32.mrf.mxu0
      %v2117 = vpop.f32.mrf.mxu0
      %v2118 = vadd.f32 %v1957, %v2117
      %v2119 = vpop.f32.mrf.mxu0
      %2120 = vmatprep.mubr.bf16.mxu0 %v867
      %2121 = vmatmul.mubr.bf16.gmra.mxu0 %v819
      %v2122 = vpop.f32.mrf.mxu0
      %v2123 = vadd.f32 %v1962, %v2122
      %v2124 = vpop.f32.mrf.mxu0
      %v2125 = vpop.f32.mrf.mxu0
      %v2126 = vadd.f32 %v1965, %v2125
      %v2127 = vpop.f32.mrf.mxu0
      %2128 = vmatprep.mubr.bf16.mxu0 %v868
      %2129 = vmatmul.mubr.bf16.gmra.mxu0 %v820
      %v2130 = vpop.f32.mrf.mxu0
      %v2131 = vadd.f32 %v1970, %v2130
      %v2132 = vpop.f32.mrf.mxu0
      %v2133 = vpop.f32.mrf.mxu0
      %v2134 = vadd.f32 %v1973, %v2133
      %v2135 = vpop.f32.mrf.mxu0
      %2136 = vdwg.mxu0
      %2137 = vmatprep.subr.bf16.mxu0 0
      %2138 = vmatpush1.bf16.msra.mxu0 %v1420
      %2139 = vmatprep.subr.bf16.mxu0 0
      %2140 = vmatpush1.bf16.msra.mxu0 %v1419
      %2141 = vmatprep.subr.bf16.mxu0 0
      %2142 = vmatpush1.bf16.msra.mxu0 %v1418
      %2143 = vmatprep.subr.bf16.mxu0 0
      %2144 = vmatpush1.bf16.msra.mxu0 %v1417
      %2145 = vmatprep.subr.bf16.mxu0 0
      %2146 = vmatpush1.bf16.msra.mxu0 %v1416
      %2147 = vmatprep.subr.bf16.mxu0 0
      %2148 = vmatpush1.bf16.msra.mxu0 %v1415
      %2149 = vmatprep.subr.bf16.mxu0 0
      %2150 = vmatpush1.bf16.msra.mxu0 %v1414
      %2151 = vmatprep.subr.bf16.mxu0 0
      %2152 = vmatpush1.bf16.msra.mxu0 %v1413
      %2153 = vmatprep.subr.bf16.mxu0 0
      %2154 = vmatpush2.bf16.msra.mxu0 0
      %2155 = vmatprep.subr.bf16.mxu0 0
      %2156 = vmatpush2.bf16.msra.mxu0 0
      %2157 = vmatprep.subr.bf16.mxu0 0
      %2158 = vmatpush2.bf16.msra.mxu0 0
      %2159 = vmatprep.subr.bf16.mxu0 0
      %2160 = vmatpush2.bf16.msra.mxu0 0
      %2161 = vmatprep.subr.bf16.mxu0 0
      %2162 = vmatpush2.bf16.msra.mxu0 0
      %2163 = vmatprep.subr.bf16.mxu0 0
      %2164 = vmatpush2.bf16.msra.mxu0 0
      %2165 = vmatprep.subr.bf16.mxu0 0
      %2166 = vmatpush2.bf16.msra.mxu0 0
      %2167 = vmatprep.subr.bf16.mxu0 0
      %2168 = vmatpush2.bf16.msra.mxu0 0
      %2169 = vmatprep.mubr.bf16.mxu0 0
      %2170 = vmatmul.mubr.bf16.gmra.mxu0 %v901
      %v2171 = vpop.f32.mrf.mxu0
      %v2172 = vadd.f32 %v2011, %v2171
      %v2173 = vpop.f32.mrf.mxu0
      %v2174 = vpop.f32.mrf.mxu0
      %v2175 = vadd.f32 %v2014, %v2174
      %v2176 = vpop.f32.mrf.mxu0
      %2177 = vmatprep.mubr.bf16.mxu0 0
      %2178 = vmatmul.mubr.bf16.gmra.mxu0 %v902
      %v2179 = vpop.f32.mrf.mxu0
      %v2180 = vadd.f32 %v2019, %v2179
      %v2181 = vpop.f32.mrf.mxu0
      %v2182 = vpop.f32.mrf.mxu0
      %v2183 = vadd.f32 %v2022, %v2182
      %v2184 = vpop.f32.mrf.mxu0
      %2185 = vmatprep.mubr.bf16.mxu0 0
      %2186 = vmatmul.mubr.bf16.gmra.mxu0 %v903
      %v2187 = vpop.f32.mrf.mxu0
      %v2188 = vadd.f32 %v2027, %v2187
      %v2189 = vpop.f32.mrf.mxu0
      %v2190 = vpop.f32.mrf.mxu0
      %v2191 = vadd.f32 %v2030, %v2190
      %v2192 = vpop.f32.mrf.mxu0
      %2193 = vmatprep.mubr.bf16.mxu0 0
      %2194 = vmatmul.mubr.bf16.gmra.mxu0 %v904
      %v2195 = vpop.f32.mrf.mxu0
      %v2196 = vadd.f32 %v2035, %v2195
      %v2197 = vpop.f32.mrf.mxu0
      %v2198 = vpop.f32.mrf.mxu0
      %v2199 = vadd.f32 %v2038, %v2198
      %v2200 = vpop.f32.mrf.mxu0
      %2201 = vmatprep.mubr.bf16.mxu0 0
      %2202 = vmatmul.mubr.bf16.gmra.mxu0 %v905
      %v2203 = vpop.f32.mrf.mxu0
      %v2204 = vadd.f32 %v2043, %v2203
      %v2205 = vpop.f32.mrf.mxu0
      %v2206 = vpop.f32.mrf.mxu0
      %v2207 = vadd.f32 %v2046, %v2206
      %v2208 = vpop.f32.mrf.mxu0
      %2209 = vmatprep.mubr.bf16.mxu0 0
      %2210 = vmatmul.mubr.bf16.gmra.mxu0 %v906
      %v2211 = vpop.f32.mrf.mxu0
      %v2212 = vadd.f32 %v2051, %v2211
      %v2213 = vpop.f32.mrf.mxu0
      %v2214 = vpop.f32.mrf.mxu0
      %v2215 = vadd.f32 %v2054, %v2214
      %v2216 = vpop.f32.mrf.mxu0
      %2217 = vmatprep.mubr.bf16.mxu0 0
      %2218 = vmatmul.mubr.bf16.gmra.mxu0 %v907
      %v2219 = vpop.f32.mrf.mxu0
      %v2220 = vadd.f32 %v2059, %v2219
      %v2221 = vpop.f32.mrf.mxu0
      %v2222 = vpop.f32.mrf.mxu0
      %v2223 = vadd.f32 %v2062, %v2222
      %v2224 = vpop.f32.mrf.mxu0
      %2225 = vmatprep.mubr.bf16.mxu0 0
      %2226 = vmatmul.mubr.bf16.gmra.mxu0 %v908
      %v2227 = vpop.f32.mrf.mxu0
      %v2228 = vadd.f32 %v2067, %v2227
      %v2229 = vpop.f32.mrf.mxu0
      %v2230 = vpop.f32.mrf.mxu0
      %v2231 = vadd.f32 %v2070, %v2230
      %v2232 = vpop.f32.mrf.mxu0
      %2233 = vmatprep.mubr.bf16.mxu0 0
      %2234 = vmatmul.mubr.bf16.gmra.mxu0 %v909
      %v2235 = vpop.f32.mrf.mxu0
      %v2236 = vadd.f32 %v2075, %v2235
      %v2237 = vpop.f32.mrf.mxu0
      %v2238 = vpop.f32.mrf.mxu0
      %v2239 = vadd.f32 %v2078, %v2238
      %v2240 = vpop.f32.mrf.mxu0
      %2241 = vmatprep.mubr.bf16.mxu0 0
      %2242 = vmatmul.mubr.bf16.gmra.mxu0 %v910
      %v2243 = vpop.f32.mrf.mxu0
      %v2244 = vadd.f32 %v2083, %v2243
      %v2245 = vpop.f32.mrf.mxu0
      %v2246 = vpop.f32.mrf.mxu0
      %v2247 = vadd.f32 %v2086, %v2246
      %v2248 = vpop.f32.mrf.mxu0
      %2249 = vmatprep.mubr.bf16.mxu0 0
      %2250 = vmatmul.mubr.bf16.gmra.mxu0 %v911
      %v2251 = vpop.f32.mrf.mxu0
      %v2252 = vadd.f32 %v2091, %v2251
      %v2253 = vpop.f32.mrf.mxu0
      %v2254 = vpop.f32.mrf.mxu0
      %v2255 = vadd.f32 %v2094, %v2254
      %v2256 = vpop.f32.mrf.mxu0
      %2257 = vmatprep.mubr.bf16.mxu0 0
      %2258 = vmatmul.mubr.bf16.gmra.mxu0 %v912
      %v2259 = vpop.f32.mrf.mxu0
      %v2260 = vadd.f32 %v2099, %v2259
      %v2261 = vpop.f32.mrf.mxu0
      %v2262 = vpop.f32.mrf.mxu0
      %v2263 = vadd.f32 %v2102, %v2262
      %v2264 = vpop.f32.mrf.mxu0
      %2265 = vmatprep.mubr.bf16.mxu0 0
      %2266 = vmatmul.mubr.bf16.gmra.mxu0 %v913
      %v2267 = vpop.f32.mrf.mxu0
      %v2268 = vadd.f32 %v2107, %v2267
      %v2269 = vpop.f32.mrf.mxu0
      %v2270 = vpop.f32.mrf.mxu0
      %v2271 = vadd.f32 %v2110, %v2270
      %v2272 = vpop.f32.mrf.mxu0
      %2273 = vmatprep.mubr.bf16.mxu0 0
      %2274 = vmatmul.mubr.bf16.gmra.mxu0 %v914
      %v2275 = vpop.f32.mrf.mxu0
      %v2276 = vadd.f32 %v2115, %v2275
      %v2277 = vpop.f32.mrf.mxu0
      %v2278 = vpop.f32.mrf.mxu0
      %v2279 = vadd.f32 %v2118, %v2278
      %v2280 = vpop.f32.mrf.mxu0
      %2281 = vmatprep.mubr.bf16.mxu0 0
      %2282 = vmatmul.mubr.bf16.gmra.mxu0 %v915
      %v2283 = vpop.f32.mrf.mxu0
      %v2284 = vadd.f32 %v2123, %v2283
      %v2285 = vpop.f32.mrf.mxu0
      %v2286 = vpop.f32.mrf.mxu0
      %v2287 = vadd.f32 %v2126, %v2286
      %v2288 = vpop.f32.mrf.mxu0
      %2289 = vmatprep.mubr.bf16.mxu0 0
      %2290 = vmatmul.mubr.bf16.gmra.mxu0 %v916
      %v2291 = vpop.f32.mrf.mxu0
      %v2292 = vadd.f32 %v2131, %v2291
      %v2293 = vpop.f32.mrf.mxu0
      %v2294 = vpop.f32.mrf.mxu0
      %v2295 = vadd.f32 %v2134, %v2294
      %v2296 = vpop.f32.mrf.mxu0
      %2297 = vdwg.mxu0
      %2298 = vst [vmem:[%s262] sm:$0xff] %v2172
      %2299 = vst [vmem:[%s262 + $0x8] sm:$0xff] %v2175
      %2300 = vst [vmem:[%s262 + $0x10] sm:$0xff] %v2180
      %2301 = vst [vmem:[%s262 + $0x18] sm:$0xff] %v2183
      %2302 = vst [vmem:[%s262 + $0x20] sm:$0xff] %v2188
      %2303 = vst [vmem:[%s262 + $0x28] sm:$0xff] %v2191
      %2304 = vst [vmem:[%s262 + $0x30] sm:$0xff] %v2196
      %2305 = vst [vmem:[%s262 + $0x38] sm:$0xff] %v2199
      %2306 = vst [vmem:[%s262 + $0x40] sm:$0xff] %v2204
      %2307 = vst [vmem:[%s262 + $0x48] sm:$0xff] %v2207
      %2308 = vst [vmem:[%s262 + $0x50] sm:$0xff] %v2212
      %2309 = vst [vmem:[%s262 + $0x58] sm:$0xff] %v2215
      %2310 = vst [vmem:[%s262 + $0x60] sm:$0xff] %v2220
      %2311 = vst [vmem:[%s262 + $0x68] sm:$0xff] %v2223
      %2312 = vst [vmem:[%s262 + $0x70] sm:$0xff] %v2228
      %2313 = vst [vmem:[%s262 + $0x78] sm:$0xff] %v2231
      %2314 = vst [vmem:[%s262 + $0x80] sm:$0xff] %v2236
      %2315 = vst [vmem:[%s262 + $0x88] sm:$0xff] %v2239
      %2316 = vst [vmem:[%s262 + $0x90] sm:$0xff] %v2244
      %2317 = vst [vmem:[%s262 + $0x98] sm:$0xff] %v2247
      %2318 = vst [vmem:[%s262 + $0xa0] sm:$0xff] %v2252
      %2319 = vst [vmem:[%s262 + $0xa8] sm:$0xff] %v2255
      %2320 = vst [vmem:[%s262 + $0xb0] sm:$0xff] %v2260
      %2321 = vst [vmem:[%s262 + $0xb8] sm:$0xff] %v2263
      %2322 = vst [vmem:[%s262 + $0xc0] sm:$0xff] %v2268
      %2323 = vst [vmem:[%s262 + $0xc8] sm:$0xff] %v2271
      %2324 = vst [vmem:[%s262 + $0xd0] sm:$0xff] %v2276
      %2325 = vst [vmem:[%s262 + $0xd8] sm:$0xff] %v2279
      %2326 = vst [vmem:[%s262 + $0xe0] sm:$0xff] %v2284
      %2327 = vst [vmem:[%s262 + $0xe8] sm:$0xff] %v2287
      %2328 = vst [vmem:[%s262 + $0xf0] sm:$0xff] %v2292
      %2329 = vst [vmem:[%s262 + $0xf8] sm:$0xff] %v2295
      %v2330 = vadd.f32 %v2172, %v2175
      %v2331 = vadd.f32 %v2330, %v2180
      %v2332 = vadd.f32 %v2331, %v2183
      %v2333 = vadd.f32 %v2332, %v2188
      %v2334 = vadd.f32 %v2333, %v2191
      %v2335 = vadd.f32 %v2334, %v2196
      %v2336 = vadd.f32 %v2335, %v2199
      %v2337 = vadd.f32 %v2336, %v2204
      %v2338 = vadd.f32 %v2337, %v2207
      %v2339 = vadd.f32 %v2338, %v2212
      %v2340 = vadd.f32 %v2339, %v2215
      %v2341 = vadd.f32 %v2340, %v2220
      %v2342 = vadd.f32 %v2341, %v2223
      %v2343 = vadd.f32 %v2342, %v2228
      %v2344 = vadd.f32 %v2343, %v2231
      %v2345 = vadd.f32 %v2344, %v2236
      %v2346 = vadd.f32 %v2345, %v2239
      %v2347 = vadd.f32 %v2346, %v2244
      %v2348 = vadd.f32 %v2347, %v2247
      %v2349 = vadd.f32 %v2348, %v2252
      %v2350 = vadd.f32 %v2349, %v2255
      %v2351 = vadd.f32 %v2350, %v2260
      %v2352 = vadd.f32 %v2351, %v2263
      %v2353 = vadd.f32 %v2352, %v2268
      %v2354 = vadd.f32 %v2353, %v2271
      %v2355 = vadd.f32 %v2354, %v2276
      %v2356 = vadd.f32 %v2355, %v2279
      %v2357 = vadd.f32 %v2356, %v2284
      %v2358 = vadd.f32 %v2357, %v2287
      %v2359 = vadd.f32 %v2358, %v2292
      %v2360 = vadd.f32 %v2359, %v2295
      %v2361 = vrot.slane %v2360, 4
      %v2362 = vadd.f32 %v2360, %v2361
      %v2363 = vrot.slane %v2362, 2
      %v2364 = vadd.f32 %v2362, %v2363
      %v2365 = vrot.slane %v2364, 1
      %v2366 = vadd.f32 %v2364, %v2365
      %2367 = vst [vmem:[%s265] sm:$0x1] %v2366
      %v2368 = vmul.f32 %v2172, %v2172
      %v2369 = vmul.f32 %v2175, %v2175
      %v2370 = vmul.f32 %v2180, %v2180
      %v2371 = vmul.f32 %v2183, %v2183
      %v2372 = vmul.f32 %v2188, %v2188
      %v2373 = vmul.f32 %v2191, %v2191
      %v2374 = vmul.f32 %v2196, %v2196
      %v2375 = vmul.f32 %v2199, %v2199
      %v2376 = vmul.f32 %v2204, %v2204
      %v2377 = vmul.f32 %v2207, %v2207
      %v2378 = vmul.f32 %v2212, %v2212
      %v2379 = vmul.f32 %v2215, %v2215
      %v2380 = vmul.f32 %v2220, %v2220
      %v2381 = vmul.f32 %v2223, %v2223
      %v2382 = vmul.f32 %v2228, %v2228
      %v2383 = vmul.f32 %v2231, %v2231
      %v2384 = vmul.f32 %v2236, %v2236
      %v2385 = vmul.f32 %v2239, %v2239
      %v2386 = vmul.f32 %v2244, %v2244
      %v2387 = vmul.f32 %v2247, %v2247
      %v2388 = vmul.f32 %v2252, %v2252
      %v2389 = vmul.f32 %v2255, %v2255
      %v2390 = vmul.f32 %v2260, %v2260
      %v2391 = vmul.f32 %v2263, %v2263
      %v2392 = vmul.f32 %v2268, %v2268
      %v2393 = vmul.f32 %v2271, %v2271
      %v2394 = vmul.f32 %v2276, %v2276
      %v2395 = vmul.f32 %v2279, %v2279
      %v2396 = vmul.f32 %v2284, %v2284
      %v2397 = vmul.f32 %v2287, %v2287
      %v2398 = vmul.f32 %v2292, %v2292
      %v2399 = vmul.f32 %v2295, %v2295
      %v2400 = vadd.f32 %v2368, %v2369
      %v2401 = vadd.f32 %v2400, %v2370
      %v2402 = vadd.f32 %v2401, %v2371
      %v2403 = vadd.f32 %v2402, %v2372
      %v2404 = vadd.f32 %v2403, %v2373
      %v2405 = vadd.f32 %v2404, %v2374
      %v2406 = vadd.f32 %v2405, %v2375
      %v2407 = vadd.f32 %v2406, %v2376
      %v2408 = vadd.f32 %v2407, %v2377
      %v2409 = vadd.f32 %v2408, %v2378
      %v2410 = vadd.f32 %v2409, %v2379
      %v2411 = vadd.f32 %v2410, %v2380
      %v2412 = vadd.f32 %v2411, %v2381
      %v2413 = vadd.f32 %v2412, %v2382
      %v2414 = vadd.f32 %v2413, %v2383
      %v2415 = vadd.f32 %v2414, %v2384
      %v2416 = vadd.f32 %v2415, %v2385
      %v2417 = vadd.f32 %v2416, %v2386
      %v2418 = vadd.f32 %v2417, %v2387
      %v2419 = vadd.f32 %v2418, %v2388
      %v2420 = vadd.f32 %v2419, %v2389
      %v2421 = vadd.f32 %v2420, %v2390
      %v2422 = vadd.f32 %v2421, %v2391
      %v2423 = vadd.f32 %v2422, %v2392
      %v2424 = vadd.f32 %v2423, %v2393
      %v2425 = vadd.f32 %v2424, %v2394
      %v2426 = vadd.f32 %v2425, %v2395
      %v2427 = vadd.f32 %v2426, %v2396
      %v2428 = vadd.f32 %v2427, %v2397
      %v2429 = vadd.f32 %v2428, %v2398
      %v2430 = vadd.f32 %v2429, %v2399
      %v2431 = vrot.slane %v2430, 4
      %v2432 = vadd.f32 %v2430, %v2431
      %v2433 = vrot.slane %v2432, 2
      %v2434 = vadd.f32 %v2432, %v2433
      %v2435 = vrot.slane %v2434, 1
      %v2436 = vadd.f32 %v2434, %v2435
      %2437 = vst [vmem:[%s268] sm:$0x1] %v2436
      %p2438 = scmp.lt.s32.totalorder %s18, 1
      %s2439 = scalar_select %p2438, %s18, 1
      %s2440 = smul.addr %s2439, 32
      %s2441 = smul.addr %s2440, 8
      %s2442 = scalar_lea.vmem %s4, %s2441
      %p2443 = scmp.lt.s32.totalorder %s18, 1
      %s2444 = scalar_select %p2443, %s18, 1
      %s2445 = scalar_lea.vmem %s5, %s2444
      %p2446 = scmp.lt.s32.totalorder %s18, 1
      %s2447 = scalar_select %p2446, %s18, 1
      %s2448 = scalar_lea.vmem %s6, %s2447
      // Predicated region
      $region37: #{bottleneck_forward.5} parent=35 // pred_check
        %p2449 = pneg %p125
      $region38: #{bottleneck_forward.5} parent=35 // pred_check_branch
        %2451 = sbr.rel (%p2449) target = $region40
      $region39: #{bottleneck_forward.5} parent=35 // pred_region
        _
      $region40: #{bottleneck_forward.5} parent=35 // pred_fallthru
        _
      // Predicated region
      $region41: #{bottleneck_forward.5} parent=35 // pred_check
        %p2452 = pneg %p151
      $region42: #{bottleneck_forward.5} parent=35 // pred_check_branch
        %2454 = sbr.rel (%p2452) target = $region44
      $region43: #{bottleneck_forward.5} parent=35 // pred_region
        _
      $region44: #{bottleneck_forward.5} parent=35 // pred_fallthru
        _
      // Predicated region
      $region45: #{bottleneck_forward.5} parent=35 // pred_check
        %p2455 = pneg %p177
      $region46: #{bottleneck_forward.5} parent=35 // pred_check_branch
        %2457 = sbr.rel (%p2455) target = $region48
      $region47: #{bottleneck_forward.5} parent=35 // pred_region
        _
      $region48: #{bottleneck_forward.5} parent=35 // pred_fallthru
        _
    $region36: #{bottleneck_forward.5} parent=5 // pred_fallthru
      _
    %p2458 = scmp.le.s32.totalorder 2, %s13
    // Predicated region
    $region49: #{bottleneck_forward.5} parent=5 // pred_check
      %p2459 = pneg %p2458
    $region50: #{bottleneck_forward.5} parent=5 // pred_check_branch
      %2461 = sbr.rel (%p2459) target = $region52
    $region51: #{bottleneck_forward.5} parent=5 // pred_region
      %s2462 = ssub.s32 %s13, 2
      // Predicated region
      $region53: #{bottleneck_forward.5} parent=51 // pred_check
        %p2463 = pneg %p131
      $region54: #{bottleneck_forward.5} parent=51 // pred_check_branch
        %2465 = sbr.rel (%p2463) target = $region56
      $region55: #{bottleneck_forward.5} parent=51 // pred_region
        %p2466 = scmp.lt.s32.totalorder %s19, 1
        %s2467 = scalar_select %p2466, %s19, 1
        %s2468 = smul.addr %s2467, 32
        %s2469 = smul.addr %s2468, 8
        %s2470 = scalar_lea.vmem %s4, %s2469
      $region56: #{bottleneck_forward.5} parent=51 // pred_fallthru
        _
      // Predicated region
      $region57: #{bottleneck_forward.5} parent=51 // pred_check
        %p2471 = pneg %p157
      $region58: #{bottleneck_forward.5} parent=51 // pred_check_branch
        %2473 = sbr.rel (%p2471) target = $region60
      $region59: #{bottleneck_forward.5} parent=51 // pred_region
        %p2474 = scmp.lt.s32.totalorder %s19, 1
        %s2475 = scalar_select %p2474, %s19, 1
        %s2476 = scalar_lea.vmem %s5, %s2475
      $region60: #{bottleneck_forward.5} parent=51 // pred_fallthru
        _
      // Predicated region
      $region61: #{bottleneck_forward.5} parent=51 // pred_check
        %p2477 = pneg %p183
      $region62: #{bottleneck_forward.5} parent=51 // pred_check_branch
        %2479 = sbr.rel (%p2477) target = $region64
      $region63: #{bottleneck_forward.5} parent=51 // pred_region
        %p2480 = scmp.lt.s32.totalorder %s19, 1
        %s2481 = scalar_select %p2480, %s19, 1
        %s2482 = scalar_lea.vmem %s6, %s2481
      $region64: #{bottleneck_forward.5} parent=51 // pred_fallthru
        _
    $region52: #{bottleneck_forward.5} parent=5 // pred_fallthru
      _
  $region6: #{bottleneck_forward.5} parent=0 // loop_footer
    %s17 = sadd.s32 1, %s13
  $region7: #{bottleneck_forward.5} parent=0 // loop_footer_branch
    %12 = sbr.rel target = $region3
  $region8: #{bottleneck_forward.5} parent=0 // loop_exit
    _

</llo_original>
